<compile_context>
chip_gen: v5e
topology: v5e:2x2
jax: 0.10.0
libtpu: 0.0.40
codegen_flags: <defaults>
</compile_context>

<pallas_src>
import functools

import jax
import jax.numpy as jnp
import numpy as np
from jax.experimental import pallas as pl
from jax.experimental.pallas import tpu as pltpu

EPS = 1e-5                 # nn.BatchNorm2d default eps
TM = 256                   # row tile for the (only) tiled GEMM (conv1)
MAX_FUSED_BN_ROWS = 1024   # single-block fused-BN path guard


def _round_up(x, m):
    return (x + m - 1) // m * m


# ----------------------------- Pallas kernels ------------------------------

def _gemm_kernel(p_ref, w_ref, o_ref, *, apply_relu):
    # bf16 x bf16 -> f32 accumulate on the MXU; optional fused ReLU on the VPU.
    y = jnp.dot(p_ref[...], w_ref[...], preferred_element_type=jnp.float32)
    if apply_relu:
        y = jnp.maximum(y, 0.0)
    o_ref[...] = y.astype(o_ref.dtype)


def _gemm_bn_relu_kernel(p_ref, w_ref, g_ref, b_ref, o_ref):
    # Whole-output-resident GEMM (grid == (1,)), so training-mode batch stats
    # can be computed in-kernel on the f32 accumulator (epilogue stays f32).
    y = jnp.dot(p_ref[...], w_ref[...], preferred_element_type=jnp.float32)
    mean = jnp.mean(y, axis=0, keepdims=True)
    var = jnp.mean(jnp.square(y - mean), axis=0, keepdims=True)  # biased, like PyTorch
    scale = g_ref[...] * jax.lax.rsqrt(var + EPS)
    shift = b_ref[...] - mean * scale
    o_ref[...] = jnp.maximum(y * scale + shift, 0.0).astype(o_ref.dtype)


def _gemm_bn_relu_head_kernel(p_ref, w_ref, g_ref, b_ref, w5_ref, o_ref):
    # conv4 GEMM + BN + ReLU, then conv5 folded in as an elementwise multiply
    # with the (row-tiled) centre 2x2 of the conv5 weight + a lane reduction.
    y = jnp.dot(p_ref[...], w_ref[...], preferred_element_type=jnp.float32)
    mean = jnp.mean(y, axis=0, keepdims=True)
    var = jnp.mean(jnp.square(y - mean), axis=0, keepdims=True)
    scale = g_ref[...] * jax.lax.rsqrt(var + EPS)
    shift = b_ref[...] - mean * scale
    y = jnp.maximum(y * scale + shift, 0.0)
    # Emulate the bf16 MXU-operand rounding of the reference conv5.
    yb = y.astype(jnp.bfloat16).astype(jnp.float32)
    o_ref[...] = jnp.sum(yb * w5_ref[...], axis=1, keepdims=True)  # (M, 1) f32


# ------------------------------- layer glue --------------------------------

def _im2col(x_nhwc, k, stride, pad):
    """Extract conv patches; patch feature order is (kh, kw, cin)."""
    N, H, W, C = x_nhwc.shape
    Ho = (H + 2 * pad - k) // stride + 1
    Wo = (W + 2 * pad - k) // stride + 1
    xp = jnp.pad(x_nhwc, ((0, 0), (pad, pad), (pad, pad), (0, 0)))
    cols = []
    for di in range(k):
        for dj in range(k):
            cols.append(xp[:, di:di + stride * Ho:stride, dj:dj + stride * Wo:stride, :])
    p = jnp.stack(cols, axis=3)  # (N, Ho, Wo, k*k, C)
    return p.reshape(N * Ho * Wo, k * k * C), Ho, Wo


def conv_relu_layer(x_nhwc, w_hwio, *, stride, pad, apply_relu,
                    out_dtype=jnp.bfloat16):
    """Conv2d (bias=False) via M-tiled Pallas GEMM, optional fused ReLU."""
    kh, kw, cin, cout = w_hwio.shape
    N = x_nhwc.shape[0]

    # Lane / sublane alignment padding (only conv1/conv5 need it).
    cin_p = _round_up(cin, 8)
    cout_p = _round_up(cout, 128)
    if cin_p != cin:
        x_nhwc = jnp.pad(x_nhwc, ((0, 0), (0, 0), (0, 0), (0, cin_p - cin)))
        w_hwio = jnp.pad(w_hwio, ((0, 0), (0, 0), (0, cin_p - cin), (0, 0)))
    if cout_p != cout:
        w_hwio = jnp.pad(w_hwio, ((0, 0), (0, 0), (0, 0), (0, cout_p - cout)))

    patches, Ho, Wo = _im2col(x_nhwc.astype(jnp.bfloat16), kh, stride, pad)
    M, K = patches.shape
    w_flat = w_hwio.reshape(K, cout_p).astype(jnp.bfloat16)

    # Tile M when there is enough work (conv1: M=512 -> grid=(2,) engages the
    # second TensorCore on v7x); otherwise a single full block.
    if M > TM:
        Mp = _round_up(M, TM)
        if Mp != M:
            patches = jnp.pad(patches, ((0, Mp - M), (0, 0)))
        tm, grid_m = TM, Mp // TM
    else:
        Mp, tm, grid_m = M, M, 1

    out = pl.pallas_call(
        functools.partial(_gemm_kernel, apply_relu=apply_relu),
        out_shape=jax.ShapeDtypeStruct((Mp, cout_p), out_dtype),
        grid=(grid_m,),
        in_specs=[
            pl.BlockSpec((tm, K), lambda i: (i, 0)),        # pipelined patch tiles
            pl.BlockSpec((K, cout_p), lambda i: (0, 0)),    # resident weights
        ],
        out_specs=pl.BlockSpec((tm, cout_p), lambda i: (i, 0)),
        compiler_params=pltpu.CompilerParams(
            dimension_semantics=("parallel",)),
    )(patches, w_flat)

    return out[:M, :cout].reshape(N, Ho, Wo, cout)


def conv_bn_relu_layer(x_nhwc, w_hwio, gamma, beta, *, stride, pad):
    """Conv2d + BatchNorm2d (train-mode batch stats) + ReLU, fused in one kernel."""
    kh, kw, cin, cout = w_hwio.shape
    N = x_nhwc.shape[0]
    Ho = (x_nhwc.shape[1] + 2 * pad - kh) // stride + 1
    Wo = (x_nhwc.shape[2] + 2 * pad - kw) // stride + 1
    M = N * Ho * Wo

    if M > MAX_FUSED_BN_ROWS or M % 8 != 0 or cin % 8 != 0 or cout % 128 != 0:
        # Fallback (never hit at this problem size): tiled GEMM, BN+ReLU in JAX.
        # TODO(synk): two-pass cross-tile BN-stat kernel for large batches.
        y = conv_relu_layer(x_nhwc, w_hwio, stride=stride, pad=pad,
                            apply_relu=False, out_dtype=jnp.float32)
        mean = jnp.mean(y, axis=(0, 1, 2), keepdims=True)
        var = jnp.mean(jnp.square(y - mean), axis=(0, 1, 2), keepdims=True)
        y = jnp.maximum((y - mean) * jax.lax.rsqrt(var + EPS) * gamma + beta, 0.0)
        return y.astype(jnp.bfloat16)

    patches, Ho, Wo = _im2col(x_nhwc.astype(jnp.bfloat16), kh, stride, pad)
    K = patches.shape[1]
    w_flat = w_hwio.reshape(K, cout).astype(jnp.bfloat16)
    g2 = gamma.reshape(1, cout).astype(jnp.float32)
    b2 = beta.reshape(1, cout).astype(jnp.float32)

    out = pl.pallas_call(
        _gemm_bn_relu_kernel,
        out_shape=jax.ShapeDtypeStruct((M, cout), jnp.bfloat16),
        grid=(1,),
        in_specs=[
            pl.BlockSpec((M, K), lambda i: (0, 0)),
            pl.BlockSpec((K, cout), lambda i: (0, 0)),
            pl.BlockSpec((1, cout), lambda i: (0, 0)),
            pl.BlockSpec((1, cout), lambda i: (0, 0)),
        ],
        out_specs=pl.BlockSpec((M, cout), lambda i: (0, 0)),
        compiler_params=pltpu.CompilerParams(
            dimension_semantics=("arbitrary",)),
    )(patches, w_flat, g2, b2)

    return out.reshape(N, Ho, Wo, cout)


def conv4_conv5_head(x_nhwc, w4, gamma4, beta4, w5):
    """conv4 + BN + ReLU fused with conv5 (4x4, s1, p1, cout=1) in one kernel.

    Valid when conv4's output map is 2x2 (true for 32x32 inputs): with pad=1,
    only the centre 2x2 of conv5's 4x4 kernel ever touches non-padding input,
    so conv5 reduces to a per-row multiply + lane reduction over conv4's
    VMEM-resident output — no 128-padded conv5 weight, no extra pallas_call.
    """
    kh, kw, cin, cout = w4.shape           # (4, 4, 256, 512)
    N = x_nhwc.shape[0]
    Ho = (x_nhwc.shape[1] + 2 - kh) // 2 + 1
    Wo = (x_nhwc.shape[2] + 2 - kw) // 2 + 1

    if (Ho, Wo) != (2, 2) or N * Ho * Wo % 8 != 0:
        # Fallback (not hit at this problem size): unfused conv4 / conv5.
        y = conv_bn_relu_layer(x_nhwc, w4, gamma4, beta4, stride=2, pad=1)
        y = conv_relu_layer(y, w5, stride=1, pad=1, apply_relu=False,
                            out_dtype=jnp.float32)
        return jnp.transpose(y, (0, 3, 1, 2))            # NHWC -> NCHW

    patches, _, _ = _im2col(x_nhwc.astype(jnp.bfloat16), kh, 2, 1)
    M, K = patches.shape                                  # (8, 4096)
    w4_flat = w4.reshape(K, cout).astype(jnp.bfloat16)
    g2 = gamma4.reshape(1, cout).astype(jnp.float32)
    b2 = beta4.reshape(1, cout).astype(jnp.float32)
    # conv5 weight: only the centre 2x2 taps touch real data; tile its rows to
    # match the (n, ho, wo)-ordered rows of conv4's GEMM output.
    w5c = w5[1:3, 1:3, :, 0].astype(jnp.bfloat16).astype(jnp.float32)  # (2,2,512)
    w5_rows = jnp.tile(w5c.reshape(Ho * Wo, cout), (N, 1))             # (8, 512)

    p = pl.pallas_call(
        _gemm_bn_relu_head_kernel,
        out_shape=jax.ShapeDtypeStruct((M, 1), jnp.float32),
        grid=(1,),
        in_specs=[
            pl.BlockSpec((M, K), lambda i: (0, 0)),
            pl.BlockSpec((K, cout), lambda i: (0, 0)),
            pl.BlockSpec((1, cout), lambda i: (0, 0)),
            pl.BlockSpec((1, cout), lambda i: (0, 0)),
            pl.BlockSpec((M, cout), lambda i: (0, 0)),
        ],
        out_specs=pl.BlockSpec((M, 1), lambda i: (0, 0)),
        compiler_params=pltpu.CompilerParams(
            dimension_semantics=("arbitrary",)),
    )(patches, w4_flat, g2, b2, w5_rows)

    # Per-image logit = sum of its 4 spatial partial sums.
    return p.reshape(N, Ho * Wo).sum(axis=1).reshape(N, 1, 1, 1)  # NCHW (N,1,1,1)


# (cin, cout, k, stride, pad, batch_norm, relu) — mirrors Discriminator.forward
LAYER_CFG = [
    (3,   64,  4, 2, 1, False, True),   # conv1 (no BN) + ReLU
    (64,  128, 4, 2, 1, True,  True),   # conv2 + BN + ReLU
    (128, 256, 4, 2, 1, True,  True),   # conv3 + BN + ReLU
    (256, 512, 4, 2, 1, True,  True),   # conv4 + BN + ReLU
    (512, 1,   4, 1, 1, False, False),  # conv5 (no BN, no ReLU)
]


def init_params(key):
    params = []
    for (cin, cout, k, s, p, bn, relu) in LAYER_CFG:
        key, sub = jax.random.split(key)
        w = jax.random.normal(sub, (k, k, cin, cout), jnp.float32) * 0.05
        gamma = jnp.ones((cout,), jnp.float32)   # BatchNorm2d default affine init
        beta = jnp.zeros((cout,), jnp.float32)
        params.append((w, gamma, beta))
    return params


@jax.jit
def discriminator_forward(x_nchw, params):
    (w1, _, _), (w2, g2, b2), (w3, g3, b3), (w4, g4, b4), (w5, _, _) = params
    x = jnp.transpose(x_nchw, (0, 2, 3, 1))                          # NCHW -> NHWC
    x = conv_relu_layer(x, w1, stride=2, pad=1, apply_relu=True)     # conv1 + ReLU
    x = conv_bn_relu_layer(x, w2, g2, b2, stride=2, pad=1)           # conv2 + BN + ReLU
    x = conv_bn_relu_layer(x, w3, g3, b3, stride=2, pad=1)           # conv3 + BN + ReLU
    return conv4_conv5_head(x, w4, g4, b4, w5)                       # conv4+BN+ReLU+conv5


def _ref_forward(x_nchw, params):
    """Pure-JAX reference with matching numerics (bf16 MXU operands, f32 acc)."""
    x = jnp.transpose(x_nchw, (0, 2, 3, 1))
    for (w, gamma, beta), (cin, cout, k, s, p, bn, relu) in zip(params, LAYER_CFG):
        x = jax.lax.conv_general_dilated(
            x.astype(jnp.bfloat16), w.astype(jnp.bfloat16), (s, s), [(p, p), (p, p)],
            dimension_numbers=("NHWC", "HWIO", "NHWC"),
            preferred_element_type=jnp.float32)
        if bn:
            mean = jnp.mean(x, axis=(0, 1, 2), keepdims=True)
            var = jnp.mean(jnp.square(x - mean), axis=(0, 1, 2), keepdims=True)
            x = (x - mean) * jax.lax.rsqrt(var + EPS) * gamma + beta
        if relu:
            x = jnp.maximum(x, 0.0)
    return jnp.transpose(x, (0, 3, 1, 2))


if __name__ == "__main__":
    key = jax.random.PRNGKey(0)
    pkey, xkey = jax.random.split(key)
    params = init_params(pkey)
    # small input consistent with the module: 3-channel 32x32 images, batch 2
    x = jax.random.normal(xkey, (2, 3, 32, 32), jnp.float32)

    out = discriminator_forward(x, params)
    out = jax.block_until_ready(out)
    assert out.shape == (2, 1, 1, 1), out.shape

    ref = _ref_forward(x, params)
    np.testing.assert_allclose(np.asarray(out), np.asarray(ref), rtol=2e-2, atol=2e-2)

    print("KERNEL_OK")
</pallas_src>

<mosaic_0001>
module attributes {stable_mosaic.version = 11 : i64} {
  func.func @_gemm_kernel(%arg0: i32, %arg1: memref<256x128xbf16, #tpu.memory_space<vmem>>, %arg2: memref<128x128xbf16, #tpu.memory_space<vmem>>, %arg3: memref<256x128xbf16, #tpu.memory_space<vmem>>) attributes {dimension_semantics = [#tpu.dimension_semantics<parallel>], iteration_bounds = array<i64: 2>, scalar_prefetch = 0 : i64, scratch_operands = 0 : i64, tpu.core_type = #tpu.core_type<tc>, window_params = [{transform_indices = @transform_0, window_bounds = array<i64: 256, 128>}, {pipeline_mode = #tpu.pipeline_mode<synchronous>, transform_indices = @transform_1, window_bounds = array<i64: 128, 128>}, {transform_indices = @transform_2, window_bounds = array<i64: 256, 128>}]} {
    %c0 = arith.constant 0 : index
    %c0_0 = arith.constant 0 : index
    %0 = vector.load %arg1[%c0, %c0_0] : memref<256x128xbf16, #tpu.memory_space<vmem>>, vector<256x128xbf16>
    %c0_1 = arith.constant 0 : index
    %c0_2 = arith.constant 0 : index
    %1 = vector.load %arg2[%c0_1, %c0_2] : memref<128x128xbf16, #tpu.memory_space<vmem>>, vector<128x128xbf16>
    %cst = arith.constant dense<0.000000e+00> : vector<256x128xf32>
    %2 = tpu.matmul %0, %1, %cst {dimension_numbers = #tpu.dot_dimension_numbers<[1], [0], [0], [1], [0, 0, 1, 1], [], []>} : vector<256x128xbf16>, vector<128x128xbf16>, vector<256x128xf32> -> vector<256x128xf32>
    %cst_3 = arith.constant 0.000000e+00 : f32
    %3 = vector.broadcast %cst_3 : f32 to vector<256x128xf32>
    %4 = arith.maximumf %2, %3 : vector<256x128xf32>
    %5 = arith.truncf %4 : vector<256x128xf32> to vector<256x128xbf16>
    %c0_4 = arith.constant 0 : index
    %c0_5 = arith.constant 0 : index
    %6 = vector.load %arg3[%c0_4, %c0_5] : memref<256x128xbf16, #tpu.memory_space<vmem>>, vector<256x128xbf16>
    tpu.vector_store %arg3[%c0_4, %c0_5], %5 {strides = array<i32>} : memref<256x128xbf16, #tpu.memory_space<vmem>>, vector<256x128xbf16>,
    return
  }
  func.func @transform_0(%arg0: i32) -> (i32, i32) {
    %c0_i32 = arith.constant 0 : i32
    %c0_i32_0 = arith.constant 0 : i32
    return %arg0, %c0_i32 : i32, i32
  }
  func.func @transform_1(%arg0: i32) -> (i32, i32) {
    %c0_i32 = arith.constant 0 : i32
    %c0_i32_0 = arith.constant 0 : i32
    %c0_i32_1 = arith.constant 0 : i32
    return %c0_i32, %c0_i32_0 : i32, i32
  }
  func.func @transform_2(%arg0: i32) -> (i32, i32) {
    %c0_i32 = arith.constant 0 : i32
    %c0_i32_0 = arith.constant 0 : i32
    return %arg0, %c0_i32 : i32, i32
  }
}

module attributes {stable_mosaic.version = 11 : i64} {
  func.func @_gemm_bn_relu_kernel(%arg0: i32, %arg1: memref<128x1024xbf16, #tpu.memory_space<vmem>>, %arg2: memref<1024x128xbf16, #tpu.memory_space<vmem>>, %arg3: memref<1x128xf32, #tpu.memory_space<vmem>>, %arg4: memref<1x128xf32, #tpu.memory_space<vmem>>, %arg5: memref<128x128xbf16, #tpu.memory_space<vmem>>) attributes {dimension_semantics = [#tpu.dimension_semantics<arbitrary>], iteration_bounds = array<i64: 1>, scalar_prefetch = 0 : i64, scratch_operands = 0 : i64, tpu.core_type = #tpu.core_type<tc>, window_params = [{pipeline_mode = #tpu.pipeline_mode<synchronous>, transform_indices = @transform_0, window_bounds = array<i64: 128, 1024>}, {pipeline_mode = #tpu.pipeline_mode<synchronous>, transform_indices = @transform_1, window_bounds = array<i64: 1024, 128>}, {pipeline_mode = #tpu.pipeline_mode<synchronous>, transform_indices = @transform_2, window_bounds = array<i64: 1, 128>}, {pipeline_mode = #tpu.pipeline_mode<synchronous>, transform_indices = @transform_3, window_bounds = array<i64: 1, 128>}, {pipeline_mode = #tpu.pipeline_mode<synchronous>, transform_indices = @transform_4, window_bounds = array<i64: 128, 128>}]} {
    %c0 = arith.constant 0 : index
    %c0_0 = arith.constant 0 : index
    %0 = vector.load %arg1[%c0, %c0_0] : memref<128x1024xbf16, #tpu.memory_space<vmem>>, vector<128x1024xbf16>
    %c0_1 = arith.constant 0 : index
    %c0_2 = arith.constant 0 : index
    %1 = vector.load %arg2[%c0_1, %c0_2] : memref<1024x128xbf16, #tpu.memory_space<vmem>>, vector<1024x128xbf16>
    %cst = arith.constant dense<0.000000e+00> : vector<128x128xf32>
    %2 = tpu.matmul %0, %1, %cst {dimension_numbers = #tpu.dot_dimension_numbers<[1], [0], [0], [1], [0, 0, 1, 1], [], []>} : vector<128x1024xbf16>, vector<1024x128xbf16>, vector<128x128xf32> -> vector<128x128xf32>
    %cst_3 = arith.constant dense<0.000000e+00> : vector<128xf32>
    %3 = vector.multi_reduction <add>, %2, %cst_3 [0] : vector<128x128xf32> to vector<128xf32>
    %4 = vector.shape_cast %3 : vector<128xf32> to vector<1x128xf32>
    %cst_4 = arith.constant 1.280000e+02 : f32
    %5 = vector.broadcast %cst_4 : f32 to vector<1x128xf32>
    %6 = arith.divf %4, %5 : vector<1x128xf32>
    %7 = vector.broadcast %6 : vector<1x128xf32> to vector<128x128xf32>
    %8 = arith.subf %2, %7 : vector<128x128xf32>
    %9 = arith.mulf %8, %8 : vector<128x128xf32>
    %cst_5 = arith.constant dense<0.000000e+00> : vector<128xf32>
    %10 = vector.multi_reduction <add>, %9, %cst_5 [0] : vector<128x128xf32> to vector<128xf32>
    %11 = vector.shape_cast %10 : vector<128xf32> to vector<1x128xf32>
    %cst_6 = arith.constant 1.280000e+02 : f32
    %12 = vector.broadcast %cst_6 : f32 to vector<1x128xf32>
    %13 = arith.divf %11, %12 : vector<1x128xf32>
    %c0_7 = arith.constant 0 : index
    %c0_8 = arith.constant 0 : index
    %14 = vector.load %arg3[%c0_7, %c0_8] : memref<1x128xf32, #tpu.memory_space<vmem>>, vector<1x128xf32>
    %cst_9 = arith.constant 9.99999974E-6 : f32
    %15 = vector.broadcast %cst_9 : f32 to vector<1x128xf32>
    %16 = arith.addf %13, %15 : vector<1x128xf32>
    %17 = math.rsqrt %16 : vector<1x128xf32>
    %18 = arith.mulf %14, %17 : vector<1x128xf32>
    %c0_10 = arith.constant 0 : index
    %c0_11 = arith.constant 0 : index
    %19 = vector.load %arg4[%c0_10, %c0_11] : memref<1x128xf32, #tpu.memory_space<vmem>>, vector<1x128xf32>
    %20 = arith.mulf %6, %18 : vector<1x128xf32>
    %21 = arith.subf %19, %20 : vector<1x128xf32>
    %22 = vector.broadcast %18 : vector<1x128xf32> to vector<128x128xf32>
    %23 = arith.mulf %2, %22 : vector<128x128xf32>
    %24 = vector.broadcast %21 : vector<1x128xf32> to vector<128x128xf32>
    %25 = arith.addf %23, %24 : vector<128x128xf32>
    %cst_12 = arith.constant 0.000000e+00 : f32
    %26 = vector.broadcast %cst_12 : f32 to vector<128x128xf32>
    %27 = arith.maximumf %25, %26 : vector<128x128xf32>
    %28 = arith.truncf %27 : vector<128x128xf32> to vector<128x128xbf16>
    %c0_13 = arith.constant 0 : index
    %c0_14 = arith.constant 0 : index
    %29 = vector.load %arg5[%c0_13, %c0_14] : memref<128x128xbf16, #tpu.memory_space<vmem>>, vector<128x128xbf16>
    tpu.vector_store %arg5[%c0_13, %c0_14], %28 {strides = array<i32>} : memref<128x128xbf16, #tpu.memory_space<vmem>>, vector<128x128xbf16>,
    return
  }
  func.func @transform_0(%arg0: i32) -> (i32, i32) {
    %c0_i32 = arith.constant 0 : i32
    %c0_i32_0 = arith.constant 0 : i32
    %c0_i32_1 = arith.constant 0 : i32
    return %c0_i32, %c0_i32_0 : i32, i32
  }
  func.func @transform_1(%arg0: i32) -> (i32, i32) {
    %c0_i32 = arith.constant 0 : i32
    %c0_i32_0 = arith.constant 0 : i32
    %c0_i32_1 = arith.constant 0 : i32
    return %c0_i32, %c0_i32_0 : i32, i32
  }
  func.func @transform_2(%arg0: i32) -> (i32, i32) {
    %c0_i32 = arith.constant 0 : i32
    %c0_i32_0 = arith.constant 0 : i32
    %c0_i32_1 = arith.constant 0 : i32
    return %c0_i32, %c0_i32_0 : i32, i32
  }
  func.func @transform_3(%arg0: i32) -> (i32, i32) {
    %c0_i32 = arith.constant 0 : i32
    %c0_i32_0 = arith.constant 0 : i32
    %c0_i32_1 = arith.constant 0 : i32
    return %c0_i32, %c0_i32_0 : i32, i32
  }
  func.func @transform_4(%arg0: i32) -> (i32, i32) {
    %c0_i32 = arith.constant 0 : i32
    %c0_i32_0 = arith.constant 0 : i32
    %c0_i32_1 = arith.constant 0 : i32
    return %c0_i32, %c0_i32_0 : i32, i32
  }
}

module attributes {stable_mosaic.version = 11 : i64} {
  func.func @_gemm_bn_relu_kernel(%arg0: i32, %arg1: memref<32x2048xbf16, #tpu.memory_space<vmem>>, %arg2: memref<2048x256xbf16, #tpu.memory_space<vmem>>, %arg3: memref<1x256xf32, #tpu.memory_space<vmem>>, %arg4: memref<1x256xf32, #tpu.memory_space<vmem>>, %arg5: memref<32x256xbf16, #tpu.memory_space<vmem>>) attributes {dimension_semantics = [#tpu.dimension_semantics<arbitrary>], iteration_bounds = array<i64: 1>, scalar_prefetch = 0 : i64, scratch_operands = 0 : i64, tpu.core_type = #tpu.core_type<tc>, window_params = [{pipeline_mode = #tpu.pipeline_mode<synchronous>, transform_indices = @transform_0, window_bounds = array<i64: 32, 2048>}, {pipeline_mode = #tpu.pipeline_mode<synchronous>, transform_indices = @transform_1, window_bounds = array<i64: 2048, 256>}, {pipeline_mode = #tpu.pipeline_mode<synchronous>, transform_indices = @transform_2, window_bounds = array<i64: 1, 256>}, {pipeline_mode = #tpu.pipeline_mode<synchronous>, transform_indices = @transform_3, window_bounds = array<i64: 1, 256>}, {pipeline_mode = #tpu.pipeline_mode<synchronous>, transform_indices = @transform_4, window_bounds = array<i64: 32, 256>}]} {
    %c0 = arith.constant 0 : index
    %c0_0 = arith.constant 0 : index
    %0 = vector.load %arg1[%c0, %c0_0] : memref<32x2048xbf16, #tpu.memory_space<vmem>>, vector<32x2048xbf16>
    %c0_1 = arith.constant 0 : index
    %c0_2 = arith.constant 0 : index
    %1 = vector.load %arg2[%c0_1, %c0_2] : memref<2048x256xbf16, #tpu.memory_space<vmem>>, vector<2048x256xbf16>
    %cst = arith.constant dense<0.000000e+00> : vector<32x256xf32>
    %2 = tpu.matmul %0, %1, %cst {dimension_numbers = #tpu.dot_dimension_numbers<[1], [0], [0], [1], [0, 0, 1, 1], [], []>} : vector<32x2048xbf16>, vector<2048x256xbf16>, vector<32x256xf32> -> vector<32x256xf32>
    %cst_3 = arith.constant dense<0.000000e+00> : vector<256xf32>
    %3 = vector.multi_reduction <add>, %2, %cst_3 [0] : vector<32x256xf32> to vector<256xf32>
    %4 = vector.shape_cast %3 : vector<256xf32> to vector<1x256xf32>
    %cst_4 = arith.constant 3.200000e+01 : f32
    %5 = vector.broadcast %cst_4 : f32 to vector<1x256xf32>
    %6 = arith.divf %4, %5 : vector<1x256xf32>
    %7 = vector.broadcast %6 : vector<1x256xf32> to vector<32x256xf32>
    %8 = arith.subf %2, %7 : vector<32x256xf32>
    %9 = arith.mulf %8, %8 : vector<32x256xf32>
    %cst_5 = arith.constant dense<0.000000e+00> : vector<256xf32>
    %10 = vector.multi_reduction <add>, %9, %cst_5 [0] : vector<32x256xf32> to vector<256xf32>
    %11 = vector.shape_cast %10 : vector<256xf32> to vector<1x256xf32>
    %cst_6 = arith.constant 3.200000e+01 : f32
    %12 = vector.broadcast %cst_6 : f32 to vector<1x256xf32>
    %13 = arith.divf %11, %12 : vector<1x256xf32>
    %c0_7 = arith.constant 0 : index
    %c0_8 = arith.constant 0 : index
    %14 = vector.load %arg3[%c0_7, %c0_8] : memref<1x256xf32, #tpu.memory_space<vmem>>, vector<1x256xf32>
    %cst_9 = arith.constant 9.99999974E-6 : f32
    %15 = vector.broadcast %cst_9 : f32 to vector<1x256xf32>
    %16 = arith.addf %13, %15 : vector<1x256xf32>
    %17 = math.rsqrt %16 : vector<1x256xf32>
    %18 = arith.mulf %14, %17 : vector<1x256xf32>
    %c0_10 = arith.constant 0 : index
    %c0_11 = arith.constant 0 : index
    %19 = vector.load %arg4[%c0_10, %c0_11] : memref<1x256xf32, #tpu.memory_space<vmem>>, vector<1x256xf32>
    %20 = arith.mulf %6, %18 : vector<1x256xf32>
    %21 = arith.subf %19, %20 : vector<1x256xf32>
    %22 = vector.broadcast %18 : vector<1x256xf32> to vector<32x256xf32>
    %23 = arith.mulf %2, %22 : vector<32x256xf32>
    %24 = vector.broadcast %21 : vector<1x256xf32> to vector<32x256xf32>
    %25 = arith.addf %23, %24 : vector<32x256xf32>
    %cst_12 = arith.constant 0.000000e+00 : f32
    %26 = vector.broadcast %cst_12 : f32 to vector<32x256xf32>
    %27 = arith.maximumf %25, %26 : vector<32x256xf32>
    %28 = arith.truncf %27 : vector<32x256xf32> to vector<32x256xbf16>
    %c0_13 = arith.constant 0 : index
    %c0_14 = arith.constant 0 : index
    %29 = vector.load %arg5[%c0_13, %c0_14] : memref<32x256xbf16, #tpu.memory_space<vmem>>, vector<32x256xbf16>
    tpu.vector_store %arg5[%c0_13, %c0_14], %28 {strides = array<i32>} : memref<32x256xbf16, #tpu.memory_space<vmem>>, vector<32x256xbf16>,
    return
  }
  func.func @transform_0(%arg0: i32) -> (i32, i32) {
    %c0_i32 = arith.constant 0 : i32
    %c0_i32_0 = arith.constant 0 : i32
    %c0_i32_1 = arith.constant 0 : i32
    return %c0_i32, %c0_i32_0 : i32, i32
  }
  func.func @transform_1(%arg0: i32) -> (i32, i32) {
    %c0_i32 = arith.constant 0 : i32
    %c0_i32_0 = arith.constant 0 : i32
    %c0_i32_1 = arith.constant 0 : i32
    return %c0_i32, %c0_i32_0 : i32, i32
  }
  func.func @transform_2(%arg0: i32) -> (i32, i32) {
    %c0_i32 = arith.constant 0 : i32
    %c0_i32_0 = arith.constant 0 : i32
    %c0_i32_1 = arith.constant 0 : i32
    return %c0_i32, %c0_i32_0 : i32, i32
  }
  func.func @transform_3(%arg0: i32) -> (i32, i32) {
    %c0_i32 = arith.constant 0 : i32
    %c0_i32_0 = arith.constant 0 : i32
    %c0_i32_1 = arith.constant 0 : i32
    return %c0_i32, %c0_i32_0 : i32, i32
  }
  func.func @transform_4(%arg0: i32) -> (i32, i32) {
    %c0_i32 = arith.constant 0 : i32
    %c0_i32_0 = arith.constant 0 : i32
    %c0_i32_1 = arith.constant 0 : i32
    return %c0_i32, %c0_i32_0 : i32, i32
  }
}

module attributes {stable_mosaic.version = 11 : i64} {
  func.func @_gemm_bn_relu_head_kernel(%arg0: i32, %arg1: memref<8x4096xbf16, #tpu.memory_space<vmem>>, %arg2: memref<4096x512xbf16, #tpu.memory_space<vmem>>, %arg3: memref<1x512xf32, #tpu.memory_space<vmem>>, %arg4: memref<1x512xf32, #tpu.memory_space<vmem>>, %arg5: memref<8x512xf32, #tpu.memory_space<vmem>>, %arg6: memref<8x1xf32, #tpu.memory_space<vmem>>) attributes {dimension_semantics = [#tpu.dimension_semantics<arbitrary>], iteration_bounds = array<i64: 1>, scalar_prefetch = 0 : i64, scratch_operands = 0 : i64, tpu.core_type = #tpu.core_type<tc>, window_params = [{pipeline_mode = #tpu.pipeline_mode<synchronous>, transform_indices = @transform_0, window_bounds = array<i64: 8, 4096>}, {pipeline_mode = #tpu.pipeline_mode<synchronous>, transform_indices = @transform_1, window_bounds = array<i64: 4096, 512>}, {pipeline_mode = #tpu.pipeline_mode<synchronous>, transform_indices = @transform_2, window_bounds = array<i64: 1, 512>}, {pipeline_mode = #tpu.pipeline_mode<synchronous>, transform_indices = @transform_3, window_bounds = array<i64: 1, 512>}, {pipeline_mode = #tpu.pipeline_mode<synchronous>, transform_indices = @transform_4, window_bounds = array<i64: 8, 512>}, {pipeline_mode = #tpu.pipeline_mode<synchronous>, transform_indices = @transform_5, window_bounds = array<i64: 8, 1>}]} {
    %c0 = arith.constant 0 : index
    %c0_0 = arith.constant 0 : index
    %0 = vector.load %arg1[%c0, %c0_0] : memref<8x4096xbf16, #tpu.memory_space<vmem>>, vector<8x4096xbf16>
    %c0_1 = arith.constant 0 : index
    %c0_2 = arith.constant 0 : index
    %1 = vector.load %arg2[%c0_1, %c0_2] : memref<4096x512xbf16, #tpu.memory_space<vmem>>, vector<4096x512xbf16>
    %cst = arith.constant dense<0.000000e+00> : vector<8x512xf32>
    %2 = tpu.matmul %0, %1, %cst {dimension_numbers = #tpu.dot_dimension_numbers<[1], [0], [0], [1], [0, 0, 1, 1], [], []>} : vector<8x4096xbf16>, vector<4096x512xbf16>, vector<8x512xf32> -> vector<8x512xf32>
    %cst_3 = arith.constant dense<0.000000e+00> : vector<512xf32>
    %3 = vector.multi_reduction <add>, %2, %cst_3 [0] : vector<8x512xf32> to vector<512xf32>
    %4 = vector.shape_cast %3 : vector<512xf32> to vector<1x512xf32>
    %cst_4 = arith.constant 8.000000e+00 : f32
    %5 = vector.broadcast %cst_4 : f32 to vector<1x512xf32>
    %6 = arith.divf %4, %5 : vector<1x512xf32>
    %7 = vector.broadcast %6 : vector<1x512xf32> to vector<8x512xf32>
    %8 = arith.subf %2, %7 : vector<8x512xf32>
    %9 = arith.mulf %8, %8 : vector<8x512xf32>
    %cst_5 = arith.constant dense<0.000000e+00> : vector<512xf32>
    %10 = vector.multi_reduction <add>, %9, %cst_5 [0] : vector<8x512xf32> to vector<512xf32>
    %11 = vector.shape_cast %10 : vector<512xf32> to vector<1x512xf32>
    %cst_6 = arith.constant 8.000000e+00 : f32
    %12 = vector.broadcast %cst_6 : f32 to vector<1x512xf32>
    %13 = arith.divf %11, %12 : vector<1x512xf32>
    %c0_7 = arith.constant 0 : index
    %c0_8 = arith.constant 0 : index
    %14 = vector.load %arg3[%c0_7, %c0_8] : memref<1x512xf32, #tpu.memory_space<vmem>>, vector<1x512xf32>
    %cst_9 = arith.constant 9.99999974E-6 : f32
    %15 = vector.broadcast %cst_9 : f32 to vector<1x512xf32>
    %16 = arith.addf %13, %15 : vector<1x512xf32>
    %17 = math.rsqrt %16 : vector<1x512xf32>
    %18 = arith.mulf %14, %17 : vector<1x512xf32>
    %c0_10 = arith.constant 0 : index
    %c0_11 = arith.constant 0 : index
    %19 = vector.load %arg4[%c0_10, %c0_11] : memref<1x512xf32, #tpu.memory_space<vmem>>, vector<1x512xf32>
    %20 = arith.mulf %6, %18 : vector<1x512xf32>
    %21 = arith.subf %19, %20 : vector<1x512xf32>
    %22 = vector.broadcast %18 : vector<1x512xf32> to vector<8x512xf32>
    %23 = arith.mulf %2, %22 : vector<8x512xf32>
    %24 = vector.broadcast %21 : vector<1x512xf32> to vector<8x512xf32>
    %25 = arith.addf %23, %24 : vector<8x512xf32>
    %cst_12 = arith.constant 0.000000e+00 : f32
    %26 = vector.broadcast %cst_12 : f32 to vector<8x512xf32>
    %27 = arith.maximumf %25, %26 : vector<8x512xf32>
    %28 = arith.truncf %27 : vector<8x512xf32> to vector<8x512xbf16>
    %29 = arith.extf %28 : vector<8x512xbf16> to vector<8x512xf32>
    %c0_13 = arith.constant 0 : index
    %c0_14 = arith.constant 0 : index
    %30 = vector.load %arg5[%c0_13, %c0_14] : memref<8x512xf32, #tpu.memory_space<vmem>>, vector<8x512xf32>
    %31 = arith.mulf %29, %30 : vector<8x512xf32>
    %cst_15 = arith.constant dense<0.000000e+00> : vector<8xf32>
    %32 = vector.multi_reduction <add>, %31, %cst_15 [1] : vector<8x512xf32> to vector<8xf32>
    %33 = vector.shape_cast %32 : vector<8xf32> to vector<8x1xf32>
    %c0_16 = arith.constant 0 : index
    %c0_17 = arith.constant 0 : index
    %34 = vector.load %arg6[%c0_16, %c0_17] : memref<8x1xf32, #tpu.memory_space<vmem>>, vector<8x1xf32>
    tpu.vector_store %arg6[%c0_16, %c0_17], %33 {strides = array<i32>} : memref<8x1xf32, #tpu.memory_space<vmem>>, vector<8x1xf32>,
    return
  }
  func.func @transform_0(%arg0: i32) -> (i32, i32) {
    %c0_i32 = arith.constant 0 : i32
    %c0_i32_0 = arith.constant 0 : i32
    %c0_i32_1 = arith.constant 0 : i32
    return %c0_i32, %c0_i32_0 : i32, i32
  }
  func.func @transform_1(%arg0: i32) -> (i32, i32) {
    %c0_i32 = arith.constant 0 : i32
    %c0_i32_0 = arith.constant 0 : i32
    %c0_i32_1 = arith.constant 0 : i32
    return %c0_i32, %c0_i32_0 : i32, i32
  }
  func.func @transform_2(%arg0: i32) -> (i32, i32) {
    %c0_i32 = arith.constant 0 : i32
    %c0_i32_0 = arith.constant 0 : i32
    %c0_i32_1 = arith.constant 0 : i32
    return %c0_i32, %c0_i32_0 : i32, i32
  }
  func.func @transform_3(%arg0: i32) -> (i32, i32) {
    %c0_i32 = arith.constant 0 : i32
    %c0_i32_0 = arith.constant 0 : i32
    %c0_i32_1 = arith.constant 0 : i32
    return %c0_i32, %c0_i32_0 : i32, i32
  }
  func.func @transform_4(%arg0: i32) -> (i32, i32) {
    %c0_i32 = arith.constant 0 : i32
    %c0_i32_0 = arith.constant 0 : i32
    %c0_i32_1 = arith.constant 0 : i32
    return %c0_i32, %c0_i32_0 : i32, i32
  }
  func.func @transform_5(%arg0: i32) -> (i32, i32) {
    %c0_i32 = arith.constant 0 : i32
    %c0_i32_0 = arith.constant 0 : i32
    %c0_i32_1 = arith.constant 0 : i32
    return %c0_i32, %c0_i32_0 : i32, i32
  }
}

</mosaic_0001>

<llo_original>
// kernel: tile.7
$region0: #{tile.7}
  %s0 = inlined_call_operand.vmem [shape: f32[2,4,512], index: 0, kind: input, shape index: {}]
  %s1 = inlined_call_operand.vmem [shape: f32[8,512], index: 1, kind: output, shape index: {}]
  $region1: #{tile.7} parent=0
    #allocation0 [shape = 'u8[32768]{0}', space=vmem, size = 0x8000, scoped, tag = 'scoped mem for input reshape']
    %s3 = ssub.s32 16, 1
    %s4 = scalar_lea.vmem %s0, 28
    %v5 = vld [vmem:[%s4] sm:%s3]
    %s6 = scalar_lea.vmem [#allocation0], 56
    %7 = vst [vmem:[%s6] sm:%s3] %v5
    %s8 = scalar_lea.vmem %s0, 24
    %v9 = vld [vmem:[%s8] sm:%s3]
    %s10 = scalar_lea.vmem [#allocation0], 48
    %11 = vst [vmem:[%s10] sm:%s3] %v9
    %s12 = scalar_lea.vmem %s0, 20
    %v13 = vld [vmem:[%s12] sm:%s3]
    %s14 = scalar_lea.vmem [#allocation0], 40
    %15 = vst [vmem:[%s14] sm:%s3] %v13
    %s16 = scalar_lea.vmem %s0, 16
    %v17 = vld [vmem:[%s16] sm:%s3]
    %s18 = scalar_lea.vmem [#allocation0], 32
    %19 = vst [vmem:[%s18] sm:%s3] %v17
    %s20 = scalar_lea.vmem %s0, 12
    %v21 = vld [vmem:[%s20] sm:%s3]
    %s22 = scalar_lea.vmem [#allocation0], 24
    %23 = vst [vmem:[%s22] sm:%s3] %v21
    %s24 = scalar_lea.vmem %s0, 8
    %v25 = vld [vmem:[%s24] sm:%s3]
    %s26 = scalar_lea.vmem [#allocation0], 16
    %27 = vst [vmem:[%s26] sm:%s3] %v25
    %s28 = scalar_lea.vmem %s0, 4
    %v29 = vld [vmem:[%s28] sm:%s3]
    %s30 = scalar_lea.vmem [#allocation0], 8
    %31 = vst [vmem:[%s30] sm:%s3] %v29
    %v32 = vld [vmem:[%s0] sm:%s3]
    %33 = vst [vmem:[#allocation0] sm:%s3] %v32
    %v34 = vld [vmem:[#allocation0] sm:$0xf]
    %35 = vst [vmem:[%s1] sm:$0xf] %v34
    %s36 = scalar_lea.vmem [#allocation0], 8
    %v37 = vld [vmem:[%s36] sm:$0xf]
    %s38 = scalar_lea.vmem %s1, 8
    %39 = vst [vmem:[%s38] sm:$0xf] %v37
    %s40 = scalar_lea.vmem [#allocation0], 16
    %v41 = vld [vmem:[%s40] sm:$0xf]
    %s42 = scalar_lea.vmem %s1, 16
    %43 = vst [vmem:[%s42] sm:$0xf] %v41
    %s44 = scalar_lea.vmem [#allocation0], 24
    %v45 = vld [vmem:[%s44] sm:$0xf]
    %s46 = scalar_lea.vmem %s1, 24
    %47 = vst [vmem:[%s46] sm:$0xf] %v45
    %s48 = scalar_lea.vmem [#allocation0], 32
    %v49 = vld [vmem:[%s48] sm:$0xf]
    %s50 = scalar_lea.vmem %s1, 4
    %51 = vst [vmem:[%s50] sm:$0xf] %v49
    %s52 = scalar_lea.vmem [#allocation0], 40
    %v53 = vld [vmem:[%s52] sm:$0xf]
    %s54 = scalar_lea.vmem %s1, 12
    %55 = vst [vmem:[%s54] sm:$0xf] %v53
    %s56 = scalar_lea.vmem [#allocation0], 48
    %v57 = vld [vmem:[%s56] sm:$0xf]
    %s58 = scalar_lea.vmem %s1, 20
    %59 = vst [vmem:[%s58] sm:$0xf] %v57
    %s60 = scalar_lea.vmem [#allocation0], 56
    %v61 = vld [vmem:[%s60] sm:$0xf]
    %s62 = scalar_lea.vmem %s1, 28
    %63 = vst [vmem:[%s62] sm:$0xf] %v61

// kernel: discriminator_forward.4
$region0: #{discriminator_forward.4}
  #allocation0 [shape = 'u32[]', space=smem, size = 0x4, offset = 0x4, fixed_abs, tag = 'smem constant byte address 0x4 - core index']
  #allocation1 [shape = 'u32[72,128]{1,0:T(1,128)}', space=vmem, size = 0x9000, scoped, tag = 'internal scratch']
  %s0 = inlined_call_operand.vmem [shape: bf16[512,128], index: 0, kind: input, shape index: {}]
  %s1 = inlined_call_operand.vmem [shape: bf16[128,128], index: 1, kind: input, shape index: {}]
  %s2 = inlined_call_operand.vmem [shape: bf16[512,128], index: 2, kind: output, shape index: {}]
  %s3 = sld [smem:[#allocation0]]
  $region41: #{discriminator_forward.4} parent=0
    _
  %s5 = ssub.s32 1, %s3
  %s6 = scalar_select 0, %s5, %s3
  loop: start=0, step=1, limit=4
  $region2: #{discriminator_forward.4} parent=0 // loop_pre_header
    _
  $region3: #{discriminator_forward.4} parent=0 // loop_header
    %s8 = sphi 0, %s12
    %p9 = scmp.ge.s32.totalorder %s8, 4
    %s18 = sphi 0, %s20
    %s21 = sphi 0, %s18
    %s22 = sphi 0, %s21
    %s38 = sphi 0, %s22
    %s42 = sphi 0, %s42
    %s44 = sphi 0, %s42
    %s45 = sphi 0, %s44
    %s59 = sphi 0, %s45
    %s65 = sphi 0, %s67
    %s68 = sphi 0, %s65
    %s69 = sphi 0, %s68
    %s85 = sphi 0, %s69
  $region4: #{discriminator_forward.4} parent=0 // loop_header_branch
    %11 = sbr.rel (%p9) target = $region8
  $region5: #{discriminator_forward.4} parent=0 // loop_body
    %s13 = ssub.s32 %s8, 1
    %s14 = ssub.s32 %s8, 2
    %s15 = sadd.s32 %s8, 1
    %s16 = ssub.s32 %s8, %s15
    %p17 = scmp.eq.s32.totalorder %s16, 0
    %s19 = sadd.s32 %s18, 1
    %s20 = scalar_select %p17, %s18, %s19
    %p23 = pneg %p17
    %p24 = scmp.eq.s32.totalorder %s8, 1
    %p25 = por %p23, %p24
    %p26 = scmp.ne.s32.totalorder %s18, %s21
    %p27 = scmp.eq.s32.totalorder %s8, 0
    %p28 = por %p26, %p27
    %p29 = scmp.ne.s32.totalorder %s18, %s21
    %p30 = scmp.eq.s32.totalorder %s13, 1
    %p31 = por %p29, %p30
    %p32 = scmp.ne.s32.totalorder %s21, %s22
    %p33 = scmp.eq.s32.totalorder %s13, 0
    %p34 = por %p32, %p33
    %p35 = scmp.ne.s32.totalorder %s21, %s22
    %p36 = scmp.eq.s32.totalorder %s14, 1
    %p37 = por %p35, %p36
    %p39 = scmp.ne.s32.totalorder %s22, %s38
    %p40 = scmp.eq.s32.totalorder %s14, 0
    %p41 = por %p39, %p40
    %s43 = sadd.s32 %s42, 1
    %p46 = scmp.eq.s32.totalorder %s8, 1
    %p47 = scmp.ne.s32.totalorder %s42, %s44
    %p48 = scmp.eq.s32.totalorder %s8, 0
    %p49 = por %p47, %p48
    %p50 = scmp.ne.s32.totalorder %s42, %s44
    %p51 = scmp.eq.s32.totalorder %s13, 1
    %p52 = por %p50, %p51
    %p53 = scmp.ne.s32.totalorder %s44, %s45
    %p54 = scmp.eq.s32.totalorder %s13, 0
    %p55 = por %p53, %p54
    %p56 = scmp.ne.s32.totalorder %s44, %s45
    %p57 = scmp.eq.s32.totalorder %s14, 1
    %p58 = por %p56, %p57
    %p60 = scmp.ne.s32.totalorder %s45, %s59
    %p61 = scmp.eq.s32.totalorder %s14, 0
    %p62 = por %p60, %p61
    %s63 = ssub.s32 %s8, %s15
    %p64 = scmp.eq.s32.totalorder %s63, 0
    %s66 = sadd.s32 %s65, 1
    %s67 = scalar_select %p64, %s65, %s66
    %p70 = pneg %p64
    %p71 = scmp.eq.s32.totalorder %s8, 1
    %p72 = por %p70, %p71
    %p73 = scmp.ne.s32.totalorder %s65, %s68
    %p74 = scmp.eq.s32.totalorder %s8, 0
    %p75 = por %p73, %p74
    %p76 = scmp.ne.s32.totalorder %s65, %s68
    %p77 = scmp.eq.s32.totalorder %s13, 1
    %p78 = por %p76, %p77
    %p79 = scmp.ne.s32.totalorder %s68, %s69
    %p80 = scmp.eq.s32.totalorder %s13, 0
    %p81 = por %p79, %p80
    %p82 = scmp.ne.s32.totalorder %s68, %s69
    %p83 = scmp.eq.s32.totalorder %s14, 1
    %p84 = por %p82, %p83
    %p86 = scmp.ne.s32.totalorder %s69, %s85
    %p87 = scmp.eq.s32.totalorder %s14, 0
    %p88 = por %p86, %p87
    %p89 = scmp.le.s32.totalorder 1, %s8
    %p90 = scmp.lt.s32.totalorder %s8, 3
    %p91 = pnand %p89, %p90
    %p92 = pneg %p91
    // Predicated region
    $region9: #{discriminator_forward.4} parent=5 // pred_check
      _
    $region10: #{discriminator_forward.4} parent=5 // pred_check_branch
      %94 = sbr.rel (%p91) target = $region12
    $region11: #{discriminator_forward.4} parent=5 // pred_region
      %s95 = ssub.s32 %s8, 1
      // Predicated region
      $region13: #{discriminator_forward.4} parent=11 // pred_check
        %p96 = pneg %p55
      $region14: #{discriminator_forward.4} parent=11 // pred_check_branch
        %98 = sbr.rel (%p96) target = $region16
      $region15: #{discriminator_forward.4} parent=11 // pred_region
        _
      $region16: #{discriminator_forward.4} parent=11 // pred_fallthru
        _
    $region12: #{discriminator_forward.4} parent=5 // pred_fallthru
      _
    %p99 = scmp.lt.s32.totalorder %s8, 2
    // Predicated region
    $region17: #{discriminator_forward.4} parent=5 // pred_check
      %p100 = pneg %p99
    $region18: #{discriminator_forward.4} parent=5 // pred_check_branch
      %102 = sbr.rel (%p100) target = $region20
    $region19: #{discriminator_forward.4} parent=5 // pred_region
      // Predicated region
      $region21: #{discriminator_forward.4} parent=19 // pred_check
        %p103 = pneg %p28
      $region22: #{discriminator_forward.4} parent=19 // pred_check_branch
        %105 = sbr.rel (%p103) target = $region24
      $region23: #{discriminator_forward.4} parent=19 // pred_region
        %s106 = smul.u32 32, %s8
        %p107 = scmp.lt.s32.totalorder %s106, 63
        %s108 = scalar_select %p107, %s106, 63
        %s109 = smul.addr %s108, 4
        %s110 = scalar_lea.vmem %s0, %s109
        %s111 = smul.u32 32, %s8
      $region24: #{discriminator_forward.4} parent=19 // pred_fallthru
        _
    $region20: #{discriminator_forward.4} parent=5 // pred_fallthru
      _
    %p112 = scmp.le.s32.totalorder 1, %s8
    %p113 = scmp.lt.s32.totalorder %s8, 3
    %p114 = pnand %p112, %p113
    %p115 = pneg %p114
    // Predicated region
    $region25: #{discriminator_forward.4} parent=5 // pred_check
      _
    $region26: #{discriminator_forward.4} parent=5 // pred_check_branch
      %117 = sbr.rel (%p114) target = $region28
    $region27: #{discriminator_forward.4} parent=5 // pred_region
      %s118 = ssub.s32 %s8, 1
      %s119 = smul.u32 32, %s13
      %p120 = scmp.lt.s32.totalorder %s119, 63
      %s121 = scalar_select %p120, %s119, 63
      %s122 = smul.addr %s121, 4
      %s123 = scalar_lea.vmem %s0, %s122
      %p124 = pneg %p34
      %p125 = pneg %p31
      %p126 = pneg %p55
      %p127 = pneg %p52
      %p128 = pneg %p81
      %p129 = pneg %p78
      %s130 = smul.u32 32, %s13
      %p131 = scmp.lt.s32.totalorder %s130, 63
      %s132 = scalar_select %p131, %s130, 63
      %s133 = smul.addr %s132, 4
      %s134 = scalar_lea.vmem %s2, %s133
      %s135 = smul.u32 32, %s13
      %p136 = scmp.lt.s32.totalorder %s135, 63
      %s137 = scalar_select %p136, %s135, 63
      %s138 = smul.addr %s137, 4
      %s139 = scalar_lea.vmem %s0, %s138
      %s140 = smul.u32 32, %s13
      %s141 = smul.u32 32, %s13
      %p142 = scmp.lt.s32.totalorder %s141, 63
      %s143 = scalar_select %p142, %s141, 63
      %s144 = smul.addr %s143, 4
      %s145 = scalar_lea.vmem %s2, %s144
      %s146 = smul.u32 32, %s13
      %v147 = vld [vmem:[%s139] sm:$0xf]
      %v148 = vld [vmem:[%s139 + $0x4] sm:$0xf]
      %v149 = vld [vmem:[%s139 + $0x8] sm:$0xf]
      %v150 = vld [vmem:[%s139 + $0xc] sm:$0xf]
      %v151 = vld [vmem:[%s139 + $0x10] sm:$0xf]
      %v152 = vld [vmem:[%s139 + $0x14] sm:$0xf]
      %v153 = vld [vmem:[%s139 + $0x18] sm:$0xf]
      %v154 = vld [vmem:[%s139 + $0x1c] sm:$0xf]
      %v155 = vld [vmem:[%s139 + $0x20] sm:$0xf]
      %v156 = vld [vmem:[%s139 + $0x24] sm:$0xf]
      %v157 = vld [vmem:[%s139 + $0x28] sm:$0xf]
      %v158 = vld [vmem:[%s139 + $0x2c] sm:$0xf]
      %v159 = vld [vmem:[%s139 + $0x30] sm:$0xf]
      %v160 = vld [vmem:[%s139 + $0x34] sm:$0xf]
      %v161 = vld [vmem:[%s139 + $0x38] sm:$0xf]
      %v162 = vld [vmem:[%s139 + $0x3c] sm:$0xf]
      %v163 = vld [vmem:[%s139 + $0x40] sm:$0xf]
      %v164 = vld [vmem:[%s139 + $0x44] sm:$0xf]
      %v165 = vld [vmem:[%s139 + $0x48] sm:$0xf]
      %v166 = vld [vmem:[%s139 + $0x4c] sm:$0xf]
      %v167 = vld [vmem:[%s139 + $0x50] sm:$0xf]
      %v168 = vld [vmem:[%s139 + $0x54] sm:$0xf]
      %v169 = vld [vmem:[%s139 + $0x58] sm:$0xf]
      %v170 = vld [vmem:[%s139 + $0x5c] sm:$0xf]
      %v171 = vld [vmem:[%s139 + $0x60] sm:$0xf]
      %v172 = vld [vmem:[%s139 + $0x64] sm:$0xf]
      %v173 = vld [vmem:[%s139 + $0x68] sm:$0xf]
      %v174 = vld [vmem:[%s139 + $0x6c] sm:$0xf]
      %v175 = vld [vmem:[%s139 + $0x70] sm:$0xf]
      %v176 = vld [vmem:[%s139 + $0x74] sm:$0xf]
      %v177 = vld [vmem:[%s139 + $0x78] sm:$0xf]
      %v178 = vld [vmem:[%s139 + $0x7c] sm:$0xf]
      %v179 = vld [vmem:[%s1] sm:$0xf]
      %v180 = vld [vmem:[%s1 + $0x4] sm:$0xf]
      %v181 = vld [vmem:[%s1 + $0x8] sm:$0xf]
      %v182 = vld [vmem:[%s1 + $0xc] sm:$0xf]
      %v183 = vld [vmem:[%s1 + $0x10] sm:$0xf]
      %v184 = vld [vmem:[%s1 + $0x14] sm:$0xf]
      %v185 = vld [vmem:[%s1 + $0x18] sm:$0xf]
      %v186 = vld [vmem:[%s1 + $0x1c] sm:$0xf]
      %v187 = vld [vmem:[%s1 + $0x20] sm:$0xf]
      %v188 = vld [vmem:[%s1 + $0x24] sm:$0xf]
      %v189 = vld [vmem:[%s1 + $0x28] sm:$0xf]
      %v190 = vld [vmem:[%s1 + $0x2c] sm:$0xf]
      %v191 = vld [vmem:[%s1 + $0x30] sm:$0xf]
      %v192 = vld [vmem:[%s1 + $0x34] sm:$0xf]
      %v193 = vld [vmem:[%s1 + $0x38] sm:$0xf]
      %v194 = vld [vmem:[%s1 + $0x3c] sm:$0xf]
      %v227 = vunpack.c.l.b16 %v147
      %v228 = vunpack.c.l.b16 %v148
      %v229 = vunpack.c.l.b16 %v149
      %v230 = vunpack.c.l.b16 %v150
      %v231 = vunpack.c.l.b16 %v151
      %v232 = vunpack.c.l.b16 %v152
      %v233 = vunpack.c.l.b16 %v153
      %v234 = vunpack.c.l.b16 %v154
      %v235 = vunpack.c.l.b16 %v155
      %v236 = vunpack.c.l.b16 %v156
      %v237 = vunpack.c.l.b16 %v157
      %v238 = vunpack.c.l.b16 %v158
      %v239 = vunpack.c.l.b16 %v159
      %v240 = vunpack.c.l.b16 %v160
      %v241 = vunpack.c.l.b16 %v161
      %v242 = vunpack.c.l.b16 %v162
      %v243 = vunpack.c.l.b16 %v163
      %v244 = vunpack.c.l.b16 %v164
      %v245 = vunpack.c.l.b16 %v165
      %v246 = vunpack.c.l.b16 %v166
      %v247 = vunpack.c.l.b16 %v167
      %v248 = vunpack.c.l.b16 %v168
      %v249 = vunpack.c.l.b16 %v169
      %v250 = vunpack.c.l.b16 %v170
      %v251 = vunpack.c.l.b16 %v171
      %v252 = vunpack.c.l.b16 %v172
      %v253 = vunpack.c.l.b16 %v173
      %v254 = vunpack.c.l.b16 %v174
      %v255 = vunpack.c.l.b16 %v175
      %v256 = vunpack.c.l.b16 %v176
      %v257 = vunpack.c.l.b16 %v177
      %v258 = vunpack.c.l.b16 %v178
      %v259 = vpack.c.b16 %v228, %v227
      %v260 = vpack.c.b16 %v230, %v229
      %v261 = vpack.c.b16 %v232, %v231
      %v262 = vpack.c.b16 %v234, %v233
      %v263 = vpack.c.b16 %v236, %v235
      %v264 = vpack.c.b16 %v238, %v237
      %v265 = vpack.c.b16 %v240, %v239
      %v266 = vpack.c.b16 %v242, %v241
      %v267 = vpack.c.b16 %v244, %v243
      %v268 = vpack.c.b16 %v246, %v245
      %v269 = vpack.c.b16 %v248, %v247
      %v270 = vpack.c.b16 %v250, %v249
      %v271 = vpack.c.b16 %v252, %v251
      %v272 = vpack.c.b16 %v254, %v253
      %v273 = vpack.c.b16 %v256, %v255
      %v274 = vpack.c.b16 %v258, %v257
      %v307 = vunpack.c.l.b16 %v179
      %v308 = vunpack.c.l.b16 %v180
      %v309 = vunpack.c.l.b16 %v181
      %v310 = vunpack.c.l.b16 %v182
      %v311 = vunpack.c.l.b16 %v183
      %v312 = vunpack.c.l.b16 %v184
      %v313 = vunpack.c.l.b16 %v185
      %v314 = vunpack.c.l.b16 %v186
      %v315 = vunpack.c.l.b16 %v187
      %v316 = vunpack.c.l.b16 %v188
      %v317 = vunpack.c.l.b16 %v189
      %v318 = vunpack.c.l.b16 %v190
      %v319 = vunpack.c.l.b16 %v191
      %v320 = vunpack.c.l.b16 %v192
      %v321 = vunpack.c.l.b16 %v193
      %v322 = vunpack.c.l.b16 %v194
      %v323 = vpack.c.b16 %v308, %v307
      %v324 = vpack.c.b16 %v310, %v309
      %v325 = vpack.c.b16 %v312, %v311
      %v326 = vpack.c.b16 %v314, %v313
      %v327 = vpack.c.b16 %v316, %v315
      %v328 = vpack.c.b16 %v318, %v317
      %v329 = vpack.c.b16 %v320, %v319
      %v330 = vpack.c.b16 %v322, %v321
      %339 = vmatpush.bf16.msra.mxu0 %v330
      %340 = vmatpush.bf16.msra.mxu0 %v329
      %341 = vmatpush.bf16.msra.mxu0 %v328
      %342 = vmatpush.bf16.msra.mxu0 %v327
      %343 = vmatpush.bf16.msra.mxu0 %v326
      %344 = vmatpush.bf16.msra.mxu0 %v325
      %345 = vmatpush.bf16.msra.mxu0 %v324
      %346 = vmatpush.bf16.msra.mxu0 %v323
      %347 = vmatmul.bf16.gmra.mxu0 %v259
      %v348 = vpop.f32.mrf.mxu0
      %v349 = vadd.f32 0.0, %v348
      %v350 = vpop.f32.mrf.mxu0
      %v351 = vadd.f32 0.0, %v350
      %352 = vmatmul.bf16.gmra.mxu0 %v260
      %v353 = vpop.f32.mrf.mxu0
      %v354 = vadd.f32 0.0, %v353
      %v355 = vpop.f32.mrf.mxu0
      %v356 = vadd.f32 0.0, %v355
      %357 = vmatmul.bf16.gmra.mxu0 %v261
      %v358 = vpop.f32.mrf.mxu0
      %v359 = vadd.f32 0.0, %v358
      %v360 = vpop.f32.mrf.mxu0
      %v361 = vadd.f32 0.0, %v360
      %362 = vmatmul.bf16.gmra.mxu0 %v262
      %v363 = vpop.f32.mrf.mxu0
      %v364 = vadd.f32 0.0, %v363
      %v365 = vpop.f32.mrf.mxu0
      %v366 = vadd.f32 0.0, %v365
      %367 = vmatmul.bf16.gmra.mxu0 %v263
      %v368 = vpop.f32.mrf.mxu0
      %v369 = vadd.f32 0.0, %v368
      %v370 = vpop.f32.mrf.mxu0
      %v371 = vadd.f32 0.0, %v370
      %372 = vmatmul.bf16.gmra.mxu0 %v264
      %v373 = vpop.f32.mrf.mxu0
      %v374 = vadd.f32 0.0, %v373
      %v375 = vpop.f32.mrf.mxu0
      %v376 = vadd.f32 0.0, %v375
      %377 = vmatmul.bf16.gmra.mxu0 %v265
      %v378 = vpop.f32.mrf.mxu0
      %v379 = vadd.f32 0.0, %v378
      %v380 = vpop.f32.mrf.mxu0
      %v381 = vadd.f32 0.0, %v380
      %382 = vmatmul.bf16.gmra.mxu0 %v266
      %v383 = vpop.f32.mrf.mxu0
      %v384 = vadd.f32 0.0, %v383
      %v385 = vpop.f32.mrf.mxu0
      %v386 = vadd.f32 0.0, %v385
      %387 = vmatmul.bf16.gmra.mxu0 %v267
      %v388 = vpop.f32.mrf.mxu0
      %v389 = vadd.f32 0.0, %v388
      %v390 = vpop.f32.mrf.mxu0
      %v391 = vadd.f32 0.0, %v390
      %392 = vmatmul.bf16.gmra.mxu0 %v268
      %v393 = vpop.f32.mrf.mxu0
      %v394 = vadd.f32 0.0, %v393
      %v395 = vpop.f32.mrf.mxu0
      %v396 = vadd.f32 0.0, %v395
      %397 = vmatmul.bf16.gmra.mxu0 %v269
      %v398 = vpop.f32.mrf.mxu0
      %v399 = vadd.f32 0.0, %v398
      %v400 = vpop.f32.mrf.mxu0
      %v401 = vadd.f32 0.0, %v400
      %402 = vmatmul.bf16.gmra.mxu0 %v270
      %v403 = vpop.f32.mrf.mxu0
      %v404 = vadd.f32 0.0, %v403
      %v405 = vpop.f32.mrf.mxu0
      %v406 = vadd.f32 0.0, %v405
      %407 = vmatmul.bf16.gmra.mxu0 %v271
      %v408 = vpop.f32.mrf.mxu0
      %v409 = vadd.f32 0.0, %v408
      %v410 = vpop.f32.mrf.mxu0
      %v411 = vadd.f32 0.0, %v410
      %412 = vmatmul.bf16.gmra.mxu0 %v272
      %v413 = vpop.f32.mrf.mxu0
      %v414 = vadd.f32 0.0, %v413
      %v415 = vpop.f32.mrf.mxu0
      %v416 = vadd.f32 0.0, %v415
      %417 = vmatmul.bf16.gmra.mxu0 %v273
      %v418 = vpop.f32.mrf.mxu0
      %v419 = vadd.f32 0.0, %v418
      %v420 = vpop.f32.mrf.mxu0
      %v421 = vadd.f32 0.0, %v420
      %422 = vmatmul.bf16.gmra.mxu0 %v274
      %v423 = vpop.f32.mrf.mxu0
      %v424 = vadd.f32 0.0, %v423
      %v425 = vpop.f32.mrf.mxu0
      %v426 = vadd.f32 0.0, %v425
      %427 = vdwg.mxu0
      %v428 = vmax.f32 %v349, 0.0
      %v429 = vmax.f32 %v351, 0.0
      %v430 = vmax.f32 %v354, 0.0
      %v431 = vmax.f32 %v356, 0.0
      %v432 = vmax.f32 %v359, 0.0
      %v433 = vmax.f32 %v361, 0.0
      %v434 = vmax.f32 %v364, 0.0
      %v435 = vmax.f32 %v366, 0.0
      %v436 = vmax.f32 %v369, 0.0
      %v437 = vmax.f32 %v371, 0.0
      %v438 = vmax.f32 %v374, 0.0
      %v439 = vmax.f32 %v376, 0.0
      %v440 = vmax.f32 %v379, 0.0
      %v441 = vmax.f32 %v381, 0.0
      %v442 = vmax.f32 %v384, 0.0
      %v443 = vmax.f32 %v386, 0.0
      %v444 = vmax.f32 %v389, 0.0
      %v445 = vmax.f32 %v391, 0.0
      %v446 = vmax.f32 %v394, 0.0
      %v447 = vmax.f32 %v396, 0.0
      %v448 = vmax.f32 %v399, 0.0
      %v449 = vmax.f32 %v401, 0.0
      %v450 = vmax.f32 %v404, 0.0
      %v451 = vmax.f32 %v406, 0.0
      %v452 = vmax.f32 %v409, 0.0
      %v453 = vmax.f32 %v411, 0.0
      %v454 = vmax.f32 %v414, 0.0
      %v455 = vmax.f32 %v416, 0.0
      %v456 = vmax.f32 %v419, 0.0
      %v457 = vmax.f32 %v421, 0.0
      %v458 = vmax.f32 %v424, 0.0
      %v459 = vmax.f32 %v426, 0.0
      %v460 = vpack.c.bf16 %v428, %v428
      %v461 = vpack.c.bf16 %v429, %v429
      %v462 = vpack.c.bf16 %v430, %v430
      %v463 = vpack.c.bf16 %v431, %v431
      %v464 = vpack.c.bf16 %v432, %v432
      %v465 = vpack.c.bf16 %v433, %v433
      %v466 = vpack.c.bf16 %v434, %v434
      %v467 = vpack.c.bf16 %v435, %v435
      %v468 = vpack.c.bf16 %v436, %v436
      %v469 = vpack.c.bf16 %v437, %v437
      %v470 = vpack.c.bf16 %v438, %v438
      %v471 = vpack.c.bf16 %v439, %v439
      %v472 = vpack.c.bf16 %v440, %v440
      %v473 = vpack.c.bf16 %v441, %v441
      %v474 = vpack.c.bf16 %v442, %v442
      %v475 = vpack.c.bf16 %v443, %v443
      %v476 = vpack.c.bf16 %v444, %v444
      %v477 = vpack.c.bf16 %v445, %v445
      %v478 = vpack.c.bf16 %v446, %v446
      %v479 = vpack.c.bf16 %v447, %v447
      %v480 = vpack.c.bf16 %v448, %v448
      %v481 = vpack.c.bf16 %v449, %v449
      %v482 = vpack.c.bf16 %v450, %v450
      %v483 = vpack.c.bf16 %v451, %v451
      %v484 = vpack.c.bf16 %v452, %v452
      %v485 = vpack.c.bf16 %v453, %v453
      %v486 = vpack.c.bf16 %v454, %v454
      %v487 = vpack.c.bf16 %v455, %v455
      %v488 = vpack.c.bf16 %v456, %v456
      %v489 = vpack.c.bf16 %v457, %v457
      %v490 = vpack.c.bf16 %v458, %v458
      %v491 = vpack.c.bf16 %v459, %v459
      %492 = vst [vmem:[%s145] sm:$0xf] %v460
      %493 = vst [vmem:[%s145 + $0x4] sm:$0xf] %v461
      %494 = vst [vmem:[%s145 + $0x8] sm:$0xf] %v462
      %495 = vst [vmem:[%s145 + $0xc] sm:$0xf] %v463
      %496 = vst [vmem:[%s145 + $0x10] sm:$0xf] %v464
      %497 = vst [vmem:[%s145 + $0x14] sm:$0xf] %v465
      %498 = vst [vmem:[%s145 + $0x18] sm:$0xf] %v466
      %499 = vst [vmem:[%s145 + $0x1c] sm:$0xf] %v467
      %500 = vst [vmem:[%s145 + $0x20] sm:$0xf] %v468
      %501 = vst [vmem:[%s145 + $0x24] sm:$0xf] %v469
      %502 = vst [vmem:[%s145 + $0x28] sm:$0xf] %v470
      %503 = vst [vmem:[%s145 + $0x2c] sm:$0xf] %v471
      %504 = vst [vmem:[%s145 + $0x30] sm:$0xf] %v472
      %505 = vst [vmem:[%s145 + $0x34] sm:$0xf] %v473
      %506 = vst [vmem:[%s145 + $0x38] sm:$0xf] %v474
      %507 = vst [vmem:[%s145 + $0x3c] sm:$0xf] %v475
      %508 = vst [vmem:[%s145 + $0x40] sm:$0xf] %v476
      %509 = vst [vmem:[%s145 + $0x44] sm:$0xf] %v477
      %510 = vst [vmem:[%s145 + $0x48] sm:$0xf] %v478
      %511 = vst [vmem:[%s145 + $0x4c] sm:$0xf] %v479
      %512 = vst [vmem:[%s145 + $0x50] sm:$0xf] %v480
      %513 = vst [vmem:[%s145 + $0x54] sm:$0xf] %v481
      %514 = vst [vmem:[%s145 + $0x58] sm:$0xf] %v482
      %515 = vst [vmem:[%s145 + $0x5c] sm:$0xf] %v483
      %516 = vst [vmem:[%s145 + $0x60] sm:$0xf] %v484
      %517 = vst [vmem:[%s145 + $0x64] sm:$0xf] %v485
      %518 = vst [vmem:[%s145 + $0x68] sm:$0xf] %v486
      %519 = vst [vmem:[%s145 + $0x6c] sm:$0xf] %v487
      %520 = vst [vmem:[%s145 + $0x70] sm:$0xf] %v488
      %521 = vst [vmem:[%s145 + $0x74] sm:$0xf] %v489
      %522 = vst [vmem:[%s145 + $0x78] sm:$0xf] %v490
      %523 = vst [vmem:[%s145 + $0x7c] sm:$0xf] %v491
      %s524 = smul.u32 32, %s13
      %p525 = scmp.lt.s32.totalorder %s524, 63
      %s526 = scalar_select %p525, %s524, 63
      %s527 = smul.addr %s526, 4
      %s528 = scalar_lea.vmem %s2, %s527
      // Predicated region
      $region29: #{discriminator_forward.4} parent=27 // pred_check
        %p529 = pneg %p78
      $region30: #{discriminator_forward.4} parent=27 // pred_check_branch
        %531 = sbr.rel (%p529) target = $region32
      $region31: #{discriminator_forward.4} parent=27 // pred_region
        %s532 = smul.u32 32, %s13
      $region32: #{discriminator_forward.4} parent=27 // pred_fallthru
        _
    $region28: #{discriminator_forward.4} parent=5 // pred_fallthru
      _
    %p533 = scmp.le.s32.totalorder 2, %s8
    // Predicated region
    $region33: #{discriminator_forward.4} parent=5 // pred_check
      %p534 = pneg %p533
    $region34: #{discriminator_forward.4} parent=5 // pred_check_branch
      %536 = sbr.rel (%p534) target = $region36
    $region35: #{discriminator_forward.4} parent=5 // pred_region
      %s537 = ssub.s32 %s8, 2
      // Predicated region
      $region37: #{discriminator_forward.4} parent=35 // pred_check
        %p538 = pneg %p84
      $region38: #{discriminator_forward.4} parent=35 // pred_check_branch
        %540 = sbr.rel (%p538) target = $region40
      $region39: #{discriminator_forward.4} parent=35 // pred_region
        %s541 = smul.u32 32, %s14
        %p542 = scmp.lt.s32.totalorder %s541, 63
        %s543 = scalar_select %p542, %s541, 63
        %s544 = smul.addr %s543, 4
        %s545 = scalar_lea.vmem %s2, %s544
      $region40: #{discriminator_forward.4} parent=35 // pred_fallthru
        _
    $region36: #{discriminator_forward.4} parent=5 // pred_fallthru
      _
  $region6: #{discriminator_forward.4} parent=0 // loop_footer
    %s12 = sadd.s32 1, %s8
  $region7: #{discriminator_forward.4} parent=0 // loop_footer_branch
    %7 = sbr.rel target = $region3
  $region8: #{discriminator_forward.4} parent=0 // loop_exit
    _

// kernel: discriminator_forward.5
$region0: #{discriminator_forward.5}
  #allocation0 [shape = 'u32[]', space=smem, size = 0x4, offset = 0x4, fixed_abs, tag = 'smem constant byte address 0x4 - core index']
  #allocation1 [shape = 'u32[72,128]{1,0:T(1,128)}', space=vmem, size = 0x9000, scoped, tag = 'internal scratch']
  %s0 = inlined_call_operand.vmem [shape: bf16[128,1024], index: 0, kind: input, shape index: {}]
  %s1 = inlined_call_operand.vmem [shape: bf16[1024,128], index: 1, kind: input, shape index: {}]
  %s2 = inlined_call_operand.vmem [shape: f32[1,128], index: 2, kind: input, shape index: {}]
  %s3 = inlined_call_operand.vmem [shape: f32[1,128], index: 3, kind: input, shape index: {}]
  %s4 = inlined_call_operand.vmem [shape: bf16[128,128], index: 4, kind: output, shape index: {}]
  %s5 = sld [smem:[#allocation0]]
  $region26: #{discriminator_forward.5} parent=0
    _
  %s7 = ssub.s32 1, %s5
  %s8 = scalar_select 0, %s7, %s5
  // Predicated region
  $region2: #{discriminator_forward.5} parent=0 // pred_check
    _
  $region3: #{discriminator_forward.5} parent=0 // pred_check_branch
    %10 = sbr.rel (0) target = $region5
  $region4: #{discriminator_forward.5} parent=0 // pred_region
    _
  $region5: #{discriminator_forward.5} parent=0 // pred_fallthru
    _
  // Predicated region
  $region6: #{discriminator_forward.5} parent=0 // pred_check
    _
  $region7: #{discriminator_forward.5} parent=0 // pred_check_branch
    %12 = sbr.rel (0) target = $region9
  $region8: #{discriminator_forward.5} parent=0 // pred_region
    _
  $region9: #{discriminator_forward.5} parent=0 // pred_fallthru
    _
  // Predicated region
  $region10: #{discriminator_forward.5} parent=0 // pred_check
    _
  $region11: #{discriminator_forward.5} parent=0 // pred_check_branch
    %14 = sbr.rel (0) target = $region13
  $region12: #{discriminator_forward.5} parent=0 // pred_region
    _
  $region13: #{discriminator_forward.5} parent=0 // pred_fallthru
    _
  // Predicated region
  $region14: #{discriminator_forward.5} parent=0 // pred_check
    _
  $region15: #{discriminator_forward.5} parent=0 // pred_check_branch
    %16 = sbr.rel (0) target = $region17
  $region16: #{discriminator_forward.5} parent=0 // pred_region
    _
  $region17: #{discriminator_forward.5} parent=0 // pred_fallthru
    _
  %v17 = vld [vmem:[%s0] sm:$0xff]
  %v18 = vld [vmem:[%s0 + $0x8] sm:$0xff]
  %v19 = vld [vmem:[%s0 + $0x10] sm:$0xff]
  %v20 = vld [vmem:[%s0 + $0x18] sm:$0xff]
  %v21 = vld [vmem:[%s0 + $0x20] sm:$0xff]
  %v22 = vld [vmem:[%s0 + $0x28] sm:$0xff]
  %v23 = vld [vmem:[%s0 + $0x30] sm:$0xff]
  %v24 = vld [vmem:[%s0 + $0x38] sm:$0xff]
  %v25 = vld [vmem:[%s0 + $0x40] sm:$0xff]
  %v26 = vld [vmem:[%s0 + $0x48] sm:$0xff]
  %v27 = vld [vmem:[%s0 + $0x50] sm:$0xff]
  %v28 = vld [vmem:[%s0 + $0x58] sm:$0xff]
  %v29 = vld [vmem:[%s0 + $0x60] sm:$0xff]
  %v30 = vld [vmem:[%s0 + $0x68] sm:$0xff]
  %v31 = vld [vmem:[%s0 + $0x70] sm:$0xff]
  %v32 = vld [vmem:[%s0 + $0x78] sm:$0xff]
  %v33 = vld [vmem:[%s0 + $0x80] sm:$0xff]
  %v34 = vld [vmem:[%s0 + $0x88] sm:$0xff]
  %v35 = vld [vmem:[%s0 + $0x90] sm:$0xff]
  %v36 = vld [vmem:[%s0 + $0x98] sm:$0xff]
  %v37 = vld [vmem:[%s0 + $0xa0] sm:$0xff]
  %v38 = vld [vmem:[%s0 + $0xa8] sm:$0xff]
  %v39 = vld [vmem:[%s0 + $0xb0] sm:$0xff]
  %v40 = vld [vmem:[%s0 + $0xb8] sm:$0xff]
  %v41 = vld [vmem:[%s0 + $0xc0] sm:$0xff]
  %v42 = vld [vmem:[%s0 + $0xc8] sm:$0xff]
  %v43 = vld [vmem:[%s0 + $0xd0] sm:$0xff]
  %v44 = vld [vmem:[%s0 + $0xd8] sm:$0xff]
  %v45 = vld [vmem:[%s0 + $0xe0] sm:$0xff]
  %v46 = vld [vmem:[%s0 + $0xe8] sm:$0xff]
  %v47 = vld [vmem:[%s0 + $0xf0] sm:$0xff]
  %v48 = vld [vmem:[%s0 + $0xf8] sm:$0xff]
  %v49 = vld [vmem:[%s0 + $0x100] sm:$0xff]
  %v50 = vld [vmem:[%s0 + $0x108] sm:$0xff]
  %v51 = vld [vmem:[%s0 + $0x110] sm:$0xff]
  %v52 = vld [vmem:[%s0 + $0x118] sm:$0xff]
  %v53 = vld [vmem:[%s0 + $0x120] sm:$0xff]
  %v54 = vld [vmem:[%s0 + $0x128] sm:$0xff]
  %v55 = vld [vmem:[%s0 + $0x130] sm:$0xff]
  %v56 = vld [vmem:[%s0 + $0x138] sm:$0xff]
  %v57 = vld [vmem:[%s0 + $0x140] sm:$0xff]
  %v58 = vld [vmem:[%s0 + $0x148] sm:$0xff]
  %v59 = vld [vmem:[%s0 + $0x150] sm:$0xff]
  %v60 = vld [vmem:[%s0 + $0x158] sm:$0xff]
  %v61 = vld [vmem:[%s0 + $0x160] sm:$0xff]
  %v62 = vld [vmem:[%s0 + $0x168] sm:$0xff]
  %v63 = vld [vmem:[%s0 + $0x170] sm:$0xff]
  %v64 = vld [vmem:[%s0 + $0x178] sm:$0xff]
  %v65 = vld [vmem:[%s0 + $0x180] sm:$0xff]
  %v66 = vld [vmem:[%s0 + $0x188] sm:$0xff]
  %v67 = vld [vmem:[%s0 + $0x190] sm:$0xff]
  %v68 = vld [vmem:[%s0 + $0x198] sm:$0xff]
  %v69 = vld [vmem:[%s0 + $0x1a0] sm:$0xff]
  %v70 = vld [vmem:[%s0 + $0x1a8] sm:$0xff]
  %v71 = vld [vmem:[%s0 + $0x1b0] sm:$0xff]
  %v72 = vld [vmem:[%s0 + $0x1b8] sm:$0xff]
  %v73 = vld [vmem:[%s0 + $0x1c0] sm:$0xff]
  %v74 = vld [vmem:[%s0 + $0x1c8] sm:$0xff]
  %v75 = vld [vmem:[%s0 + $0x1d0] sm:$0xff]
  %v76 = vld [vmem:[%s0 + $0x1d8] sm:$0xff]
  %v77 = vld [vmem:[%s0 + $0x1e0] sm:$0xff]
  %v78 = vld [vmem:[%s0 + $0x1e8] sm:$0xff]
  %v79 = vld [vmem:[%s0 + $0x1f0] sm:$0xff]
  %v80 = vld [vmem:[%s0 + $0x1f8] sm:$0xff]
  %v81 = vld [vmem:[%s1] sm:$0xf]
  %v82 = vld [vmem:[%s1 + $0x4] sm:$0xf]
  %v83 = vld [vmem:[%s1 + $0x8] sm:$0xf]
  %v84 = vld [vmem:[%s1 + $0xc] sm:$0xf]
  %v85 = vld [vmem:[%s1 + $0x10] sm:$0xf]
  %v86 = vld [vmem:[%s1 + $0x14] sm:$0xf]
  %v87 = vld [vmem:[%s1 + $0x18] sm:$0xf]
  %v88 = vld [vmem:[%s1 + $0x1c] sm:$0xf]
  %v89 = vld [vmem:[%s1 + $0x20] sm:$0xf]
  %v90 = vld [vmem:[%s1 + $0x24] sm:$0xf]
  %v91 = vld [vmem:[%s1 + $0x28] sm:$0xf]
  %v92 = vld [vmem:[%s1 + $0x2c] sm:$0xf]
  %v93 = vld [vmem:[%s1 + $0x30] sm:$0xf]
  %v94 = vld [vmem:[%s1 + $0x34] sm:$0xf]
  %v95 = vld [vmem:[%s1 + $0x38] sm:$0xf]
  %v96 = vld [vmem:[%s1 + $0x3c] sm:$0xf]
  %v97 = vld [vmem:[%s1 + $0x40] sm:$0xf]
  %v98 = vld [vmem:[%s1 + $0x44] sm:$0xf]
  %v99 = vld [vmem:[%s1 + $0x48] sm:$0xf]
  %v100 = vld [vmem:[%s1 + $0x4c] sm:$0xf]
  %v101 = vld [vmem:[%s1 + $0x50] sm:$0xf]
  %v102 = vld [vmem:[%s1 + $0x54] sm:$0xf]
  %v103 = vld [vmem:[%s1 + $0x58] sm:$0xf]
  %v104 = vld [vmem:[%s1 + $0x5c] sm:$0xf]
  %v105 = vld [vmem:[%s1 + $0x60] sm:$0xf]
  %v106 = vld [vmem:[%s1 + $0x64] sm:$0xf]
  %v107 = vld [vmem:[%s1 + $0x68] sm:$0xf]
  %v108 = vld [vmem:[%s1 + $0x6c] sm:$0xf]
  %v109 = vld [vmem:[%s1 + $0x70] sm:$0xf]
  %v110 = vld [vmem:[%s1 + $0x74] sm:$0xf]
  %v111 = vld [vmem:[%s1 + $0x78] sm:$0xf]
  %v112 = vld [vmem:[%s1 + $0x7c] sm:$0xf]
  %v113 = vld [vmem:[%s1 + $0x80] sm:$0xf]
  %v114 = vld [vmem:[%s1 + $0x84] sm:$0xf]
  %v115 = vld [vmem:[%s1 + $0x88] sm:$0xf]
  %v116 = vld [vmem:[%s1 + $0x8c] sm:$0xf]
  %v117 = vld [vmem:[%s1 + $0x90] sm:$0xf]
  %v118 = vld [vmem:[%s1 + $0x94] sm:$0xf]
  %v119 = vld [vmem:[%s1 + $0x98] sm:$0xf]
  %v120 = vld [vmem:[%s1 + $0x9c] sm:$0xf]
  %v121 = vld [vmem:[%s1 + $0xa0] sm:$0xf]
  %v122 = vld [vmem:[%s1 + $0xa4] sm:$0xf]
  %v123 = vld [vmem:[%s1 + $0xa8] sm:$0xf]
  %v124 = vld [vmem:[%s1 + $0xac] sm:$0xf]
  %v125 = vld [vmem:[%s1 + $0xb0] sm:$0xf]
  %v126 = vld [vmem:[%s1 + $0xb4] sm:$0xf]
  %v127 = vld [vmem:[%s1 + $0xb8] sm:$0xf]
  %v128 = vld [vmem:[%s1 + $0xbc] sm:$0xf]
  %v129 = vld [vmem:[%s1 + $0xc0] sm:$0xf]
  %v130 = vld [vmem:[%s1 + $0xc4] sm:$0xf]
  %v131 = vld [vmem:[%s1 + $0xc8] sm:$0xf]
  %v132 = vld [vmem:[%s1 + $0xcc] sm:$0xf]
  %v133 = vld [vmem:[%s1 + $0xd0] sm:$0xf]
  %v134 = vld [vmem:[%s1 + $0xd4] sm:$0xf]
  %v135 = vld [vmem:[%s1 + $0xd8] sm:$0xf]
  %v136 = vld [vmem:[%s1 + $0xdc] sm:$0xf]
  %v137 = vld [vmem:[%s1 + $0xe0] sm:$0xf]
  %v138 = vld [vmem:[%s1 + $0xe4] sm:$0xf]
  %v139 = vld [vmem:[%s1 + $0xe8] sm:$0xf]
  %v140 = vld [vmem:[%s1 + $0xec] sm:$0xf]
  %v141 = vld [vmem:[%s1 + $0xf0] sm:$0xf]
  %v142 = vld [vmem:[%s1 + $0xf4] sm:$0xf]
  %v143 = vld [vmem:[%s1 + $0xf8] sm:$0xf]
  %v144 = vld [vmem:[%s1 + $0xfc] sm:$0xf]
  %v145 = vld [vmem:[%s1 + $0x100] sm:$0xf]
  %v146 = vld [vmem:[%s1 + $0x104] sm:$0xf]
  %v147 = vld [vmem:[%s1 + $0x108] sm:$0xf]
  %v148 = vld [vmem:[%s1 + $0x10c] sm:$0xf]
  %v149 = vld [vmem:[%s1 + $0x110] sm:$0xf]
  %v150 = vld [vmem:[%s1 + $0x114] sm:$0xf]
  %v151 = vld [vmem:[%s1 + $0x118] sm:$0xf]
  %v152 = vld [vmem:[%s1 + $0x11c] sm:$0xf]
  %v153 = vld [vmem:[%s1 + $0x120] sm:$0xf]
  %v154 = vld [vmem:[%s1 + $0x124] sm:$0xf]
  %v155 = vld [vmem:[%s1 + $0x128] sm:$0xf]
  %v156 = vld [vmem:[%s1 + $0x12c] sm:$0xf]
  %v157 = vld [vmem:[%s1 + $0x130] sm:$0xf]
  %v158 = vld [vmem:[%s1 + $0x134] sm:$0xf]
  %v159 = vld [vmem:[%s1 + $0x138] sm:$0xf]
  %v160 = vld [vmem:[%s1 + $0x13c] sm:$0xf]
  %v161 = vld [vmem:[%s1 + $0x140] sm:$0xf]
  %v162 = vld [vmem:[%s1 + $0x144] sm:$0xf]
  %v163 = vld [vmem:[%s1 + $0x148] sm:$0xf]
  %v164 = vld [vmem:[%s1 + $0x14c] sm:$0xf]
  %v165 = vld [vmem:[%s1 + $0x150] sm:$0xf]
  %v166 = vld [vmem:[%s1 + $0x154] sm:$0xf]
  %v167 = vld [vmem:[%s1 + $0x158] sm:$0xf]
  %v168 = vld [vmem:[%s1 + $0x15c] sm:$0xf]
  %v169 = vld [vmem:[%s1 + $0x160] sm:$0xf]
  %v170 = vld [vmem:[%s1 + $0x164] sm:$0xf]
  %v171 = vld [vmem:[%s1 + $0x168] sm:$0xf]
  %v172 = vld [vmem:[%s1 + $0x16c] sm:$0xf]
  %v173 = vld [vmem:[%s1 + $0x170] sm:$0xf]
  %v174 = vld [vmem:[%s1 + $0x174] sm:$0xf]
  %v175 = vld [vmem:[%s1 + $0x178] sm:$0xf]
  %v176 = vld [vmem:[%s1 + $0x17c] sm:$0xf]
  %v177 = vld [vmem:[%s1 + $0x180] sm:$0xf]
  %v178 = vld [vmem:[%s1 + $0x184] sm:$0xf]
  %v179 = vld [vmem:[%s1 + $0x188] sm:$0xf]
  %v180 = vld [vmem:[%s1 + $0x18c] sm:$0xf]
  %v181 = vld [vmem:[%s1 + $0x190] sm:$0xf]
  %v182 = vld [vmem:[%s1 + $0x194] sm:$0xf]
  %v183 = vld [vmem:[%s1 + $0x198] sm:$0xf]
  %v184 = vld [vmem:[%s1 + $0x19c] sm:$0xf]
  %v185 = vld [vmem:[%s1 + $0x1a0] sm:$0xf]
  %v186 = vld [vmem:[%s1 + $0x1a4] sm:$0xf]
  %v187 = vld [vmem:[%s1 + $0x1a8] sm:$0xf]
  %v188 = vld [vmem:[%s1 + $0x1ac] sm:$0xf]
  %v189 = vld [vmem:[%s1 + $0x1b0] sm:$0xf]
  %v190 = vld [vmem:[%s1 + $0x1b4] sm:$0xf]
  %v191 = vld [vmem:[%s1 + $0x1b8] sm:$0xf]
  %v192 = vld [vmem:[%s1 + $0x1bc] sm:$0xf]
  %v193 = vld [vmem:[%s1 + $0x1c0] sm:$0xf]
  %v194 = vld [vmem:[%s1 + $0x1c4] sm:$0xf]
  %v195 = vld [vmem:[%s1 + $0x1c8] sm:$0xf]
  %v196 = vld [vmem:[%s1 + $0x1cc] sm:$0xf]
  %v197 = vld [vmem:[%s1 + $0x1d0] sm:$0xf]
  %v198 = vld [vmem:[%s1 + $0x1d4] sm:$0xf]
  %v199 = vld [vmem:[%s1 + $0x1d8] sm:$0xf]
  %v200 = vld [vmem:[%s1 + $0x1dc] sm:$0xf]
  %v201 = vld [vmem:[%s1 + $0x1e0] sm:$0xf]
  %v202 = vld [vmem:[%s1 + $0x1e4] sm:$0xf]
  %v203 = vld [vmem:[%s1 + $0x1e8] sm:$0xf]
  %v204 = vld [vmem:[%s1 + $0x1ec] sm:$0xf]
  %v205 = vld [vmem:[%s1 + $0x1f0] sm:$0xf]
  %v206 = vld [vmem:[%s1 + $0x1f4] sm:$0xf]
  %v207 = vld [vmem:[%s1 + $0x1f8] sm:$0xf]
  %v208 = vld [vmem:[%s1 + $0x1fc] sm:$0xf]
  %v273 = vunpack.c.l.b16 %v17
  %v274 = vunpack.c.h.b16 %v17
  %v275 = vunpack.c.l.b16 %v18
  %v276 = vunpack.c.h.b16 %v18
  %v277 = vunpack.c.l.b16 %v19
  %v278 = vunpack.c.h.b16 %v19
  %v279 = vunpack.c.l.b16 %v20
  %v280 = vunpack.c.h.b16 %v20
  %v281 = vunpack.c.l.b16 %v21
  %v282 = vunpack.c.h.b16 %v21
  %v283 = vunpack.c.l.b16 %v22
  %v284 = vunpack.c.h.b16 %v22
  %v285 = vunpack.c.l.b16 %v23
  %v286 = vunpack.c.h.b16 %v23
  %v287 = vunpack.c.l.b16 %v24
  %v288 = vunpack.c.h.b16 %v24
  %v289 = vunpack.c.l.b16 %v25
  %v290 = vunpack.c.h.b16 %v25
  %v291 = vunpack.c.l.b16 %v26
  %v292 = vunpack.c.h.b16 %v26
  %v293 = vunpack.c.l.b16 %v27
  %v294 = vunpack.c.h.b16 %v27
  %v295 = vunpack.c.l.b16 %v28
  %v296 = vunpack.c.h.b16 %v28
  %v297 = vunpack.c.l.b16 %v29
  %v298 = vunpack.c.h.b16 %v29
  %v299 = vunpack.c.l.b16 %v30
  %v300 = vunpack.c.h.b16 %v30
  %v301 = vunpack.c.l.b16 %v31
  %v302 = vunpack.c.h.b16 %v31
  %v303 = vunpack.c.l.b16 %v32
  %v304 = vunpack.c.h.b16 %v32
  %v305 = vunpack.c.l.b16 %v33
  %v306 = vunpack.c.h.b16 %v33
  %v307 = vunpack.c.l.b16 %v34
  %v308 = vunpack.c.h.b16 %v34
  %v309 = vunpack.c.l.b16 %v35
  %v310 = vunpack.c.h.b16 %v35
  %v311 = vunpack.c.l.b16 %v36
  %v312 = vunpack.c.h.b16 %v36
  %v313 = vunpack.c.l.b16 %v37
  %v314 = vunpack.c.h.b16 %v37
  %v315 = vunpack.c.l.b16 %v38
  %v316 = vunpack.c.h.b16 %v38
  %v317 = vunpack.c.l.b16 %v39
  %v318 = vunpack.c.h.b16 %v39
  %v319 = vunpack.c.l.b16 %v40
  %v320 = vunpack.c.h.b16 %v40
  %v321 = vunpack.c.l.b16 %v41
  %v322 = vunpack.c.h.b16 %v41
  %v323 = vunpack.c.l.b16 %v42
  %v324 = vunpack.c.h.b16 %v42
  %v325 = vunpack.c.l.b16 %v43
  %v326 = vunpack.c.h.b16 %v43
  %v327 = vunpack.c.l.b16 %v44
  %v328 = vunpack.c.h.b16 %v44
  %v329 = vunpack.c.l.b16 %v45
  %v330 = vunpack.c.h.b16 %v45
  %v331 = vunpack.c.l.b16 %v46
  %v332 = vunpack.c.h.b16 %v46
  %v333 = vunpack.c.l.b16 %v47
  %v334 = vunpack.c.h.b16 %v47
  %v335 = vunpack.c.l.b16 %v48
  %v336 = vunpack.c.h.b16 %v48
  %v337 = vunpack.c.l.b16 %v49
  %v338 = vunpack.c.h.b16 %v49
  %v339 = vunpack.c.l.b16 %v50
  %v340 = vunpack.c.h.b16 %v50
  %v341 = vunpack.c.l.b16 %v51
  %v342 = vunpack.c.h.b16 %v51
  %v343 = vunpack.c.l.b16 %v52
  %v344 = vunpack.c.h.b16 %v52
  %v345 = vunpack.c.l.b16 %v53
  %v346 = vunpack.c.h.b16 %v53
  %v347 = vunpack.c.l.b16 %v54
  %v348 = vunpack.c.h.b16 %v54
  %v349 = vunpack.c.l.b16 %v55
  %v350 = vunpack.c.h.b16 %v55
  %v351 = vunpack.c.l.b16 %v56
  %v352 = vunpack.c.h.b16 %v56
  %v353 = vunpack.c.l.b16 %v57
  %v354 = vunpack.c.h.b16 %v57
  %v355 = vunpack.c.l.b16 %v58
  %v356 = vunpack.c.h.b16 %v58
  %v357 = vunpack.c.l.b16 %v59
  %v358 = vunpack.c.h.b16 %v59
  %v359 = vunpack.c.l.b16 %v60
  %v360 = vunpack.c.h.b16 %v60
  %v361 = vunpack.c.l.b16 %v61
  %v362 = vunpack.c.h.b16 %v61
  %v363 = vunpack.c.l.b16 %v62
  %v364 = vunpack.c.h.b16 %v62
  %v365 = vunpack.c.l.b16 %v63
  %v366 = vunpack.c.h.b16 %v63
  %v367 = vunpack.c.l.b16 %v64
  %v368 = vunpack.c.h.b16 %v64
  %v369 = vunpack.c.l.b16 %v65
  %v370 = vunpack.c.h.b16 %v65
  %v371 = vunpack.c.l.b16 %v66
  %v372 = vunpack.c.h.b16 %v66
  %v373 = vunpack.c.l.b16 %v67
  %v374 = vunpack.c.h.b16 %v67
  %v375 = vunpack.c.l.b16 %v68
  %v376 = vunpack.c.h.b16 %v68
  %v377 = vunpack.c.l.b16 %v69
  %v378 = vunpack.c.h.b16 %v69
  %v379 = vunpack.c.l.b16 %v70
  %v380 = vunpack.c.h.b16 %v70
  %v381 = vunpack.c.l.b16 %v71
  %v382 = vunpack.c.h.b16 %v71
  %v383 = vunpack.c.l.b16 %v72
  %v384 = vunpack.c.h.b16 %v72
  %v385 = vunpack.c.l.b16 %v73
  %v386 = vunpack.c.h.b16 %v73
  %v387 = vunpack.c.l.b16 %v74
  %v388 = vunpack.c.h.b16 %v74
  %v389 = vunpack.c.l.b16 %v75
  %v390 = vunpack.c.h.b16 %v75
  %v391 = vunpack.c.l.b16 %v76
  %v392 = vunpack.c.h.b16 %v76
  %v393 = vunpack.c.l.b16 %v77
  %v394 = vunpack.c.h.b16 %v77
  %v395 = vunpack.c.l.b16 %v78
  %v396 = vunpack.c.h.b16 %v78
  %v397 = vunpack.c.l.b16 %v79
  %v398 = vunpack.c.h.b16 %v79
  %v399 = vunpack.c.l.b16 %v80
  %v400 = vunpack.c.h.b16 %v80
  %v401 = vpack.c.b16 %v281, %v273
  %v402 = vpack.c.b16 %v282, %v274
  %v403 = vpack.c.b16 %v283, %v275
  %v404 = vpack.c.b16 %v284, %v276
  %v405 = vpack.c.b16 %v285, %v277
  %v406 = vpack.c.b16 %v286, %v278
  %v407 = vpack.c.b16 %v287, %v279
  %v408 = vpack.c.b16 %v288, %v280
  %v409 = vpack.c.b16 %v297, %v289
  %v410 = vpack.c.b16 %v298, %v290
  %v411 = vpack.c.b16 %v299, %v291
  %v412 = vpack.c.b16 %v300, %v292
  %v413 = vpack.c.b16 %v301, %v293
  %v414 = vpack.c.b16 %v302, %v294
  %v415 = vpack.c.b16 %v303, %v295
  %v416 = vpack.c.b16 %v304, %v296
  %v417 = vpack.c.b16 %v313, %v305
  %v418 = vpack.c.b16 %v314, %v306
  %v419 = vpack.c.b16 %v315, %v307
  %v420 = vpack.c.b16 %v316, %v308
  %v421 = vpack.c.b16 %v317, %v309
  %v422 = vpack.c.b16 %v318, %v310
  %v423 = vpack.c.b16 %v319, %v311
  %v424 = vpack.c.b16 %v320, %v312
  %v425 = vpack.c.b16 %v329, %v321
  %v426 = vpack.c.b16 %v330, %v322
  %v427 = vpack.c.b16 %v331, %v323
  %v428 = vpack.c.b16 %v332, %v324
  %v429 = vpack.c.b16 %v333, %v325
  %v430 = vpack.c.b16 %v334, %v326
  %v431 = vpack.c.b16 %v335, %v327
  %v432 = vpack.c.b16 %v336, %v328
  %v433 = vpack.c.b16 %v345, %v337
  %v434 = vpack.c.b16 %v346, %v338
  %v435 = vpack.c.b16 %v347, %v339
  %v436 = vpack.c.b16 %v348, %v340
  %v437 = vpack.c.b16 %v349, %v341
  %v438 = vpack.c.b16 %v350, %v342
  %v439 = vpack.c.b16 %v351, %v343
  %v440 = vpack.c.b16 %v352, %v344
  %v441 = vpack.c.b16 %v361, %v353
  %v442 = vpack.c.b16 %v362, %v354
  %v443 = vpack.c.b16 %v363, %v355
  %v444 = vpack.c.b16 %v364, %v356
  %v445 = vpack.c.b16 %v365, %v357
  %v446 = vpack.c.b16 %v366, %v358
  %v447 = vpack.c.b16 %v367, %v359
  %v448 = vpack.c.b16 %v368, %v360
  %v449 = vpack.c.b16 %v377, %v369
  %v450 = vpack.c.b16 %v378, %v370
  %v451 = vpack.c.b16 %v379, %v371
  %v452 = vpack.c.b16 %v380, %v372
  %v453 = vpack.c.b16 %v381, %v373
  %v454 = vpack.c.b16 %v382, %v374
  %v455 = vpack.c.b16 %v383, %v375
  %v456 = vpack.c.b16 %v384, %v376
  %v457 = vpack.c.b16 %v393, %v385
  %v458 = vpack.c.b16 %v394, %v386
  %v459 = vpack.c.b16 %v395, %v387
  %v460 = vpack.c.b16 %v396, %v388
  %v461 = vpack.c.b16 %v397, %v389
  %v462 = vpack.c.b16 %v398, %v390
  %v463 = vpack.c.b16 %v399, %v391
  %v464 = vpack.c.b16 %v400, %v392
  %v657 = vunpack.c.l.b16 %v81
  %v658 = vunpack.c.l.b16 %v82
  %v659 = vunpack.c.l.b16 %v83
  %v660 = vunpack.c.l.b16 %v84
  %v661 = vunpack.c.l.b16 %v85
  %v662 = vunpack.c.l.b16 %v86
  %v663 = vunpack.c.l.b16 %v87
  %v664 = vunpack.c.l.b16 %v88
  %v665 = vunpack.c.l.b16 %v89
  %v666 = vunpack.c.l.b16 %v90
  %v667 = vunpack.c.l.b16 %v91
  %v668 = vunpack.c.l.b16 %v92
  %v669 = vunpack.c.l.b16 %v93
  %v670 = vunpack.c.l.b16 %v94
  %v671 = vunpack.c.l.b16 %v95
  %v672 = vunpack.c.l.b16 %v96
  %v673 = vunpack.c.l.b16 %v97
  %v674 = vunpack.c.l.b16 %v98
  %v675 = vunpack.c.l.b16 %v99
  %v676 = vunpack.c.l.b16 %v100
  %v677 = vunpack.c.l.b16 %v101
  %v678 = vunpack.c.l.b16 %v102
  %v679 = vunpack.c.l.b16 %v103
  %v680 = vunpack.c.l.b16 %v104
  %v681 = vunpack.c.l.b16 %v105
  %v682 = vunpack.c.l.b16 %v106
  %v683 = vunpack.c.l.b16 %v107
  %v684 = vunpack.c.l.b16 %v108
  %v685 = vunpack.c.l.b16 %v109
  %v686 = vunpack.c.l.b16 %v110
  %v687 = vunpack.c.l.b16 %v111
  %v688 = vunpack.c.l.b16 %v112
  %v689 = vunpack.c.l.b16 %v113
  %v690 = vunpack.c.l.b16 %v114
  %v691 = vunpack.c.l.b16 %v115
  %v692 = vunpack.c.l.b16 %v116
  %v693 = vunpack.c.l.b16 %v117
  %v694 = vunpack.c.l.b16 %v118
  %v695 = vunpack.c.l.b16 %v119
  %v696 = vunpack.c.l.b16 %v120
  %v697 = vunpack.c.l.b16 %v121
  %v698 = vunpack.c.l.b16 %v122
  %v699 = vunpack.c.l.b16 %v123
  %v700 = vunpack.c.l.b16 %v124
  %v701 = vunpack.c.l.b16 %v125
  %v702 = vunpack.c.l.b16 %v126
  %v703 = vunpack.c.l.b16 %v127
  %v704 = vunpack.c.l.b16 %v128
  %v705 = vunpack.c.l.b16 %v129
  %v706 = vunpack.c.l.b16 %v130
  %v707 = vunpack.c.l.b16 %v131
  %v708 = vunpack.c.l.b16 %v132
  %v709 = vunpack.c.l.b16 %v133
  %v710 = vunpack.c.l.b16 %v134
  %v711 = vunpack.c.l.b16 %v135
  %v712 = vunpack.c.l.b16 %v136
  %v713 = vunpack.c.l.b16 %v137
  %v714 = vunpack.c.l.b16 %v138
  %v715 = vunpack.c.l.b16 %v139
  %v716 = vunpack.c.l.b16 %v140
  %v717 = vunpack.c.l.b16 %v141
  %v718 = vunpack.c.l.b16 %v142
  %v719 = vunpack.c.l.b16 %v143
  %v720 = vunpack.c.l.b16 %v144
  %v721 = vunpack.c.l.b16 %v145
  %v722 = vunpack.c.l.b16 %v146
  %v723 = vunpack.c.l.b16 %v147
  %v724 = vunpack.c.l.b16 %v148
  %v725 = vunpack.c.l.b16 %v149
  %v726 = vunpack.c.l.b16 %v150
  %v727 = vunpack.c.l.b16 %v151
  %v728 = vunpack.c.l.b16 %v152
  %v729 = vunpack.c.l.b16 %v153
  %v730 = vunpack.c.l.b16 %v154
  %v731 = vunpack.c.l.b16 %v155
  %v732 = vunpack.c.l.b16 %v156
  %v733 = vunpack.c.l.b16 %v157
  %v734 = vunpack.c.l.b16 %v158
  %v735 = vunpack.c.l.b16 %v159
  %v736 = vunpack.c.l.b16 %v160
  %v737 = vunpack.c.l.b16 %v161
  %v738 = vunpack.c.l.b16 %v162
  %v739 = vunpack.c.l.b16 %v163
  %v740 = vunpack.c.l.b16 %v164
  %v741 = vunpack.c.l.b16 %v165
  %v742 = vunpack.c.l.b16 %v166
  %v743 = vunpack.c.l.b16 %v167
  %v744 = vunpack.c.l.b16 %v168
  %v745 = vunpack.c.l.b16 %v169
  %v746 = vunpack.c.l.b16 %v170
  %v747 = vunpack.c.l.b16 %v171
  %v748 = vunpack.c.l.b16 %v172
  %v749 = vunpack.c.l.b16 %v173
  %v750 = vunpack.c.l.b16 %v174
  %v751 = vunpack.c.l.b16 %v175
  %v752 = vunpack.c.l.b16 %v176
  %v753 = vunpack.c.l.b16 %v177
  %v754 = vunpack.c.l.b16 %v178
  %v755 = vunpack.c.l.b16 %v179
  %v756 = vunpack.c.l.b16 %v180
  %v757 = vunpack.c.l.b16 %v181
  %v758 = vunpack.c.l.b16 %v182
  %v759 = vunpack.c.l.b16 %v183
  %v760 = vunpack.c.l.b16 %v184
  %v761 = vunpack.c.l.b16 %v185
  %v762 = vunpack.c.l.b16 %v186
  %v763 = vunpack.c.l.b16 %v187
  %v764 = vunpack.c.l.b16 %v188
  %v765 = vunpack.c.l.b16 %v189
  %v766 = vunpack.c.l.b16 %v190
  %v767 = vunpack.c.l.b16 %v191
  %v768 = vunpack.c.l.b16 %v192
  %v769 = vunpack.c.l.b16 %v193
  %v770 = vunpack.c.l.b16 %v194
  %v771 = vunpack.c.l.b16 %v195
  %v772 = vunpack.c.l.b16 %v196
  %v773 = vunpack.c.l.b16 %v197
  %v774 = vunpack.c.l.b16 %v198
  %v775 = vunpack.c.l.b16 %v199
  %v776 = vunpack.c.l.b16 %v200
  %v777 = vunpack.c.l.b16 %v201
  %v778 = vunpack.c.l.b16 %v202
  %v779 = vunpack.c.l.b16 %v203
  %v780 = vunpack.c.l.b16 %v204
  %v781 = vunpack.c.l.b16 %v205
  %v782 = vunpack.c.l.b16 %v206
  %v783 = vunpack.c.l.b16 %v207
  %v784 = vunpack.c.l.b16 %v208
  %v785 = vpack.c.b16 %v658, %v657
  %v786 = vpack.c.b16 %v660, %v659
  %v787 = vpack.c.b16 %v662, %v661
  %v788 = vpack.c.b16 %v664, %v663
  %v789 = vpack.c.b16 %v666, %v665
  %v790 = vpack.c.b16 %v668, %v667
  %v791 = vpack.c.b16 %v670, %v669
  %v792 = vpack.c.b16 %v672, %v671
  %v793 = vpack.c.b16 %v674, %v673
  %v794 = vpack.c.b16 %v676, %v675
  %v795 = vpack.c.b16 %v678, %v677
  %v796 = vpack.c.b16 %v680, %v679
  %v797 = vpack.c.b16 %v682, %v681
  %v798 = vpack.c.b16 %v684, %v683
  %v799 = vpack.c.b16 %v686, %v685
  %v800 = vpack.c.b16 %v688, %v687
  %v801 = vpack.c.b16 %v690, %v689
  %v802 = vpack.c.b16 %v692, %v691
  %v803 = vpack.c.b16 %v694, %v693
  %v804 = vpack.c.b16 %v696, %v695
  %v805 = vpack.c.b16 %v698, %v697
  %v806 = vpack.c.b16 %v700, %v699
  %v807 = vpack.c.b16 %v702, %v701
  %v808 = vpack.c.b16 %v704, %v703
  %v809 = vpack.c.b16 %v706, %v705
  %v810 = vpack.c.b16 %v708, %v707
  %v811 = vpack.c.b16 %v710, %v709
  %v812 = vpack.c.b16 %v712, %v711
  %v813 = vpack.c.b16 %v714, %v713
  %v814 = vpack.c.b16 %v716, %v715
  %v815 = vpack.c.b16 %v718, %v717
  %v816 = vpack.c.b16 %v720, %v719
  %v817 = vpack.c.b16 %v722, %v721
  %v818 = vpack.c.b16 %v724, %v723
  %v819 = vpack.c.b16 %v726, %v725
  %v820 = vpack.c.b16 %v728, %v727
  %v821 = vpack.c.b16 %v730, %v729
  %v822 = vpack.c.b16 %v732, %v731
  %v823 = vpack.c.b16 %v734, %v733
  %v824 = vpack.c.b16 %v736, %v735
  %v825 = vpack.c.b16 %v738, %v737
  %v826 = vpack.c.b16 %v740, %v739
  %v827 = vpack.c.b16 %v742, %v741
  %v828 = vpack.c.b16 %v744, %v743
  %v829 = vpack.c.b16 %v746, %v745
  %v830 = vpack.c.b16 %v748, %v747
  %v831 = vpack.c.b16 %v750, %v749
  %v832 = vpack.c.b16 %v752, %v751
  %v833 = vpack.c.b16 %v754, %v753
  %v834 = vpack.c.b16 %v756, %v755
  %v835 = vpack.c.b16 %v758, %v757
  %v836 = vpack.c.b16 %v760, %v759
  %v837 = vpack.c.b16 %v762, %v761
  %v838 = vpack.c.b16 %v764, %v763
  %v839 = vpack.c.b16 %v766, %v765
  %v840 = vpack.c.b16 %v768, %v767
  %v841 = vpack.c.b16 %v770, %v769
  %v842 = vpack.c.b16 %v772, %v771
  %v843 = vpack.c.b16 %v774, %v773
  %v844 = vpack.c.b16 %v776, %v775
  %v845 = vpack.c.b16 %v778, %v777
  %v846 = vpack.c.b16 %v780, %v779
  %v847 = vpack.c.b16 %v782, %v781
  %v848 = vpack.c.b16 %v784, %v783
  %913 = vmatpush.bf16.msra.mxu0 %v792
  %914 = vmatpush.bf16.msra.mxu0 %v791
  %915 = vmatpush.bf16.msra.mxu0 %v790
  %916 = vmatpush.bf16.msra.mxu0 %v789
  %917 = vmatpush.bf16.msra.mxu0 %v788
  %918 = vmatpush.bf16.msra.mxu0 %v787
  %919 = vmatpush.bf16.msra.mxu0 %v786
  %920 = vmatpush.bf16.msra.mxu0 %v785
  %921 = vmatmul.bf16.gmra.mxu0 %v401
  %v922 = vpop.f32.mrf.mxu0
  %v923 = vadd.f32 0.0, %v922
  %v924 = vpop.f32.mrf.mxu0
  %v925 = vadd.f32 0.0, %v924
  %926 = vmatmul.bf16.gmra.mxu0 %v409
  %v927 = vpop.f32.mrf.mxu0
  %v928 = vadd.f32 0.0, %v927
  %v929 = vpop.f32.mrf.mxu0
  %v930 = vadd.f32 0.0, %v929
  %931 = vmatmul.bf16.gmra.mxu0 %v417
  %v932 = vpop.f32.mrf.mxu0
  %v933 = vadd.f32 0.0, %v932
  %v934 = vpop.f32.mrf.mxu0
  %v935 = vadd.f32 0.0, %v934
  %936 = vmatmul.bf16.gmra.mxu0 %v425
  %v937 = vpop.f32.mrf.mxu0
  %v938 = vadd.f32 0.0, %v937
  %v939 = vpop.f32.mrf.mxu0
  %v940 = vadd.f32 0.0, %v939
  %941 = vmatmul.bf16.gmra.mxu0 %v433
  %v942 = vpop.f32.mrf.mxu0
  %v943 = vadd.f32 0.0, %v942
  %v944 = vpop.f32.mrf.mxu0
  %v945 = vadd.f32 0.0, %v944
  %946 = vmatmul.bf16.gmra.mxu0 %v441
  %v947 = vpop.f32.mrf.mxu0
  %v948 = vadd.f32 0.0, %v947
  %v949 = vpop.f32.mrf.mxu0
  %v950 = vadd.f32 0.0, %v949
  %951 = vmatmul.bf16.gmra.mxu0 %v449
  %v952 = vpop.f32.mrf.mxu0
  %v953 = vadd.f32 0.0, %v952
  %v954 = vpop.f32.mrf.mxu0
  %v955 = vadd.f32 0.0, %v954
  %956 = vmatmul.bf16.gmra.mxu0 %v457
  %v957 = vpop.f32.mrf.mxu0
  %v958 = vadd.f32 0.0, %v957
  %v959 = vpop.f32.mrf.mxu0
  %v960 = vadd.f32 0.0, %v959
  %961 = vdwg.mxu0
  %962 = vmatpush.bf16.msra.mxu0 %v800
  %963 = vmatpush.bf16.msra.mxu0 %v799
  %964 = vmatpush.bf16.msra.mxu0 %v798
  %965 = vmatpush.bf16.msra.mxu0 %v797
  %966 = vmatpush.bf16.msra.mxu0 %v796
  %967 = vmatpush.bf16.msra.mxu0 %v795
  %968 = vmatpush.bf16.msra.mxu0 %v794
  %969 = vmatpush.bf16.msra.mxu0 %v793
  %970 = vmatmul.bf16.gmra.mxu0 %v402
  %v971 = vpop.f32.mrf.mxu0
  %v972 = vadd.f32 %v923, %v971
  %v973 = vpop.f32.mrf.mxu0
  %v974 = vadd.f32 %v925, %v973
  %975 = vmatmul.bf16.gmra.mxu0 %v410
  %v976 = vpop.f32.mrf.mxu0
  %v977 = vadd.f32 %v928, %v976
  %v978 = vpop.f32.mrf.mxu0
  %v979 = vadd.f32 %v930, %v978
  %980 = vmatmul.bf16.gmra.mxu0 %v418
  %v981 = vpop.f32.mrf.mxu0
  %v982 = vadd.f32 %v933, %v981
  %v983 = vpop.f32.mrf.mxu0
  %v984 = vadd.f32 %v935, %v983
  %985 = vmatmul.bf16.gmra.mxu0 %v426
  %v986 = vpop.f32.mrf.mxu0
  %v987 = vadd.f32 %v938, %v986
  %v988 = vpop.f32.mrf.mxu0
  %v989 = vadd.f32 %v940, %v988
  %990 = vmatmul.bf16.gmra.mxu0 %v434
  %v991 = vpop.f32.mrf.mxu0
  %v992 = vadd.f32 %v943, %v991
  %v993 = vpop.f32.mrf.mxu0
  %v994 = vadd.f32 %v945, %v993
  %995 = vmatmul.bf16.gmra.mxu0 %v442
  %v996 = vpop.f32.mrf.mxu0
  %v997 = vadd.f32 %v948, %v996
  %v998 = vpop.f32.mrf.mxu0
  %v999 = vadd.f32 %v950, %v998
  %1000 = vmatmul.bf16.gmra.mxu0 %v450
  %v1001 = vpop.f32.mrf.mxu0
  %v1002 = vadd.f32 %v953, %v1001
  %v1003 = vpop.f32.mrf.mxu0
  %v1004 = vadd.f32 %v955, %v1003
  %1005 = vmatmul.bf16.gmra.mxu0 %v458
  %v1006 = vpop.f32.mrf.mxu0
  %v1007 = vadd.f32 %v958, %v1006
  %v1008 = vpop.f32.mrf.mxu0
  %v1009 = vadd.f32 %v960, %v1008
  %1010 = vdwg.mxu0
  %1011 = vmatpush.bf16.msra.mxu0 %v808
  %1012 = vmatpush.bf16.msra.mxu0 %v807
  %1013 = vmatpush.bf16.msra.mxu0 %v806
  %1014 = vmatpush.bf16.msra.mxu0 %v805
  %1015 = vmatpush.bf16.msra.mxu0 %v804
  %1016 = vmatpush.bf16.msra.mxu0 %v803
  %1017 = vmatpush.bf16.msra.mxu0 %v802
  %1018 = vmatpush.bf16.msra.mxu0 %v801
  %1019 = vmatmul.bf16.gmra.mxu0 %v403
  %v1020 = vpop.f32.mrf.mxu0
  %v1021 = vadd.f32 %v972, %v1020
  %v1022 = vpop.f32.mrf.mxu0
  %v1023 = vadd.f32 %v974, %v1022
  %1024 = vmatmul.bf16.gmra.mxu0 %v411
  %v1025 = vpop.f32.mrf.mxu0
  %v1026 = vadd.f32 %v977, %v1025
  %v1027 = vpop.f32.mrf.mxu0
  %v1028 = vadd.f32 %v979, %v1027
  %1029 = vmatmul.bf16.gmra.mxu0 %v419
  %v1030 = vpop.f32.mrf.mxu0
  %v1031 = vadd.f32 %v982, %v1030
  %v1032 = vpop.f32.mrf.mxu0
  %v1033 = vadd.f32 %v984, %v1032
  %1034 = vmatmul.bf16.gmra.mxu0 %v427
  %v1035 = vpop.f32.mrf.mxu0
  %v1036 = vadd.f32 %v987, %v1035
  %v1037 = vpop.f32.mrf.mxu0
  %v1038 = vadd.f32 %v989, %v1037
  %1039 = vmatmul.bf16.gmra.mxu0 %v435
  %v1040 = vpop.f32.mrf.mxu0
  %v1041 = vadd.f32 %v992, %v1040
  %v1042 = vpop.f32.mrf.mxu0
  %v1043 = vadd.f32 %v994, %v1042
  %1044 = vmatmul.bf16.gmra.mxu0 %v443
  %v1045 = vpop.f32.mrf.mxu0
  %v1046 = vadd.f32 %v997, %v1045
  %v1047 = vpop.f32.mrf.mxu0
  %v1048 = vadd.f32 %v999, %v1047
  %1049 = vmatmul.bf16.gmra.mxu0 %v451
  %v1050 = vpop.f32.mrf.mxu0
  %v1051 = vadd.f32 %v1002, %v1050
  %v1052 = vpop.f32.mrf.mxu0
  %v1053 = vadd.f32 %v1004, %v1052
  %1054 = vmatmul.bf16.gmra.mxu0 %v459
  %v1055 = vpop.f32.mrf.mxu0
  %v1056 = vadd.f32 %v1007, %v1055
  %v1057 = vpop.f32.mrf.mxu0
  %v1058 = vadd.f32 %v1009, %v1057
  %1059 = vdwg.mxu0
  %1060 = vmatpush.bf16.msra.mxu0 %v816
  %1061 = vmatpush.bf16.msra.mxu0 %v815
  %1062 = vmatpush.bf16.msra.mxu0 %v814
  %1063 = vmatpush.bf16.msra.mxu0 %v813
  %1064 = vmatpush.bf16.msra.mxu0 %v812
  %1065 = vmatpush.bf16.msra.mxu0 %v811
  %1066 = vmatpush.bf16.msra.mxu0 %v810
  %1067 = vmatpush.bf16.msra.mxu0 %v809
  %1068 = vmatmul.bf16.gmra.mxu0 %v404
  %v1069 = vpop.f32.mrf.mxu0
  %v1070 = vadd.f32 %v1021, %v1069
  %v1071 = vpop.f32.mrf.mxu0
  %v1072 = vadd.f32 %v1023, %v1071
  %1073 = vmatmul.bf16.gmra.mxu0 %v412
  %v1074 = vpop.f32.mrf.mxu0
  %v1075 = vadd.f32 %v1026, %v1074
  %v1076 = vpop.f32.mrf.mxu0
  %v1077 = vadd.f32 %v1028, %v1076
  %1078 = vmatmul.bf16.gmra.mxu0 %v420
  %v1079 = vpop.f32.mrf.mxu0
  %v1080 = vadd.f32 %v1031, %v1079
  %v1081 = vpop.f32.mrf.mxu0
  %v1082 = vadd.f32 %v1033, %v1081
  %1083 = vmatmul.bf16.gmra.mxu0 %v428
  %v1084 = vpop.f32.mrf.mxu0
  %v1085 = vadd.f32 %v1036, %v1084
  %v1086 = vpop.f32.mrf.mxu0
  %v1087 = vadd.f32 %v1038, %v1086
  %1088 = vmatmul.bf16.gmra.mxu0 %v436
  %v1089 = vpop.f32.mrf.mxu0
  %v1090 = vadd.f32 %v1041, %v1089
  %v1091 = vpop.f32.mrf.mxu0
  %v1092 = vadd.f32 %v1043, %v1091
  %1093 = vmatmul.bf16.gmra.mxu0 %v444
  %v1094 = vpop.f32.mrf.mxu0
  %v1095 = vadd.f32 %v1046, %v1094
  %v1096 = vpop.f32.mrf.mxu0
  %v1097 = vadd.f32 %v1048, %v1096
  %1098 = vmatmul.bf16.gmra.mxu0 %v452
  %v1099 = vpop.f32.mrf.mxu0
  %v1100 = vadd.f32 %v1051, %v1099
  %v1101 = vpop.f32.mrf.mxu0
  %v1102 = vadd.f32 %v1053, %v1101
  %1103 = vmatmul.bf16.gmra.mxu0 %v460
  %v1104 = vpop.f32.mrf.mxu0
  %v1105 = vadd.f32 %v1056, %v1104
  %v1106 = vpop.f32.mrf.mxu0
  %v1107 = vadd.f32 %v1058, %v1106
  %1108 = vdwg.mxu0
  %1109 = vmatpush.bf16.msra.mxu0 %v824
  %1110 = vmatpush.bf16.msra.mxu0 %v823
  %1111 = vmatpush.bf16.msra.mxu0 %v822
  %1112 = vmatpush.bf16.msra.mxu0 %v821
  %1113 = vmatpush.bf16.msra.mxu0 %v820
  %1114 = vmatpush.bf16.msra.mxu0 %v819
  %1115 = vmatpush.bf16.msra.mxu0 %v818
  %1116 = vmatpush.bf16.msra.mxu0 %v817
  %1117 = vmatmul.bf16.gmra.mxu0 %v405
  %v1118 = vpop.f32.mrf.mxu0
  %v1119 = vadd.f32 %v1070, %v1118
  %v1120 = vpop.f32.mrf.mxu0
  %v1121 = vadd.f32 %v1072, %v1120
  %1122 = vmatmul.bf16.gmra.mxu0 %v413
  %v1123 = vpop.f32.mrf.mxu0
  %v1124 = vadd.f32 %v1075, %v1123
  %v1125 = vpop.f32.mrf.mxu0
  %v1126 = vadd.f32 %v1077, %v1125
  %1127 = vmatmul.bf16.gmra.mxu0 %v421
  %v1128 = vpop.f32.mrf.mxu0
  %v1129 = vadd.f32 %v1080, %v1128
  %v1130 = vpop.f32.mrf.mxu0
  %v1131 = vadd.f32 %v1082, %v1130
  %1132 = vmatmul.bf16.gmra.mxu0 %v429
  %v1133 = vpop.f32.mrf.mxu0
  %v1134 = vadd.f32 %v1085, %v1133
  %v1135 = vpop.f32.mrf.mxu0
  %v1136 = vadd.f32 %v1087, %v1135
  %1137 = vmatmul.bf16.gmra.mxu0 %v437
  %v1138 = vpop.f32.mrf.mxu0
  %v1139 = vadd.f32 %v1090, %v1138
  %v1140 = vpop.f32.mrf.mxu0
  %v1141 = vadd.f32 %v1092, %v1140
  %1142 = vmatmul.bf16.gmra.mxu0 %v445
  %v1143 = vpop.f32.mrf.mxu0
  %v1144 = vadd.f32 %v1095, %v1143
  %v1145 = vpop.f32.mrf.mxu0
  %v1146 = vadd.f32 %v1097, %v1145
  %1147 = vmatmul.bf16.gmra.mxu0 %v453
  %v1148 = vpop.f32.mrf.mxu0
  %v1149 = vadd.f32 %v1100, %v1148
  %v1150 = vpop.f32.mrf.mxu0
  %v1151 = vadd.f32 %v1102, %v1150
  %1152 = vmatmul.bf16.gmra.mxu0 %v461
  %v1153 = vpop.f32.mrf.mxu0
  %v1154 = vadd.f32 %v1105, %v1153
  %v1155 = vpop.f32.mrf.mxu0
  %v1156 = vadd.f32 %v1107, %v1155
  %1157 = vdwg.mxu0
  %1158 = vmatpush.bf16.msra.mxu0 %v832
  %1159 = vmatpush.bf16.msra.mxu0 %v831
  %1160 = vmatpush.bf16.msra.mxu0 %v830
  %1161 = vmatpush.bf16.msra.mxu0 %v829
  %1162 = vmatpush.bf16.msra.mxu0 %v828
  %1163 = vmatpush.bf16.msra.mxu0 %v827
  %1164 = vmatpush.bf16.msra.mxu0 %v826
  %1165 = vmatpush.bf16.msra.mxu0 %v825
  %1166 = vmatmul.bf16.gmra.mxu0 %v406
  %v1167 = vpop.f32.mrf.mxu0
  %v1168 = vadd.f32 %v1119, %v1167
  %v1169 = vpop.f32.mrf.mxu0
  %v1170 = vadd.f32 %v1121, %v1169
  %1171 = vmatmul.bf16.gmra.mxu0 %v414
  %v1172 = vpop.f32.mrf.mxu0
  %v1173 = vadd.f32 %v1124, %v1172
  %v1174 = vpop.f32.mrf.mxu0
  %v1175 = vadd.f32 %v1126, %v1174
  %1176 = vmatmul.bf16.gmra.mxu0 %v422
  %v1177 = vpop.f32.mrf.mxu0
  %v1178 = vadd.f32 %v1129, %v1177
  %v1179 = vpop.f32.mrf.mxu0
  %v1180 = vadd.f32 %v1131, %v1179
  %1181 = vmatmul.bf16.gmra.mxu0 %v430
  %v1182 = vpop.f32.mrf.mxu0
  %v1183 = vadd.f32 %v1134, %v1182
  %v1184 = vpop.f32.mrf.mxu0
  %v1185 = vadd.f32 %v1136, %v1184
  %1186 = vmatmul.bf16.gmra.mxu0 %v438
  %v1187 = vpop.f32.mrf.mxu0
  %v1188 = vadd.f32 %v1139, %v1187
  %v1189 = vpop.f32.mrf.mxu0
  %v1190 = vadd.f32 %v1141, %v1189
  %1191 = vmatmul.bf16.gmra.mxu0 %v446
  %v1192 = vpop.f32.mrf.mxu0
  %v1193 = vadd.f32 %v1144, %v1192
  %v1194 = vpop.f32.mrf.mxu0
  %v1195 = vadd.f32 %v1146, %v1194
  %1196 = vmatmul.bf16.gmra.mxu0 %v454
  %v1197 = vpop.f32.mrf.mxu0
  %v1198 = vadd.f32 %v1149, %v1197
  %v1199 = vpop.f32.mrf.mxu0
  %v1200 = vadd.f32 %v1151, %v1199
  %1201 = vmatmul.bf16.gmra.mxu0 %v462
  %v1202 = vpop.f32.mrf.mxu0
  %v1203 = vadd.f32 %v1154, %v1202
  %v1204 = vpop.f32.mrf.mxu0
  %v1205 = vadd.f32 %v1156, %v1204
  %1206 = vdwg.mxu0
  %1207 = vmatpush.bf16.msra.mxu0 %v840
  %1208 = vmatpush.bf16.msra.mxu0 %v839
  %1209 = vmatpush.bf16.msra.mxu0 %v838
  %1210 = vmatpush.bf16.msra.mxu0 %v837
  %1211 = vmatpush.bf16.msra.mxu0 %v836
  %1212 = vmatpush.bf16.msra.mxu0 %v835
  %1213 = vmatpush.bf16.msra.mxu0 %v834
  %1214 = vmatpush.bf16.msra.mxu0 %v833
  %1215 = vmatmul.bf16.gmra.mxu0 %v407
  %v1216 = vpop.f32.mrf.mxu0
  %v1217 = vadd.f32 %v1168, %v1216
  %v1218 = vpop.f32.mrf.mxu0
  %v1219 = vadd.f32 %v1170, %v1218
  %1220 = vmatmul.bf16.gmra.mxu0 %v415
  %v1221 = vpop.f32.mrf.mxu0
  %v1222 = vadd.f32 %v1173, %v1221
  %v1223 = vpop.f32.mrf.mxu0
  %v1224 = vadd.f32 %v1175, %v1223
  %1225 = vmatmul.bf16.gmra.mxu0 %v423
  %v1226 = vpop.f32.mrf.mxu0
  %v1227 = vadd.f32 %v1178, %v1226
  %v1228 = vpop.f32.mrf.mxu0
  %v1229 = vadd.f32 %v1180, %v1228
  %1230 = vmatmul.bf16.gmra.mxu0 %v431
  %v1231 = vpop.f32.mrf.mxu0
  %v1232 = vadd.f32 %v1183, %v1231
  %v1233 = vpop.f32.mrf.mxu0
  %v1234 = vadd.f32 %v1185, %v1233
  %1235 = vmatmul.bf16.gmra.mxu0 %v439
  %v1236 = vpop.f32.mrf.mxu0
  %v1237 = vadd.f32 %v1188, %v1236
  %v1238 = vpop.f32.mrf.mxu0
  %v1239 = vadd.f32 %v1190, %v1238
  %1240 = vmatmul.bf16.gmra.mxu0 %v447
  %v1241 = vpop.f32.mrf.mxu0
  %v1242 = vadd.f32 %v1193, %v1241
  %v1243 = vpop.f32.mrf.mxu0
  %v1244 = vadd.f32 %v1195, %v1243
  %1245 = vmatmul.bf16.gmra.mxu0 %v455
  %v1246 = vpop.f32.mrf.mxu0
  %v1247 = vadd.f32 %v1198, %v1246
  %v1248 = vpop.f32.mrf.mxu0
  %v1249 = vadd.f32 %v1200, %v1248
  %1250 = vmatmul.bf16.gmra.mxu0 %v463
  %v1251 = vpop.f32.mrf.mxu0
  %v1252 = vadd.f32 %v1203, %v1251
  %v1253 = vpop.f32.mrf.mxu0
  %v1254 = vadd.f32 %v1205, %v1253
  %1255 = vdwg.mxu0
  %1256 = vmatpush.bf16.msra.mxu0 %v848
  %1257 = vmatpush.bf16.msra.mxu0 %v847
  %1258 = vmatpush.bf16.msra.mxu0 %v846
  %1259 = vmatpush.bf16.msra.mxu0 %v845
  %1260 = vmatpush.bf16.msra.mxu0 %v844
  %1261 = vmatpush.bf16.msra.mxu0 %v843
  %1262 = vmatpush.bf16.msra.mxu0 %v842
  %1263 = vmatpush.bf16.msra.mxu0 %v841
  %1264 = vmatmul.bf16.gmra.mxu0 %v408
  %v1265 = vpop.f32.mrf.mxu0
  %v1266 = vadd.f32 %v1217, %v1265
  %v1267 = vpop.f32.mrf.mxu0
  %v1268 = vadd.f32 %v1219, %v1267
  %1269 = vmatmul.bf16.gmra.mxu0 %v416
  %v1270 = vpop.f32.mrf.mxu0
  %v1271 = vadd.f32 %v1222, %v1270
  %v1272 = vpop.f32.mrf.mxu0
  %v1273 = vadd.f32 %v1224, %v1272
  %1274 = vmatmul.bf16.gmra.mxu0 %v424
  %v1275 = vpop.f32.mrf.mxu0
  %v1276 = vadd.f32 %v1227, %v1275
  %v1277 = vpop.f32.mrf.mxu0
  %v1278 = vadd.f32 %v1229, %v1277
  %1279 = vmatmul.bf16.gmra.mxu0 %v432
  %v1280 = vpop.f32.mrf.mxu0
  %v1281 = vadd.f32 %v1232, %v1280
  %v1282 = vpop.f32.mrf.mxu0
  %v1283 = vadd.f32 %v1234, %v1282
  %1284 = vmatmul.bf16.gmra.mxu0 %v440
  %v1285 = vpop.f32.mrf.mxu0
  %v1286 = vadd.f32 %v1237, %v1285
  %v1287 = vpop.f32.mrf.mxu0
  %v1288 = vadd.f32 %v1239, %v1287
  %1289 = vmatmul.bf16.gmra.mxu0 %v448
  %v1290 = vpop.f32.mrf.mxu0
  %v1291 = vadd.f32 %v1242, %v1290
  %v1292 = vpop.f32.mrf.mxu0
  %v1293 = vadd.f32 %v1244, %v1292
  %1294 = vmatmul.bf16.gmra.mxu0 %v456
  %v1295 = vpop.f32.mrf.mxu0
  %v1296 = vadd.f32 %v1247, %v1295
  %v1297 = vpop.f32.mrf.mxu0
  %v1298 = vadd.f32 %v1249, %v1297
  %1299 = vmatmul.bf16.gmra.mxu0 %v464
  %v1300 = vpop.f32.mrf.mxu0
  %v1301 = vadd.f32 %v1252, %v1300
  %v1302 = vpop.f32.mrf.mxu0
  %v1303 = vadd.f32 %v1254, %v1302
  %1304 = vdwg.mxu0
  %v1305 = vadd.f32 %v1266, %v1268
  %v1306 = vadd.f32 %v1305, %v1271
  %v1307 = vadd.f32 %v1306, %v1273
  %v1308 = vadd.f32 %v1307, %v1276
  %v1309 = vadd.f32 %v1308, %v1278
  %v1310 = vadd.f32 %v1309, %v1281
  %v1311 = vadd.f32 %v1310, %v1283
  %v1312 = vadd.f32 %v1311, %v1286
  %v1313 = vadd.f32 %v1312, %v1288
  %v1314 = vadd.f32 %v1313, %v1291
  %v1315 = vadd.f32 %v1314, %v1293
  %v1316 = vadd.f32 %v1315, %v1296
  %v1317 = vadd.f32 %v1316, %v1298
  %v1318 = vadd.f32 %v1317, %v1301
  %v1319 = vadd.f32 %v1318, %v1303
  %v1320 = vrot.slane %v1319, 4
  %v1321 = vadd.f32 %v1319, %v1320
  %v1322 = vrot.slane %v1321, 2
  %v1323 = vadd.f32 %v1321, %v1322
  %v1324 = vrot.slane %v1323, 1
  %v1325 = vadd.f32 %v1323, %v1324
  %v1326 = vrcp.pop 128.0
  %v1327 = vmul.f32 128.0, %v1326
  %v1328 = vsub.f32 1.0, %v1327
  %v1329 = vmul.f32 %v1326, %v1328
  %v1330 = vadd.f32 %v1326, %v1329
  %vm1331 = vweird.f32 %v1326
  %v1332 = vsel %vm1331, %v1326, %v1330
  %v1333 = vmul.f32 %v1325, %v1332
  %v1334 = vsub.f32 %v1266, %v1333
  %v1335 = vsub.f32 %v1268, %v1333
  %v1336 = vsub.f32 %v1271, %v1333
  %v1337 = vsub.f32 %v1273, %v1333
  %v1338 = vsub.f32 %v1276, %v1333
  %v1339 = vsub.f32 %v1278, %v1333
  %v1340 = vsub.f32 %v1281, %v1333
  %v1341 = vsub.f32 %v1283, %v1333
  %v1342 = vsub.f32 %v1286, %v1333
  %v1343 = vsub.f32 %v1288, %v1333
  %v1344 = vsub.f32 %v1291, %v1333
  %v1345 = vsub.f32 %v1293, %v1333
  %v1346 = vsub.f32 %v1296, %v1333
  %v1347 = vsub.f32 %v1298, %v1333
  %v1348 = vsub.f32 %v1301, %v1333
  %v1349 = vsub.f32 %v1303, %v1333
  %v1350 = vmul.f32 %v1334, %v1334
  %v1351 = vmul.f32 %v1335, %v1335
  %v1352 = vmul.f32 %v1336, %v1336
  %v1353 = vmul.f32 %v1337, %v1337
  %v1354 = vmul.f32 %v1338, %v1338
  %v1355 = vmul.f32 %v1339, %v1339
  %v1356 = vmul.f32 %v1340, %v1340
  %v1357 = vmul.f32 %v1341, %v1341
  %v1358 = vmul.f32 %v1342, %v1342
  %v1359 = vmul.f32 %v1343, %v1343
  %v1360 = vmul.f32 %v1344, %v1344
  %v1361 = vmul.f32 %v1345, %v1345
  %v1362 = vmul.f32 %v1346, %v1346
  %v1363 = vmul.f32 %v1347, %v1347
  %v1364 = vmul.f32 %v1348, %v1348
  %v1365 = vmul.f32 %v1349, %v1349
  %v1366 = vadd.f32 %v1350, %v1351
  %v1367 = vadd.f32 %v1366, %v1352
  %v1368 = vadd.f32 %v1367, %v1353
  %v1369 = vadd.f32 %v1368, %v1354
  %v1370 = vadd.f32 %v1369, %v1355
  %v1371 = vadd.f32 %v1370, %v1356
  %v1372 = vadd.f32 %v1371, %v1357
  %v1373 = vadd.f32 %v1372, %v1358
  %v1374 = vadd.f32 %v1373, %v1359
  %v1375 = vadd.f32 %v1374, %v1360
  %v1376 = vadd.f32 %v1375, %v1361
  %v1377 = vadd.f32 %v1376, %v1362
  %v1378 = vadd.f32 %v1377, %v1363
  %v1379 = vadd.f32 %v1378, %v1364
  %v1380 = vadd.f32 %v1379, %v1365
  %v1381 = vrot.slane %v1380, 4
  %v1382 = vadd.f32 %v1380, %v1381
  %v1383 = vrot.slane %v1382, 2
  %v1384 = vadd.f32 %v1382, %v1383
  %v1385 = vrot.slane %v1384, 1
  %v1386 = vadd.f32 %v1384, %v1385
  %v1387 = vmul.f32 %v1386, %v1332
  %v1388 = vld [vmem:[%s2] sm:$0x1]
  %v1389 = vadd.f32 %v1387, 1e-05
  %v1390 = vrsqrt.pop %v1389
  %v1391 = vmul.f32 %v1390, %v1389
  %v1392 = vmul.f32 %v1391, %v1390
  %v1393 = vmul.f32 0.5, %v1392
  %v1394 = vsub.f32 1.5, %v1393
  %v1395 = vmul.f32 %v1390, %v1394
  %vm1396 = vweird.f32 %v1389
  %vm1397 = vweird.f32 %v1390
  %vm1398 = vmor %vm1396, %vm1397
  %v1399 = vsel %vm1398, %v1390, %v1395
  %v1400 = vmul.f32 %v1388, %v1399
  %v1401 = vld [vmem:[%s3] sm:$0x1]
  %v1402 = vmul.f32 %v1333, %v1400
  %v1403 = vsub.f32 %v1401, %v1402
  %v1405 = vperm.slane %v1400, 0
  %v1407 = vmul.f32 %v1266, %v1405
  %v1408 = vmul.f32 %v1268, %v1405
  %v1409 = vmul.f32 %v1271, %v1405
  %v1410 = vmul.f32 %v1273, %v1405
  %v1411 = vmul.f32 %v1276, %v1405
  %v1412 = vmul.f32 %v1278, %v1405
  %v1413 = vmul.f32 %v1281, %v1405
  %v1414 = vmul.f32 %v1283, %v1405
  %v1415 = vmul.f32 %v1286, %v1405
  %v1416 = vmul.f32 %v1288, %v1405
  %v1417 = vmul.f32 %v1291, %v1405
  %v1418 = vmul.f32 %v1293, %v1405
  %v1419 = vmul.f32 %v1296, %v1405
  %v1420 = vmul.f32 %v1298, %v1405
  %v1421 = vmul.f32 %v1301, %v1405
  %v1422 = vmul.f32 %v1303, %v1405
  %v1424 = vperm.slane %v1403, 0
  %v1426 = vadd.f32 %v1407, %v1424
  %v1427 = vadd.f32 %v1408, %v1424
  %v1428 = vadd.f32 %v1409, %v1424
  %v1429 = vadd.f32 %v1410, %v1424
  %v1430 = vadd.f32 %v1411, %v1424
  %v1431 = vadd.f32 %v1412, %v1424
  %v1432 = vadd.f32 %v1413, %v1424
  %v1433 = vadd.f32 %v1414, %v1424
  %v1434 = vadd.f32 %v1415, %v1424
  %v1435 = vadd.f32 %v1416, %v1424
  %v1436 = vadd.f32 %v1417, %v1424
  %v1437 = vadd.f32 %v1418, %v1424
  %v1438 = vadd.f32 %v1419, %v1424
  %v1439 = vadd.f32 %v1420, %v1424
  %v1440 = vadd.f32 %v1421, %v1424
  %v1441 = vadd.f32 %v1422, %v1424
  %v1442 = vmax.f32 %v1426, 0.0
  %v1443 = vmax.f32 %v1427, 0.0
  %v1444 = vmax.f32 %v1428, 0.0
  %v1445 = vmax.f32 %v1429, 0.0
  %v1446 = vmax.f32 %v1430, 0.0
  %v1447 = vmax.f32 %v1431, 0.0
  %v1448 = vmax.f32 %v1432, 0.0
  %v1449 = vmax.f32 %v1433, 0.0
  %v1450 = vmax.f32 %v1434, 0.0
  %v1451 = vmax.f32 %v1435, 0.0
  %v1452 = vmax.f32 %v1436, 0.0
  %v1453 = vmax.f32 %v1437, 0.0
  %v1454 = vmax.f32 %v1438, 0.0
  %v1455 = vmax.f32 %v1439, 0.0
  %v1456 = vmax.f32 %v1440, 0.0
  %v1457 = vmax.f32 %v1441, 0.0
  %v1458 = vpack.c.bf16 %v1442, %v1442
  %v1459 = vpack.c.bf16 %v1443, %v1443
  %v1460 = vpack.c.bf16 %v1444, %v1444
  %v1461 = vpack.c.bf16 %v1445, %v1445
  %v1462 = vpack.c.bf16 %v1446, %v1446
  %v1463 = vpack.c.bf16 %v1447, %v1447
  %v1464 = vpack.c.bf16 %v1448, %v1448
  %v1465 = vpack.c.bf16 %v1449, %v1449
  %v1466 = vpack.c.bf16 %v1450, %v1450
  %v1467 = vpack.c.bf16 %v1451, %v1451
  %v1468 = vpack.c.bf16 %v1452, %v1452
  %v1469 = vpack.c.bf16 %v1453, %v1453
  %v1470 = vpack.c.bf16 %v1454, %v1454
  %v1471 = vpack.c.bf16 %v1455, %v1455
  %v1472 = vpack.c.bf16 %v1456, %v1456
  %v1473 = vpack.c.bf16 %v1457, %v1457
  %1474 = vst [vmem:[%s4] sm:$0xf] %v1458
  %1475 = vst [vmem:[%s4 + $0x4] sm:$0xf] %v1459
  %1476 = vst [vmem:[%s4 + $0x8] sm:$0xf] %v1460
  %1477 = vst [vmem:[%s4 + $0xc] sm:$0xf] %v1461
  %1478 = vst [vmem:[%s4 + $0x10] sm:$0xf] %v1462
  %1479 = vst [vmem:[%s4 + $0x14] sm:$0xf] %v1463
  %1480 = vst [vmem:[%s4 + $0x18] sm:$0xf] %v1464
  %1481 = vst [vmem:[%s4 + $0x1c] sm:$0xf] %v1465
  %1482 = vst [vmem:[%s4 + $0x20] sm:$0xf] %v1466
  %1483 = vst [vmem:[%s4 + $0x24] sm:$0xf] %v1467
  %1484 = vst [vmem:[%s4 + $0x28] sm:$0xf] %v1468
  %1485 = vst [vmem:[%s4 + $0x2c] sm:$0xf] %v1469
  %1486 = vst [vmem:[%s4 + $0x30] sm:$0xf] %v1470
  %1487 = vst [vmem:[%s4 + $0x34] sm:$0xf] %v1471
  %1488 = vst [vmem:[%s4 + $0x38] sm:$0xf] %v1472
  %1489 = vst [vmem:[%s4 + $0x3c] sm:$0xf] %v1473
  // Predicated region
  $region18: #{discriminator_forward.5} parent=0 // pred_check
    _
  $region19: #{discriminator_forward.5} parent=0 // pred_check_branch
    %1491 = sbr.rel (0) target = $region21
  $region20: #{discriminator_forward.5} parent=0 // pred_region
    _
  $region21: #{discriminator_forward.5} parent=0 // pred_fallthru
    _
  // Predicated region
  $region22: #{discriminator_forward.5} parent=0 // pred_check
    _
  $region23: #{discriminator_forward.5} parent=0 // pred_check_branch
    %1493 = sbr.rel (0) target = $region25
  $region24: #{discriminator_forward.5} parent=0 // pred_region
    _
  $region25: #{discriminator_forward.5} parent=0 // pred_fallthru
    _

// kernel: discriminator_forward.6
$region0: #{discriminator_forward.6}
  #allocation0 [shape = 'u32[]', space=smem, size = 0x4, offset = 0x4, fixed_abs, tag = 'smem constant byte address 0x4 - core index']
  #allocation1 [shape = 'u32[72,128]{1,0:T(1,128)}', space=vmem, size = 0x9000, scoped, tag = 'internal scratch']
  %s0 = inlined_call_operand.vmem [shape: bf16[32,2048], index: 0, kind: input, shape index: {}]
  %s1 = inlined_call_operand.vmem [shape: bf16[2048,256], index: 1, kind: input, shape index: {}]
  %s2 = inlined_call_operand.vmem [shape: f32[1,256], index: 2, kind: input, shape index: {}]
  %s3 = inlined_call_operand.vmem [shape: f32[1,256], index: 3, kind: input, shape index: {}]
  %s4 = inlined_call_operand.vmem [shape: bf16[32,256], index: 4, kind: output, shape index: {}]
  %s5 = sld [smem:[#allocation0]]
  $region26: #{discriminator_forward.6} parent=0
    _
  %s7 = ssub.s32 1, %s5
  %s8 = scalar_select 0, %s7, %s5
  // Predicated region
  $region2: #{discriminator_forward.6} parent=0 // pred_check
    _
  $region3: #{discriminator_forward.6} parent=0 // pred_check_branch
    %10 = sbr.rel (0) target = $region5
  $region4: #{discriminator_forward.6} parent=0 // pred_region
    _
  $region5: #{discriminator_forward.6} parent=0 // pred_fallthru
    _
  // Predicated region
  $region6: #{discriminator_forward.6} parent=0 // pred_check
    _
  $region7: #{discriminator_forward.6} parent=0 // pred_check_branch
    %12 = sbr.rel (0) target = $region9
  $region8: #{discriminator_forward.6} parent=0 // pred_region
    _
  $region9: #{discriminator_forward.6} parent=0 // pred_fallthru
    _
  // Predicated region
  $region10: #{discriminator_forward.6} parent=0 // pred_check
    _
  $region11: #{discriminator_forward.6} parent=0 // pred_check_branch
    %14 = sbr.rel (0) target = $region13
  $region12: #{discriminator_forward.6} parent=0 // pred_region
    _
  $region13: #{discriminator_forward.6} parent=0 // pred_fallthru
    _
  // Predicated region
  $region14: #{discriminator_forward.6} parent=0 // pred_check
    _
  $region15: #{discriminator_forward.6} parent=0 // pred_check_branch
    %16 = sbr.rel (0) target = $region17
  $region16: #{discriminator_forward.6} parent=0 // pred_region
    _
  $region17: #{discriminator_forward.6} parent=0 // pred_fallthru
    _
  %v17 = vld [vmem:[%s0] sm:$0xff]
  %v18 = vld [vmem:[%s0 + $0x8] sm:$0xff]
  %v19 = vld [vmem:[%s0 + $0x10] sm:$0xff]
  %v20 = vld [vmem:[%s0 + $0x18] sm:$0xff]
  %v21 = vld [vmem:[%s0 + $0x20] sm:$0xff]
  %v22 = vld [vmem:[%s0 + $0x28] sm:$0xff]
  %v23 = vld [vmem:[%s0 + $0x30] sm:$0xff]
  %v24 = vld [vmem:[%s0 + $0x38] sm:$0xff]
  %v25 = vld [vmem:[%s0 + $0x40] sm:$0xff]
  %v26 = vld [vmem:[%s0 + $0x48] sm:$0xff]
  %v27 = vld [vmem:[%s0 + $0x50] sm:$0xff]
  %v28 = vld [vmem:[%s0 + $0x58] sm:$0xff]
  %v29 = vld [vmem:[%s0 + $0x60] sm:$0xff]
  %v30 = vld [vmem:[%s0 + $0x68] sm:$0xff]
  %v31 = vld [vmem:[%s0 + $0x70] sm:$0xff]
  %v32 = vld [vmem:[%s0 + $0x78] sm:$0xff]
  %v33 = vld [vmem:[%s0 + $0x80] sm:$0xff]
  %v34 = vld [vmem:[%s0 + $0x88] sm:$0xff]
  %v35 = vld [vmem:[%s0 + $0x90] sm:$0xff]
  %v36 = vld [vmem:[%s0 + $0x98] sm:$0xff]
  %v37 = vld [vmem:[%s0 + $0xa0] sm:$0xff]
  %v38 = vld [vmem:[%s0 + $0xa8] sm:$0xff]
  %v39 = vld [vmem:[%s0 + $0xb0] sm:$0xff]
  %v40 = vld [vmem:[%s0 + $0xb8] sm:$0xff]
  %v41 = vld [vmem:[%s0 + $0xc0] sm:$0xff]
  %v42 = vld [vmem:[%s0 + $0xc8] sm:$0xff]
  %v43 = vld [vmem:[%s0 + $0xd0] sm:$0xff]
  %v44 = vld [vmem:[%s0 + $0xd8] sm:$0xff]
  %v45 = vld [vmem:[%s0 + $0xe0] sm:$0xff]
  %v46 = vld [vmem:[%s0 + $0xe8] sm:$0xff]
  %v47 = vld [vmem:[%s0 + $0xf0] sm:$0xff]
  %v48 = vld [vmem:[%s0 + $0xf8] sm:$0xff]
  %v49 = vld [vmem:[%s1] sm:$0xff]
  %v50 = vld [vmem:[%s1 + $0x8] sm:$0xff]
  %v51 = vld [vmem:[%s1 + $0x10] sm:$0xff]
  %v52 = vld [vmem:[%s1 + $0x18] sm:$0xff]
  %v53 = vld [vmem:[%s1 + $0x20] sm:$0xff]
  %v54 = vld [vmem:[%s1 + $0x28] sm:$0xff]
  %v55 = vld [vmem:[%s1 + $0x30] sm:$0xff]
  %v56 = vld [vmem:[%s1 + $0x38] sm:$0xff]
  %v57 = vld [vmem:[%s1 + $0x40] sm:$0xff]
  %v58 = vld [vmem:[%s1 + $0x48] sm:$0xff]
  %v59 = vld [vmem:[%s1 + $0x50] sm:$0xff]
  %v60 = vld [vmem:[%s1 + $0x58] sm:$0xff]
  %v61 = vld [vmem:[%s1 + $0x60] sm:$0xff]
  %v62 = vld [vmem:[%s1 + $0x68] sm:$0xff]
  %v63 = vld [vmem:[%s1 + $0x70] sm:$0xff]
  %v64 = vld [vmem:[%s1 + $0x78] sm:$0xff]
  %v65 = vld [vmem:[%s1 + $0x80] sm:$0xff]
  %v66 = vld [vmem:[%s1 + $0x88] sm:$0xff]
  %v67 = vld [vmem:[%s1 + $0x90] sm:$0xff]
  %v68 = vld [vmem:[%s1 + $0x98] sm:$0xff]
  %v69 = vld [vmem:[%s1 + $0xa0] sm:$0xff]
  %v70 = vld [vmem:[%s1 + $0xa8] sm:$0xff]
  %v71 = vld [vmem:[%s1 + $0xb0] sm:$0xff]
  %v72 = vld [vmem:[%s1 + $0xb8] sm:$0xff]
  %v73 = vld [vmem:[%s1 + $0xc0] sm:$0xff]
  %v74 = vld [vmem:[%s1 + $0xc8] sm:$0xff]
  %v75 = vld [vmem:[%s1 + $0xd0] sm:$0xff]
  %v76 = vld [vmem:[%s1 + $0xd8] sm:$0xff]
  %v77 = vld [vmem:[%s1 + $0xe0] sm:$0xff]
  %v78 = vld [vmem:[%s1 + $0xe8] sm:$0xff]
  %v79 = vld [vmem:[%s1 + $0xf0] sm:$0xff]
  %v80 = vld [vmem:[%s1 + $0xf8] sm:$0xff]
  %v81 = vld [vmem:[%s1 + $0x100] sm:$0xff]
  %v82 = vld [vmem:[%s1 + $0x108] sm:$0xff]
  %v83 = vld [vmem:[%s1 + $0x110] sm:$0xff]
  %v84 = vld [vmem:[%s1 + $0x118] sm:$0xff]
  %v85 = vld [vmem:[%s1 + $0x120] sm:$0xff]
  %v86 = vld [vmem:[%s1 + $0x128] sm:$0xff]
  %v87 = vld [vmem:[%s1 + $0x130] sm:$0xff]
  %v88 = vld [vmem:[%s1 + $0x138] sm:$0xff]
  %v89 = vld [vmem:[%s1 + $0x140] sm:$0xff]
  %v90 = vld [vmem:[%s1 + $0x148] sm:$0xff]
  %v91 = vld [vmem:[%s1 + $0x150] sm:$0xff]
  %v92 = vld [vmem:[%s1 + $0x158] sm:$0xff]
  %v93 = vld [vmem:[%s1 + $0x160] sm:$0xff]
  %v94 = vld [vmem:[%s1 + $0x168] sm:$0xff]
  %v95 = vld [vmem:[%s1 + $0x170] sm:$0xff]
  %v96 = vld [vmem:[%s1 + $0x178] sm:$0xff]
  %v97 = vld [vmem:[%s1 + $0x180] sm:$0xff]
  %v98 = vld [vmem:[%s1 + $0x188] sm:$0xff]
  %v99 = vld [vmem:[%s1 + $0x190] sm:$0xff]
  %v100 = vld [vmem:[%s1 + $0x198] sm:$0xff]
  %v101 = vld [vmem:[%s1 + $0x1a0] sm:$0xff]
  %v102 = vld [vmem:[%s1 + $0x1a8] sm:$0xff]
  %v103 = vld [vmem:[%s1 + $0x1b0] sm:$0xff]
  %v104 = vld [vmem:[%s1 + $0x1b8] sm:$0xff]
  %v105 = vld [vmem:[%s1 + $0x1c0] sm:$0xff]
  %v106 = vld [vmem:[%s1 + $0x1c8] sm:$0xff]
  %v107 = vld [vmem:[%s1 + $0x1d0] sm:$0xff]
  %v108 = vld [vmem:[%s1 + $0x1d8] sm:$0xff]
  %v109 = vld [vmem:[%s1 + $0x1e0] sm:$0xff]
  %v110 = vld [vmem:[%s1 + $0x1e8] sm:$0xff]
  %v111 = vld [vmem:[%s1 + $0x1f0] sm:$0xff]
  %v112 = vld [vmem:[%s1 + $0x1f8] sm:$0xff]
  %v113 = vld [vmem:[%s1 + $0x200] sm:$0xff]
  %v114 = vld [vmem:[%s1 + $0x208] sm:$0xff]
  %v115 = vld [vmem:[%s1 + $0x210] sm:$0xff]
  %v116 = vld [vmem:[%s1 + $0x218] sm:$0xff]
  %v117 = vld [vmem:[%s1 + $0x220] sm:$0xff]
  %v118 = vld [vmem:[%s1 + $0x228] sm:$0xff]
  %v119 = vld [vmem:[%s1 + $0x230] sm:$0xff]
  %v120 = vld [vmem:[%s1 + $0x238] sm:$0xff]
  %v121 = vld [vmem:[%s1 + $0x240] sm:$0xff]
  %v122 = vld [vmem:[%s1 + $0x248] sm:$0xff]
  %v123 = vld [vmem:[%s1 + $0x250] sm:$0xff]
  %v124 = vld [vmem:[%s1 + $0x258] sm:$0xff]
  %v125 = vld [vmem:[%s1 + $0x260] sm:$0xff]
  %v126 = vld [vmem:[%s1 + $0x268] sm:$0xff]
  %v127 = vld [vmem:[%s1 + $0x270] sm:$0xff]
  %v128 = vld [vmem:[%s1 + $0x278] sm:$0xff]
  %v129 = vld [vmem:[%s1 + $0x280] sm:$0xff]
  %v130 = vld [vmem:[%s1 + $0x288] sm:$0xff]
  %v131 = vld [vmem:[%s1 + $0x290] sm:$0xff]
  %v132 = vld [vmem:[%s1 + $0x298] sm:$0xff]
  %v133 = vld [vmem:[%s1 + $0x2a0] sm:$0xff]
  %v134 = vld [vmem:[%s1 + $0x2a8] sm:$0xff]
  %v135 = vld [vmem:[%s1 + $0x2b0] sm:$0xff]
  %v136 = vld [vmem:[%s1 + $0x2b8] sm:$0xff]
  %v137 = vld [vmem:[%s1 + $0x2c0] sm:$0xff]
  %v138 = vld [vmem:[%s1 + $0x2c8] sm:$0xff]
  %v139 = vld [vmem:[%s1 + $0x2d0] sm:$0xff]
  %v140 = vld [vmem:[%s1 + $0x2d8] sm:$0xff]
  %v141 = vld [vmem:[%s1 + $0x2e0] sm:$0xff]
  %v142 = vld [vmem:[%s1 + $0x2e8] sm:$0xff]
  %v143 = vld [vmem:[%s1 + $0x2f0] sm:$0xff]
  %v144 = vld [vmem:[%s1 + $0x2f8] sm:$0xff]
  %v145 = vld [vmem:[%s1 + $0x300] sm:$0xff]
  %v146 = vld [vmem:[%s1 + $0x308] sm:$0xff]
  %v147 = vld [vmem:[%s1 + $0x310] sm:$0xff]
  %v148 = vld [vmem:[%s1 + $0x318] sm:$0xff]
  %v149 = vld [vmem:[%s1 + $0x320] sm:$0xff]
  %v150 = vld [vmem:[%s1 + $0x328] sm:$0xff]
  %v151 = vld [vmem:[%s1 + $0x330] sm:$0xff]
  %v152 = vld [vmem:[%s1 + $0x338] sm:$0xff]
  %v153 = vld [vmem:[%s1 + $0x340] sm:$0xff]
  %v154 = vld [vmem:[%s1 + $0x348] sm:$0xff]
  %v155 = vld [vmem:[%s1 + $0x350] sm:$0xff]
  %v156 = vld [vmem:[%s1 + $0x358] sm:$0xff]
  %v157 = vld [vmem:[%s1 + $0x360] sm:$0xff]
  %v158 = vld [vmem:[%s1 + $0x368] sm:$0xff]
  %v159 = vld [vmem:[%s1 + $0x370] sm:$0xff]
  %v160 = vld [vmem:[%s1 + $0x378] sm:$0xff]
  %v161 = vld [vmem:[%s1 + $0x380] sm:$0xff]
  %v162 = vld [vmem:[%s1 + $0x388] sm:$0xff]
  %v163 = vld [vmem:[%s1 + $0x390] sm:$0xff]
  %v164 = vld [vmem:[%s1 + $0x398] sm:$0xff]
  %v165 = vld [vmem:[%s1 + $0x3a0] sm:$0xff]
  %v166 = vld [vmem:[%s1 + $0x3a8] sm:$0xff]
  %v167 = vld [vmem:[%s1 + $0x3b0] sm:$0xff]
  %v168 = vld [vmem:[%s1 + $0x3b8] sm:$0xff]
  %v169 = vld [vmem:[%s1 + $0x3c0] sm:$0xff]
  %v170 = vld [vmem:[%s1 + $0x3c8] sm:$0xff]
  %v171 = vld [vmem:[%s1 + $0x3d0] sm:$0xff]
  %v172 = vld [vmem:[%s1 + $0x3d8] sm:$0xff]
  %v173 = vld [vmem:[%s1 + $0x3e0] sm:$0xff]
  %v174 = vld [vmem:[%s1 + $0x3e8] sm:$0xff]
  %v175 = vld [vmem:[%s1 + $0x3f0] sm:$0xff]
  %v176 = vld [vmem:[%s1 + $0x3f8] sm:$0xff]
  %v177 = vld [vmem:[%s1 + $0x400] sm:$0xff]
  %v178 = vld [vmem:[%s1 + $0x408] sm:$0xff]
  %v179 = vld [vmem:[%s1 + $0x410] sm:$0xff]
  %v180 = vld [vmem:[%s1 + $0x418] sm:$0xff]
  %v181 = vld [vmem:[%s1 + $0x420] sm:$0xff]
  %v182 = vld [vmem:[%s1 + $0x428] sm:$0xff]
  %v183 = vld [vmem:[%s1 + $0x430] sm:$0xff]
  %v184 = vld [vmem:[%s1 + $0x438] sm:$0xff]
  %v185 = vld [vmem:[%s1 + $0x440] sm:$0xff]
  %v186 = vld [vmem:[%s1 + $0x448] sm:$0xff]
  %v187 = vld [vmem:[%s1 + $0x450] sm:$0xff]
  %v188 = vld [vmem:[%s1 + $0x458] sm:$0xff]
  %v189 = vld [vmem:[%s1 + $0x460] sm:$0xff]
  %v190 = vld [vmem:[%s1 + $0x468] sm:$0xff]
  %v191 = vld [vmem:[%s1 + $0x470] sm:$0xff]
  %v192 = vld [vmem:[%s1 + $0x478] sm:$0xff]
  %v193 = vld [vmem:[%s1 + $0x480] sm:$0xff]
  %v194 = vld [vmem:[%s1 + $0x488] sm:$0xff]
  %v195 = vld [vmem:[%s1 + $0x490] sm:$0xff]
  %v196 = vld [vmem:[%s1 + $0x498] sm:$0xff]
  %v197 = vld [vmem:[%s1 + $0x4a0] sm:$0xff]
  %v198 = vld [vmem:[%s1 + $0x4a8] sm:$0xff]
  %v199 = vld [vmem:[%s1 + $0x4b0] sm:$0xff]
  %v200 = vld [vmem:[%s1 + $0x4b8] sm:$0xff]
  %v201 = vld [vmem:[%s1 + $0x4c0] sm:$0xff]
  %v202 = vld [vmem:[%s1 + $0x4c8] sm:$0xff]
  %v203 = vld [vmem:[%s1 + $0x4d0] sm:$0xff]
  %v204 = vld [vmem:[%s1 + $0x4d8] sm:$0xff]
  %v205 = vld [vmem:[%s1 + $0x4e0] sm:$0xff]
  %v206 = vld [vmem:[%s1 + $0x4e8] sm:$0xff]
  %v207 = vld [vmem:[%s1 + $0x4f0] sm:$0xff]
  %v208 = vld [vmem:[%s1 + $0x4f8] sm:$0xff]
  %v209 = vld [vmem:[%s1 + $0x500] sm:$0xff]
  %v210 = vld [vmem:[%s1 + $0x508] sm:$0xff]
  %v211 = vld [vmem:[%s1 + $0x510] sm:$0xff]
  %v212 = vld [vmem:[%s1 + $0x518] sm:$0xff]
  %v213 = vld [vmem:[%s1 + $0x520] sm:$0xff]
  %v214 = vld [vmem:[%s1 + $0x528] sm:$0xff]
  %v215 = vld [vmem:[%s1 + $0x530] sm:$0xff]
  %v216 = vld [vmem:[%s1 + $0x538] sm:$0xff]
  %v217 = vld [vmem:[%s1 + $0x540] sm:$0xff]
  %v218 = vld [vmem:[%s1 + $0x548] sm:$0xff]
  %v219 = vld [vmem:[%s1 + $0x550] sm:$0xff]
  %v220 = vld [vmem:[%s1 + $0x558] sm:$0xff]
  %v221 = vld [vmem:[%s1 + $0x560] sm:$0xff]
  %v222 = vld [vmem:[%s1 + $0x568] sm:$0xff]
  %v223 = vld [vmem:[%s1 + $0x570] sm:$0xff]
  %v224 = vld [vmem:[%s1 + $0x578] sm:$0xff]
  %v225 = vld [vmem:[%s1 + $0x580] sm:$0xff]
  %v226 = vld [vmem:[%s1 + $0x588] sm:$0xff]
  %v227 = vld [vmem:[%s1 + $0x590] sm:$0xff]
  %v228 = vld [vmem:[%s1 + $0x598] sm:$0xff]
  %v229 = vld [vmem:[%s1 + $0x5a0] sm:$0xff]
  %v230 = vld [vmem:[%s1 + $0x5a8] sm:$0xff]
  %v231 = vld [vmem:[%s1 + $0x5b0] sm:$0xff]
  %v232 = vld [vmem:[%s1 + $0x5b8] sm:$0xff]
  %v233 = vld [vmem:[%s1 + $0x5c0] sm:$0xff]
  %v234 = vld [vmem:[%s1 + $0x5c8] sm:$0xff]
  %v235 = vld [vmem:[%s1 + $0x5d0] sm:$0xff]
  %v236 = vld [vmem:[%s1 + $0x5d8] sm:$0xff]
  %v237 = vld [vmem:[%s1 + $0x5e0] sm:$0xff]
  %v238 = vld [vmem:[%s1 + $0x5e8] sm:$0xff]
  %v239 = vld [vmem:[%s1 + $0x5f0] sm:$0xff]
  %v240 = vld [vmem:[%s1 + $0x5f8] sm:$0xff]
  %v241 = vld [vmem:[%s1 + $0x600] sm:$0xff]
  %v242 = vld [vmem:[%s1 + $0x608] sm:$0xff]
  %v243 = vld [vmem:[%s1 + $0x610] sm:$0xff]
  %v244 = vld [vmem:[%s1 + $0x618] sm:$0xff]
  %v245 = vld [vmem:[%s1 + $0x620] sm:$0xff]
  %v246 = vld [vmem:[%s1 + $0x628] sm:$0xff]
  %v247 = vld [vmem:[%s1 + $0x630] sm:$0xff]
  %v248 = vld [vmem:[%s1 + $0x638] sm:$0xff]
  %v249 = vld [vmem:[%s1 + $0x640] sm:$0xff]
  %v250 = vld [vmem:[%s1 + $0x648] sm:$0xff]
  %v251 = vld [vmem:[%s1 + $0x650] sm:$0xff]
  %v252 = vld [vmem:[%s1 + $0x658] sm:$0xff]
  %v253 = vld [vmem:[%s1 + $0x660] sm:$0xff]
  %v254 = vld [vmem:[%s1 + $0x668] sm:$0xff]
  %v255 = vld [vmem:[%s1 + $0x670] sm:$0xff]
  %v256 = vld [vmem:[%s1 + $0x678] sm:$0xff]
  %v257 = vld [vmem:[%s1 + $0x680] sm:$0xff]
  %v258 = vld [vmem:[%s1 + $0x688] sm:$0xff]
  %v259 = vld [vmem:[%s1 + $0x690] sm:$0xff]
  %v260 = vld [vmem:[%s1 + $0x698] sm:$0xff]
  %v261 = vld [vmem:[%s1 + $0x6a0] sm:$0xff]
  %v262 = vld [vmem:[%s1 + $0x6a8] sm:$0xff]
  %v263 = vld [vmem:[%s1 + $0x6b0] sm:$0xff]
  %v264 = vld [vmem:[%s1 + $0x6b8] sm:$0xff]
  %v265 = vld [vmem:[%s1 + $0x6c0] sm:$0xff]
  %v266 = vld [vmem:[%s1 + $0x6c8] sm:$0xff]
  %v267 = vld [vmem:[%s1 + $0x6d0] sm:$0xff]
  %v268 = vld [vmem:[%s1 + $0x6d8] sm:$0xff]
  %v269 = vld [vmem:[%s1 + $0x6e0] sm:$0xff]
  %v270 = vld [vmem:[%s1 + $0x6e8] sm:$0xff]
  %v271 = vld [vmem:[%s1 + $0x6f0] sm:$0xff]
  %v272 = vld [vmem:[%s1 + $0x6f8] sm:$0xff]
  %v273 = vld [vmem:[%s1 + $0x700] sm:$0xff]
  %v274 = vld [vmem:[%s1 + $0x708] sm:$0xff]
  %v275 = vld [vmem:[%s1 + $0x710] sm:$0xff]
  %v276 = vld [vmem:[%s1 + $0x718] sm:$0xff]
  %v277 = vld [vmem:[%s1 + $0x720] sm:$0xff]
  %v278 = vld [vmem:[%s1 + $0x728] sm:$0xff]
  %v279 = vld [vmem:[%s1 + $0x730] sm:$0xff]
  %v280 = vld [vmem:[%s1 + $0x738] sm:$0xff]
  %v281 = vld [vmem:[%s1 + $0x740] sm:$0xff]
  %v282 = vld [vmem:[%s1 + $0x748] sm:$0xff]
  %v283 = vld [vmem:[%s1 + $0x750] sm:$0xff]
  %v284 = vld [vmem:[%s1 + $0x758] sm:$0xff]
  %v285 = vld [vmem:[%s1 + $0x760] sm:$0xff]
  %v286 = vld [vmem:[%s1 + $0x768] sm:$0xff]
  %v287 = vld [vmem:[%s1 + $0x770] sm:$0xff]
  %v288 = vld [vmem:[%s1 + $0x778] sm:$0xff]
  %v289 = vld [vmem:[%s1 + $0x780] sm:$0xff]
  %v290 = vld [vmem:[%s1 + $0x788] sm:$0xff]
  %v291 = vld [vmem:[%s1 + $0x790] sm:$0xff]
  %v292 = vld [vmem:[%s1 + $0x798] sm:$0xff]
  %v293 = vld [vmem:[%s1 + $0x7a0] sm:$0xff]
  %v294 = vld [vmem:[%s1 + $0x7a8] sm:$0xff]
  %v295 = vld [vmem:[%s1 + $0x7b0] sm:$0xff]
  %v296 = vld [vmem:[%s1 + $0x7b8] sm:$0xff]
  %v297 = vld [vmem:[%s1 + $0x7c0] sm:$0xff]
  %v298 = vld [vmem:[%s1 + $0x7c8] sm:$0xff]
  %v299 = vld [vmem:[%s1 + $0x7d0] sm:$0xff]
  %v300 = vld [vmem:[%s1 + $0x7d8] sm:$0xff]
  %v301 = vld [vmem:[%s1 + $0x7e0] sm:$0xff]
  %v302 = vld [vmem:[%s1 + $0x7e8] sm:$0xff]
  %v303 = vld [vmem:[%s1 + $0x7f0] sm:$0xff]
  %v304 = vld [vmem:[%s1 + $0x7f8] sm:$0xff]
  %v337 = vunpack.c.l.b16 %v17
  %v338 = vunpack.c.h.b16 %v17
  %v339 = vunpack.c.l.b16 %v18
  %v340 = vunpack.c.h.b16 %v18
  %v341 = vunpack.c.l.b16 %v19
  %v342 = vunpack.c.h.b16 %v19
  %v343 = vunpack.c.l.b16 %v20
  %v344 = vunpack.c.h.b16 %v20
  %v345 = vunpack.c.l.b16 %v21
  %v346 = vunpack.c.h.b16 %v21
  %v347 = vunpack.c.l.b16 %v22
  %v348 = vunpack.c.h.b16 %v22
  %v349 = vunpack.c.l.b16 %v23
  %v350 = vunpack.c.h.b16 %v23
  %v351 = vunpack.c.l.b16 %v24
  %v352 = vunpack.c.h.b16 %v24
  %v353 = vunpack.c.l.b16 %v25
  %v354 = vunpack.c.h.b16 %v25
  %v355 = vunpack.c.l.b16 %v26
  %v356 = vunpack.c.h.b16 %v26
  %v357 = vunpack.c.l.b16 %v27
  %v358 = vunpack.c.h.b16 %v27
  %v359 = vunpack.c.l.b16 %v28
  %v360 = vunpack.c.h.b16 %v28
  %v361 = vunpack.c.l.b16 %v29
  %v362 = vunpack.c.h.b16 %v29
  %v363 = vunpack.c.l.b16 %v30
  %v364 = vunpack.c.h.b16 %v30
  %v365 = vunpack.c.l.b16 %v31
  %v366 = vunpack.c.h.b16 %v31
  %v367 = vunpack.c.l.b16 %v32
  %v368 = vunpack.c.h.b16 %v32
  %v369 = vunpack.c.l.b16 %v33
  %v370 = vunpack.c.h.b16 %v33
  %v371 = vunpack.c.l.b16 %v34
  %v372 = vunpack.c.h.b16 %v34
  %v373 = vunpack.c.l.b16 %v35
  %v374 = vunpack.c.h.b16 %v35
  %v375 = vunpack.c.l.b16 %v36
  %v376 = vunpack.c.h.b16 %v36
  %v377 = vunpack.c.l.b16 %v37
  %v378 = vunpack.c.h.b16 %v37
  %v379 = vunpack.c.l.b16 %v38
  %v380 = vunpack.c.h.b16 %v38
  %v381 = vunpack.c.l.b16 %v39
  %v382 = vunpack.c.h.b16 %v39
  %v383 = vunpack.c.l.b16 %v40
  %v384 = vunpack.c.h.b16 %v40
  %v385 = vunpack.c.l.b16 %v41
  %v386 = vunpack.c.h.b16 %v41
  %v387 = vunpack.c.l.b16 %v42
  %v388 = vunpack.c.h.b16 %v42
  %v389 = vunpack.c.l.b16 %v43
  %v390 = vunpack.c.h.b16 %v43
  %v391 = vunpack.c.l.b16 %v44
  %v392 = vunpack.c.h.b16 %v44
  %v393 = vunpack.c.l.b16 %v45
  %v394 = vunpack.c.h.b16 %v45
  %v395 = vunpack.c.l.b16 %v46
  %v396 = vunpack.c.h.b16 %v46
  %v397 = vunpack.c.l.b16 %v47
  %v398 = vunpack.c.h.b16 %v47
  %v399 = vunpack.c.l.b16 %v48
  %v400 = vunpack.c.h.b16 %v48
  %v401 = vpack.c.b16 %v353, %v337
  %v402 = vpack.c.b16 %v354, %v338
  %v403 = vpack.c.b16 %v355, %v339
  %v404 = vpack.c.b16 %v356, %v340
  %v405 = vpack.c.b16 %v357, %v341
  %v406 = vpack.c.b16 %v358, %v342
  %v407 = vpack.c.b16 %v359, %v343
  %v408 = vpack.c.b16 %v360, %v344
  %v409 = vpack.c.b16 %v361, %v345
  %v410 = vpack.c.b16 %v362, %v346
  %v411 = vpack.c.b16 %v363, %v347
  %v412 = vpack.c.b16 %v364, %v348
  %v413 = vpack.c.b16 %v365, %v349
  %v414 = vpack.c.b16 %v366, %v350
  %v415 = vpack.c.b16 %v367, %v351
  %v416 = vpack.c.b16 %v368, %v352
  %v417 = vpack.c.b16 %v385, %v369
  %v418 = vpack.c.b16 %v386, %v370
  %v419 = vpack.c.b16 %v387, %v371
  %v420 = vpack.c.b16 %v388, %v372
  %v421 = vpack.c.b16 %v389, %v373
  %v422 = vpack.c.b16 %v390, %v374
  %v423 = vpack.c.b16 %v391, %v375
  %v424 = vpack.c.b16 %v392, %v376
  %v425 = vpack.c.b16 %v393, %v377
  %v426 = vpack.c.b16 %v394, %v378
  %v427 = vpack.c.b16 %v395, %v379
  %v428 = vpack.c.b16 %v396, %v380
  %v429 = vpack.c.b16 %v397, %v381
  %v430 = vpack.c.b16 %v398, %v382
  %v431 = vpack.c.b16 %v399, %v383
  %v432 = vpack.c.b16 %v400, %v384
  %v721 = vunpack.c.l.b16 %v49
  %v722 = vunpack.c.h.b16 %v49
  %v723 = vunpack.c.l.b16 %v50
  %v724 = vunpack.c.h.b16 %v50
  %v725 = vunpack.c.l.b16 %v51
  %v726 = vunpack.c.h.b16 %v51
  %v727 = vunpack.c.l.b16 %v52
  %v728 = vunpack.c.h.b16 %v52
  %v729 = vunpack.c.l.b16 %v53
  %v730 = vunpack.c.h.b16 %v53
  %v731 = vunpack.c.l.b16 %v54
  %v732 = vunpack.c.h.b16 %v54
  %v733 = vunpack.c.l.b16 %v55
  %v734 = vunpack.c.h.b16 %v55
  %v735 = vunpack.c.l.b16 %v56
  %v736 = vunpack.c.h.b16 %v56
  %v737 = vunpack.c.l.b16 %v57
  %v738 = vunpack.c.h.b16 %v57
  %v739 = vunpack.c.l.b16 %v58
  %v740 = vunpack.c.h.b16 %v58
  %v741 = vunpack.c.l.b16 %v59
  %v742 = vunpack.c.h.b16 %v59
  %v743 = vunpack.c.l.b16 %v60
  %v744 = vunpack.c.h.b16 %v60
  %v745 = vunpack.c.l.b16 %v61
  %v746 = vunpack.c.h.b16 %v61
  %v747 = vunpack.c.l.b16 %v62
  %v748 = vunpack.c.h.b16 %v62
  %v749 = vunpack.c.l.b16 %v63
  %v750 = vunpack.c.h.b16 %v63
  %v751 = vunpack.c.l.b16 %v64
  %v752 = vunpack.c.h.b16 %v64
  %v753 = vunpack.c.l.b16 %v65
  %v754 = vunpack.c.h.b16 %v65
  %v755 = vunpack.c.l.b16 %v66
  %v756 = vunpack.c.h.b16 %v66
  %v757 = vunpack.c.l.b16 %v67
  %v758 = vunpack.c.h.b16 %v67
  %v759 = vunpack.c.l.b16 %v68
  %v760 = vunpack.c.h.b16 %v68
  %v761 = vunpack.c.l.b16 %v69
  %v762 = vunpack.c.h.b16 %v69
  %v763 = vunpack.c.l.b16 %v70
  %v764 = vunpack.c.h.b16 %v70
  %v765 = vunpack.c.l.b16 %v71
  %v766 = vunpack.c.h.b16 %v71
  %v767 = vunpack.c.l.b16 %v72
  %v768 = vunpack.c.h.b16 %v72
  %v769 = vunpack.c.l.b16 %v73
  %v770 = vunpack.c.h.b16 %v73
  %v771 = vunpack.c.l.b16 %v74
  %v772 = vunpack.c.h.b16 %v74
  %v773 = vunpack.c.l.b16 %v75
  %v774 = vunpack.c.h.b16 %v75
  %v775 = vunpack.c.l.b16 %v76
  %v776 = vunpack.c.h.b16 %v76
  %v777 = vunpack.c.l.b16 %v77
  %v778 = vunpack.c.h.b16 %v77
  %v779 = vunpack.c.l.b16 %v78
  %v780 = vunpack.c.h.b16 %v78
  %v781 = vunpack.c.l.b16 %v79
  %v782 = vunpack.c.h.b16 %v79
  %v783 = vunpack.c.l.b16 %v80
  %v784 = vunpack.c.h.b16 %v80
  %v785 = vunpack.c.l.b16 %v81
  %v786 = vunpack.c.h.b16 %v81
  %v787 = vunpack.c.l.b16 %v82
  %v788 = vunpack.c.h.b16 %v82
  %v789 = vunpack.c.l.b16 %v83
  %v790 = vunpack.c.h.b16 %v83
  %v791 = vunpack.c.l.b16 %v84
  %v792 = vunpack.c.h.b16 %v84
  %v793 = vunpack.c.l.b16 %v85
  %v794 = vunpack.c.h.b16 %v85
  %v795 = vunpack.c.l.b16 %v86
  %v796 = vunpack.c.h.b16 %v86
  %v797 = vunpack.c.l.b16 %v87
  %v798 = vunpack.c.h.b16 %v87
  %v799 = vunpack.c.l.b16 %v88
  %v800 = vunpack.c.h.b16 %v88
  %v801 = vunpack.c.l.b16 %v89
  %v802 = vunpack.c.h.b16 %v89
  %v803 = vunpack.c.l.b16 %v90
  %v804 = vunpack.c.h.b16 %v90
  %v805 = vunpack.c.l.b16 %v91
  %v806 = vunpack.c.h.b16 %v91
  %v807 = vunpack.c.l.b16 %v92
  %v808 = vunpack.c.h.b16 %v92
  %v809 = vunpack.c.l.b16 %v93
  %v810 = vunpack.c.h.b16 %v93
  %v811 = vunpack.c.l.b16 %v94
  %v812 = vunpack.c.h.b16 %v94
  %v813 = vunpack.c.l.b16 %v95
  %v814 = vunpack.c.h.b16 %v95
  %v815 = vunpack.c.l.b16 %v96
  %v816 = vunpack.c.h.b16 %v96
  %v817 = vunpack.c.l.b16 %v97
  %v818 = vunpack.c.h.b16 %v97
  %v819 = vunpack.c.l.b16 %v98
  %v820 = vunpack.c.h.b16 %v98
  %v821 = vunpack.c.l.b16 %v99
  %v822 = vunpack.c.h.b16 %v99
  %v823 = vunpack.c.l.b16 %v100
  %v824 = vunpack.c.h.b16 %v100
  %v825 = vunpack.c.l.b16 %v101
  %v826 = vunpack.c.h.b16 %v101
  %v827 = vunpack.c.l.b16 %v102
  %v828 = vunpack.c.h.b16 %v102
  %v829 = vunpack.c.l.b16 %v103
  %v830 = vunpack.c.h.b16 %v103
  %v831 = vunpack.c.l.b16 %v104
  %v832 = vunpack.c.h.b16 %v104
  %v833 = vunpack.c.l.b16 %v105
  %v834 = vunpack.c.h.b16 %v105
  %v835 = vunpack.c.l.b16 %v106
  %v836 = vunpack.c.h.b16 %v106
  %v837 = vunpack.c.l.b16 %v107
  %v838 = vunpack.c.h.b16 %v107
  %v839 = vunpack.c.l.b16 %v108
  %v840 = vunpack.c.h.b16 %v108
  %v841 = vunpack.c.l.b16 %v109
  %v842 = vunpack.c.h.b16 %v109
  %v843 = vunpack.c.l.b16 %v110
  %v844 = vunpack.c.h.b16 %v110
  %v845 = vunpack.c.l.b16 %v111
  %v846 = vunpack.c.h.b16 %v111
  %v847 = vunpack.c.l.b16 %v112
  %v848 = vunpack.c.h.b16 %v112
  %v849 = vunpack.c.l.b16 %v113
  %v850 = vunpack.c.h.b16 %v113
  %v851 = vunpack.c.l.b16 %v114
  %v852 = vunpack.c.h.b16 %v114
  %v853 = vunpack.c.l.b16 %v115
  %v854 = vunpack.c.h.b16 %v115
  %v855 = vunpack.c.l.b16 %v116
  %v856 = vunpack.c.h.b16 %v116
  %v857 = vunpack.c.l.b16 %v117
  %v858 = vunpack.c.h.b16 %v117
  %v859 = vunpack.c.l.b16 %v118
  %v860 = vunpack.c.h.b16 %v118
  %v861 = vunpack.c.l.b16 %v119
  %v862 = vunpack.c.h.b16 %v119
  %v863 = vunpack.c.l.b16 %v120
  %v864 = vunpack.c.h.b16 %v120
  %v865 = vunpack.c.l.b16 %v121
  %v866 = vunpack.c.h.b16 %v121
  %v867 = vunpack.c.l.b16 %v122
  %v868 = vunpack.c.h.b16 %v122
  %v869 = vunpack.c.l.b16 %v123
  %v870 = vunpack.c.h.b16 %v123
  %v871 = vunpack.c.l.b16 %v124
  %v872 = vunpack.c.h.b16 %v124
  %v873 = vunpack.c.l.b16 %v125
  %v874 = vunpack.c.h.b16 %v125
  %v875 = vunpack.c.l.b16 %v126
  %v876 = vunpack.c.h.b16 %v126
  %v877 = vunpack.c.l.b16 %v127
  %v878 = vunpack.c.h.b16 %v127
  %v879 = vunpack.c.l.b16 %v128
  %v880 = vunpack.c.h.b16 %v128
  %v881 = vunpack.c.l.b16 %v129
  %v882 = vunpack.c.h.b16 %v129
  %v883 = vunpack.c.l.b16 %v130
  %v884 = vunpack.c.h.b16 %v130
  %v885 = vunpack.c.l.b16 %v131
  %v886 = vunpack.c.h.b16 %v131
  %v887 = vunpack.c.l.b16 %v132
  %v888 = vunpack.c.h.b16 %v132
  %v889 = vunpack.c.l.b16 %v133
  %v890 = vunpack.c.h.b16 %v133
  %v891 = vunpack.c.l.b16 %v134
  %v892 = vunpack.c.h.b16 %v134
  %v893 = vunpack.c.l.b16 %v135
  %v894 = vunpack.c.h.b16 %v135
  %v895 = vunpack.c.l.b16 %v136
  %v896 = vunpack.c.h.b16 %v136
  %v897 = vunpack.c.l.b16 %v137
  %v898 = vunpack.c.h.b16 %v137
  %v899 = vunpack.c.l.b16 %v138
  %v900 = vunpack.c.h.b16 %v138
  %v901 = vunpack.c.l.b16 %v139
  %v902 = vunpack.c.h.b16 %v139
  %v903 = vunpack.c.l.b16 %v140
  %v904 = vunpack.c.h.b16 %v140
  %v905 = vunpack.c.l.b16 %v141
  %v906 = vunpack.c.h.b16 %v141
  %v907 = vunpack.c.l.b16 %v142
  %v908 = vunpack.c.h.b16 %v142
  %v909 = vunpack.c.l.b16 %v143
  %v910 = vunpack.c.h.b16 %v143
  %v911 = vunpack.c.l.b16 %v144
  %v912 = vunpack.c.h.b16 %v144
  %v913 = vunpack.c.l.b16 %v145
  %v914 = vunpack.c.h.b16 %v145
  %v915 = vunpack.c.l.b16 %v146
  %v916 = vunpack.c.h.b16 %v146
  %v917 = vunpack.c.l.b16 %v147
  %v918 = vunpack.c.h.b16 %v147
  %v919 = vunpack.c.l.b16 %v148
  %v920 = vunpack.c.h.b16 %v148
  %v921 = vunpack.c.l.b16 %v149
  %v922 = vunpack.c.h.b16 %v149
  %v923 = vunpack.c.l.b16 %v150
  %v924 = vunpack.c.h.b16 %v150
  %v925 = vunpack.c.l.b16 %v151
  %v926 = vunpack.c.h.b16 %v151
  %v927 = vunpack.c.l.b16 %v152
  %v928 = vunpack.c.h.b16 %v152
  %v929 = vunpack.c.l.b16 %v153
  %v930 = vunpack.c.h.b16 %v153
  %v931 = vunpack.c.l.b16 %v154
  %v932 = vunpack.c.h.b16 %v154
  %v933 = vunpack.c.l.b16 %v155
  %v934 = vunpack.c.h.b16 %v155
  %v935 = vunpack.c.l.b16 %v156
  %v936 = vunpack.c.h.b16 %v156
  %v937 = vunpack.c.l.b16 %v157
  %v938 = vunpack.c.h.b16 %v157
  %v939 = vunpack.c.l.b16 %v158
  %v940 = vunpack.c.h.b16 %v158
  %v941 = vunpack.c.l.b16 %v159
  %v942 = vunpack.c.h.b16 %v159
  %v943 = vunpack.c.l.b16 %v160
  %v944 = vunpack.c.h.b16 %v160
  %v945 = vunpack.c.l.b16 %v161
  %v946 = vunpack.c.h.b16 %v161
  %v947 = vunpack.c.l.b16 %v162
  %v948 = vunpack.c.h.b16 %v162
  %v949 = vunpack.c.l.b16 %v163
  %v950 = vunpack.c.h.b16 %v163
  %v951 = vunpack.c.l.b16 %v164
  %v952 = vunpack.c.h.b16 %v164
  %v953 = vunpack.c.l.b16 %v165
  %v954 = vunpack.c.h.b16 %v165
  %v955 = vunpack.c.l.b16 %v166
  %v956 = vunpack.c.h.b16 %v166
  %v957 = vunpack.c.l.b16 %v167
  %v958 = vunpack.c.h.b16 %v167
  %v959 = vunpack.c.l.b16 %v168
  %v960 = vunpack.c.h.b16 %v168
  %v961 = vunpack.c.l.b16 %v169
  %v962 = vunpack.c.h.b16 %v169
  %v963 = vunpack.c.l.b16 %v170
  %v964 = vunpack.c.h.b16 %v170
  %v965 = vunpack.c.l.b16 %v171
  %v966 = vunpack.c.h.b16 %v171
  %v967 = vunpack.c.l.b16 %v172
  %v968 = vunpack.c.h.b16 %v172
  %v969 = vunpack.c.l.b16 %v173
  %v970 = vunpack.c.h.b16 %v173
  %v971 = vunpack.c.l.b16 %v174
  %v972 = vunpack.c.h.b16 %v174
  %v973 = vunpack.c.l.b16 %v175
  %v974 = vunpack.c.h.b16 %v175
  %v975 = vunpack.c.l.b16 %v176
  %v976 = vunpack.c.h.b16 %v176
  %v977 = vunpack.c.l.b16 %v177
  %v978 = vunpack.c.h.b16 %v177
  %v979 = vunpack.c.l.b16 %v178
  %v980 = vunpack.c.h.b16 %v178
  %v981 = vunpack.c.l.b16 %v179
  %v982 = vunpack.c.h.b16 %v179
  %v983 = vunpack.c.l.b16 %v180
  %v984 = vunpack.c.h.b16 %v180
  %v985 = vunpack.c.l.b16 %v181
  %v986 = vunpack.c.h.b16 %v181
  %v987 = vunpack.c.l.b16 %v182
  %v988 = vunpack.c.h.b16 %v182
  %v989 = vunpack.c.l.b16 %v183
  %v990 = vunpack.c.h.b16 %v183
  %v991 = vunpack.c.l.b16 %v184
  %v992 = vunpack.c.h.b16 %v184
  %v993 = vunpack.c.l.b16 %v185
  %v994 = vunpack.c.h.b16 %v185
  %v995 = vunpack.c.l.b16 %v186
  %v996 = vunpack.c.h.b16 %v186
  %v997 = vunpack.c.l.b16 %v187
  %v998 = vunpack.c.h.b16 %v187
  %v999 = vunpack.c.l.b16 %v188
  %v1000 = vunpack.c.h.b16 %v188
  %v1001 = vunpack.c.l.b16 %v189
  %v1002 = vunpack.c.h.b16 %v189
  %v1003 = vunpack.c.l.b16 %v190
  %v1004 = vunpack.c.h.b16 %v190
  %v1005 = vunpack.c.l.b16 %v191
  %v1006 = vunpack.c.h.b16 %v191
  %v1007 = vunpack.c.l.b16 %v192
  %v1008 = vunpack.c.h.b16 %v192
  %v1009 = vunpack.c.l.b16 %v193
  %v1010 = vunpack.c.h.b16 %v193
  %v1011 = vunpack.c.l.b16 %v194
  %v1012 = vunpack.c.h.b16 %v194
  %v1013 = vunpack.c.l.b16 %v195
  %v1014 = vunpack.c.h.b16 %v195
  %v1015 = vunpack.c.l.b16 %v196
  %v1016 = vunpack.c.h.b16 %v196
  %v1017 = vunpack.c.l.b16 %v197
  %v1018 = vunpack.c.h.b16 %v197
  %v1019 = vunpack.c.l.b16 %v198
  %v1020 = vunpack.c.h.b16 %v198
  %v1021 = vunpack.c.l.b16 %v199
  %v1022 = vunpack.c.h.b16 %v199
  %v1023 = vunpack.c.l.b16 %v200
  %v1024 = vunpack.c.h.b16 %v200
  %v1025 = vunpack.c.l.b16 %v201
  %v1026 = vunpack.c.h.b16 %v201
  %v1027 = vunpack.c.l.b16 %v202
  %v1028 = vunpack.c.h.b16 %v202
  %v1029 = vunpack.c.l.b16 %v203
  %v1030 = vunpack.c.h.b16 %v203
  %v1031 = vunpack.c.l.b16 %v204
  %v1032 = vunpack.c.h.b16 %v204
  %v1033 = vunpack.c.l.b16 %v205
  %v1034 = vunpack.c.h.b16 %v205
  %v1035 = vunpack.c.l.b16 %v206
  %v1036 = vunpack.c.h.b16 %v206
  %v1037 = vunpack.c.l.b16 %v207
  %v1038 = vunpack.c.h.b16 %v207
  %v1039 = vunpack.c.l.b16 %v208
  %v1040 = vunpack.c.h.b16 %v208
  %v1041 = vunpack.c.l.b16 %v209
  %v1042 = vunpack.c.h.b16 %v209
  %v1043 = vunpack.c.l.b16 %v210
  %v1044 = vunpack.c.h.b16 %v210
  %v1045 = vunpack.c.l.b16 %v211
  %v1046 = vunpack.c.h.b16 %v211
  %v1047 = vunpack.c.l.b16 %v212
  %v1048 = vunpack.c.h.b16 %v212
  %v1049 = vunpack.c.l.b16 %v213
  %v1050 = vunpack.c.h.b16 %v213
  %v1051 = vunpack.c.l.b16 %v214
  %v1052 = vunpack.c.h.b16 %v214
  %v1053 = vunpack.c.l.b16 %v215
  %v1054 = vunpack.c.h.b16 %v215
  %v1055 = vunpack.c.l.b16 %v216
  %v1056 = vunpack.c.h.b16 %v216
  %v1057 = vunpack.c.l.b16 %v217
  %v1058 = vunpack.c.h.b16 %v217
  %v1059 = vunpack.c.l.b16 %v218
  %v1060 = vunpack.c.h.b16 %v218
  %v1061 = vunpack.c.l.b16 %v219
  %v1062 = vunpack.c.h.b16 %v219
  %v1063 = vunpack.c.l.b16 %v220
  %v1064 = vunpack.c.h.b16 %v220
  %v1065 = vunpack.c.l.b16 %v221
  %v1066 = vunpack.c.h.b16 %v221
  %v1067 = vunpack.c.l.b16 %v222
  %v1068 = vunpack.c.h.b16 %v222
  %v1069 = vunpack.c.l.b16 %v223
  %v1070 = vunpack.c.h.b16 %v223
  %v1071 = vunpack.c.l.b16 %v224
  %v1072 = vunpack.c.h.b16 %v224
  %v1073 = vunpack.c.l.b16 %v225
  %v1074 = vunpack.c.h.b16 %v225
  %v1075 = vunpack.c.l.b16 %v226
  %v1076 = vunpack.c.h.b16 %v226
  %v1077 = vunpack.c.l.b16 %v227
  %v1078 = vunpack.c.h.b16 %v227
  %v1079 = vunpack.c.l.b16 %v228
  %v1080 = vunpack.c.h.b16 %v228
  %v1081 = vunpack.c.l.b16 %v229
  %v1082 = vunpack.c.h.b16 %v229
  %v1083 = vunpack.c.l.b16 %v230
  %v1084 = vunpack.c.h.b16 %v230
  %v1085 = vunpack.c.l.b16 %v231
  %v1086 = vunpack.c.h.b16 %v231
  %v1087 = vunpack.c.l.b16 %v232
  %v1088 = vunpack.c.h.b16 %v232
  %v1089 = vunpack.c.l.b16 %v233
  %v1090 = vunpack.c.h.b16 %v233
  %v1091 = vunpack.c.l.b16 %v234
  %v1092 = vunpack.c.h.b16 %v234
  %v1093 = vunpack.c.l.b16 %v235
  %v1094 = vunpack.c.h.b16 %v235
  %v1095 = vunpack.c.l.b16 %v236
  %v1096 = vunpack.c.h.b16 %v236
  %v1097 = vunpack.c.l.b16 %v237
  %v1098 = vunpack.c.h.b16 %v237
  %v1099 = vunpack.c.l.b16 %v238
  %v1100 = vunpack.c.h.b16 %v238
  %v1101 = vunpack.c.l.b16 %v239
  %v1102 = vunpack.c.h.b16 %v239
  %v1103 = vunpack.c.l.b16 %v240
  %v1104 = vunpack.c.h.b16 %v240
  %v1105 = vunpack.c.l.b16 %v241
  %v1106 = vunpack.c.h.b16 %v241
  %v1107 = vunpack.c.l.b16 %v242
  %v1108 = vunpack.c.h.b16 %v242
  %v1109 = vunpack.c.l.b16 %v243
  %v1110 = vunpack.c.h.b16 %v243
  %v1111 = vunpack.c.l.b16 %v244
  %v1112 = vunpack.c.h.b16 %v244
  %v1113 = vunpack.c.l.b16 %v245
  %v1114 = vunpack.c.h.b16 %v245
  %v1115 = vunpack.c.l.b16 %v246
  %v1116 = vunpack.c.h.b16 %v246
  %v1117 = vunpack.c.l.b16 %v247
  %v1118 = vunpack.c.h.b16 %v247
  %v1119 = vunpack.c.l.b16 %v248
  %v1120 = vunpack.c.h.b16 %v248
  %v1121 = vunpack.c.l.b16 %v249
  %v1122 = vunpack.c.h.b16 %v249
  %v1123 = vunpack.c.l.b16 %v250
  %v1124 = vunpack.c.h.b16 %v250
  %v1125 = vunpack.c.l.b16 %v251
  %v1126 = vunpack.c.h.b16 %v251
  %v1127 = vunpack.c.l.b16 %v252
  %v1128 = vunpack.c.h.b16 %v252
  %v1129 = vunpack.c.l.b16 %v253
  %v1130 = vunpack.c.h.b16 %v253
  %v1131 = vunpack.c.l.b16 %v254
  %v1132 = vunpack.c.h.b16 %v254
  %v1133 = vunpack.c.l.b16 %v255
  %v1134 = vunpack.c.h.b16 %v255
  %v1135 = vunpack.c.l.b16 %v256
  %v1136 = vunpack.c.h.b16 %v256
  %v1137 = vunpack.c.l.b16 %v257
  %v1138 = vunpack.c.h.b16 %v257
  %v1139 = vunpack.c.l.b16 %v258
  %v1140 = vunpack.c.h.b16 %v258
  %v1141 = vunpack.c.l.b16 %v259
  %v1142 = vunpack.c.h.b16 %v259
  %v1143 = vunpack.c.l.b16 %v260
  %v1144 = vunpack.c.h.b16 %v260
  %v1145 = vunpack.c.l.b16 %v261
  %v1146 = vunpack.c.h.b16 %v261
  %v1147 = vunpack.c.l.b16 %v262
  %v1148 = vunpack.c.h.b16 %v262
  %v1149 = vunpack.c.l.b16 %v263
  %v1150 = vunpack.c.h.b16 %v263
  %v1151 = vunpack.c.l.b16 %v264
  %v1152 = vunpack.c.h.b16 %v264
  %v1153 = vunpack.c.l.b16 %v265
  %v1154 = vunpack.c.h.b16 %v265
  %v1155 = vunpack.c.l.b16 %v266
  %v1156 = vunpack.c.h.b16 %v266
  %v1157 = vunpack.c.l.b16 %v267
  %v1158 = vunpack.c.h.b16 %v267
  %v1159 = vunpack.c.l.b16 %v268
  %v1160 = vunpack.c.h.b16 %v268
  %v1161 = vunpack.c.l.b16 %v269
  %v1162 = vunpack.c.h.b16 %v269
  %v1163 = vunpack.c.l.b16 %v270
  %v1164 = vunpack.c.h.b16 %v270
  %v1165 = vunpack.c.l.b16 %v271
  %v1166 = vunpack.c.h.b16 %v271
  %v1167 = vunpack.c.l.b16 %v272
  %v1168 = vunpack.c.h.b16 %v272
  %v1169 = vunpack.c.l.b16 %v273
  %v1170 = vunpack.c.h.b16 %v273
  %v1171 = vunpack.c.l.b16 %v274
  %v1172 = vunpack.c.h.b16 %v274
  %v1173 = vunpack.c.l.b16 %v275
  %v1174 = vunpack.c.h.b16 %v275
  %v1175 = vunpack.c.l.b16 %v276
  %v1176 = vunpack.c.h.b16 %v276
  %v1177 = vunpack.c.l.b16 %v277
  %v1178 = vunpack.c.h.b16 %v277
  %v1179 = vunpack.c.l.b16 %v278
  %v1180 = vunpack.c.h.b16 %v278
  %v1181 = vunpack.c.l.b16 %v279
  %v1182 = vunpack.c.h.b16 %v279
  %v1183 = vunpack.c.l.b16 %v280
  %v1184 = vunpack.c.h.b16 %v280
  %v1185 = vunpack.c.l.b16 %v281
  %v1186 = vunpack.c.h.b16 %v281
  %v1187 = vunpack.c.l.b16 %v282
  %v1188 = vunpack.c.h.b16 %v282
  %v1189 = vunpack.c.l.b16 %v283
  %v1190 = vunpack.c.h.b16 %v283
  %v1191 = vunpack.c.l.b16 %v284
  %v1192 = vunpack.c.h.b16 %v284
  %v1193 = vunpack.c.l.b16 %v285
  %v1194 = vunpack.c.h.b16 %v285
  %v1195 = vunpack.c.l.b16 %v286
  %v1196 = vunpack.c.h.b16 %v286
  %v1197 = vunpack.c.l.b16 %v287
  %v1198 = vunpack.c.h.b16 %v287
  %v1199 = vunpack.c.l.b16 %v288
  %v1200 = vunpack.c.h.b16 %v288
  %v1201 = vunpack.c.l.b16 %v289
  %v1202 = vunpack.c.h.b16 %v289
  %v1203 = vunpack.c.l.b16 %v290
  %v1204 = vunpack.c.h.b16 %v290
  %v1205 = vunpack.c.l.b16 %v291
  %v1206 = vunpack.c.h.b16 %v291
  %v1207 = vunpack.c.l.b16 %v292
  %v1208 = vunpack.c.h.b16 %v292
  %v1209 = vunpack.c.l.b16 %v293
  %v1210 = vunpack.c.h.b16 %v293
  %v1211 = vunpack.c.l.b16 %v294
  %v1212 = vunpack.c.h.b16 %v294
  %v1213 = vunpack.c.l.b16 %v295
  %v1214 = vunpack.c.h.b16 %v295
  %v1215 = vunpack.c.l.b16 %v296
  %v1216 = vunpack.c.h.b16 %v296
  %v1217 = vunpack.c.l.b16 %v297
  %v1218 = vunpack.c.h.b16 %v297
  %v1219 = vunpack.c.l.b16 %v298
  %v1220 = vunpack.c.h.b16 %v298
  %v1221 = vunpack.c.l.b16 %v299
  %v1222 = vunpack.c.h.b16 %v299
  %v1223 = vunpack.c.l.b16 %v300
  %v1224 = vunpack.c.h.b16 %v300
  %v1225 = vunpack.c.l.b16 %v301
  %v1226 = vunpack.c.h.b16 %v301
  %v1227 = vunpack.c.l.b16 %v302
  %v1228 = vunpack.c.h.b16 %v302
  %v1229 = vunpack.c.l.b16 %v303
  %v1230 = vunpack.c.h.b16 %v303
  %v1231 = vunpack.c.l.b16 %v304
  %v1232 = vunpack.c.h.b16 %v304
  %v1233 = vpack.c.b16 %v723, %v721
  %v1234 = vpack.c.b16 %v724, %v722
  %v1235 = vpack.c.b16 %v727, %v725
  %v1236 = vpack.c.b16 %v728, %v726
  %v1237 = vpack.c.b16 %v731, %v729
  %v1238 = vpack.c.b16 %v732, %v730
  %v1239 = vpack.c.b16 %v735, %v733
  %v1240 = vpack.c.b16 %v736, %v734
  %v1241 = vpack.c.b16 %v739, %v737
  %v1242 = vpack.c.b16 %v740, %v738
  %v1243 = vpack.c.b16 %v743, %v741
  %v1244 = vpack.c.b16 %v744, %v742
  %v1245 = vpack.c.b16 %v747, %v745
  %v1246 = vpack.c.b16 %v748, %v746
  %v1247 = vpack.c.b16 %v751, %v749
  %v1248 = vpack.c.b16 %v752, %v750
  %v1249 = vpack.c.b16 %v755, %v753
  %v1250 = vpack.c.b16 %v756, %v754
  %v1251 = vpack.c.b16 %v759, %v757
  %v1252 = vpack.c.b16 %v760, %v758
  %v1253 = vpack.c.b16 %v763, %v761
  %v1254 = vpack.c.b16 %v764, %v762
  %v1255 = vpack.c.b16 %v767, %v765
  %v1256 = vpack.c.b16 %v768, %v766
  %v1257 = vpack.c.b16 %v771, %v769
  %v1258 = vpack.c.b16 %v772, %v770
  %v1259 = vpack.c.b16 %v775, %v773
  %v1260 = vpack.c.b16 %v776, %v774
  %v1261 = vpack.c.b16 %v779, %v777
  %v1262 = vpack.c.b16 %v780, %v778
  %v1263 = vpack.c.b16 %v783, %v781
  %v1264 = vpack.c.b16 %v784, %v782
  %v1265 = vpack.c.b16 %v787, %v785
  %v1266 = vpack.c.b16 %v788, %v786
  %v1267 = vpack.c.b16 %v791, %v789
  %v1268 = vpack.c.b16 %v792, %v790
  %v1269 = vpack.c.b16 %v795, %v793
  %v1270 = vpack.c.b16 %v796, %v794
  %v1271 = vpack.c.b16 %v799, %v797
  %v1272 = vpack.c.b16 %v800, %v798
  %v1273 = vpack.c.b16 %v803, %v801
  %v1274 = vpack.c.b16 %v804, %v802
  %v1275 = vpack.c.b16 %v807, %v805
  %v1276 = vpack.c.b16 %v808, %v806
  %v1277 = vpack.c.b16 %v811, %v809
  %v1278 = vpack.c.b16 %v812, %v810
  %v1279 = vpack.c.b16 %v815, %v813
  %v1280 = vpack.c.b16 %v816, %v814
  %v1281 = vpack.c.b16 %v819, %v817
  %v1282 = vpack.c.b16 %v820, %v818
  %v1283 = vpack.c.b16 %v823, %v821
  %v1284 = vpack.c.b16 %v824, %v822
  %v1285 = vpack.c.b16 %v827, %v825
  %v1286 = vpack.c.b16 %v828, %v826
  %v1287 = vpack.c.b16 %v831, %v829
  %v1288 = vpack.c.b16 %v832, %v830
  %v1289 = vpack.c.b16 %v835, %v833
  %v1290 = vpack.c.b16 %v836, %v834
  %v1291 = vpack.c.b16 %v839, %v837
  %v1292 = vpack.c.b16 %v840, %v838
  %v1293 = vpack.c.b16 %v843, %v841
  %v1294 = vpack.c.b16 %v844, %v842
  %v1295 = vpack.c.b16 %v847, %v845
  %v1296 = vpack.c.b16 %v848, %v846
  %v1297 = vpack.c.b16 %v851, %v849
  %v1298 = vpack.c.b16 %v852, %v850
  %v1299 = vpack.c.b16 %v855, %v853
  %v1300 = vpack.c.b16 %v856, %v854
  %v1301 = vpack.c.b16 %v859, %v857
  %v1302 = vpack.c.b16 %v860, %v858
  %v1303 = vpack.c.b16 %v863, %v861
  %v1304 = vpack.c.b16 %v864, %v862
  %v1305 = vpack.c.b16 %v867, %v865
  %v1306 = vpack.c.b16 %v868, %v866
  %v1307 = vpack.c.b16 %v871, %v869
  %v1308 = vpack.c.b16 %v872, %v870
  %v1309 = vpack.c.b16 %v875, %v873
  %v1310 = vpack.c.b16 %v876, %v874
  %v1311 = vpack.c.b16 %v879, %v877
  %v1312 = vpack.c.b16 %v880, %v878
  %v1313 = vpack.c.b16 %v883, %v881
  %v1314 = vpack.c.b16 %v884, %v882
  %v1315 = vpack.c.b16 %v887, %v885
  %v1316 = vpack.c.b16 %v888, %v886
  %v1317 = vpack.c.b16 %v891, %v889
  %v1318 = vpack.c.b16 %v892, %v890
  %v1319 = vpack.c.b16 %v895, %v893
  %v1320 = vpack.c.b16 %v896, %v894
  %v1321 = vpack.c.b16 %v899, %v897
  %v1322 = vpack.c.b16 %v900, %v898
  %v1323 = vpack.c.b16 %v903, %v901
  %v1324 = vpack.c.b16 %v904, %v902
  %v1325 = vpack.c.b16 %v907, %v905
  %v1326 = vpack.c.b16 %v908, %v906
  %v1327 = vpack.c.b16 %v911, %v909
  %v1328 = vpack.c.b16 %v912, %v910
  %v1329 = vpack.c.b16 %v915, %v913
  %v1330 = vpack.c.b16 %v916, %v914
  %v1331 = vpack.c.b16 %v919, %v917
  %v1332 = vpack.c.b16 %v920, %v918
  %v1333 = vpack.c.b16 %v923, %v921
  %v1334 = vpack.c.b16 %v924, %v922
  %v1335 = vpack.c.b16 %v927, %v925
  %v1336 = vpack.c.b16 %v928, %v926
  %v1337 = vpack.c.b16 %v931, %v929
  %v1338 = vpack.c.b16 %v932, %v930
  %v1339 = vpack.c.b16 %v935, %v933
  %v1340 = vpack.c.b16 %v936, %v934
  %v1341 = vpack.c.b16 %v939, %v937
  %v1342 = vpack.c.b16 %v940, %v938
  %v1343 = vpack.c.b16 %v943, %v941
  %v1344 = vpack.c.b16 %v944, %v942
  %v1345 = vpack.c.b16 %v947, %v945
  %v1346 = vpack.c.b16 %v948, %v946
  %v1347 = vpack.c.b16 %v951, %v949
  %v1348 = vpack.c.b16 %v952, %v950
  %v1349 = vpack.c.b16 %v955, %v953
  %v1350 = vpack.c.b16 %v956, %v954
  %v1351 = vpack.c.b16 %v959, %v957
  %v1352 = vpack.c.b16 %v960, %v958
  %v1353 = vpack.c.b16 %v963, %v961
  %v1354 = vpack.c.b16 %v964, %v962
  %v1355 = vpack.c.b16 %v967, %v965
  %v1356 = vpack.c.b16 %v968, %v966
  %v1357 = vpack.c.b16 %v971, %v969
  %v1358 = vpack.c.b16 %v972, %v970
  %v1359 = vpack.c.b16 %v975, %v973
  %v1360 = vpack.c.b16 %v976, %v974
  %v1361 = vpack.c.b16 %v979, %v977
  %v1362 = vpack.c.b16 %v980, %v978
  %v1363 = vpack.c.b16 %v983, %v981
  %v1364 = vpack.c.b16 %v984, %v982
  %v1365 = vpack.c.b16 %v987, %v985
  %v1366 = vpack.c.b16 %v988, %v986
  %v1367 = vpack.c.b16 %v991, %v989
  %v1368 = vpack.c.b16 %v992, %v990
  %v1369 = vpack.c.b16 %v995, %v993
  %v1370 = vpack.c.b16 %v996, %v994
  %v1371 = vpack.c.b16 %v999, %v997
  %v1372 = vpack.c.b16 %v1000, %v998
  %v1373 = vpack.c.b16 %v1003, %v1001
  %v1374 = vpack.c.b16 %v1004, %v1002
  %v1375 = vpack.c.b16 %v1007, %v1005
  %v1376 = vpack.c.b16 %v1008, %v1006
  %v1377 = vpack.c.b16 %v1011, %v1009
  %v1378 = vpack.c.b16 %v1012, %v1010
  %v1379 = vpack.c.b16 %v1015, %v1013
  %v1380 = vpack.c.b16 %v1016, %v1014
  %v1381 = vpack.c.b16 %v1019, %v1017
  %v1382 = vpack.c.b16 %v1020, %v1018
  %v1383 = vpack.c.b16 %v1023, %v1021
  %v1384 = vpack.c.b16 %v1024, %v1022
  %v1385 = vpack.c.b16 %v1027, %v1025
  %v1386 = vpack.c.b16 %v1028, %v1026
  %v1387 = vpack.c.b16 %v1031, %v1029
  %v1388 = vpack.c.b16 %v1032, %v1030
  %v1389 = vpack.c.b16 %v1035, %v1033
  %v1390 = vpack.c.b16 %v1036, %v1034
  %v1391 = vpack.c.b16 %v1039, %v1037
  %v1392 = vpack.c.b16 %v1040, %v1038
  %v1393 = vpack.c.b16 %v1043, %v1041
  %v1394 = vpack.c.b16 %v1044, %v1042
  %v1395 = vpack.c.b16 %v1047, %v1045
  %v1396 = vpack.c.b16 %v1048, %v1046
  %v1397 = vpack.c.b16 %v1051, %v1049
  %v1398 = vpack.c.b16 %v1052, %v1050
  %v1399 = vpack.c.b16 %v1055, %v1053
  %v1400 = vpack.c.b16 %v1056, %v1054
  %v1401 = vpack.c.b16 %v1059, %v1057
  %v1402 = vpack.c.b16 %v1060, %v1058
  %v1403 = vpack.c.b16 %v1063, %v1061
  %v1404 = vpack.c.b16 %v1064, %v1062
  %v1405 = vpack.c.b16 %v1067, %v1065
  %v1406 = vpack.c.b16 %v1068, %v1066
  %v1407 = vpack.c.b16 %v1071, %v1069
  %v1408 = vpack.c.b16 %v1072, %v1070
  %v1409 = vpack.c.b16 %v1075, %v1073
  %v1410 = vpack.c.b16 %v1076, %v1074
  %v1411 = vpack.c.b16 %v1079, %v1077
  %v1412 = vpack.c.b16 %v1080, %v1078
  %v1413 = vpack.c.b16 %v1083, %v1081
  %v1414 = vpack.c.b16 %v1084, %v1082
  %v1415 = vpack.c.b16 %v1087, %v1085
  %v1416 = vpack.c.b16 %v1088, %v1086
  %v1417 = vpack.c.b16 %v1091, %v1089
  %v1418 = vpack.c.b16 %v1092, %v1090
  %v1419 = vpack.c.b16 %v1095, %v1093
  %v1420 = vpack.c.b16 %v1096, %v1094
  %v1421 = vpack.c.b16 %v1099, %v1097
  %v1422 = vpack.c.b16 %v1100, %v1098
  %v1423 = vpack.c.b16 %v1103, %v1101
  %v1424 = vpack.c.b16 %v1104, %v1102
  %v1425 = vpack.c.b16 %v1107, %v1105
  %v1426 = vpack.c.b16 %v1108, %v1106
  %v1427 = vpack.c.b16 %v1111, %v1109
  %v1428 = vpack.c.b16 %v1112, %v1110
  %v1429 = vpack.c.b16 %v1115, %v1113
  %v1430 = vpack.c.b16 %v1116, %v1114
  %v1431 = vpack.c.b16 %v1119, %v1117
  %v1432 = vpack.c.b16 %v1120, %v1118
  %v1433 = vpack.c.b16 %v1123, %v1121
  %v1434 = vpack.c.b16 %v1124, %v1122
  %v1435 = vpack.c.b16 %v1127, %v1125
  %v1436 = vpack.c.b16 %v1128, %v1126
  %v1437 = vpack.c.b16 %v1131, %v1129
  %v1438 = vpack.c.b16 %v1132, %v1130
  %v1439 = vpack.c.b16 %v1135, %v1133
  %v1440 = vpack.c.b16 %v1136, %v1134
  %v1441 = vpack.c.b16 %v1139, %v1137
  %v1442 = vpack.c.b16 %v1140, %v1138
  %v1443 = vpack.c.b16 %v1143, %v1141
  %v1444 = vpack.c.b16 %v1144, %v1142
  %v1445 = vpack.c.b16 %v1147, %v1145
  %v1446 = vpack.c.b16 %v1148, %v1146
  %v1447 = vpack.c.b16 %v1151, %v1149
  %v1448 = vpack.c.b16 %v1152, %v1150
  %v1449 = vpack.c.b16 %v1155, %v1153
  %v1450 = vpack.c.b16 %v1156, %v1154
  %v1451 = vpack.c.b16 %v1159, %v1157
  %v1452 = vpack.c.b16 %v1160, %v1158
  %v1453 = vpack.c.b16 %v1163, %v1161
  %v1454 = vpack.c.b16 %v1164, %v1162
  %v1455 = vpack.c.b16 %v1167, %v1165
  %v1456 = vpack.c.b16 %v1168, %v1166
  %v1457 = vpack.c.b16 %v1171, %v1169
  %v1458 = vpack.c.b16 %v1172, %v1170
  %v1459 = vpack.c.b16 %v1175, %v1173
  %v1460 = vpack.c.b16 %v1176, %v1174
  %v1461 = vpack.c.b16 %v1179, %v1177
  %v1462 = vpack.c.b16 %v1180, %v1178
  %v1463 = vpack.c.b16 %v1183, %v1181
  %v1464 = vpack.c.b16 %v1184, %v1182
  %v1465 = vpack.c.b16 %v1187, %v1185
  %v1466 = vpack.c.b16 %v1188, %v1186
  %v1467 = vpack.c.b16 %v1191, %v1189
  %v1468 = vpack.c.b16 %v1192, %v1190
  %v1469 = vpack.c.b16 %v1195, %v1193
  %v1470 = vpack.c.b16 %v1196, %v1194
  %v1471 = vpack.c.b16 %v1199, %v1197
  %v1472 = vpack.c.b16 %v1200, %v1198
  %v1473 = vpack.c.b16 %v1203, %v1201
  %v1474 = vpack.c.b16 %v1204, %v1202
  %v1475 = vpack.c.b16 %v1207, %v1205
  %v1476 = vpack.c.b16 %v1208, %v1206
  %v1477 = vpack.c.b16 %v1211, %v1209
  %v1478 = vpack.c.b16 %v1212, %v1210
  %v1479 = vpack.c.b16 %v1215, %v1213
  %v1480 = vpack.c.b16 %v1216, %v1214
  %v1481 = vpack.c.b16 %v1219, %v1217
  %v1482 = vpack.c.b16 %v1220, %v1218
  %v1483 = vpack.c.b16 %v1223, %v1221
  %v1484 = vpack.c.b16 %v1224, %v1222
  %v1485 = vpack.c.b16 %v1227, %v1225
  %v1486 = vpack.c.b16 %v1228, %v1226
  %v1487 = vpack.c.b16 %v1231, %v1229
  %v1488 = vpack.c.b16 %v1232, %v1230
  %1745 = vmatpush.bf16.msra.mxu0 %v1247
  %1746 = vmatpush.bf16.msra.mxu0 %v1245
  %1747 = vmatpush.bf16.msra.mxu0 %v1243
  %1748 = vmatpush.bf16.msra.mxu0 %v1241
  %1749 = vmatpush.bf16.msra.mxu0 %v1239
  %1750 = vmatpush.bf16.msra.mxu0 %v1237
  %1751 = vmatpush.bf16.msra.mxu0 %v1235
  %1752 = vmatpush.bf16.msra.mxu0 %v1233
  %1753 = vmatmul.bf16.gmra.mxu0 %v401
  %v1754 = vpop.f32.mrf.mxu0
  %v1755 = vadd.f32 0.0, %v1754
  %v1756 = vpop.f32.mrf.mxu0
  %v1757 = vadd.f32 0.0, %v1756
  %1758 = vmatmul.bf16.gmra.mxu0 %v417
  %v1759 = vpop.f32.mrf.mxu0
  %v1760 = vadd.f32 0.0, %v1759
  %v1761 = vpop.f32.mrf.mxu0
  %v1762 = vadd.f32 0.0, %v1761
  %1763 = vdwg.mxu0
  %1764 = vmatpush.bf16.msra.mxu0 %v1263
  %1765 = vmatpush.bf16.msra.mxu0 %v1261
  %1766 = vmatpush.bf16.msra.mxu0 %v1259
  %1767 = vmatpush.bf16.msra.mxu0 %v1257
  %1768 = vmatpush.bf16.msra.mxu0 %v1255
  %1769 = vmatpush.bf16.msra.mxu0 %v1253
  %1770 = vmatpush.bf16.msra.mxu0 %v1251
  %1771 = vmatpush.bf16.msra.mxu0 %v1249
  %1772 = vmatmul.bf16.gmra.mxu0 %v402
  %v1773 = vpop.f32.mrf.mxu0
  %v1774 = vadd.f32 %v1755, %v1773
  %v1775 = vpop.f32.mrf.mxu0
  %v1776 = vadd.f32 %v1757, %v1775
  %1777 = vmatmul.bf16.gmra.mxu0 %v418
  %v1778 = vpop.f32.mrf.mxu0
  %v1779 = vadd.f32 %v1760, %v1778
  %v1780 = vpop.f32.mrf.mxu0
  %v1781 = vadd.f32 %v1762, %v1780
  %1782 = vdwg.mxu0
  %1783 = vmatpush.bf16.msra.mxu0 %v1279
  %1784 = vmatpush.bf16.msra.mxu0 %v1277
  %1785 = vmatpush.bf16.msra.mxu0 %v1275
  %1786 = vmatpush.bf16.msra.mxu0 %v1273
  %1787 = vmatpush.bf16.msra.mxu0 %v1271
  %1788 = vmatpush.bf16.msra.mxu0 %v1269
  %1789 = vmatpush.bf16.msra.mxu0 %v1267
  %1790 = vmatpush.bf16.msra.mxu0 %v1265
  %1791 = vmatmul.bf16.gmra.mxu0 %v403
  %v1792 = vpop.f32.mrf.mxu0
  %v1793 = vadd.f32 %v1774, %v1792
  %v1794 = vpop.f32.mrf.mxu0
  %v1795 = vadd.f32 %v1776, %v1794
  %1796 = vmatmul.bf16.gmra.mxu0 %v419
  %v1797 = vpop.f32.mrf.mxu0
  %v1798 = vadd.f32 %v1779, %v1797
  %v1799 = vpop.f32.mrf.mxu0
  %v1800 = vadd.f32 %v1781, %v1799
  %1801 = vdwg.mxu0
  %1802 = vmatpush.bf16.msra.mxu0 %v1295
  %1803 = vmatpush.bf16.msra.mxu0 %v1293
  %1804 = vmatpush.bf16.msra.mxu0 %v1291
  %1805 = vmatpush.bf16.msra.mxu0 %v1289
  %1806 = vmatpush.bf16.msra.mxu0 %v1287
  %1807 = vmatpush.bf16.msra.mxu0 %v1285
  %1808 = vmatpush.bf16.msra.mxu0 %v1283
  %1809 = vmatpush.bf16.msra.mxu0 %v1281
  %1810 = vmatmul.bf16.gmra.mxu0 %v404
  %v1811 = vpop.f32.mrf.mxu0
  %v1812 = vadd.f32 %v1793, %v1811
  %v1813 = vpop.f32.mrf.mxu0
  %v1814 = vadd.f32 %v1795, %v1813
  %1815 = vmatmul.bf16.gmra.mxu0 %v420
  %v1816 = vpop.f32.mrf.mxu0
  %v1817 = vadd.f32 %v1798, %v1816
  %v1818 = vpop.f32.mrf.mxu0
  %v1819 = vadd.f32 %v1800, %v1818
  %1820 = vdwg.mxu0
  %1821 = vmatpush.bf16.msra.mxu0 %v1311
  %1822 = vmatpush.bf16.msra.mxu0 %v1309
  %1823 = vmatpush.bf16.msra.mxu0 %v1307
  %1824 = vmatpush.bf16.msra.mxu0 %v1305
  %1825 = vmatpush.bf16.msra.mxu0 %v1303
  %1826 = vmatpush.bf16.msra.mxu0 %v1301
  %1827 = vmatpush.bf16.msra.mxu0 %v1299
  %1828 = vmatpush.bf16.msra.mxu0 %v1297
  %1829 = vmatmul.bf16.gmra.mxu0 %v405
  %v1830 = vpop.f32.mrf.mxu0
  %v1831 = vadd.f32 %v1812, %v1830
  %v1832 = vpop.f32.mrf.mxu0
  %v1833 = vadd.f32 %v1814, %v1832
  %1834 = vmatmul.bf16.gmra.mxu0 %v421
  %v1835 = vpop.f32.mrf.mxu0
  %v1836 = vadd.f32 %v1817, %v1835
  %v1837 = vpop.f32.mrf.mxu0
  %v1838 = vadd.f32 %v1819, %v1837
  %1839 = vdwg.mxu0
  %1840 = vmatpush.bf16.msra.mxu0 %v1327
  %1841 = vmatpush.bf16.msra.mxu0 %v1325
  %1842 = vmatpush.bf16.msra.mxu0 %v1323
  %1843 = vmatpush.bf16.msra.mxu0 %v1321
  %1844 = vmatpush.bf16.msra.mxu0 %v1319
  %1845 = vmatpush.bf16.msra.mxu0 %v1317
  %1846 = vmatpush.bf16.msra.mxu0 %v1315
  %1847 = vmatpush.bf16.msra.mxu0 %v1313
  %1848 = vmatmul.bf16.gmra.mxu0 %v406
  %v1849 = vpop.f32.mrf.mxu0
  %v1850 = vadd.f32 %v1831, %v1849
  %v1851 = vpop.f32.mrf.mxu0
  %v1852 = vadd.f32 %v1833, %v1851
  %1853 = vmatmul.bf16.gmra.mxu0 %v422
  %v1854 = vpop.f32.mrf.mxu0
  %v1855 = vadd.f32 %v1836, %v1854
  %v1856 = vpop.f32.mrf.mxu0
  %v1857 = vadd.f32 %v1838, %v1856
  %1858 = vdwg.mxu0
  %1859 = vmatpush.bf16.msra.mxu0 %v1343
  %1860 = vmatpush.bf16.msra.mxu0 %v1341
  %1861 = vmatpush.bf16.msra.mxu0 %v1339
  %1862 = vmatpush.bf16.msra.mxu0 %v1337
  %1863 = vmatpush.bf16.msra.mxu0 %v1335
  %1864 = vmatpush.bf16.msra.mxu0 %v1333
  %1865 = vmatpush.bf16.msra.mxu0 %v1331
  %1866 = vmatpush.bf16.msra.mxu0 %v1329
  %1867 = vmatmul.bf16.gmra.mxu0 %v407
  %v1868 = vpop.f32.mrf.mxu0
  %v1869 = vadd.f32 %v1850, %v1868
  %v1870 = vpop.f32.mrf.mxu0
  %v1871 = vadd.f32 %v1852, %v1870
  %1872 = vmatmul.bf16.gmra.mxu0 %v423
  %v1873 = vpop.f32.mrf.mxu0
  %v1874 = vadd.f32 %v1855, %v1873
  %v1875 = vpop.f32.mrf.mxu0
  %v1876 = vadd.f32 %v1857, %v1875
  %1877 = vdwg.mxu0
  %1878 = vmatpush.bf16.msra.mxu0 %v1359
  %1879 = vmatpush.bf16.msra.mxu0 %v1357
  %1880 = vmatpush.bf16.msra.mxu0 %v1355
  %1881 = vmatpush.bf16.msra.mxu0 %v1353
  %1882 = vmatpush.bf16.msra.mxu0 %v1351
  %1883 = vmatpush.bf16.msra.mxu0 %v1349
  %1884 = vmatpush.bf16.msra.mxu0 %v1347
  %1885 = vmatpush.bf16.msra.mxu0 %v1345
  %1886 = vmatmul.bf16.gmra.mxu0 %v408
  %v1887 = vpop.f32.mrf.mxu0
  %v1888 = vadd.f32 %v1869, %v1887
  %v1889 = vpop.f32.mrf.mxu0
  %v1890 = vadd.f32 %v1871, %v1889
  %1891 = vmatmul.bf16.gmra.mxu0 %v424
  %v1892 = vpop.f32.mrf.mxu0
  %v1893 = vadd.f32 %v1874, %v1892
  %v1894 = vpop.f32.mrf.mxu0
  %v1895 = vadd.f32 %v1876, %v1894
  %1896 = vdwg.mxu0
  %1897 = vmatpush.bf16.msra.mxu0 %v1375
  %1898 = vmatpush.bf16.msra.mxu0 %v1373
  %1899 = vmatpush.bf16.msra.mxu0 %v1371
  %1900 = vmatpush.bf16.msra.mxu0 %v1369
  %1901 = vmatpush.bf16.msra.mxu0 %v1367
  %1902 = vmatpush.bf16.msra.mxu0 %v1365
  %1903 = vmatpush.bf16.msra.mxu0 %v1363
  %1904 = vmatpush.bf16.msra.mxu0 %v1361
  %1905 = vmatmul.bf16.gmra.mxu0 %v409
  %v1906 = vpop.f32.mrf.mxu0
  %v1907 = vadd.f32 %v1888, %v1906
  %v1908 = vpop.f32.mrf.mxu0
  %v1909 = vadd.f32 %v1890, %v1908
  %1910 = vmatmul.bf16.gmra.mxu0 %v425
  %v1911 = vpop.f32.mrf.mxu0
  %v1912 = vadd.f32 %v1893, %v1911
  %v1913 = vpop.f32.mrf.mxu0
  %v1914 = vadd.f32 %v1895, %v1913
  %1915 = vdwg.mxu0
  %1916 = vmatpush.bf16.msra.mxu0 %v1391
  %1917 = vmatpush.bf16.msra.mxu0 %v1389
  %1918 = vmatpush.bf16.msra.mxu0 %v1387
  %1919 = vmatpush.bf16.msra.mxu0 %v1385
  %1920 = vmatpush.bf16.msra.mxu0 %v1383
  %1921 = vmatpush.bf16.msra.mxu0 %v1381
  %1922 = vmatpush.bf16.msra.mxu0 %v1379
  %1923 = vmatpush.bf16.msra.mxu0 %v1377
  %1924 = vmatmul.bf16.gmra.mxu0 %v410
  %v1925 = vpop.f32.mrf.mxu0
  %v1926 = vadd.f32 %v1907, %v1925
  %v1927 = vpop.f32.mrf.mxu0
  %v1928 = vadd.f32 %v1909, %v1927
  %1929 = vmatmul.bf16.gmra.mxu0 %v426
  %v1930 = vpop.f32.mrf.mxu0
  %v1931 = vadd.f32 %v1912, %v1930
  %v1932 = vpop.f32.mrf.mxu0
  %v1933 = vadd.f32 %v1914, %v1932
  %1934 = vdwg.mxu0
  %1935 = vmatpush.bf16.msra.mxu0 %v1407
  %1936 = vmatpush.bf16.msra.mxu0 %v1405
  %1937 = vmatpush.bf16.msra.mxu0 %v1403
  %1938 = vmatpush.bf16.msra.mxu0 %v1401
  %1939 = vmatpush.bf16.msra.mxu0 %v1399
  %1940 = vmatpush.bf16.msra.mxu0 %v1397
  %1941 = vmatpush.bf16.msra.mxu0 %v1395
  %1942 = vmatpush.bf16.msra.mxu0 %v1393
  %1943 = vmatmul.bf16.gmra.mxu0 %v411
  %v1944 = vpop.f32.mrf.mxu0
  %v1945 = vadd.f32 %v1926, %v1944
  %v1946 = vpop.f32.mrf.mxu0
  %v1947 = vadd.f32 %v1928, %v1946
  %1948 = vmatmul.bf16.gmra.mxu0 %v427
  %v1949 = vpop.f32.mrf.mxu0
  %v1950 = vadd.f32 %v1931, %v1949
  %v1951 = vpop.f32.mrf.mxu0
  %v1952 = vadd.f32 %v1933, %v1951
  %1953 = vdwg.mxu0
  %1954 = vmatpush.bf16.msra.mxu0 %v1423
  %1955 = vmatpush.bf16.msra.mxu0 %v1421
  %1956 = vmatpush.bf16.msra.mxu0 %v1419
  %1957 = vmatpush.bf16.msra.mxu0 %v1417
  %1958 = vmatpush.bf16.msra.mxu0 %v1415
  %1959 = vmatpush.bf16.msra.mxu0 %v1413
  %1960 = vmatpush.bf16.msra.mxu0 %v1411
  %1961 = vmatpush.bf16.msra.mxu0 %v1409
  %1962 = vmatmul.bf16.gmra.mxu0 %v412
  %v1963 = vpop.f32.mrf.mxu0
  %v1964 = vadd.f32 %v1945, %v1963
  %v1965 = vpop.f32.mrf.mxu0
  %v1966 = vadd.f32 %v1947, %v1965
  %1967 = vmatmul.bf16.gmra.mxu0 %v428
  %v1968 = vpop.f32.mrf.mxu0
  %v1969 = vadd.f32 %v1950, %v1968
  %v1970 = vpop.f32.mrf.mxu0
  %v1971 = vadd.f32 %v1952, %v1970
  %1972 = vdwg.mxu0
  %1973 = vmatpush.bf16.msra.mxu0 %v1439
  %1974 = vmatpush.bf16.msra.mxu0 %v1437
  %1975 = vmatpush.bf16.msra.mxu0 %v1435
  %1976 = vmatpush.bf16.msra.mxu0 %v1433
  %1977 = vmatpush.bf16.msra.mxu0 %v1431
  %1978 = vmatpush.bf16.msra.mxu0 %v1429
  %1979 = vmatpush.bf16.msra.mxu0 %v1427
  %1980 = vmatpush.bf16.msra.mxu0 %v1425
  %1981 = vmatmul.bf16.gmra.mxu0 %v413
  %v1982 = vpop.f32.mrf.mxu0
  %v1983 = vadd.f32 %v1964, %v1982
  %v1984 = vpop.f32.mrf.mxu0
  %v1985 = vadd.f32 %v1966, %v1984
  %1986 = vmatmul.bf16.gmra.mxu0 %v429
  %v1987 = vpop.f32.mrf.mxu0
  %v1988 = vadd.f32 %v1969, %v1987
  %v1989 = vpop.f32.mrf.mxu0
  %v1990 = vadd.f32 %v1971, %v1989
  %1991 = vdwg.mxu0
  %1992 = vmatpush.bf16.msra.mxu0 %v1455
  %1993 = vmatpush.bf16.msra.mxu0 %v1453
  %1994 = vmatpush.bf16.msra.mxu0 %v1451
  %1995 = vmatpush.bf16.msra.mxu0 %v1449
  %1996 = vmatpush.bf16.msra.mxu0 %v1447
  %1997 = vmatpush.bf16.msra.mxu0 %v1445
  %1998 = vmatpush.bf16.msra.mxu0 %v1443
  %1999 = vmatpush.bf16.msra.mxu0 %v1441
  %2000 = vmatmul.bf16.gmra.mxu0 %v414
  %v2001 = vpop.f32.mrf.mxu0
  %v2002 = vadd.f32 %v1983, %v2001
  %v2003 = vpop.f32.mrf.mxu0
  %v2004 = vadd.f32 %v1985, %v2003
  %2005 = vmatmul.bf16.gmra.mxu0 %v430
  %v2006 = vpop.f32.mrf.mxu0
  %v2007 = vadd.f32 %v1988, %v2006
  %v2008 = vpop.f32.mrf.mxu0
  %v2009 = vadd.f32 %v1990, %v2008
  %2010 = vdwg.mxu0
  %2011 = vmatpush.bf16.msra.mxu0 %v1471
  %2012 = vmatpush.bf16.msra.mxu0 %v1469
  %2013 = vmatpush.bf16.msra.mxu0 %v1467
  %2014 = vmatpush.bf16.msra.mxu0 %v1465
  %2015 = vmatpush.bf16.msra.mxu0 %v1463
  %2016 = vmatpush.bf16.msra.mxu0 %v1461
  %2017 = vmatpush.bf16.msra.mxu0 %v1459
  %2018 = vmatpush.bf16.msra.mxu0 %v1457
  %2019 = vmatmul.bf16.gmra.mxu0 %v415
  %v2020 = vpop.f32.mrf.mxu0
  %v2021 = vadd.f32 %v2002, %v2020
  %v2022 = vpop.f32.mrf.mxu0
  %v2023 = vadd.f32 %v2004, %v2022
  %2024 = vmatmul.bf16.gmra.mxu0 %v431
  %v2025 = vpop.f32.mrf.mxu0
  %v2026 = vadd.f32 %v2007, %v2025
  %v2027 = vpop.f32.mrf.mxu0
  %v2028 = vadd.f32 %v2009, %v2027
  %2029 = vdwg.mxu0
  %2030 = vmatpush.bf16.msra.mxu0 %v1487
  %2031 = vmatpush.bf16.msra.mxu0 %v1485
  %2032 = vmatpush.bf16.msra.mxu0 %v1483
  %2033 = vmatpush.bf16.msra.mxu0 %v1481
  %2034 = vmatpush.bf16.msra.mxu0 %v1479
  %2035 = vmatpush.bf16.msra.mxu0 %v1477
  %2036 = vmatpush.bf16.msra.mxu0 %v1475
  %2037 = vmatpush.bf16.msra.mxu0 %v1473
  %2038 = vmatmul.bf16.gmra.mxu0 %v416
  %v2039 = vpop.f32.mrf.mxu0
  %v2040 = vadd.f32 %v2021, %v2039
  %v2041 = vpop.f32.mrf.mxu0
  %v2042 = vadd.f32 %v2023, %v2041
  %2043 = vmatmul.bf16.gmra.mxu0 %v432
  %v2044 = vpop.f32.mrf.mxu0
  %v2045 = vadd.f32 %v2026, %v2044
  %v2046 = vpop.f32.mrf.mxu0
  %v2047 = vadd.f32 %v2028, %v2046
  %2048 = vdwg.mxu0
  %2049 = vmatpush.bf16.msra.mxu0 %v1248
  %2050 = vmatpush.bf16.msra.mxu0 %v1246
  %2051 = vmatpush.bf16.msra.mxu0 %v1244
  %2052 = vmatpush.bf16.msra.mxu0 %v1242
  %2053 = vmatpush.bf16.msra.mxu0 %v1240
  %2054 = vmatpush.bf16.msra.mxu0 %v1238
  %2055 = vmatpush.bf16.msra.mxu0 %v1236
  %2056 = vmatpush.bf16.msra.mxu0 %v1234
  %2057 = vmatmul.bf16.gmra.mxu0 %v401
  %v2058 = vpop.f32.mrf.mxu0
  %v2059 = vadd.f32 0.0, %v2058
  %v2060 = vpop.f32.mrf.mxu0
  %v2061 = vadd.f32 0.0, %v2060
  %2062 = vmatmul.bf16.gmra.mxu0 %v417
  %v2063 = vpop.f32.mrf.mxu0
  %v2064 = vadd.f32 0.0, %v2063
  %v2065 = vpop.f32.mrf.mxu0
  %v2066 = vadd.f32 0.0, %v2065
  %2067 = vdwg.mxu0
  %2068 = vmatpush.bf16.msra.mxu0 %v1264
  %2069 = vmatpush.bf16.msra.mxu0 %v1262
  %2070 = vmatpush.bf16.msra.mxu0 %v1260
  %2071 = vmatpush.bf16.msra.mxu0 %v1258
  %2072 = vmatpush.bf16.msra.mxu0 %v1256
  %2073 = vmatpush.bf16.msra.mxu0 %v1254
  %2074 = vmatpush.bf16.msra.mxu0 %v1252
  %2075 = vmatpush.bf16.msra.mxu0 %v1250
  %2076 = vmatmul.bf16.gmra.mxu0 %v402
  %v2077 = vpop.f32.mrf.mxu0
  %v2078 = vadd.f32 %v2059, %v2077
  %v2079 = vpop.f32.mrf.mxu0
  %v2080 = vadd.f32 %v2061, %v2079
  %2081 = vmatmul.bf16.gmra.mxu0 %v418
  %v2082 = vpop.f32.mrf.mxu0
  %v2083 = vadd.f32 %v2064, %v2082
  %v2084 = vpop.f32.mrf.mxu0
  %v2085 = vadd.f32 %v2066, %v2084
  %2086 = vdwg.mxu0
  %2087 = vmatpush.bf16.msra.mxu0 %v1280
  %2088 = vmatpush.bf16.msra.mxu0 %v1278
  %2089 = vmatpush.bf16.msra.mxu0 %v1276
  %2090 = vmatpush.bf16.msra.mxu0 %v1274
  %2091 = vmatpush.bf16.msra.mxu0 %v1272
  %2092 = vmatpush.bf16.msra.mxu0 %v1270
  %2093 = vmatpush.bf16.msra.mxu0 %v1268
  %2094 = vmatpush.bf16.msra.mxu0 %v1266
  %2095 = vmatmul.bf16.gmra.mxu0 %v403
  %v2096 = vpop.f32.mrf.mxu0
  %v2097 = vadd.f32 %v2078, %v2096
  %v2098 = vpop.f32.mrf.mxu0
  %v2099 = vadd.f32 %v2080, %v2098
  %2100 = vmatmul.bf16.gmra.mxu0 %v419
  %v2101 = vpop.f32.mrf.mxu0
  %v2102 = vadd.f32 %v2083, %v2101
  %v2103 = vpop.f32.mrf.mxu0
  %v2104 = vadd.f32 %v2085, %v2103
  %2105 = vdwg.mxu0
  %2106 = vmatpush.bf16.msra.mxu0 %v1296
  %2107 = vmatpush.bf16.msra.mxu0 %v1294
  %2108 = vmatpush.bf16.msra.mxu0 %v1292
  %2109 = vmatpush.bf16.msra.mxu0 %v1290
  %2110 = vmatpush.bf16.msra.mxu0 %v1288
  %2111 = vmatpush.bf16.msra.mxu0 %v1286
  %2112 = vmatpush.bf16.msra.mxu0 %v1284
  %2113 = vmatpush.bf16.msra.mxu0 %v1282
  %2114 = vmatmul.bf16.gmra.mxu0 %v404
  %v2115 = vpop.f32.mrf.mxu0
  %v2116 = vadd.f32 %v2097, %v2115
  %v2117 = vpop.f32.mrf.mxu0
  %v2118 = vadd.f32 %v2099, %v2117
  %2119 = vmatmul.bf16.gmra.mxu0 %v420
  %v2120 = vpop.f32.mrf.mxu0
  %v2121 = vadd.f32 %v2102, %v2120
  %v2122 = vpop.f32.mrf.mxu0
  %v2123 = vadd.f32 %v2104, %v2122
  %2124 = vdwg.mxu0
  %2125 = vmatpush.bf16.msra.mxu0 %v1312
  %2126 = vmatpush.bf16.msra.mxu0 %v1310
  %2127 = vmatpush.bf16.msra.mxu0 %v1308
  %2128 = vmatpush.bf16.msra.mxu0 %v1306
  %2129 = vmatpush.bf16.msra.mxu0 %v1304
  %2130 = vmatpush.bf16.msra.mxu0 %v1302
  %2131 = vmatpush.bf16.msra.mxu0 %v1300
  %2132 = vmatpush.bf16.msra.mxu0 %v1298
  %2133 = vmatmul.bf16.gmra.mxu0 %v405
  %v2134 = vpop.f32.mrf.mxu0
  %v2135 = vadd.f32 %v2116, %v2134
  %v2136 = vpop.f32.mrf.mxu0
  %v2137 = vadd.f32 %v2118, %v2136
  %2138 = vmatmul.bf16.gmra.mxu0 %v421
  %v2139 = vpop.f32.mrf.mxu0
  %v2140 = vadd.f32 %v2121, %v2139
  %v2141 = vpop.f32.mrf.mxu0
  %v2142 = vadd.f32 %v2123, %v2141
  %2143 = vdwg.mxu0
  %2144 = vmatpush.bf16.msra.mxu0 %v1328
  %2145 = vmatpush.bf16.msra.mxu0 %v1326
  %2146 = vmatpush.bf16.msra.mxu0 %v1324
  %2147 = vmatpush.bf16.msra.mxu0 %v1322
  %2148 = vmatpush.bf16.msra.mxu0 %v1320
  %2149 = vmatpush.bf16.msra.mxu0 %v1318
  %2150 = vmatpush.bf16.msra.mxu0 %v1316
  %2151 = vmatpush.bf16.msra.mxu0 %v1314
  %2152 = vmatmul.bf16.gmra.mxu0 %v406
  %v2153 = vpop.f32.mrf.mxu0
  %v2154 = vadd.f32 %v2135, %v2153
  %v2155 = vpop.f32.mrf.mxu0
  %v2156 = vadd.f32 %v2137, %v2155
  %2157 = vmatmul.bf16.gmra.mxu0 %v422
  %v2158 = vpop.f32.mrf.mxu0
  %v2159 = vadd.f32 %v2140, %v2158
  %v2160 = vpop.f32.mrf.mxu0
  %v2161 = vadd.f32 %v2142, %v2160
  %2162 = vdwg.mxu0
  %2163 = vmatpush.bf16.msra.mxu0 %v1344
  %2164 = vmatpush.bf16.msra.mxu0 %v1342
  %2165 = vmatpush.bf16.msra.mxu0 %v1340
  %2166 = vmatpush.bf16.msra.mxu0 %v1338
  %2167 = vmatpush.bf16.msra.mxu0 %v1336
  %2168 = vmatpush.bf16.msra.mxu0 %v1334
  %2169 = vmatpush.bf16.msra.mxu0 %v1332
  %2170 = vmatpush.bf16.msra.mxu0 %v1330
  %2171 = vmatmul.bf16.gmra.mxu0 %v407
  %v2172 = vpop.f32.mrf.mxu0
  %v2173 = vadd.f32 %v2154, %v2172
  %v2174 = vpop.f32.mrf.mxu0
  %v2175 = vadd.f32 %v2156, %v2174
  %2176 = vmatmul.bf16.gmra.mxu0 %v423
  %v2177 = vpop.f32.mrf.mxu0
  %v2178 = vadd.f32 %v2159, %v2177
  %v2179 = vpop.f32.mrf.mxu0
  %v2180 = vadd.f32 %v2161, %v2179
  %2181 = vdwg.mxu0
  %2182 = vmatpush.bf16.msra.mxu0 %v1360
  %2183 = vmatpush.bf16.msra.mxu0 %v1358
  %2184 = vmatpush.bf16.msra.mxu0 %v1356
  %2185 = vmatpush.bf16.msra.mxu0 %v1354
  %2186 = vmatpush.bf16.msra.mxu0 %v1352
  %2187 = vmatpush.bf16.msra.mxu0 %v1350
  %2188 = vmatpush.bf16.msra.mxu0 %v1348
  %2189 = vmatpush.bf16.msra.mxu0 %v1346
  %2190 = vmatmul.bf16.gmra.mxu0 %v408
  %v2191 = vpop.f32.mrf.mxu0
  %v2192 = vadd.f32 %v2173, %v2191
  %v2193 = vpop.f32.mrf.mxu0
  %v2194 = vadd.f32 %v2175, %v2193
  %2195 = vmatmul.bf16.gmra.mxu0 %v424
  %v2196 = vpop.f32.mrf.mxu0
  %v2197 = vadd.f32 %v2178, %v2196
  %v2198 = vpop.f32.mrf.mxu0
  %v2199 = vadd.f32 %v2180, %v2198
  %2200 = vdwg.mxu0
  %2201 = vmatpush.bf16.msra.mxu0 %v1376
  %2202 = vmatpush.bf16.msra.mxu0 %v1374
  %2203 = vmatpush.bf16.msra.mxu0 %v1372
  %2204 = vmatpush.bf16.msra.mxu0 %v1370
  %2205 = vmatpush.bf16.msra.mxu0 %v1368
  %2206 = vmatpush.bf16.msra.mxu0 %v1366
  %2207 = vmatpush.bf16.msra.mxu0 %v1364
  %2208 = vmatpush.bf16.msra.mxu0 %v1362
  %2209 = vmatmul.bf16.gmra.mxu0 %v409
  %v2210 = vpop.f32.mrf.mxu0
  %v2211 = vadd.f32 %v2192, %v2210
  %v2212 = vpop.f32.mrf.mxu0
  %v2213 = vadd.f32 %v2194, %v2212
  %2214 = vmatmul.bf16.gmra.mxu0 %v425
  %v2215 = vpop.f32.mrf.mxu0
  %v2216 = vadd.f32 %v2197, %v2215
  %v2217 = vpop.f32.mrf.mxu0
  %v2218 = vadd.f32 %v2199, %v2217
  %2219 = vdwg.mxu0
  %2220 = vmatpush.bf16.msra.mxu0 %v1392
  %2221 = vmatpush.bf16.msra.mxu0 %v1390
  %2222 = vmatpush.bf16.msra.mxu0 %v1388
  %2223 = vmatpush.bf16.msra.mxu0 %v1386
  %2224 = vmatpush.bf16.msra.mxu0 %v1384
  %2225 = vmatpush.bf16.msra.mxu0 %v1382
  %2226 = vmatpush.bf16.msra.mxu0 %v1380
  %2227 = vmatpush.bf16.msra.mxu0 %v1378
  %2228 = vmatmul.bf16.gmra.mxu0 %v410
  %v2229 = vpop.f32.mrf.mxu0
  %v2230 = vadd.f32 %v2211, %v2229
  %v2231 = vpop.f32.mrf.mxu0
  %v2232 = vadd.f32 %v2213, %v2231
  %2233 = vmatmul.bf16.gmra.mxu0 %v426
  %v2234 = vpop.f32.mrf.mxu0
  %v2235 = vadd.f32 %v2216, %v2234
  %v2236 = vpop.f32.mrf.mxu0
  %v2237 = vadd.f32 %v2218, %v2236
  %2238 = vdwg.mxu0
  %2239 = vmatpush.bf16.msra.mxu0 %v1408
  %2240 = vmatpush.bf16.msra.mxu0 %v1406
  %2241 = vmatpush.bf16.msra.mxu0 %v1404
  %2242 = vmatpush.bf16.msra.mxu0 %v1402
  %2243 = vmatpush.bf16.msra.mxu0 %v1400
  %2244 = vmatpush.bf16.msra.mxu0 %v1398
  %2245 = vmatpush.bf16.msra.mxu0 %v1396
  %2246 = vmatpush.bf16.msra.mxu0 %v1394
  %2247 = vmatmul.bf16.gmra.mxu0 %v411
  %v2248 = vpop.f32.mrf.mxu0
  %v2249 = vadd.f32 %v2230, %v2248
  %v2250 = vpop.f32.mrf.mxu0
  %v2251 = vadd.f32 %v2232, %v2250
  %2252 = vmatmul.bf16.gmra.mxu0 %v427
  %v2253 = vpop.f32.mrf.mxu0
  %v2254 = vadd.f32 %v2235, %v2253
  %v2255 = vpop.f32.mrf.mxu0
  %v2256 = vadd.f32 %v2237, %v2255
  %2257 = vdwg.mxu0
  %2258 = vmatpush.bf16.msra.mxu0 %v1424
  %2259 = vmatpush.bf16.msra.mxu0 %v1422
  %2260 = vmatpush.bf16.msra.mxu0 %v1420
  %2261 = vmatpush.bf16.msra.mxu0 %v1418
  %2262 = vmatpush.bf16.msra.mxu0 %v1416
  %2263 = vmatpush.bf16.msra.mxu0 %v1414
  %2264 = vmatpush.bf16.msra.mxu0 %v1412
  %2265 = vmatpush.bf16.msra.mxu0 %v1410
  %2266 = vmatmul.bf16.gmra.mxu0 %v412
  %v2267 = vpop.f32.mrf.mxu0
  %v2268 = vadd.f32 %v2249, %v2267
  %v2269 = vpop.f32.mrf.mxu0
  %v2270 = vadd.f32 %v2251, %v2269
  %2271 = vmatmul.bf16.gmra.mxu0 %v428
  %v2272 = vpop.f32.mrf.mxu0
  %v2273 = vadd.f32 %v2254, %v2272
  %v2274 = vpop.f32.mrf.mxu0
  %v2275 = vadd.f32 %v2256, %v2274
  %2276 = vdwg.mxu0
  %2277 = vmatpush.bf16.msra.mxu0 %v1440
  %2278 = vmatpush.bf16.msra.mxu0 %v1438
  %2279 = vmatpush.bf16.msra.mxu0 %v1436
  %2280 = vmatpush.bf16.msra.mxu0 %v1434
  %2281 = vmatpush.bf16.msra.mxu0 %v1432
  %2282 = vmatpush.bf16.msra.mxu0 %v1430
  %2283 = vmatpush.bf16.msra.mxu0 %v1428
  %2284 = vmatpush.bf16.msra.mxu0 %v1426
  %2285 = vmatmul.bf16.gmra.mxu0 %v413
  %v2286 = vpop.f32.mrf.mxu0
  %v2287 = vadd.f32 %v2268, %v2286
  %v2288 = vpop.f32.mrf.mxu0
  %v2289 = vadd.f32 %v2270, %v2288
  %2290 = vmatmul.bf16.gmra.mxu0 %v429
  %v2291 = vpop.f32.mrf.mxu0
  %v2292 = vadd.f32 %v2273, %v2291
  %v2293 = vpop.f32.mrf.mxu0
  %v2294 = vadd.f32 %v2275, %v2293
  %2295 = vdwg.mxu0
  %2296 = vmatpush.bf16.msra.mxu0 %v1456
  %2297 = vmatpush.bf16.msra.mxu0 %v1454
  %2298 = vmatpush.bf16.msra.mxu0 %v1452
  %2299 = vmatpush.bf16.msra.mxu0 %v1450
  %2300 = vmatpush.bf16.msra.mxu0 %v1448
  %2301 = vmatpush.bf16.msra.mxu0 %v1446
  %2302 = vmatpush.bf16.msra.mxu0 %v1444
  %2303 = vmatpush.bf16.msra.mxu0 %v1442
  %2304 = vmatmul.bf16.gmra.mxu0 %v414
  %v2305 = vpop.f32.mrf.mxu0
  %v2306 = vadd.f32 %v2287, %v2305
  %v2307 = vpop.f32.mrf.mxu0
  %v2308 = vadd.f32 %v2289, %v2307
  %2309 = vmatmul.bf16.gmra.mxu0 %v430
  %v2310 = vpop.f32.mrf.mxu0
  %v2311 = vadd.f32 %v2292, %v2310
  %v2312 = vpop.f32.mrf.mxu0
  %v2313 = vadd.f32 %v2294, %v2312
  %2314 = vdwg.mxu0
  %2315 = vmatpush.bf16.msra.mxu0 %v1472
  %2316 = vmatpush.bf16.msra.mxu0 %v1470
  %2317 = vmatpush.bf16.msra.mxu0 %v1468
  %2318 = vmatpush.bf16.msra.mxu0 %v1466
  %2319 = vmatpush.bf16.msra.mxu0 %v1464
  %2320 = vmatpush.bf16.msra.mxu0 %v1462
  %2321 = vmatpush.bf16.msra.mxu0 %v1460
  %2322 = vmatpush.bf16.msra.mxu0 %v1458
  %2323 = vmatmul.bf16.gmra.mxu0 %v415
  %v2324 = vpop.f32.mrf.mxu0
  %v2325 = vadd.f32 %v2306, %v2324
  %v2326 = vpop.f32.mrf.mxu0
  %v2327 = vadd.f32 %v2308, %v2326
  %2328 = vmatmul.bf16.gmra.mxu0 %v431
  %v2329 = vpop.f32.mrf.mxu0
  %v2330 = vadd.f32 %v2311, %v2329
  %v2331 = vpop.f32.mrf.mxu0
  %v2332 = vadd.f32 %v2313, %v2331
  %2333 = vdwg.mxu0
  %2334 = vmatpush.bf16.msra.mxu0 %v1488
  %2335 = vmatpush.bf16.msra.mxu0 %v1486
  %2336 = vmatpush.bf16.msra.mxu0 %v1484
  %2337 = vmatpush.bf16.msra.mxu0 %v1482
  %2338 = vmatpush.bf16.msra.mxu0 %v1480
  %2339 = vmatpush.bf16.msra.mxu0 %v1478
  %2340 = vmatpush.bf16.msra.mxu0 %v1476
  %2341 = vmatpush.bf16.msra.mxu0 %v1474
  %2342 = vmatmul.bf16.gmra.mxu0 %v416
  %v2343 = vpop.f32.mrf.mxu0
  %v2344 = vadd.f32 %v2325, %v2343
  %v2345 = vpop.f32.mrf.mxu0
  %v2346 = vadd.f32 %v2327, %v2345
  %2347 = vmatmul.bf16.gmra.mxu0 %v432
  %v2348 = vpop.f32.mrf.mxu0
  %v2349 = vadd.f32 %v2330, %v2348
  %v2350 = vpop.f32.mrf.mxu0
  %v2351 = vadd.f32 %v2332, %v2350
  %2352 = vdwg.mxu0
  %v2353 = vadd.f32 %v2040, %v2042
  %v2354 = vadd.f32 %v2353, %v2045
  %v2355 = vadd.f32 %v2354, %v2047
  %v2356 = vrot.slane %v2355, 4
  %v2357 = vadd.f32 %v2355, %v2356
  %v2358 = vrot.slane %v2357, 2
  %v2359 = vadd.f32 %v2357, %v2358
  %v2360 = vrot.slane %v2359, 1
  %v2361 = vadd.f32 %v2359, %v2360
  %v2362 = vadd.f32 %v2344, %v2346
  %v2363 = vadd.f32 %v2362, %v2349
  %v2364 = vadd.f32 %v2363, %v2351
  %v2365 = vrot.slane %v2364, 4
  %v2366 = vadd.f32 %v2364, %v2365
  %v2367 = vrot.slane %v2366, 2
  %v2368 = vadd.f32 %v2366, %v2367
  %v2369 = vrot.slane %v2368, 1
  %v2370 = vadd.f32 %v2368, %v2369
  %v2371 = vrcp.pop 32.0
  %v2372 = vmul.f32 32.0, %v2371
  %v2373 = vsub.f32 1.0, %v2372
  %v2374 = vmul.f32 %v2371, %v2373
  %v2375 = vadd.f32 %v2371, %v2374
  %vm2376 = vweird.f32 %v2371
  %v2377 = vsel %vm2376, %v2371, %v2375
  %v2378 = vmul.f32 %v2361, %v2377
  %v2379 = vmul.f32 %v2370, %v2377
  %v2380 = vsub.f32 %v2040, %v2378
  %v2381 = vsub.f32 %v2344, %v2379
  %v2382 = vsub.f32 %v2042, %v2378
  %v2383 = vsub.f32 %v2346, %v2379
  %v2384 = vsub.f32 %v2045, %v2378
  %v2385 = vsub.f32 %v2349, %v2379
  %v2386 = vsub.f32 %v2047, %v2378
  %v2387 = vsub.f32 %v2351, %v2379
  %v2388 = vmul.f32 %v2380, %v2380
  %v2389 = vmul.f32 %v2381, %v2381
  %v2390 = vmul.f32 %v2382, %v2382
  %v2391 = vmul.f32 %v2383, %v2383
  %v2392 = vmul.f32 %v2384, %v2384
  %v2393 = vmul.f32 %v2385, %v2385
  %v2394 = vmul.f32 %v2386, %v2386
  %v2395 = vmul.f32 %v2387, %v2387
  %v2396 = vadd.f32 %v2388, %v2390
  %v2397 = vadd.f32 %v2396, %v2392
  %v2398 = vadd.f32 %v2397, %v2394
  %v2399 = vrot.slane %v2398, 4
  %v2400 = vadd.f32 %v2398, %v2399
  %v2401 = vrot.slane %v2400, 2
  %v2402 = vadd.f32 %v2400, %v2401
  %v2403 = vrot.slane %v2402, 1
  %v2404 = vadd.f32 %v2402, %v2403
  %v2405 = vadd.f32 %v2389, %v2391
  %v2406 = vadd.f32 %v2405, %v2393
  %v2407 = vadd.f32 %v2406, %v2395
  %v2408 = vrot.slane %v2407, 4
  %v2409 = vadd.f32 %v2407, %v2408
  %v2410 = vrot.slane %v2409, 2
  %v2411 = vadd.f32 %v2409, %v2410
  %v2412 = vrot.slane %v2411, 1
  %v2413 = vadd.f32 %v2411, %v2412
  %v2414 = vmul.f32 %v2404, %v2377
  %v2415 = vmul.f32 %v2413, %v2377
  %v2416 = vld [vmem:[%s2] sm:$0x3]
  %v2417 = vadd.f32 %v2414, 1e-05
  %v2418 = vadd.f32 %v2415, 1e-05
  %v2419 = vrsqrt.pop %v2417
  %v2420 = vmul.f32 %v2419, %v2417
  %v2421 = vmul.f32 %v2420, %v2419
  %v2422 = vmul.f32 0.5, %v2421
  %v2423 = vsub.f32 1.5, %v2422
  %v2424 = vmul.f32 %v2419, %v2423
  %vm2425 = vweird.f32 %v2417
  %vm2426 = vweird.f32 %v2419
  %vm2427 = vmor %vm2425, %vm2426
  %v2428 = vsel %vm2427, %v2419, %v2424
  %v2429 = vrsqrt.pop %v2418
  %v2430 = vmul.f32 %v2429, %v2418
  %v2431 = vmul.f32 %v2430, %v2429
  %v2432 = vmul.f32 0.5, %v2431
  %v2433 = vsub.f32 1.5, %v2432
  %v2434 = vmul.f32 %v2429, %v2433
  %vm2435 = vweird.f32 %v2418
  %vm2436 = vweird.f32 %v2429
  %vm2437 = vmor %vm2435, %vm2436
  %v2438 = vsel %vm2437, %v2429, %v2434
  %v2441 = vrot.slane %v2438, 7
  %vm2442 = vcmask 1040384
  %v2443 = vsel %vm2442, %v2428, %v2441
  %v2445 = vmul.f32 %v2416, %v2443
  %v2446 = vld [vmem:[%s3] sm:$0x3]
  %v2448 = vperm.slane %v2445, 0
  %v2449 = vperm.slane %v2445, 1
  %v2452 = vmul.f32 %v2378, %v2448
  %v2453 = vmul.f32 %v2379, %v2449
  %v2456 = vrot.slane %v2453, 7
  %v2457 = vsel %vm2442, %v2452, %v2456
  %v2459 = vsub.f32 %v2446, %v2457
  %v2460 = vmul.f32 %v2040, %v2448
  %v2461 = vmul.f32 %v2344, %v2449
  %v2462 = vmul.f32 %v2042, %v2448
  %v2463 = vmul.f32 %v2346, %v2449
  %v2464 = vmul.f32 %v2045, %v2448
  %v2465 = vmul.f32 %v2349, %v2449
  %v2466 = vmul.f32 %v2047, %v2448
  %v2467 = vmul.f32 %v2351, %v2449
  %v2469 = vperm.slane %v2459, 0
  %v2470 = vperm.slane %v2459, 1
  %v2473 = vadd.f32 %v2460, %v2469
  %v2474 = vadd.f32 %v2461, %v2470
  %v2475 = vadd.f32 %v2462, %v2469
  %v2476 = vadd.f32 %v2463, %v2470
  %v2477 = vadd.f32 %v2464, %v2469
  %v2478 = vadd.f32 %v2465, %v2470
  %v2479 = vadd.f32 %v2466, %v2469
  %v2480 = vadd.f32 %v2467, %v2470
  %v2481 = vmax.f32 %v2473, 0.0
  %v2482 = vmax.f32 %v2474, 0.0
  %v2483 = vmax.f32 %v2475, 0.0
  %v2484 = vmax.f32 %v2476, 0.0
  %v2485 = vmax.f32 %v2477, 0.0
  %v2486 = vmax.f32 %v2478, 0.0
  %v2487 = vmax.f32 %v2479, 0.0
  %v2488 = vmax.f32 %v2480, 0.0
  %v2489 = vpack.c.bf16 %v2482, %v2481
  %v2490 = vpack.c.bf16 %v2484, %v2483
  %v2491 = vpack.c.bf16 %v2486, %v2485
  %v2492 = vpack.c.bf16 %v2488, %v2487
  %2493 = vst [vmem:[%s4] sm:$0xff] %v2489
  %2494 = vst [vmem:[%s4 + $0x8] sm:$0xff] %v2490
  %2495 = vst [vmem:[%s4 + $0x10] sm:$0xff] %v2491
  %2496 = vst [vmem:[%s4 + $0x18] sm:$0xff] %v2492
  // Predicated region
  $region18: #{discriminator_forward.6} parent=0 // pred_check
    _
  $region19: #{discriminator_forward.6} parent=0 // pred_check_branch
    %2498 = sbr.rel (0) target = $region21
  $region20: #{discriminator_forward.6} parent=0 // pred_region
    _
  $region21: #{discriminator_forward.6} parent=0 // pred_fallthru
    _
  // Predicated region
  $region22: #{discriminator_forward.6} parent=0 // pred_check
    _
  $region23: #{discriminator_forward.6} parent=0 // pred_check_branch
    %2500 = sbr.rel (0) target = $region25
  $region24: #{discriminator_forward.6} parent=0 // pred_region
    _
  $region25: #{discriminator_forward.6} parent=0 // pred_fallthru
    _

// kernel: discriminator_forward.7
$region0: #{discriminator_forward.7}
  #allocation0 [shape = 'u32[]', space=smem, size = 0x4, offset = 0x4, fixed_abs, tag = 'smem constant byte address 0x4 - core index']
  #allocation1 [shape = 'u32[72,128]{1,0:T(1,128)}', space=vmem, size = 0x9000, scoped, tag = 'internal scratch']
  %s0 = inlined_call_operand.vmem [shape: bf16[8,4096], index: 0, kind: input, shape index: {}]
  %s1 = inlined_call_operand.vmem [shape: bf16[4096,512], index: 1, kind: input, shape index: {}]
  %s2 = inlined_call_operand.vmem [shape: f32[1,512], index: 2, kind: input, shape index: {}]
  %s3 = inlined_call_operand.vmem [shape: f32[1,512], index: 3, kind: input, shape index: {}]
  %s4 = inlined_call_operand.vmem [shape: f32[8,512], index: 4, kind: input, shape index: {}]
  %s5 = inlined_call_operand.vmem [shape: f32[8,1], index: 5, kind: output, shape index: {}]
  %s6 = sld [smem:[#allocation0]]
  $region30: #{discriminator_forward.7} parent=0
    _
  %s8 = ssub.s32 1, %s6
  %s9 = scalar_select 0, %s8, %s6
  // Predicated region
  $region2: #{discriminator_forward.7} parent=0 // pred_check
    _
  $region3: #{discriminator_forward.7} parent=0 // pred_check_branch
    %11 = sbr.rel (0) target = $region5
  $region4: #{discriminator_forward.7} parent=0 // pred_region
    _
  $region5: #{discriminator_forward.7} parent=0 // pred_fallthru
    _
  // Predicated region
  $region6: #{discriminator_forward.7} parent=0 // pred_check
    _
  $region7: #{discriminator_forward.7} parent=0 // pred_check_branch
    %13 = sbr.rel (0) target = $region9
  $region8: #{discriminator_forward.7} parent=0 // pred_region
    _
  $region9: #{discriminator_forward.7} parent=0 // pred_fallthru
    _
  // Predicated region
  $region10: #{discriminator_forward.7} parent=0 // pred_check
    _
  $region11: #{discriminator_forward.7} parent=0 // pred_check_branch
    %15 = sbr.rel (0) target = $region13
  $region12: #{discriminator_forward.7} parent=0 // pred_region
    _
  $region13: #{discriminator_forward.7} parent=0 // pred_fallthru
    _
  // Predicated region
  $region14: #{discriminator_forward.7} parent=0 // pred_check
    _
  $region15: #{discriminator_forward.7} parent=0 // pred_check_branch
    %17 = sbr.rel (0) target = $region17
  $region16: #{discriminator_forward.7} parent=0 // pred_region
    _
  $region17: #{discriminator_forward.7} parent=0 // pred_fallthru
    _
  // Predicated region
  $region18: #{discriminator_forward.7} parent=0 // pred_check
    _
  $region19: #{discriminator_forward.7} parent=0 // pred_check_branch
    %19 = sbr.rel (0) target = $region21
  $region20: #{discriminator_forward.7} parent=0 // pred_region
    _
  $region21: #{discriminator_forward.7} parent=0 // pred_fallthru
    _
  %v20 = vld [vmem:[%s0] sm:$0xff]
  %v21 = vld [vmem:[%s0 + $0x8] sm:$0xff]
  %v22 = vld [vmem:[%s0 + $0x10] sm:$0xff]
  %v23 = vld [vmem:[%s0 + $0x18] sm:$0xff]
  %v24 = vld [vmem:[%s0 + $0x20] sm:$0xff]
  %v25 = vld [vmem:[%s0 + $0x28] sm:$0xff]
  %v26 = vld [vmem:[%s0 + $0x30] sm:$0xff]
  %v27 = vld [vmem:[%s0 + $0x38] sm:$0xff]
  %v28 = vld [vmem:[%s0 + $0x40] sm:$0xff]
  %v29 = vld [vmem:[%s0 + $0x48] sm:$0xff]
  %v30 = vld [vmem:[%s0 + $0x50] sm:$0xff]
  %v31 = vld [vmem:[%s0 + $0x58] sm:$0xff]
  %v32 = vld [vmem:[%s0 + $0x60] sm:$0xff]
  %v33 = vld [vmem:[%s0 + $0x68] sm:$0xff]
  %v34 = vld [vmem:[%s0 + $0x70] sm:$0xff]
  %v35 = vld [vmem:[%s0 + $0x78] sm:$0xff]
  %v36 = vld [vmem:[%s1] sm:$0xff]
  %v37 = vld [vmem:[%s1 + $0x8] sm:$0xff]
  %v38 = vld [vmem:[%s1 + $0x10] sm:$0xff]
  %v39 = vld [vmem:[%s1 + $0x18] sm:$0xff]
  %v40 = vld [vmem:[%s1 + $0x20] sm:$0xff]
  %v41 = vld [vmem:[%s1 + $0x28] sm:$0xff]
  %v42 = vld [vmem:[%s1 + $0x30] sm:$0xff]
  %v43 = vld [vmem:[%s1 + $0x38] sm:$0xff]
  %v44 = vld [vmem:[%s1 + $0x40] sm:$0xff]
  %v45 = vld [vmem:[%s1 + $0x48] sm:$0xff]
  %v46 = vld [vmem:[%s1 + $0x50] sm:$0xff]
  %v47 = vld [vmem:[%s1 + $0x58] sm:$0xff]
  %v48 = vld [vmem:[%s1 + $0x60] sm:$0xff]
  %v49 = vld [vmem:[%s1 + $0x68] sm:$0xff]
  %v50 = vld [vmem:[%s1 + $0x70] sm:$0xff]
  %v51 = vld [vmem:[%s1 + $0x78] sm:$0xff]
  %v52 = vld [vmem:[%s1 + $0x80] sm:$0xff]
  %v53 = vld [vmem:[%s1 + $0x88] sm:$0xff]
  %v54 = vld [vmem:[%s1 + $0x90] sm:$0xff]
  %v55 = vld [vmem:[%s1 + $0x98] sm:$0xff]
  %v56 = vld [vmem:[%s1 + $0xa0] sm:$0xff]
  %v57 = vld [vmem:[%s1 + $0xa8] sm:$0xff]
  %v58 = vld [vmem:[%s1 + $0xb0] sm:$0xff]
  %v59 = vld [vmem:[%s1 + $0xb8] sm:$0xff]
  %v60 = vld [vmem:[%s1 + $0xc0] sm:$0xff]
  %v61 = vld [vmem:[%s1 + $0xc8] sm:$0xff]
  %v62 = vld [vmem:[%s1 + $0xd0] sm:$0xff]
  %v63 = vld [vmem:[%s1 + $0xd8] sm:$0xff]
  %v64 = vld [vmem:[%s1 + $0xe0] sm:$0xff]
  %v65 = vld [vmem:[%s1 + $0xe8] sm:$0xff]
  %v66 = vld [vmem:[%s1 + $0xf0] sm:$0xff]
  %v67 = vld [vmem:[%s1 + $0xf8] sm:$0xff]
  %v68 = vld [vmem:[%s1 + $0x100] sm:$0xff]
  %v69 = vld [vmem:[%s1 + $0x108] sm:$0xff]
  %v70 = vld [vmem:[%s1 + $0x110] sm:$0xff]
  %v71 = vld [vmem:[%s1 + $0x118] sm:$0xff]
  %v72 = vld [vmem:[%s1 + $0x120] sm:$0xff]
  %v73 = vld [vmem:[%s1 + $0x128] sm:$0xff]
  %v74 = vld [vmem:[%s1 + $0x130] sm:$0xff]
  %v75 = vld [vmem:[%s1 + $0x138] sm:$0xff]
  %v76 = vld [vmem:[%s1 + $0x140] sm:$0xff]
  %v77 = vld [vmem:[%s1 + $0x148] sm:$0xff]
  %v78 = vld [vmem:[%s1 + $0x150] sm:$0xff]
  %v79 = vld [vmem:[%s1 + $0x158] sm:$0xff]
  %v80 = vld [vmem:[%s1 + $0x160] sm:$0xff]
  %v81 = vld [vmem:[%s1 + $0x168] sm:$0xff]
  %v82 = vld [vmem:[%s1 + $0x170] sm:$0xff]
  %v83 = vld [vmem:[%s1 + $0x178] sm:$0xff]
  %v84 = vld [vmem:[%s1 + $0x180] sm:$0xff]
  %v85 = vld [vmem:[%s1 + $0x188] sm:$0xff]
  %v86 = vld [vmem:[%s1 + $0x190] sm:$0xff]
  %v87 = vld [vmem:[%s1 + $0x198] sm:$0xff]
  %v88 = vld [vmem:[%s1 + $0x1a0] sm:$0xff]
  %v89 = vld [vmem:[%s1 + $0x1a8] sm:$0xff]
  %v90 = vld [vmem:[%s1 + $0x1b0] sm:$0xff]
  %v91 = vld [vmem:[%s1 + $0x1b8] sm:$0xff]
  %v92 = vld [vmem:[%s1 + $0x1c0] sm:$0xff]
  %v93 = vld [vmem:[%s1 + $0x1c8] sm:$0xff]
  %v94 = vld [vmem:[%s1 + $0x1d0] sm:$0xff]
  %v95 = vld [vmem:[%s1 + $0x1d8] sm:$0xff]
  %v96 = vld [vmem:[%s1 + $0x1e0] sm:$0xff]
  %v97 = vld [vmem:[%s1 + $0x1e8] sm:$0xff]
  %v98 = vld [vmem:[%s1 + $0x1f0] sm:$0xff]
  %v99 = vld [vmem:[%s1 + $0x1f8] sm:$0xff]
  %v100 = vld [vmem:[%s1 + $0x200] sm:$0xff]
  %v101 = vld [vmem:[%s1 + $0x208] sm:$0xff]
  %v102 = vld [vmem:[%s1 + $0x210] sm:$0xff]
  %v103 = vld [vmem:[%s1 + $0x218] sm:$0xff]
  %v104 = vld [vmem:[%s1 + $0x220] sm:$0xff]
  %v105 = vld [vmem:[%s1 + $0x228] sm:$0xff]
  %v106 = vld [vmem:[%s1 + $0x230] sm:$0xff]
  %v107 = vld [vmem:[%s1 + $0x238] sm:$0xff]
  %v108 = vld [vmem:[%s1 + $0x240] sm:$0xff]
  %v109 = vld [vmem:[%s1 + $0x248] sm:$0xff]
  %v110 = vld [vmem:[%s1 + $0x250] sm:$0xff]
  %v111 = vld [vmem:[%s1 + $0x258] sm:$0xff]
  %v112 = vld [vmem:[%s1 + $0x260] sm:$0xff]
  %v113 = vld [vmem:[%s1 + $0x268] sm:$0xff]
  %v114 = vld [vmem:[%s1 + $0x270] sm:$0xff]
  %v115 = vld [vmem:[%s1 + $0x278] sm:$0xff]
  %v116 = vld [vmem:[%s1 + $0x280] sm:$0xff]
  %v117 = vld [vmem:[%s1 + $0x288] sm:$0xff]
  %v118 = vld [vmem:[%s1 + $0x290] sm:$0xff]
  %v119 = vld [vmem:[%s1 + $0x298] sm:$0xff]
  %v120 = vld [vmem:[%s1 + $0x2a0] sm:$0xff]
  %v121 = vld [vmem:[%s1 + $0x2a8] sm:$0xff]
  %v122 = vld [vmem:[%s1 + $0x2b0] sm:$0xff]
  %v123 = vld [vmem:[%s1 + $0x2b8] sm:$0xff]
  %v124 = vld [vmem:[%s1 + $0x2c0] sm:$0xff]
  %v125 = vld [vmem:[%s1 + $0x2c8] sm:$0xff]
  %v126 = vld [vmem:[%s1 + $0x2d0] sm:$0xff]
  %v127 = vld [vmem:[%s1 + $0x2d8] sm:$0xff]
  %v128 = vld [vmem:[%s1 + $0x2e0] sm:$0xff]
  %v129 = vld [vmem:[%s1 + $0x2e8] sm:$0xff]
  %v130 = vld [vmem:[%s1 + $0x2f0] sm:$0xff]
  %v131 = vld [vmem:[%s1 + $0x2f8] sm:$0xff]
  %v132 = vld [vmem:[%s1 + $0x300] sm:$0xff]
  %v133 = vld [vmem:[%s1 + $0x308] sm:$0xff]
  %v134 = vld [vmem:[%s1 + $0x310] sm:$0xff]
  %v135 = vld [vmem:[%s1 + $0x318] sm:$0xff]
  %v136 = vld [vmem:[%s1 + $0x320] sm:$0xff]
  %v137 = vld [vmem:[%s1 + $0x328] sm:$0xff]
  %v138 = vld [vmem:[%s1 + $0x330] sm:$0xff]
  %v139 = vld [vmem:[%s1 + $0x338] sm:$0xff]
  %v140 = vld [vmem:[%s1 + $0x340] sm:$0xff]
  %v141 = vld [vmem:[%s1 + $0x348] sm:$0xff]
  %v142 = vld [vmem:[%s1 + $0x350] sm:$0xff]
  %v143 = vld [vmem:[%s1 + $0x358] sm:$0xff]
  %v144 = vld [vmem:[%s1 + $0x360] sm:$0xff]
  %v145 = vld [vmem:[%s1 + $0x368] sm:$0xff]
  %v146 = vld [vmem:[%s1 + $0x370] sm:$0xff]
  %v147 = vld [vmem:[%s1 + $0x378] sm:$0xff]
  %v148 = vld [vmem:[%s1 + $0x380] sm:$0xff]
  %v149 = vld [vmem:[%s1 + $0x388] sm:$0xff]
  %v150 = vld [vmem:[%s1 + $0x390] sm:$0xff]
  %v151 = vld [vmem:[%s1 + $0x398] sm:$0xff]
  %v152 = vld [vmem:[%s1 + $0x3a0] sm:$0xff]
  %v153 = vld [vmem:[%s1 + $0x3a8] sm:$0xff]
  %v154 = vld [vmem:[%s1 + $0x3b0] sm:$0xff]
  %v155 = vld [vmem:[%s1 + $0x3b8] sm:$0xff]
  %v156 = vld [vmem:[%s1 + $0x3c0] sm:$0xff]
  %v157 = vld [vmem:[%s1 + $0x3c8] sm:$0xff]
  %v158 = vld [vmem:[%s1 + $0x3d0] sm:$0xff]
  %v159 = vld [vmem:[%s1 + $0x3d8] sm:$0xff]
  %v160 = vld [vmem:[%s1 + $0x3e0] sm:$0xff]
  %v161 = vld [vmem:[%s1 + $0x3e8] sm:$0xff]
  %v162 = vld [vmem:[%s1 + $0x3f0] sm:$0xff]
  %v163 = vld [vmem:[%s1 + $0x3f8] sm:$0xff]
  %v164 = vld [vmem:[%s1 + $0x400] sm:$0xff]
  %v165 = vld [vmem:[%s1 + $0x408] sm:$0xff]
  %v166 = vld [vmem:[%s1 + $0x410] sm:$0xff]
  %v167 = vld [vmem:[%s1 + $0x418] sm:$0xff]
  %v168 = vld [vmem:[%s1 + $0x420] sm:$0xff]
  %v169 = vld [vmem:[%s1 + $0x428] sm:$0xff]
  %v170 = vld [vmem:[%s1 + $0x430] sm:$0xff]
  %v171 = vld [vmem:[%s1 + $0x438] sm:$0xff]
  %v172 = vld [vmem:[%s1 + $0x440] sm:$0xff]
  %v173 = vld [vmem:[%s1 + $0x448] sm:$0xff]
  %v174 = vld [vmem:[%s1 + $0x450] sm:$0xff]
  %v175 = vld [vmem:[%s1 + $0x458] sm:$0xff]
  %v176 = vld [vmem:[%s1 + $0x460] sm:$0xff]
  %v177 = vld [vmem:[%s1 + $0x468] sm:$0xff]
  %v178 = vld [vmem:[%s1 + $0x470] sm:$0xff]
  %v179 = vld [vmem:[%s1 + $0x478] sm:$0xff]
  %v180 = vld [vmem:[%s1 + $0x480] sm:$0xff]
  %v181 = vld [vmem:[%s1 + $0x488] sm:$0xff]
  %v182 = vld [vmem:[%s1 + $0x490] sm:$0xff]
  %v183 = vld [vmem:[%s1 + $0x498] sm:$0xff]
  %v184 = vld [vmem:[%s1 + $0x4a0] sm:$0xff]
  %v185 = vld [vmem:[%s1 + $0x4a8] sm:$0xff]
  %v186 = vld [vmem:[%s1 + $0x4b0] sm:$0xff]
  %v187 = vld [vmem:[%s1 + $0x4b8] sm:$0xff]
  %v188 = vld [vmem:[%s1 + $0x4c0] sm:$0xff]
  %v189 = vld [vmem:[%s1 + $0x4c8] sm:$0xff]
  %v190 = vld [vmem:[%s1 + $0x4d0] sm:$0xff]
  %v191 = vld [vmem:[%s1 + $0x4d8] sm:$0xff]
  %v192 = vld [vmem:[%s1 + $0x4e0] sm:$0xff]
  %v193 = vld [vmem:[%s1 + $0x4e8] sm:$0xff]
  %v194 = vld [vmem:[%s1 + $0x4f0] sm:$0xff]
  %v195 = vld [vmem:[%s1 + $0x4f8] sm:$0xff]
  %v196 = vld [vmem:[%s1 + $0x500] sm:$0xff]
  %v197 = vld [vmem:[%s1 + $0x508] sm:$0xff]
  %v198 = vld [vmem:[%s1 + $0x510] sm:$0xff]
  %v199 = vld [vmem:[%s1 + $0x518] sm:$0xff]
  %v200 = vld [vmem:[%s1 + $0x520] sm:$0xff]
  %v201 = vld [vmem:[%s1 + $0x528] sm:$0xff]
  %v202 = vld [vmem:[%s1 + $0x530] sm:$0xff]
  %v203 = vld [vmem:[%s1 + $0x538] sm:$0xff]
  %v204 = vld [vmem:[%s1 + $0x540] sm:$0xff]
  %v205 = vld [vmem:[%s1 + $0x548] sm:$0xff]
  %v206 = vld [vmem:[%s1 + $0x550] sm:$0xff]
  %v207 = vld [vmem:[%s1 + $0x558] sm:$0xff]
  %v208 = vld [vmem:[%s1 + $0x560] sm:$0xff]
  %v209 = vld [vmem:[%s1 + $0x568] sm:$0xff]
  %v210 = vld [vmem:[%s1 + $0x570] sm:$0xff]
  %v211 = vld [vmem:[%s1 + $0x578] sm:$0xff]
  %v212 = vld [vmem:[%s1 + $0x580] sm:$0xff]
  %v213 = vld [vmem:[%s1 + $0x588] sm:$0xff]
  %v214 = vld [vmem:[%s1 + $0x590] sm:$0xff]
  %v215 = vld [vmem:[%s1 + $0x598] sm:$0xff]
  %v216 = vld [vmem:[%s1 + $0x5a0] sm:$0xff]
  %v217 = vld [vmem:[%s1 + $0x5a8] sm:$0xff]
  %v218 = vld [vmem:[%s1 + $0x5b0] sm:$0xff]
  %v219 = vld [vmem:[%s1 + $0x5b8] sm:$0xff]
  %v220 = vld [vmem:[%s1 + $0x5c0] sm:$0xff]
  %v221 = vld [vmem:[%s1 + $0x5c8] sm:$0xff]
  %v222 = vld [vmem:[%s1 + $0x5d0] sm:$0xff]
  %v223 = vld [vmem:[%s1 + $0x5d8] sm:$0xff]
  %v224 = vld [vmem:[%s1 + $0x5e0] sm:$0xff]
  %v225 = vld [vmem:[%s1 + $0x5e8] sm:$0xff]
  %v226 = vld [vmem:[%s1 + $0x5f0] sm:$0xff]
  %v227 = vld [vmem:[%s1 + $0x5f8] sm:$0xff]
  %v228 = vld [vmem:[%s1 + $0x600] sm:$0xff]
  %v229 = vld [vmem:[%s1 + $0x608] sm:$0xff]
  %v230 = vld [vmem:[%s1 + $0x610] sm:$0xff]
  %v231 = vld [vmem:[%s1 + $0x618] sm:$0xff]
  %v232 = vld [vmem:[%s1 + $0x620] sm:$0xff]
  %v233 = vld [vmem:[%s1 + $0x628] sm:$0xff]
  %v234 = vld [vmem:[%s1 + $0x630] sm:$0xff]
  %v235 = vld [vmem:[%s1 + $0x638] sm:$0xff]
  %v236 = vld [vmem:[%s1 + $0x640] sm:$0xff]
  %v237 = vld [vmem:[%s1 + $0x648] sm:$0xff]
  %v238 = vld [vmem:[%s1 + $0x650] sm:$0xff]
  %v239 = vld [vmem:[%s1 + $0x658] sm:$0xff]
  %v240 = vld [vmem:[%s1 + $0x660] sm:$0xff]
  %v241 = vld [vmem:[%s1 + $0x668] sm:$0xff]
  %v242 = vld [vmem:[%s1 + $0x670] sm:$0xff]
  %v243 = vld [vmem:[%s1 + $0x678] sm:$0xff]
  %v244 = vld [vmem:[%s1 + $0x680] sm:$0xff]
  %v245 = vld [vmem:[%s1 + $0x688] sm:$0xff]
  %v246 = vld [vmem:[%s1 + $0x690] sm:$0xff]
  %v247 = vld [vmem:[%s1 + $0x698] sm:$0xff]
  %v248 = vld [vmem:[%s1 + $0x6a0] sm:$0xff]
  %v249 = vld [vmem:[%s1 + $0x6a8] sm:$0xff]
  %v250 = vld [vmem:[%s1 + $0x6b0] sm:$0xff]
  %v251 = vld [vmem:[%s1 + $0x6b8] sm:$0xff]
  %v252 = vld [vmem:[%s1 + $0x6c0] sm:$0xff]
  %v253 = vld [vmem:[%s1 + $0x6c8] sm:$0xff]
  %v254 = vld [vmem:[%s1 + $0x6d0] sm:$0xff]
  %v255 = vld [vmem:[%s1 + $0x6d8] sm:$0xff]
  %v256 = vld [vmem:[%s1 + $0x6e0] sm:$0xff]
  %v257 = vld [vmem:[%s1 + $0x6e8] sm:$0xff]
  %v258 = vld [vmem:[%s1 + $0x6f0] sm:$0xff]
  %v259 = vld [vmem:[%s1 + $0x6f8] sm:$0xff]
  %v260 = vld [vmem:[%s1 + $0x700] sm:$0xff]
  %v261 = vld [vmem:[%s1 + $0x708] sm:$0xff]
  %v262 = vld [vmem:[%s1 + $0x710] sm:$0xff]
  %v263 = vld [vmem:[%s1 + $0x718] sm:$0xff]
  %v264 = vld [vmem:[%s1 + $0x720] sm:$0xff]
  %v265 = vld [vmem:[%s1 + $0x728] sm:$0xff]
  %v266 = vld [vmem:[%s1 + $0x730] sm:$0xff]
  %v267 = vld [vmem:[%s1 + $0x738] sm:$0xff]
  %v268 = vld [vmem:[%s1 + $0x740] sm:$0xff]
  %v269 = vld [vmem:[%s1 + $0x748] sm:$0xff]
  %v270 = vld [vmem:[%s1 + $0x750] sm:$0xff]
  %v271 = vld [vmem:[%s1 + $0x758] sm:$0xff]
  %v272 = vld [vmem:[%s1 + $0x760] sm:$0xff]
  %v273 = vld [vmem:[%s1 + $0x768] sm:$0xff]
  %v274 = vld [vmem:[%s1 + $0x770] sm:$0xff]
  %v275 = vld [vmem:[%s1 + $0x778] sm:$0xff]
  %v276 = vld [vmem:[%s1 + $0x780] sm:$0xff]
  %v277 = vld [vmem:[%s1 + $0x788] sm:$0xff]
  %v278 = vld [vmem:[%s1 + $0x790] sm:$0xff]
  %v279 = vld [vmem:[%s1 + $0x798] sm:$0xff]
  %v280 = vld [vmem:[%s1 + $0x7a0] sm:$0xff]
  %v281 = vld [vmem:[%s1 + $0x7a8] sm:$0xff]
  %v282 = vld [vmem:[%s1 + $0x7b0] sm:$0xff]
  %v283 = vld [vmem:[%s1 + $0x7b8] sm:$0xff]
  %v284 = vld [vmem:[%s1 + $0x7c0] sm:$0xff]
  %v285 = vld [vmem:[%s1 + $0x7c8] sm:$0xff]
  %v286 = vld [vmem:[%s1 + $0x7d0] sm:$0xff]
  %v287 = vld [vmem:[%s1 + $0x7d8] sm:$0xff]
  %v288 = vld [vmem:[%s1 + $0x7e0] sm:$0xff]
  %v289 = vld [vmem:[%s1 + $0x7e8] sm:$0xff]
  %v290 = vld [vmem:[%s1 + $0x7f0] sm:$0xff]
  %v291 = vld [vmem:[%s1 + $0x7f8] sm:$0xff]
  %v292 = vld [vmem:[%s1 + $0x800] sm:$0xff]
  %v293 = vld [vmem:[%s1 + $0x808] sm:$0xff]
  %v294 = vld [vmem:[%s1 + $0x810] sm:$0xff]
  %v295 = vld [vmem:[%s1 + $0x818] sm:$0xff]
  %v296 = vld [vmem:[%s1 + $0x820] sm:$0xff]
  %v297 = vld [vmem:[%s1 + $0x828] sm:$0xff]
  %v298 = vld [vmem:[%s1 + $0x830] sm:$0xff]
  %v299 = vld [vmem:[%s1 + $0x838] sm:$0xff]
  %v300 = vld [vmem:[%s1 + $0x840] sm:$0xff]
  %v301 = vld [vmem:[%s1 + $0x848] sm:$0xff]
  %v302 = vld [vmem:[%s1 + $0x850] sm:$0xff]
  %v303 = vld [vmem:[%s1 + $0x858] sm:$0xff]
  %v304 = vld [vmem:[%s1 + $0x860] sm:$0xff]
  %v305 = vld [vmem:[%s1 + $0x868] sm:$0xff]
  %v306 = vld [vmem:[%s1 + $0x870] sm:$0xff]
  %v307 = vld [vmem:[%s1 + $0x878] sm:$0xff]
  %v308 = vld [vmem:[%s1 + $0x880] sm:$0xff]
  %v309 = vld [vmem:[%s1 + $0x888] sm:$0xff]
  %v310 = vld [vmem:[%s1 + $0x890] sm:$0xff]
  %v311 = vld [vmem:[%s1 + $0x898] sm:$0xff]
  %v312 = vld [vmem:[%s1 + $0x8a0] sm:$0xff]
  %v313 = vld [vmem:[%s1 + $0x8a8] sm:$0xff]
  %v314 = vld [vmem:[%s1 + $0x8b0] sm:$0xff]
  %v315 = vld [vmem:[%s1 + $0x8b8] sm:$0xff]
  %v316 = vld [vmem:[%s1 + $0x8c0] sm:$0xff]
  %v317 = vld [vmem:[%s1 + $0x8c8] sm:$0xff]
  %v318 = vld [vmem:[%s1 + $0x8d0] sm:$0xff]
  %v319 = vld [vmem:[%s1 + $0x8d8] sm:$0xff]
  %v320 = vld [vmem:[%s1 + $0x8e0] sm:$0xff]
  %v321 = vld [vmem:[%s1 + $0x8e8] sm:$0xff]
  %v322 = vld [vmem:[%s1 + $0x8f0] sm:$0xff]
  %v323 = vld [vmem:[%s1 + $0x8f8] sm:$0xff]
  %v324 = vld [vmem:[%s1 + $0x900] sm:$0xff]
  %v325 = vld [vmem:[%s1 + $0x908] sm:$0xff]
  %v326 = vld [vmem:[%s1 + $0x910] sm:$0xff]
  %v327 = vld [vmem:[%s1 + $0x918] sm:$0xff]
  %v328 = vld [vmem:[%s1 + $0x920] sm:$0xff]
  %v329 = vld [vmem:[%s1 + $0x928] sm:$0xff]
  %v330 = vld [vmem:[%s1 + $0x930] sm:$0xff]
  %v331 = vld [vmem:[%s1 + $0x938] sm:$0xff]
  %v332 = vld [vmem:[%s1 + $0x940] sm:$0xff]
  %v333 = vld [vmem:[%s1 + $0x948] sm:$0xff]
  %v334 = vld [vmem:[%s1 + $0x950] sm:$0xff]
  %v335 = vld [vmem:[%s1 + $0x958] sm:$0xff]
  %v336 = vld [vmem:[%s1 + $0x960] sm:$0xff]
  %v337 = vld [vmem:[%s1 + $0x968] sm:$0xff]
  %v338 = vld [vmem:[%s1 + $0x970] sm:$0xff]
  %v339 = vld [vmem:[%s1 + $0x978] sm:$0xff]
  %v340 = vld [vmem:[%s1 + $0x980] sm:$0xff]
  %v341 = vld [vmem:[%s1 + $0x988] sm:$0xff]
  %v342 = vld [vmem:[%s1 + $0x990] sm:$0xff]
  %v343 = vld [vmem:[%s1 + $0x998] sm:$0xff]
  %v344 = vld [vmem:[%s1 + $0x9a0] sm:$0xff]
  %v345 = vld [vmem:[%s1 + $0x9a8] sm:$0xff]
  %v346 = vld [vmem:[%s1 + $0x9b0] sm:$0xff]
  %v347 = vld [vmem:[%s1 + $0x9b8] sm:$0xff]
  %v348 = vld [vmem:[%s1 + $0x9c0] sm:$0xff]
  %v349 = vld [vmem:[%s1 + $0x9c8] sm:$0xff]
  %v350 = vld [vmem:[%s1 + $0x9d0] sm:$0xff]
  %v351 = vld [vmem:[%s1 + $0x9d8] sm:$0xff]
  %v352 = vld [vmem:[%s1 + $0x9e0] sm:$0xff]
  %v353 = vld [vmem:[%s1 + $0x9e8] sm:$0xff]
  %v354 = vld [vmem:[%s1 + $0x9f0] sm:$0xff]
  %v355 = vld [vmem:[%s1 + $0x9f8] sm:$0xff]
  %v356 = vld [vmem:[%s1 + $0xa00] sm:$0xff]
  %v357 = vld [vmem:[%s1 + $0xa08] sm:$0xff]
  %v358 = vld [vmem:[%s1 + $0xa10] sm:$0xff]
  %v359 = vld [vmem:[%s1 + $0xa18] sm:$0xff]
  %v360 = vld [vmem:[%s1 + $0xa20] sm:$0xff]
  %v361 = vld [vmem:[%s1 + $0xa28] sm:$0xff]
  %v362 = vld [vmem:[%s1 + $0xa30] sm:$0xff]
  %v363 = vld [vmem:[%s1 + $0xa38] sm:$0xff]
  %v364 = vld [vmem:[%s1 + $0xa40] sm:$0xff]
  %v365 = vld [vmem:[%s1 + $0xa48] sm:$0xff]
  %v366 = vld [vmem:[%s1 + $0xa50] sm:$0xff]
  %v367 = vld [vmem:[%s1 + $0xa58] sm:$0xff]
  %v368 = vld [vmem:[%s1 + $0xa60] sm:$0xff]
  %v369 = vld [vmem:[%s1 + $0xa68] sm:$0xff]
  %v370 = vld [vmem:[%s1 + $0xa70] sm:$0xff]
  %v371 = vld [vmem:[%s1 + $0xa78] sm:$0xff]
  %v372 = vld [vmem:[%s1 + $0xa80] sm:$0xff]
  %v373 = vld [vmem:[%s1 + $0xa88] sm:$0xff]
  %v374 = vld [vmem:[%s1 + $0xa90] sm:$0xff]
  %v375 = vld [vmem:[%s1 + $0xa98] sm:$0xff]
  %v376 = vld [vmem:[%s1 + $0xaa0] sm:$0xff]
  %v377 = vld [vmem:[%s1 + $0xaa8] sm:$0xff]
  %v378 = vld [vmem:[%s1 + $0xab0] sm:$0xff]
  %v379 = vld [vmem:[%s1 + $0xab8] sm:$0xff]
  %v380 = vld [vmem:[%s1 + $0xac0] sm:$0xff]
  %v381 = vld [vmem:[%s1 + $0xac8] sm:$0xff]
  %v382 = vld [vmem:[%s1 + $0xad0] sm:$0xff]
  %v383 = vld [vmem:[%s1 + $0xad8] sm:$0xff]
  %v384 = vld [vmem:[%s1 + $0xae0] sm:$0xff]
  %v385 = vld [vmem:[%s1 + $0xae8] sm:$0xff]
  %v386 = vld [vmem:[%s1 + $0xaf0] sm:$0xff]
  %v387 = vld [vmem:[%s1 + $0xaf8] sm:$0xff]
  %v388 = vld [vmem:[%s1 + $0xb00] sm:$0xff]
  %v389 = vld [vmem:[%s1 + $0xb08] sm:$0xff]
  %v390 = vld [vmem:[%s1 + $0xb10] sm:$0xff]
  %v391 = vld [vmem:[%s1 + $0xb18] sm:$0xff]
  %v392 = vld [vmem:[%s1 + $0xb20] sm:$0xff]
  %v393 = vld [vmem:[%s1 + $0xb28] sm:$0xff]
  %v394 = vld [vmem:[%s1 + $0xb30] sm:$0xff]
  %v395 = vld [vmem:[%s1 + $0xb38] sm:$0xff]
  %v396 = vld [vmem:[%s1 + $0xb40] sm:$0xff]
  %v397 = vld [vmem:[%s1 + $0xb48] sm:$0xff]
  %v398 = vld [vmem:[%s1 + $0xb50] sm:$0xff]
  %v399 = vld [vmem:[%s1 + $0xb58] sm:$0xff]
  %v400 = vld [vmem:[%s1 + $0xb60] sm:$0xff]
  %v401 = vld [vmem:[%s1 + $0xb68] sm:$0xff]
  %v402 = vld [vmem:[%s1 + $0xb70] sm:$0xff]
  %v403 = vld [vmem:[%s1 + $0xb78] sm:$0xff]
  %v404 = vld [vmem:[%s1 + $0xb80] sm:$0xff]
  %v405 = vld [vmem:[%s1 + $0xb88] sm:$0xff]
  %v406 = vld [vmem:[%s1 + $0xb90] sm:$0xff]
  %v407 = vld [vmem:[%s1 + $0xb98] sm:$0xff]
  %v408 = vld [vmem:[%s1 + $0xba0] sm:$0xff]
  %v409 = vld [vmem:[%s1 + $0xba8] sm:$0xff]
  %v410 = vld [vmem:[%s1 + $0xbb0] sm:$0xff]
  %v411 = vld [vmem:[%s1 + $0xbb8] sm:$0xff]
  %v412 = vld [vmem:[%s1 + $0xbc0] sm:$0xff]
  %v413 = vld [vmem:[%s1 + $0xbc8] sm:$0xff]
  %v414 = vld [vmem:[%s1 + $0xbd0] sm:$0xff]
  %v415 = vld [vmem:[%s1 + $0xbd8] sm:$0xff]
  %v416 = vld [vmem:[%s1 + $0xbe0] sm:$0xff]
  %v417 = vld [vmem:[%s1 + $0xbe8] sm:$0xff]
  %v418 = vld [vmem:[%s1 + $0xbf0] sm:$0xff]
  %v419 = vld [vmem:[%s1 + $0xbf8] sm:$0xff]
  %v420 = vld [vmem:[%s1 + $0xc00] sm:$0xff]
  %v421 = vld [vmem:[%s1 + $0xc08] sm:$0xff]
  %v422 = vld [vmem:[%s1 + $0xc10] sm:$0xff]
  %v423 = vld [vmem:[%s1 + $0xc18] sm:$0xff]
  %v424 = vld [vmem:[%s1 + $0xc20] sm:$0xff]
  %v425 = vld [vmem:[%s1 + $0xc28] sm:$0xff]
  %v426 = vld [vmem:[%s1 + $0xc30] sm:$0xff]
  %v427 = vld [vmem:[%s1 + $0xc38] sm:$0xff]
  %v428 = vld [vmem:[%s1 + $0xc40] sm:$0xff]
  %v429 = vld [vmem:[%s1 + $0xc48] sm:$0xff]
  %v430 = vld [vmem:[%s1 + $0xc50] sm:$0xff]
  %v431 = vld [vmem:[%s1 + $0xc58] sm:$0xff]
  %v432 = vld [vmem:[%s1 + $0xc60] sm:$0xff]
  %v433 = vld [vmem:[%s1 + $0xc68] sm:$0xff]
  %v434 = vld [vmem:[%s1 + $0xc70] sm:$0xff]
  %v435 = vld [vmem:[%s1 + $0xc78] sm:$0xff]
  %v436 = vld [vmem:[%s1 + $0xc80] sm:$0xff]
  %v437 = vld [vmem:[%s1 + $0xc88] sm:$0xff]
  %v438 = vld [vmem:[%s1 + $0xc90] sm:$0xff]
  %v439 = vld [vmem:[%s1 + $0xc98] sm:$0xff]
  %v440 = vld [vmem:[%s1 + $0xca0] sm:$0xff]
  %v441 = vld [vmem:[%s1 + $0xca8] sm:$0xff]
  %v442 = vld [vmem:[%s1 + $0xcb0] sm:$0xff]
  %v443 = vld [vmem:[%s1 + $0xcb8] sm:$0xff]
  %v444 = vld [vmem:[%s1 + $0xcc0] sm:$0xff]
  %v445 = vld [vmem:[%s1 + $0xcc8] sm:$0xff]
  %v446 = vld [vmem:[%s1 + $0xcd0] sm:$0xff]
  %v447 = vld [vmem:[%s1 + $0xcd8] sm:$0xff]
  %v448 = vld [vmem:[%s1 + $0xce0] sm:$0xff]
  %v449 = vld [vmem:[%s1 + $0xce8] sm:$0xff]
  %v450 = vld [vmem:[%s1 + $0xcf0] sm:$0xff]
  %v451 = vld [vmem:[%s1 + $0xcf8] sm:$0xff]
  %v452 = vld [vmem:[%s1 + $0xd00] sm:$0xff]
  %v453 = vld [vmem:[%s1 + $0xd08] sm:$0xff]
  %v454 = vld [vmem:[%s1 + $0xd10] sm:$0xff]
  %v455 = vld [vmem:[%s1 + $0xd18] sm:$0xff]
  %v456 = vld [vmem:[%s1 + $0xd20] sm:$0xff]
  %v457 = vld [vmem:[%s1 + $0xd28] sm:$0xff]
  %v458 = vld [vmem:[%s1 + $0xd30] sm:$0xff]
  %v459 = vld [vmem:[%s1 + $0xd38] sm:$0xff]
  %v460 = vld [vmem:[%s1 + $0xd40] sm:$0xff]
  %v461 = vld [vmem:[%s1 + $0xd48] sm:$0xff]
  %v462 = vld [vmem:[%s1 + $0xd50] sm:$0xff]
  %v463 = vld [vmem:[%s1 + $0xd58] sm:$0xff]
  %v464 = vld [vmem:[%s1 + $0xd60] sm:$0xff]
  %v465 = vld [vmem:[%s1 + $0xd68] sm:$0xff]
  %v466 = vld [vmem:[%s1 + $0xd70] sm:$0xff]
  %v467 = vld [vmem:[%s1 + $0xd78] sm:$0xff]
  %v468 = vld [vmem:[%s1 + $0xd80] sm:$0xff]
  %v469 = vld [vmem:[%s1 + $0xd88] sm:$0xff]
  %v470 = vld [vmem:[%s1 + $0xd90] sm:$0xff]
  %v471 = vld [vmem:[%s1 + $0xd98] sm:$0xff]
  %v472 = vld [vmem:[%s1 + $0xda0] sm:$0xff]
  %v473 = vld [vmem:[%s1 + $0xda8] sm:$0xff]
  %v474 = vld [vmem:[%s1 + $0xdb0] sm:$0xff]
  %v475 = vld [vmem:[%s1 + $0xdb8] sm:$0xff]
  %v476 = vld [vmem:[%s1 + $0xdc0] sm:$0xff]
  %v477 = vld [vmem:[%s1 + $0xdc8] sm:$0xff]
  %v478 = vld [vmem:[%s1 + $0xdd0] sm:$0xff]
  %v479 = vld [vmem:[%s1 + $0xdd8] sm:$0xff]
  %v480 = vld [vmem:[%s1 + $0xde0] sm:$0xff]
  %v481 = vld [vmem:[%s1 + $0xde8] sm:$0xff]
  %v482 = vld [vmem:[%s1 + $0xdf0] sm:$0xff]
  %v483 = vld [vmem:[%s1 + $0xdf8] sm:$0xff]
  %v484 = vld [vmem:[%s1 + $0xe00] sm:$0xff]
  %v485 = vld [vmem:[%s1 + $0xe08] sm:$0xff]
  %v486 = vld [vmem:[%s1 + $0xe10] sm:$0xff]
  %v487 = vld [vmem:[%s1 + $0xe18] sm:$0xff]
  %v488 = vld [vmem:[%s1 + $0xe20] sm:$0xff]
  %v489 = vld [vmem:[%s1 + $0xe28] sm:$0xff]
  %v490 = vld [vmem:[%s1 + $0xe30] sm:$0xff]
  %v491 = vld [vmem:[%s1 + $0xe38] sm:$0xff]
  %v492 = vld [vmem:[%s1 + $0xe40] sm:$0xff]
  %v493 = vld [vmem:[%s1 + $0xe48] sm:$0xff]
  %v494 = vld [vmem:[%s1 + $0xe50] sm:$0xff]
  %v495 = vld [vmem:[%s1 + $0xe58] sm:$0xff]
  %v496 = vld [vmem:[%s1 + $0xe60] sm:$0xff]
  %v497 = vld [vmem:[%s1 + $0xe68] sm:$0xff]
  %v498 = vld [vmem:[%s1 + $0xe70] sm:$0xff]
  %v499 = vld [vmem:[%s1 + $0xe78] sm:$0xff]
  %v500 = vld [vmem:[%s1 + $0xe80] sm:$0xff]
  %v501 = vld [vmem:[%s1 + $0xe88] sm:$0xff]
  %v502 = vld [vmem:[%s1 + $0xe90] sm:$0xff]
  %v503 = vld [vmem:[%s1 + $0xe98] sm:$0xff]
  %v504 = vld [vmem:[%s1 + $0xea0] sm:$0xff]
  %v505 = vld [vmem:[%s1 + $0xea8] sm:$0xff]
  %v506 = vld [vmem:[%s1 + $0xeb0] sm:$0xff]
  %v507 = vld [vmem:[%s1 + $0xeb8] sm:$0xff]
  %v508 = vld [vmem:[%s1 + $0xec0] sm:$0xff]
  %v509 = vld [vmem:[%s1 + $0xec8] sm:$0xff]
  %v510 = vld [vmem:[%s1 + $0xed0] sm:$0xff]
  %v511 = vld [vmem:[%s1 + $0xed8] sm:$0xff]
  %v512 = vld [vmem:[%s1 + $0xee0] sm:$0xff]
  %v513 = vld [vmem:[%s1 + $0xee8] sm:$0xff]
  %v514 = vld [vmem:[%s1 + $0xef0] sm:$0xff]
  %v515 = vld [vmem:[%s1 + $0xef8] sm:$0xff]
  %v516 = vld [vmem:[%s1 + $0xf00] sm:$0xff]
  %v517 = vld [vmem:[%s1 + $0xf08] sm:$0xff]
  %v518 = vld [vmem:[%s1 + $0xf10] sm:$0xff]
  %v519 = vld [vmem:[%s1 + $0xf18] sm:$0xff]
  %v520 = vld [vmem:[%s1 + $0xf20] sm:$0xff]
  %v521 = vld [vmem:[%s1 + $0xf28] sm:$0xff]
  %v522 = vld [vmem:[%s1 + $0xf30] sm:$0xff]
  %v523 = vld [vmem:[%s1 + $0xf38] sm:$0xff]
  %v524 = vld [vmem:[%s1 + $0xf40] sm:$0xff]
  %v525 = vld [vmem:[%s1 + $0xf48] sm:$0xff]
  %v526 = vld [vmem:[%s1 + $0xf50] sm:$0xff]
  %v527 = vld [vmem:[%s1 + $0xf58] sm:$0xff]
  %v528 = vld [vmem:[%s1 + $0xf60] sm:$0xff]
  %v529 = vld [vmem:[%s1 + $0xf68] sm:$0xff]
  %v530 = vld [vmem:[%s1 + $0xf70] sm:$0xff]
  %v531 = vld [vmem:[%s1 + $0xf78] sm:$0xff]
  %v532 = vld [vmem:[%s1 + $0xf80] sm:$0xff]
  %v533 = vld [vmem:[%s1 + $0xf88] sm:$0xff]
  %v534 = vld [vmem:[%s1 + $0xf90] sm:$0xff]
  %v535 = vld [vmem:[%s1 + $0xf98] sm:$0xff]
  %v536 = vld [vmem:[%s1 + $0xfa0] sm:$0xff]
  %v537 = vld [vmem:[%s1 + $0xfa8] sm:$0xff]
  %v538 = vld [vmem:[%s1 + $0xfb0] sm:$0xff]
  %v539 = vld [vmem:[%s1 + $0xfb8] sm:$0xff]
  %v540 = vld [vmem:[%s1 + $0xfc0] sm:$0xff]
  %v541 = vld [vmem:[%s1 + $0xfc8] sm:$0xff]
  %v542 = vld [vmem:[%s1 + $0xfd0] sm:$0xff]
  %v543 = vld [vmem:[%s1 + $0xfd8] sm:$0xff]
  %v544 = vld [vmem:[%s1 + $0xfe0] sm:$0xff]
  %v545 = vld [vmem:[%s1 + $0xfe8] sm:$0xff]
  %v546 = vld [vmem:[%s1 + $0xff0] sm:$0xff]
  %v547 = vld [vmem:[%s1 + $0xff8] sm:$0xff]
  %v548 = vld [vmem:[%s1 + $0x1000] sm:$0xff]
  %v549 = vld [vmem:[%s1 + $0x1008] sm:$0xff]
  %v550 = vld [vmem:[%s1 + $0x1010] sm:$0xff]
  %v551 = vld [vmem:[%s1 + $0x1018] sm:$0xff]
  %v552 = vld [vmem:[%s1 + $0x1020] sm:$0xff]
  %v553 = vld [vmem:[%s1 + $0x1028] sm:$0xff]
  %v554 = vld [vmem:[%s1 + $0x1030] sm:$0xff]
  %v555 = vld [vmem:[%s1 + $0x1038] sm:$0xff]
  %v556 = vld [vmem:[%s1 + $0x1040] sm:$0xff]
  %v557 = vld [vmem:[%s1 + $0x1048] sm:$0xff]
  %v558 = vld [vmem:[%s1 + $0x1050] sm:$0xff]
  %v559 = vld [vmem:[%s1 + $0x1058] sm:$0xff]
  %v560 = vld [vmem:[%s1 + $0x1060] sm:$0xff]
  %v561 = vld [vmem:[%s1 + $0x1068] sm:$0xff]
  %v562 = vld [vmem:[%s1 + $0x1070] sm:$0xff]
  %v563 = vld [vmem:[%s1 + $0x1078] sm:$0xff]
  %v564 = vld [vmem:[%s1 + $0x1080] sm:$0xff]
  %v565 = vld [vmem:[%s1 + $0x1088] sm:$0xff]
  %v566 = vld [vmem:[%s1 + $0x1090] sm:$0xff]
  %v567 = vld [vmem:[%s1 + $0x1098] sm:$0xff]
  %v568 = vld [vmem:[%s1 + $0x10a0] sm:$0xff]
  %v569 = vld [vmem:[%s1 + $0x10a8] sm:$0xff]
  %v570 = vld [vmem:[%s1 + $0x10b0] sm:$0xff]
  %v571 = vld [vmem:[%s1 + $0x10b8] sm:$0xff]
  %v572 = vld [vmem:[%s1 + $0x10c0] sm:$0xff]
  %v573 = vld [vmem:[%s1 + $0x10c8] sm:$0xff]
  %v574 = vld [vmem:[%s1 + $0x10d0] sm:$0xff]
  %v575 = vld [vmem:[%s1 + $0x10d8] sm:$0xff]
  %v576 = vld [vmem:[%s1 + $0x10e0] sm:$0xff]
  %v577 = vld [vmem:[%s1 + $0x10e8] sm:$0xff]
  %v578 = vld [vmem:[%s1 + $0x10f0] sm:$0xff]
  %v579 = vld [vmem:[%s1 + $0x10f8] sm:$0xff]
  %v580 = vld [vmem:[%s1 + $0x1100] sm:$0xff]
  %v581 = vld [vmem:[%s1 + $0x1108] sm:$0xff]
  %v582 = vld [vmem:[%s1 + $0x1110] sm:$0xff]
  %v583 = vld [vmem:[%s1 + $0x1118] sm:$0xff]
  %v584 = vld [vmem:[%s1 + $0x1120] sm:$0xff]
  %v585 = vld [vmem:[%s1 + $0x1128] sm:$0xff]
  %v586 = vld [vmem:[%s1 + $0x1130] sm:$0xff]
  %v587 = vld [vmem:[%s1 + $0x1138] sm:$0xff]
  %v588 = vld [vmem:[%s1 + $0x1140] sm:$0xff]
  %v589 = vld [vmem:[%s1 + $0x1148] sm:$0xff]
  %v590 = vld [vmem:[%s1 + $0x1150] sm:$0xff]
  %v591 = vld [vmem:[%s1 + $0x1158] sm:$0xff]
  %v592 = vld [vmem:[%s1 + $0x1160] sm:$0xff]
  %v593 = vld [vmem:[%s1 + $0x1168] sm:$0xff]
  %v594 = vld [vmem:[%s1 + $0x1170] sm:$0xff]
  %v595 = vld [vmem:[%s1 + $0x1178] sm:$0xff]
  %v596 = vld [vmem:[%s1 + $0x1180] sm:$0xff]
  %v597 = vld [vmem:[%s1 + $0x1188] sm:$0xff]
  %v598 = vld [vmem:[%s1 + $0x1190] sm:$0xff]
  %v599 = vld [vmem:[%s1 + $0x1198] sm:$0xff]
  %v600 = vld [vmem:[%s1 + $0x11a0] sm:$0xff]
  %v601 = vld [vmem:[%s1 + $0x11a8] sm:$0xff]
  %v602 = vld [vmem:[%s1 + $0x11b0] sm:$0xff]
  %v603 = vld [vmem:[%s1 + $0x11b8] sm:$0xff]
  %v604 = vld [vmem:[%s1 + $0x11c0] sm:$0xff]
  %v605 = vld [vmem:[%s1 + $0x11c8] sm:$0xff]
  %v606 = vld [vmem:[%s1 + $0x11d0] sm:$0xff]
  %v607 = vld [vmem:[%s1 + $0x11d8] sm:$0xff]
  %v608 = vld [vmem:[%s1 + $0x11e0] sm:$0xff]
  %v609 = vld [vmem:[%s1 + $0x11e8] sm:$0xff]
  %v610 = vld [vmem:[%s1 + $0x11f0] sm:$0xff]
  %v611 = vld [vmem:[%s1 + $0x11f8] sm:$0xff]
  %v612 = vld [vmem:[%s1 + $0x1200] sm:$0xff]
  %v613 = vld [vmem:[%s1 + $0x1208] sm:$0xff]
  %v614 = vld [vmem:[%s1 + $0x1210] sm:$0xff]
  %v615 = vld [vmem:[%s1 + $0x1218] sm:$0xff]
  %v616 = vld [vmem:[%s1 + $0x1220] sm:$0xff]
  %v617 = vld [vmem:[%s1 + $0x1228] sm:$0xff]
  %v618 = vld [vmem:[%s1 + $0x1230] sm:$0xff]
  %v619 = vld [vmem:[%s1 + $0x1238] sm:$0xff]
  %v620 = vld [vmem:[%s1 + $0x1240] sm:$0xff]
  %v621 = vld [vmem:[%s1 + $0x1248] sm:$0xff]
  %v622 = vld [vmem:[%s1 + $0x1250] sm:$0xff]
  %v623 = vld [vmem:[%s1 + $0x1258] sm:$0xff]
  %v624 = vld [vmem:[%s1 + $0x1260] sm:$0xff]
  %v625 = vld [vmem:[%s1 + $0x1268] sm:$0xff]
  %v626 = vld [vmem:[%s1 + $0x1270] sm:$0xff]
  %v627 = vld [vmem:[%s1 + $0x1278] sm:$0xff]
  %v628 = vld [vmem:[%s1 + $0x1280] sm:$0xff]
  %v629 = vld [vmem:[%s1 + $0x1288] sm:$0xff]
  %v630 = vld [vmem:[%s1 + $0x1290] sm:$0xff]
  %v631 = vld [vmem:[%s1 + $0x1298] sm:$0xff]
  %v632 = vld [vmem:[%s1 + $0x12a0] sm:$0xff]
  %v633 = vld [vmem:[%s1 + $0x12a8] sm:$0xff]
  %v634 = vld [vmem:[%s1 + $0x12b0] sm:$0xff]
  %v635 = vld [vmem:[%s1 + $0x12b8] sm:$0xff]
  %v636 = vld [vmem:[%s1 + $0x12c0] sm:$0xff]
  %v637 = vld [vmem:[%s1 + $0x12c8] sm:$0xff]
  %v638 = vld [vmem:[%s1 + $0x12d0] sm:$0xff]
  %v639 = vld [vmem:[%s1 + $0x12d8] sm:$0xff]
  %v640 = vld [vmem:[%s1 + $0x12e0] sm:$0xff]
  %v641 = vld [vmem:[%s1 + $0x12e8] sm:$0xff]
  %v642 = vld [vmem:[%s1 + $0x12f0] sm:$0xff]
  %v643 = vld [vmem:[%s1 + $0x12f8] sm:$0xff]
  %v644 = vld [vmem:[%s1 + $0x1300] sm:$0xff]
  %v645 = vld [vmem:[%s1 + $0x1308] sm:$0xff]
  %v646 = vld [vmem:[%s1 + $0x1310] sm:$0xff]
  %v647 = vld [vmem:[%s1 + $0x1318] sm:$0xff]
  %v648 = vld [vmem:[%s1 + $0x1320] sm:$0xff]
  %v649 = vld [vmem:[%s1 + $0x1328] sm:$0xff]
  %v650 = vld [vmem:[%s1 + $0x1330] sm:$0xff]
  %v651 = vld [vmem:[%s1 + $0x1338] sm:$0xff]
  %v652 = vld [vmem:[%s1 + $0x1340] sm:$0xff]
  %v653 = vld [vmem:[%s1 + $0x1348] sm:$0xff]
  %v654 = vld [vmem:[%s1 + $0x1350] sm:$0xff]
  %v655 = vld [vmem:[%s1 + $0x1358] sm:$0xff]
  %v656 = vld [vmem:[%s1 + $0x1360] sm:$0xff]
  %v657 = vld [vmem:[%s1 + $0x1368] sm:$0xff]
  %v658 = vld [vmem:[%s1 + $0x1370] sm:$0xff]
  %v659 = vld [vmem:[%s1 + $0x1378] sm:$0xff]
  %v660 = vld [vmem:[%s1 + $0x1380] sm:$0xff]
  %v661 = vld [vmem:[%s1 + $0x1388] sm:$0xff]
  %v662 = vld [vmem:[%s1 + $0x1390] sm:$0xff]
  %v663 = vld [vmem:[%s1 + $0x1398] sm:$0xff]
  %v664 = vld [vmem:[%s1 + $0x13a0] sm:$0xff]
  %v665 = vld [vmem:[%s1 + $0x13a8] sm:$0xff]
  %v666 = vld [vmem:[%s1 + $0x13b0] sm:$0xff]
  %v667 = vld [vmem:[%s1 + $0x13b8] sm:$0xff]
  %v668 = vld [vmem:[%s1 + $0x13c0] sm:$0xff]
  %v669 = vld [vmem:[%s1 + $0x13c8] sm:$0xff]
  %v670 = vld [vmem:[%s1 + $0x13d0] sm:$0xff]
  %v671 = vld [vmem:[%s1 + $0x13d8] sm:$0xff]
  %v672 = vld [vmem:[%s1 + $0x13e0] sm:$0xff]
  %v673 = vld [vmem:[%s1 + $0x13e8] sm:$0xff]
  %v674 = vld [vmem:[%s1 + $0x13f0] sm:$0xff]
  %v675 = vld [vmem:[%s1 + $0x13f8] sm:$0xff]
  %v676 = vld [vmem:[%s1 + $0x1400] sm:$0xff]
  %v677 = vld [vmem:[%s1 + $0x1408] sm:$0xff]
  %v678 = vld [vmem:[%s1 + $0x1410] sm:$0xff]
  %v679 = vld [vmem:[%s1 + $0x1418] sm:$0xff]
  %v680 = vld [vmem:[%s1 + $0x1420] sm:$0xff]
  %v681 = vld [vmem:[%s1 + $0x1428] sm:$0xff]
  %v682 = vld [vmem:[%s1 + $0x1430] sm:$0xff]
  %v683 = vld [vmem:[%s1 + $0x1438] sm:$0xff]
  %v684 = vld [vmem:[%s1 + $0x1440] sm:$0xff]
  %v685 = vld [vmem:[%s1 + $0x1448] sm:$0xff]
  %v686 = vld [vmem:[%s1 + $0x1450] sm:$0xff]
  %v687 = vld [vmem:[%s1 + $0x1458] sm:$0xff]
  %v688 = vld [vmem:[%s1 + $0x1460] sm:$0xff]
  %v689 = vld [vmem:[%s1 + $0x1468] sm:$0xff]
  %v690 = vld [vmem:[%s1 + $0x1470] sm:$0xff]
  %v691 = vld [vmem:[%s1 + $0x1478] sm:$0xff]
  %v692 = vld [vmem:[%s1 + $0x1480] sm:$0xff]
  %v693 = vld [vmem:[%s1 + $0x1488] sm:$0xff]
  %v694 = vld [vmem:[%s1 + $0x1490] sm:$0xff]
  %v695 = vld [vmem:[%s1 + $0x1498] sm:$0xff]
  %v696 = vld [vmem:[%s1 + $0x14a0] sm:$0xff]
  %v697 = vld [vmem:[%s1 + $0x14a8] sm:$0xff]
  %v698 = vld [vmem:[%s1 + $0x14b0] sm:$0xff]
  %v699 = vld [vmem:[%s1 + $0x14b8] sm:$0xff]
  %v700 = vld [vmem:[%s1 + $0x14c0] sm:$0xff]
  %v701 = vld [vmem:[%s1 + $0x14c8] sm:$0xff]
  %v702 = vld [vmem:[%s1 + $0x14d0] sm:$0xff]
  %v703 = vld [vmem:[%s1 + $0x14d8] sm:$0xff]
  %v704 = vld [vmem:[%s1 + $0x14e0] sm:$0xff]
  %v705 = vld [vmem:[%s1 + $0x14e8] sm:$0xff]
  %v706 = vld [vmem:[%s1 + $0x14f0] sm:$0xff]
  %v707 = vld [vmem:[%s1 + $0x14f8] sm:$0xff]
  %v708 = vld [vmem:[%s1 + $0x1500] sm:$0xff]
  %v709 = vld [vmem:[%s1 + $0x1508] sm:$0xff]
  %v710 = vld [vmem:[%s1 + $0x1510] sm:$0xff]
  %v711 = vld [vmem:[%s1 + $0x1518] sm:$0xff]
  %v712 = vld [vmem:[%s1 + $0x1520] sm:$0xff]
  %v713 = vld [vmem:[%s1 + $0x1528] sm:$0xff]
  %v714 = vld [vmem:[%s1 + $0x1530] sm:$0xff]
  %v715 = vld [vmem:[%s1 + $0x1538] sm:$0xff]
  %v716 = vld [vmem:[%s1 + $0x1540] sm:$0xff]
  %v717 = vld [vmem:[%s1 + $0x1548] sm:$0xff]
  %v718 = vld [vmem:[%s1 + $0x1550] sm:$0xff]
  %v719 = vld [vmem:[%s1 + $0x1558] sm:$0xff]
  %v720 = vld [vmem:[%s1 + $0x1560] sm:$0xff]
  %v721 = vld [vmem:[%s1 + $0x1568] sm:$0xff]
  %v722 = vld [vmem:[%s1 + $0x1570] sm:$0xff]
  %v723 = vld [vmem:[%s1 + $0x1578] sm:$0xff]
  %v724 = vld [vmem:[%s1 + $0x1580] sm:$0xff]
  %v725 = vld [vmem:[%s1 + $0x1588] sm:$0xff]
  %v726 = vld [vmem:[%s1 + $0x1590] sm:$0xff]
  %v727 = vld [vmem:[%s1 + $0x1598] sm:$0xff]
  %v728 = vld [vmem:[%s1 + $0x15a0] sm:$0xff]
  %v729 = vld [vmem:[%s1 + $0x15a8] sm:$0xff]
  %v730 = vld [vmem:[%s1 + $0x15b0] sm:$0xff]
  %v731 = vld [vmem:[%s1 + $0x15b8] sm:$0xff]
  %v732 = vld [vmem:[%s1 + $0x15c0] sm:$0xff]
  %v733 = vld [vmem:[%s1 + $0x15c8] sm:$0xff]
  %v734 = vld [vmem:[%s1 + $0x15d0] sm:$0xff]
  %v735 = vld [vmem:[%s1 + $0x15d8] sm:$0xff]
  %v736 = vld [vmem:[%s1 + $0x15e0] sm:$0xff]
  %v737 = vld [vmem:[%s1 + $0x15e8] sm:$0xff]
  %v738 = vld [vmem:[%s1 + $0x15f0] sm:$0xff]
  %v739 = vld [vmem:[%s1 + $0x15f8] sm:$0xff]
  %v740 = vld [vmem:[%s1 + $0x1600] sm:$0xff]
  %v741 = vld [vmem:[%s1 + $0x1608] sm:$0xff]
  %v742 = vld [vmem:[%s1 + $0x1610] sm:$0xff]
  %v743 = vld [vmem:[%s1 + $0x1618] sm:$0xff]
  %v744 = vld [vmem:[%s1 + $0x1620] sm:$0xff]
  %v745 = vld [vmem:[%s1 + $0x1628] sm:$0xff]
  %v746 = vld [vmem:[%s1 + $0x1630] sm:$0xff]
  %v747 = vld [vmem:[%s1 + $0x1638] sm:$0xff]
  %v748 = vld [vmem:[%s1 + $0x1640] sm:$0xff]
  %v749 = vld [vmem:[%s1 + $0x1648] sm:$0xff]
  %v750 = vld [vmem:[%s1 + $0x1650] sm:$0xff]
  %v751 = vld [vmem:[%s1 + $0x1658] sm:$0xff]
  %v752 = vld [vmem:[%s1 + $0x1660] sm:$0xff]
  %v753 = vld [vmem:[%s1 + $0x1668] sm:$0xff]
  %v754 = vld [vmem:[%s1 + $0x1670] sm:$0xff]
  %v755 = vld [vmem:[%s1 + $0x1678] sm:$0xff]
  %v756 = vld [vmem:[%s1 + $0x1680] sm:$0xff]
  %v757 = vld [vmem:[%s1 + $0x1688] sm:$0xff]
  %v758 = vld [vmem:[%s1 + $0x1690] sm:$0xff]
  %v759 = vld [vmem:[%s1 + $0x1698] sm:$0xff]
  %v760 = vld [vmem:[%s1 + $0x16a0] sm:$0xff]
  %v761 = vld [vmem:[%s1 + $0x16a8] sm:$0xff]
  %v762 = vld [vmem:[%s1 + $0x16b0] sm:$0xff]
  %v763 = vld [vmem:[%s1 + $0x16b8] sm:$0xff]
  %v764 = vld [vmem:[%s1 + $0x16c0] sm:$0xff]
  %v765 = vld [vmem:[%s1 + $0x16c8] sm:$0xff]
  %v766 = vld [vmem:[%s1 + $0x16d0] sm:$0xff]
  %v767 = vld [vmem:[%s1 + $0x16d8] sm:$0xff]
  %v768 = vld [vmem:[%s1 + $0x16e0] sm:$0xff]
  %v769 = vld [vmem:[%s1 + $0x16e8] sm:$0xff]
  %v770 = vld [vmem:[%s1 + $0x16f0] sm:$0xff]
  %v771 = vld [vmem:[%s1 + $0x16f8] sm:$0xff]
  %v772 = vld [vmem:[%s1 + $0x1700] sm:$0xff]
  %v773 = vld [vmem:[%s1 + $0x1708] sm:$0xff]
  %v774 = vld [vmem:[%s1 + $0x1710] sm:$0xff]
  %v775 = vld [vmem:[%s1 + $0x1718] sm:$0xff]
  %v776 = vld [vmem:[%s1 + $0x1720] sm:$0xff]
  %v777 = vld [vmem:[%s1 + $0x1728] sm:$0xff]
  %v778 = vld [vmem:[%s1 + $0x1730] sm:$0xff]
  %v779 = vld [vmem:[%s1 + $0x1738] sm:$0xff]
  %v780 = vld [vmem:[%s1 + $0x1740] sm:$0xff]
  %v781 = vld [vmem:[%s1 + $0x1748] sm:$0xff]
  %v782 = vld [vmem:[%s1 + $0x1750] sm:$0xff]
  %v783 = vld [vmem:[%s1 + $0x1758] sm:$0xff]
  %v784 = vld [vmem:[%s1 + $0x1760] sm:$0xff]
  %v785 = vld [vmem:[%s1 + $0x1768] sm:$0xff]
  %v786 = vld [vmem:[%s1 + $0x1770] sm:$0xff]
  %v787 = vld [vmem:[%s1 + $0x1778] sm:$0xff]
  %v788 = vld [vmem:[%s1 + $0x1780] sm:$0xff]
  %v789 = vld [vmem:[%s1 + $0x1788] sm:$0xff]
  %v790 = vld [vmem:[%s1 + $0x1790] sm:$0xff]
  %v791 = vld [vmem:[%s1 + $0x1798] sm:$0xff]
  %v792 = vld [vmem:[%s1 + $0x17a0] sm:$0xff]
  %v793 = vld [vmem:[%s1 + $0x17a8] sm:$0xff]
  %v794 = vld [vmem:[%s1 + $0x17b0] sm:$0xff]
  %v795 = vld [vmem:[%s1 + $0x17b8] sm:$0xff]
  %v796 = vld [vmem:[%s1 + $0x17c0] sm:$0xff]
  %v797 = vld [vmem:[%s1 + $0x17c8] sm:$0xff]
  %v798 = vld [vmem:[%s1 + $0x17d0] sm:$0xff]
  %v799 = vld [vmem:[%s1 + $0x17d8] sm:$0xff]
  %v800 = vld [vmem:[%s1 + $0x17e0] sm:$0xff]
  %v801 = vld [vmem:[%s1 + $0x17e8] sm:$0xff]
  %v802 = vld [vmem:[%s1 + $0x17f0] sm:$0xff]
  %v803 = vld [vmem:[%s1 + $0x17f8] sm:$0xff]
  %v804 = vld [vmem:[%s1 + $0x1800] sm:$0xff]
  %v805 = vld [vmem:[%s1 + $0x1808] sm:$0xff]
  %v806 = vld [vmem:[%s1 + $0x1810] sm:$0xff]
  %v807 = vld [vmem:[%s1 + $0x1818] sm:$0xff]
  %v808 = vld [vmem:[%s1 + $0x1820] sm:$0xff]
  %v809 = vld [vmem:[%s1 + $0x1828] sm:$0xff]
  %v810 = vld [vmem:[%s1 + $0x1830] sm:$0xff]
  %v811 = vld [vmem:[%s1 + $0x1838] sm:$0xff]
  %v812 = vld [vmem:[%s1 + $0x1840] sm:$0xff]
  %v813 = vld [vmem:[%s1 + $0x1848] sm:$0xff]
  %v814 = vld [vmem:[%s1 + $0x1850] sm:$0xff]
  %v815 = vld [vmem:[%s1 + $0x1858] sm:$0xff]
  %v816 = vld [vmem:[%s1 + $0x1860] sm:$0xff]
  %v817 = vld [vmem:[%s1 + $0x1868] sm:$0xff]
  %v818 = vld [vmem:[%s1 + $0x1870] sm:$0xff]
  %v819 = vld [vmem:[%s1 + $0x1878] sm:$0xff]
  %v820 = vld [vmem:[%s1 + $0x1880] sm:$0xff]
  %v821 = vld [vmem:[%s1 + $0x1888] sm:$0xff]
  %v822 = vld [vmem:[%s1 + $0x1890] sm:$0xff]
  %v823 = vld [vmem:[%s1 + $0x1898] sm:$0xff]
  %v824 = vld [vmem:[%s1 + $0x18a0] sm:$0xff]
  %v825 = vld [vmem:[%s1 + $0x18a8] sm:$0xff]
  %v826 = vld [vmem:[%s1 + $0x18b0] sm:$0xff]
  %v827 = vld [vmem:[%s1 + $0x18b8] sm:$0xff]
  %v828 = vld [vmem:[%s1 + $0x18c0] sm:$0xff]
  %v829 = vld [vmem:[%s1 + $0x18c8] sm:$0xff]
  %v830 = vld [vmem:[%s1 + $0x18d0] sm:$0xff]
  %v831 = vld [vmem:[%s1 + $0x18d8] sm:$0xff]
  %v832 = vld [vmem:[%s1 + $0x18e0] sm:$0xff]
  %v833 = vld [vmem:[%s1 + $0x18e8] sm:$0xff]
  %v834 = vld [vmem:[%s1 + $0x18f0] sm:$0xff]
  %v835 = vld [vmem:[%s1 + $0x18f8] sm:$0xff]
  %v836 = vld [vmem:[%s1 + $0x1900] sm:$0xff]
  %v837 = vld [vmem:[%s1 + $0x1908] sm:$0xff]
  %v838 = vld [vmem:[%s1 + $0x1910] sm:$0xff]
  %v839 = vld [vmem:[%s1 + $0x1918] sm:$0xff]
  %v840 = vld [vmem:[%s1 + $0x1920] sm:$0xff]
  %v841 = vld [vmem:[%s1 + $0x1928] sm:$0xff]
  %v842 = vld [vmem:[%s1 + $0x1930] sm:$0xff]
  %v843 = vld [vmem:[%s1 + $0x1938] sm:$0xff]
  %v844 = vld [vmem:[%s1 + $0x1940] sm:$0xff]
  %v845 = vld [vmem:[%s1 + $0x1948] sm:$0xff]
  %v846 = vld [vmem:[%s1 + $0x1950] sm:$0xff]
  %v847 = vld [vmem:[%s1 + $0x1958] sm:$0xff]
  %v848 = vld [vmem:[%s1 + $0x1960] sm:$0xff]
  %v849 = vld [vmem:[%s1 + $0x1968] sm:$0xff]
  %v850 = vld [vmem:[%s1 + $0x1970] sm:$0xff]
  %v851 = vld [vmem:[%s1 + $0x1978] sm:$0xff]
  %v852 = vld [vmem:[%s1 + $0x1980] sm:$0xff]
  %v853 = vld [vmem:[%s1 + $0x1988] sm:$0xff]
  %v854 = vld [vmem:[%s1 + $0x1990] sm:$0xff]
  %v855 = vld [vmem:[%s1 + $0x1998] sm:$0xff]
  %v856 = vld [vmem:[%s1 + $0x19a0] sm:$0xff]
  %v857 = vld [vmem:[%s1 + $0x19a8] sm:$0xff]
  %v858 = vld [vmem:[%s1 + $0x19b0] sm:$0xff]
  %v859 = vld [vmem:[%s1 + $0x19b8] sm:$0xff]
  %v860 = vld [vmem:[%s1 + $0x19c0] sm:$0xff]
  %v861 = vld [vmem:[%s1 + $0x19c8] sm:$0xff]
  %v862 = vld [vmem:[%s1 + $0x19d0] sm:$0xff]
  %v863 = vld [vmem:[%s1 + $0x19d8] sm:$0xff]
  %v864 = vld [vmem:[%s1 + $0x19e0] sm:$0xff]
  %v865 = vld [vmem:[%s1 + $0x19e8] sm:$0xff]
  %v866 = vld [vmem:[%s1 + $0x19f0] sm:$0xff]
  %v867 = vld [vmem:[%s1 + $0x19f8] sm:$0xff]
  %v868 = vld [vmem:[%s1 + $0x1a00] sm:$0xff]
  %v869 = vld [vmem:[%s1 + $0x1a08] sm:$0xff]
  %v870 = vld [vmem:[%s1 + $0x1a10] sm:$0xff]
  %v871 = vld [vmem:[%s1 + $0x1a18] sm:$0xff]
  %v872 = vld [vmem:[%s1 + $0x1a20] sm:$0xff]
  %v873 = vld [vmem:[%s1 + $0x1a28] sm:$0xff]
  %v874 = vld [vmem:[%s1 + $0x1a30] sm:$0xff]
  %v875 = vld [vmem:[%s1 + $0x1a38] sm:$0xff]
  %v876 = vld [vmem:[%s1 + $0x1a40] sm:$0xff]
  %v877 = vld [vmem:[%s1 + $0x1a48] sm:$0xff]
  %v878 = vld [vmem:[%s1 + $0x1a50] sm:$0xff]
  %v879 = vld [vmem:[%s1 + $0x1a58] sm:$0xff]
  %v880 = vld [vmem:[%s1 + $0x1a60] sm:$0xff]
  %v881 = vld [vmem:[%s1 + $0x1a68] sm:$0xff]
  %v882 = vld [vmem:[%s1 + $0x1a70] sm:$0xff]
  %v883 = vld [vmem:[%s1 + $0x1a78] sm:$0xff]
  %v884 = vld [vmem:[%s1 + $0x1a80] sm:$0xff]
  %v885 = vld [vmem:[%s1 + $0x1a88] sm:$0xff]
  %v886 = vld [vmem:[%s1 + $0x1a90] sm:$0xff]
  %v887 = vld [vmem:[%s1 + $0x1a98] sm:$0xff]
  %v888 = vld [vmem:[%s1 + $0x1aa0] sm:$0xff]
  %v889 = vld [vmem:[%s1 + $0x1aa8] sm:$0xff]
  %v890 = vld [vmem:[%s1 + $0x1ab0] sm:$0xff]
  %v891 = vld [vmem:[%s1 + $0x1ab8] sm:$0xff]
  %v892 = vld [vmem:[%s1 + $0x1ac0] sm:$0xff]
  %v893 = vld [vmem:[%s1 + $0x1ac8] sm:$0xff]
  %v894 = vld [vmem:[%s1 + $0x1ad0] sm:$0xff]
  %v895 = vld [vmem:[%s1 + $0x1ad8] sm:$0xff]
  %v896 = vld [vmem:[%s1 + $0x1ae0] sm:$0xff]
  %v897 = vld [vmem:[%s1 + $0x1ae8] sm:$0xff]
  %v898 = vld [vmem:[%s1 + $0x1af0] sm:$0xff]
  %v899 = vld [vmem:[%s1 + $0x1af8] sm:$0xff]
  %v900 = vld [vmem:[%s1 + $0x1b00] sm:$0xff]
  %v901 = vld [vmem:[%s1 + $0x1b08] sm:$0xff]
  %v902 = vld [vmem:[%s1 + $0x1b10] sm:$0xff]
  %v903 = vld [vmem:[%s1 + $0x1b18] sm:$0xff]
  %v904 = vld [vmem:[%s1 + $0x1b20] sm:$0xff]
  %v905 = vld [vmem:[%s1 + $0x1b28] sm:$0xff]
  %v906 = vld [vmem:[%s1 + $0x1b30] sm:$0xff]
  %v907 = vld [vmem:[%s1 + $0x1b38] sm:$0xff]
  %v908 = vld [vmem:[%s1 + $0x1b40] sm:$0xff]
  %v909 = vld [vmem:[%s1 + $0x1b48] sm:$0xff]
  %v910 = vld [vmem:[%s1 + $0x1b50] sm:$0xff]
  %v911 = vld [vmem:[%s1 + $0x1b58] sm:$0xff]
  %v912 = vld [vmem:[%s1 + $0x1b60] sm:$0xff]
  %v913 = vld [vmem:[%s1 + $0x1b68] sm:$0xff]
  %v914 = vld [vmem:[%s1 + $0x1b70] sm:$0xff]
  %v915 = vld [vmem:[%s1 + $0x1b78] sm:$0xff]
  %v916 = vld [vmem:[%s1 + $0x1b80] sm:$0xff]
  %v917 = vld [vmem:[%s1 + $0x1b88] sm:$0xff]
  %v918 = vld [vmem:[%s1 + $0x1b90] sm:$0xff]
  %v919 = vld [vmem:[%s1 + $0x1b98] sm:$0xff]
  %v920 = vld [vmem:[%s1 + $0x1ba0] sm:$0xff]
  %v921 = vld [vmem:[%s1 + $0x1ba8] sm:$0xff]
  %v922 = vld [vmem:[%s1 + $0x1bb0] sm:$0xff]
  %v923 = vld [vmem:[%s1 + $0x1bb8] sm:$0xff]
  %v924 = vld [vmem:[%s1 + $0x1bc0] sm:$0xff]
  %v925 = vld [vmem:[%s1 + $0x1bc8] sm:$0xff]
  %v926 = vld [vmem:[%s1 + $0x1bd0] sm:$0xff]
  %v927 = vld [vmem:[%s1 + $0x1bd8] sm:$0xff]
  %v928 = vld [vmem:[%s1 + $0x1be0] sm:$0xff]
  %v929 = vld [vmem:[%s1 + $0x1be8] sm:$0xff]
  %v930 = vld [vmem:[%s1 + $0x1bf0] sm:$0xff]
  %v931 = vld [vmem:[%s1 + $0x1bf8] sm:$0xff]
  %v932 = vld [vmem:[%s1 + $0x1c00] sm:$0xff]
  %v933 = vld [vmem:[%s1 + $0x1c08] sm:$0xff]
  %v934 = vld [vmem:[%s1 + $0x1c10] sm:$0xff]
  %v935 = vld [vmem:[%s1 + $0x1c18] sm:$0xff]
  %v936 = vld [vmem:[%s1 + $0x1c20] sm:$0xff]
  %v937 = vld [vmem:[%s1 + $0x1c28] sm:$0xff]
  %v938 = vld [vmem:[%s1 + $0x1c30] sm:$0xff]
  %v939 = vld [vmem:[%s1 + $0x1c38] sm:$0xff]
  %v940 = vld [vmem:[%s1 + $0x1c40] sm:$0xff]
  %v941 = vld [vmem:[%s1 + $0x1c48] sm:$0xff]
  %v942 = vld [vmem:[%s1 + $0x1c50] sm:$0xff]
  %v943 = vld [vmem:[%s1 + $0x1c58] sm:$0xff]
  %v944 = vld [vmem:[%s1 + $0x1c60] sm:$0xff]
  %v945 = vld [vmem:[%s1 + $0x1c68] sm:$0xff]
  %v946 = vld [vmem:[%s1 + $0x1c70] sm:$0xff]
  %v947 = vld [vmem:[%s1 + $0x1c78] sm:$0xff]
  %v948 = vld [vmem:[%s1 + $0x1c80] sm:$0xff]
  %v949 = vld [vmem:[%s1 + $0x1c88] sm:$0xff]
  %v950 = vld [vmem:[%s1 + $0x1c90] sm:$0xff]
  %v951 = vld [vmem:[%s1 + $0x1c98] sm:$0xff]
  %v952 = vld [vmem:[%s1 + $0x1ca0] sm:$0xff]
  %v953 = vld [vmem:[%s1 + $0x1ca8] sm:$0xff]
  %v954 = vld [vmem:[%s1 + $0x1cb0] sm:$0xff]
  %v955 = vld [vmem:[%s1 + $0x1cb8] sm:$0xff]
  %v956 = vld [vmem:[%s1 + $0x1cc0] sm:$0xff]
  %v957 = vld [vmem:[%s1 + $0x1cc8] sm:$0xff]
  %v958 = vld [vmem:[%s1 + $0x1cd0] sm:$0xff]
  %v959 = vld [vmem:[%s1 + $0x1cd8] sm:$0xff]
  %v960 = vld [vmem:[%s1 + $0x1ce0] sm:$0xff]
  %v961 = vld [vmem:[%s1 + $0x1ce8] sm:$0xff]
  %v962 = vld [vmem:[%s1 + $0x1cf0] sm:$0xff]
  %v963 = vld [vmem:[%s1 + $0x1cf8] sm:$0xff]
  %v964 = vld [vmem:[%s1 + $0x1d00] sm:$0xff]
  %v965 = vld [vmem:[%s1 + $0x1d08] sm:$0xff]
  %v966 = vld [vmem:[%s1 + $0x1d10] sm:$0xff]
  %v967 = vld [vmem:[%s1 + $0x1d18] sm:$0xff]
  %v968 = vld [vmem:[%s1 + $0x1d20] sm:$0xff]
  %v969 = vld [vmem:[%s1 + $0x1d28] sm:$0xff]
  %v970 = vld [vmem:[%s1 + $0x1d30] sm:$0xff]
  %v971 = vld [vmem:[%s1 + $0x1d38] sm:$0xff]
  %v972 = vld [vmem:[%s1 + $0x1d40] sm:$0xff]
  %v973 = vld [vmem:[%s1 + $0x1d48] sm:$0xff]
  %v974 = vld [vmem:[%s1 + $0x1d50] sm:$0xff]
  %v975 = vld [vmem:[%s1 + $0x1d58] sm:$0xff]
  %v976 = vld [vmem:[%s1 + $0x1d60] sm:$0xff]
  %v977 = vld [vmem:[%s1 + $0x1d68] sm:$0xff]
  %v978 = vld [vmem:[%s1 + $0x1d70] sm:$0xff]
  %v979 = vld [vmem:[%s1 + $0x1d78] sm:$0xff]
  %v980 = vld [vmem:[%s1 + $0x1d80] sm:$0xff]
  %v981 = vld [vmem:[%s1 + $0x1d88] sm:$0xff]
  %v982 = vld [vmem:[%s1 + $0x1d90] sm:$0xff]
  %v983 = vld [vmem:[%s1 + $0x1d98] sm:$0xff]
  %v984 = vld [vmem:[%s1 + $0x1da0] sm:$0xff]
  %v985 = vld [vmem:[%s1 + $0x1da8] sm:$0xff]
  %v986 = vld [vmem:[%s1 + $0x1db0] sm:$0xff]
  %v987 = vld [vmem:[%s1 + $0x1db8] sm:$0xff]
  %v988 = vld [vmem:[%s1 + $0x1dc0] sm:$0xff]
  %v989 = vld [vmem:[%s1 + $0x1dc8] sm:$0xff]
  %v990 = vld [vmem:[%s1 + $0x1dd0] sm:$0xff]
  %v991 = vld [vmem:[%s1 + $0x1dd8] sm:$0xff]
  %v992 = vld [vmem:[%s1 + $0x1de0] sm:$0xff]
  %v993 = vld [vmem:[%s1 + $0x1de8] sm:$0xff]
  %v994 = vld [vmem:[%s1 + $0x1df0] sm:$0xff]
  %v995 = vld [vmem:[%s1 + $0x1df8] sm:$0xff]
  %v996 = vld [vmem:[%s1 + $0x1e00] sm:$0xff]
  %v997 = vld [vmem:[%s1 + $0x1e08] sm:$0xff]
  %v998 = vld [vmem:[%s1 + $0x1e10] sm:$0xff]
  %v999 = vld [vmem:[%s1 + $0x1e18] sm:$0xff]
  %v1000 = vld [vmem:[%s1 + $0x1e20] sm:$0xff]
  %v1001 = vld [vmem:[%s1 + $0x1e28] sm:$0xff]
  %v1002 = vld [vmem:[%s1 + $0x1e30] sm:$0xff]
  %v1003 = vld [vmem:[%s1 + $0x1e38] sm:$0xff]
  %v1004 = vld [vmem:[%s1 + $0x1e40] sm:$0xff]
  %v1005 = vld [vmem:[%s1 + $0x1e48] sm:$0xff]
  %v1006 = vld [vmem:[%s1 + $0x1e50] sm:$0xff]
  %v1007 = vld [vmem:[%s1 + $0x1e58] sm:$0xff]
  %v1008 = vld [vmem:[%s1 + $0x1e60] sm:$0xff]
  %v1009 = vld [vmem:[%s1 + $0x1e68] sm:$0xff]
  %v1010 = vld [vmem:[%s1 + $0x1e70] sm:$0xff]
  %v1011 = vld [vmem:[%s1 + $0x1e78] sm:$0xff]
  %v1012 = vld [vmem:[%s1 + $0x1e80] sm:$0xff]
  %v1013 = vld [vmem:[%s1 + $0x1e88] sm:$0xff]
  %v1014 = vld [vmem:[%s1 + $0x1e90] sm:$0xff]
  %v1015 = vld [vmem:[%s1 + $0x1e98] sm:$0xff]
  %v1016 = vld [vmem:[%s1 + $0x1ea0] sm:$0xff]
  %v1017 = vld [vmem:[%s1 + $0x1ea8] sm:$0xff]
  %v1018 = vld [vmem:[%s1 + $0x1eb0] sm:$0xff]
  %v1019 = vld [vmem:[%s1 + $0x1eb8] sm:$0xff]
  %v1020 = vld [vmem:[%s1 + $0x1ec0] sm:$0xff]
  %v1021 = vld [vmem:[%s1 + $0x1ec8] sm:$0xff]
  %v1022 = vld [vmem:[%s1 + $0x1ed0] sm:$0xff]
  %v1023 = vld [vmem:[%s1 + $0x1ed8] sm:$0xff]
  %v1024 = vld [vmem:[%s1 + $0x1ee0] sm:$0xff]
  %v1025 = vld [vmem:[%s1 + $0x1ee8] sm:$0xff]
  %v1026 = vld [vmem:[%s1 + $0x1ef0] sm:$0xff]
  %v1027 = vld [vmem:[%s1 + $0x1ef8] sm:$0xff]
  %v1028 = vld [vmem:[%s1 + $0x1f00] sm:$0xff]
  %v1029 = vld [vmem:[%s1 + $0x1f08] sm:$0xff]
  %v1030 = vld [vmem:[%s1 + $0x1f10] sm:$0xff]
  %v1031 = vld [vmem:[%s1 + $0x1f18] sm:$0xff]
  %v1032 = vld [vmem:[%s1 + $0x1f20] sm:$0xff]
  %v1033 = vld [vmem:[%s1 + $0x1f28] sm:$0xff]
  %v1034 = vld [vmem:[%s1 + $0x1f30] sm:$0xff]
  %v1035 = vld [vmem:[%s1 + $0x1f38] sm:$0xff]
  %v1036 = vld [vmem:[%s1 + $0x1f40] sm:$0xff]
  %v1037 = vld [vmem:[%s1 + $0x1f48] sm:$0xff]
  %v1038 = vld [vmem:[%s1 + $0x1f50] sm:$0xff]
  %v1039 = vld [vmem:[%s1 + $0x1f58] sm:$0xff]
  %v1040 = vld [vmem:[%s1 + $0x1f60] sm:$0xff]
  %v1041 = vld [vmem:[%s1 + $0x1f68] sm:$0xff]
  %v1042 = vld [vmem:[%s1 + $0x1f70] sm:$0xff]
  %v1043 = vld [vmem:[%s1 + $0x1f78] sm:$0xff]
  %v1044 = vld [vmem:[%s1 + $0x1f80] sm:$0xff]
  %v1045 = vld [vmem:[%s1 + $0x1f88] sm:$0xff]
  %v1046 = vld [vmem:[%s1 + $0x1f90] sm:$0xff]
  %v1047 = vld [vmem:[%s1 + $0x1f98] sm:$0xff]
  %v1048 = vld [vmem:[%s1 + $0x1fa0] sm:$0xff]
  %v1049 = vld [vmem:[%s1 + $0x1fa8] sm:$0xff]
  %v1050 = vld [vmem:[%s1 + $0x1fb0] sm:$0xff]
  %v1051 = vld [vmem:[%s1 + $0x1fb8] sm:$0xff]
  %v1052 = vld [vmem:[%s1 + $0x1fc0] sm:$0xff]
  %v1053 = vld [vmem:[%s1 + $0x1fc8] sm:$0xff]
  %v1054 = vld [vmem:[%s1 + $0x1fd0] sm:$0xff]
  %v1055 = vld [vmem:[%s1 + $0x1fd8] sm:$0xff]
  %v1056 = vld [vmem:[%s1 + $0x1fe0] sm:$0xff]
  %v1057 = vld [vmem:[%s1 + $0x1fe8] sm:$0xff]
  %v1058 = vld [vmem:[%s1 + $0x1ff0] sm:$0xff]
  %v1059 = vld [vmem:[%s1 + $0x1ff8] sm:$0xff]
  %v1076 = vunpack.c.l.b16 %v20
  %v1077 = vunpack.c.h.b16 %v20
  %v1078 = vunpack.c.l.b16 %v21
  %v1079 = vunpack.c.h.b16 %v21
  %v1080 = vunpack.c.l.b16 %v22
  %v1081 = vunpack.c.h.b16 %v22
  %v1082 = vunpack.c.l.b16 %v23
  %v1083 = vunpack.c.h.b16 %v23
  %v1084 = vunpack.c.l.b16 %v24
  %v1085 = vunpack.c.h.b16 %v24
  %v1086 = vunpack.c.l.b16 %v25
  %v1087 = vunpack.c.h.b16 %v25
  %v1088 = vunpack.c.l.b16 %v26
  %v1089 = vunpack.c.h.b16 %v26
  %v1090 = vunpack.c.l.b16 %v27
  %v1091 = vunpack.c.h.b16 %v27
  %v1092 = vunpack.c.l.b16 %v28
  %v1093 = vunpack.c.h.b16 %v28
  %v1094 = vunpack.c.l.b16 %v29
  %v1095 = vunpack.c.h.b16 %v29
  %v1096 = vunpack.c.l.b16 %v30
  %v1097 = vunpack.c.h.b16 %v30
  %v1098 = vunpack.c.l.b16 %v31
  %v1099 = vunpack.c.h.b16 %v31
  %v1100 = vunpack.c.l.b16 %v32
  %v1101 = vunpack.c.h.b16 %v32
  %v1102 = vunpack.c.l.b16 %v33
  %v1103 = vunpack.c.h.b16 %v33
  %v1104 = vunpack.c.l.b16 %v34
  %v1105 = vunpack.c.h.b16 %v34
  %v1106 = vunpack.c.l.b16 %v35
  %v1107 = vunpack.c.h.b16 %v35
  %v1108 = vpack.c.b16 %v1076, %v1076
  %v1109 = vpack.c.b16 %v1077, %v1077
  %v1110 = vpack.c.b16 %v1078, %v1078
  %v1111 = vpack.c.b16 %v1079, %v1079
  %v1112 = vpack.c.b16 %v1080, %v1080
  %v1113 = vpack.c.b16 %v1081, %v1081
  %v1114 = vpack.c.b16 %v1082, %v1082
  %v1115 = vpack.c.b16 %v1083, %v1083
  %v1116 = vpack.c.b16 %v1084, %v1084
  %v1117 = vpack.c.b16 %v1085, %v1085
  %v1118 = vpack.c.b16 %v1086, %v1086
  %v1119 = vpack.c.b16 %v1087, %v1087
  %v1120 = vpack.c.b16 %v1088, %v1088
  %v1121 = vpack.c.b16 %v1089, %v1089
  %v1122 = vpack.c.b16 %v1090, %v1090
  %v1123 = vpack.c.b16 %v1091, %v1091
  %v1124 = vpack.c.b16 %v1092, %v1092
  %v1125 = vpack.c.b16 %v1093, %v1093
  %v1126 = vpack.c.b16 %v1094, %v1094
  %v1127 = vpack.c.b16 %v1095, %v1095
  %v1128 = vpack.c.b16 %v1096, %v1096
  %v1129 = vpack.c.b16 %v1097, %v1097
  %v1130 = vpack.c.b16 %v1098, %v1098
  %v1131 = vpack.c.b16 %v1099, %v1099
  %v1132 = vpack.c.b16 %v1100, %v1100
  %v1133 = vpack.c.b16 %v1101, %v1101
  %v1134 = vpack.c.b16 %v1102, %v1102
  %v1135 = vpack.c.b16 %v1103, %v1103
  %v1136 = vpack.c.b16 %v1104, %v1104
  %v1137 = vpack.c.b16 %v1105, %v1105
  %v1138 = vpack.c.b16 %v1106, %v1106
  %v1139 = vpack.c.b16 %v1107, %v1107
  %v2196 = vunpack.c.l.b16 %v36
  %v2197 = vunpack.c.h.b16 %v36
  %v2198 = vunpack.c.l.b16 %v37
  %v2199 = vunpack.c.h.b16 %v37
  %v2200 = vunpack.c.l.b16 %v38
  %v2201 = vunpack.c.h.b16 %v38
  %v2202 = vunpack.c.l.b16 %v39
  %v2203 = vunpack.c.h.b16 %v39
  %v2204 = vunpack.c.l.b16 %v40
  %v2205 = vunpack.c.h.b16 %v40
  %v2206 = vunpack.c.l.b16 %v41
  %v2207 = vunpack.c.h.b16 %v41
  %v2208 = vunpack.c.l.b16 %v42
  %v2209 = vunpack.c.h.b16 %v42
  %v2210 = vunpack.c.l.b16 %v43
  %v2211 = vunpack.c.h.b16 %v43
  %v2212 = vunpack.c.l.b16 %v44
  %v2213 = vunpack.c.h.b16 %v44
  %v2214 = vunpack.c.l.b16 %v45
  %v2215 = vunpack.c.h.b16 %v45
  %v2216 = vunpack.c.l.b16 %v46
  %v2217 = vunpack.c.h.b16 %v46
  %v2218 = vunpack.c.l.b16 %v47
  %v2219 = vunpack.c.h.b16 %v47
  %v2220 = vunpack.c.l.b16 %v48
  %v2221 = vunpack.c.h.b16 %v48
  %v2222 = vunpack.c.l.b16 %v49
  %v2223 = vunpack.c.h.b16 %v49
  %v2224 = vunpack.c.l.b16 %v50
  %v2225 = vunpack.c.h.b16 %v50
  %v2226 = vunpack.c.l.b16 %v51
  %v2227 = vunpack.c.h.b16 %v51
  %v2228 = vunpack.c.l.b16 %v52
  %v2229 = vunpack.c.h.b16 %v52
  %v2230 = vunpack.c.l.b16 %v53
  %v2231 = vunpack.c.h.b16 %v53
  %v2232 = vunpack.c.l.b16 %v54
  %v2233 = vunpack.c.h.b16 %v54
  %v2234 = vunpack.c.l.b16 %v55
  %v2235 = vunpack.c.h.b16 %v55
  %v2236 = vunpack.c.l.b16 %v56
  %v2237 = vunpack.c.h.b16 %v56
  %v2238 = vunpack.c.l.b16 %v57
  %v2239 = vunpack.c.h.b16 %v57
  %v2240 = vunpack.c.l.b16 %v58
  %v2241 = vunpack.c.h.b16 %v58
  %v2242 = vunpack.c.l.b16 %v59
  %v2243 = vunpack.c.h.b16 %v59
  %v2244 = vunpack.c.l.b16 %v60
  %v2245 = vunpack.c.h.b16 %v60
  %v2246 = vunpack.c.l.b16 %v61
  %v2247 = vunpack.c.h.b16 %v61
  %v2248 = vunpack.c.l.b16 %v62
  %v2249 = vunpack.c.h.b16 %v62
  %v2250 = vunpack.c.l.b16 %v63
  %v2251 = vunpack.c.h.b16 %v63
  %v2252 = vunpack.c.l.b16 %v64
  %v2253 = vunpack.c.h.b16 %v64
  %v2254 = vunpack.c.l.b16 %v65
  %v2255 = vunpack.c.h.b16 %v65
  %v2256 = vunpack.c.l.b16 %v66
  %v2257 = vunpack.c.h.b16 %v66
  %v2258 = vunpack.c.l.b16 %v67
  %v2259 = vunpack.c.h.b16 %v67
  %v2260 = vunpack.c.l.b16 %v68
  %v2261 = vunpack.c.h.b16 %v68
  %v2262 = vunpack.c.l.b16 %v69
  %v2263 = vunpack.c.h.b16 %v69
  %v2264 = vunpack.c.l.b16 %v70
  %v2265 = vunpack.c.h.b16 %v70
  %v2266 = vunpack.c.l.b16 %v71
  %v2267 = vunpack.c.h.b16 %v71
  %v2268 = vunpack.c.l.b16 %v72
  %v2269 = vunpack.c.h.b16 %v72
  %v2270 = vunpack.c.l.b16 %v73
  %v2271 = vunpack.c.h.b16 %v73
  %v2272 = vunpack.c.l.b16 %v74
  %v2273 = vunpack.c.h.b16 %v74
  %v2274 = vunpack.c.l.b16 %v75
  %v2275 = vunpack.c.h.b16 %v75
  %v2276 = vunpack.c.l.b16 %v76
  %v2277 = vunpack.c.h.b16 %v76
  %v2278 = vunpack.c.l.b16 %v77
  %v2279 = vunpack.c.h.b16 %v77
  %v2280 = vunpack.c.l.b16 %v78
  %v2281 = vunpack.c.h.b16 %v78
  %v2282 = vunpack.c.l.b16 %v79
  %v2283 = vunpack.c.h.b16 %v79
  %v2284 = vunpack.c.l.b16 %v80
  %v2285 = vunpack.c.h.b16 %v80
  %v2286 = vunpack.c.l.b16 %v81
  %v2287 = vunpack.c.h.b16 %v81
  %v2288 = vunpack.c.l.b16 %v82
  %v2289 = vunpack.c.h.b16 %v82
  %v2290 = vunpack.c.l.b16 %v83
  %v2291 = vunpack.c.h.b16 %v83
  %v2292 = vunpack.c.l.b16 %v84
  %v2293 = vunpack.c.h.b16 %v84
  %v2294 = vunpack.c.l.b16 %v85
  %v2295 = vunpack.c.h.b16 %v85
  %v2296 = vunpack.c.l.b16 %v86
  %v2297 = vunpack.c.h.b16 %v86
  %v2298 = vunpack.c.l.b16 %v87
  %v2299 = vunpack.c.h.b16 %v87
  %v2300 = vunpack.c.l.b16 %v88
  %v2301 = vunpack.c.h.b16 %v88
  %v2302 = vunpack.c.l.b16 %v89
  %v2303 = vunpack.c.h.b16 %v89
  %v2304 = vunpack.c.l.b16 %v90
  %v2305 = vunpack.c.h.b16 %v90
  %v2306 = vunpack.c.l.b16 %v91
  %v2307 = vunpack.c.h.b16 %v91
  %v2308 = vunpack.c.l.b16 %v92
  %v2309 = vunpack.c.h.b16 %v92
  %v2310 = vunpack.c.l.b16 %v93
  %v2311 = vunpack.c.h.b16 %v93
  %v2312 = vunpack.c.l.b16 %v94
  %v2313 = vunpack.c.h.b16 %v94
  %v2314 = vunpack.c.l.b16 %v95
  %v2315 = vunpack.c.h.b16 %v95
  %v2316 = vunpack.c.l.b16 %v96
  %v2317 = vunpack.c.h.b16 %v96
  %v2318 = vunpack.c.l.b16 %v97
  %v2319 = vunpack.c.h.b16 %v97
  %v2320 = vunpack.c.l.b16 %v98
  %v2321 = vunpack.c.h.b16 %v98
  %v2322 = vunpack.c.l.b16 %v99
  %v2323 = vunpack.c.h.b16 %v99
  %v2324 = vunpack.c.l.b16 %v100
  %v2325 = vunpack.c.h.b16 %v100
  %v2326 = vunpack.c.l.b16 %v101
  %v2327 = vunpack.c.h.b16 %v101
  %v2328 = vunpack.c.l.b16 %v102
  %v2329 = vunpack.c.h.b16 %v102
  %v2330 = vunpack.c.l.b16 %v103
  %v2331 = vunpack.c.h.b16 %v103
  %v2332 = vunpack.c.l.b16 %v104
  %v2333 = vunpack.c.h.b16 %v104
  %v2334 = vunpack.c.l.b16 %v105
  %v2335 = vunpack.c.h.b16 %v105
  %v2336 = vunpack.c.l.b16 %v106
  %v2337 = vunpack.c.h.b16 %v106
  %v2338 = vunpack.c.l.b16 %v107
  %v2339 = vunpack.c.h.b16 %v107
  %v2340 = vunpack.c.l.b16 %v108
  %v2341 = vunpack.c.h.b16 %v108
  %v2342 = vunpack.c.l.b16 %v109
  %v2343 = vunpack.c.h.b16 %v109
  %v2344 = vunpack.c.l.b16 %v110
  %v2345 = vunpack.c.h.b16 %v110
  %v2346 = vunpack.c.l.b16 %v111
  %v2347 = vunpack.c.h.b16 %v111
  %v2348 = vunpack.c.l.b16 %v112
  %v2349 = vunpack.c.h.b16 %v112
  %v2350 = vunpack.c.l.b16 %v113
  %v2351 = vunpack.c.h.b16 %v113
  %v2352 = vunpack.c.l.b16 %v114
  %v2353 = vunpack.c.h.b16 %v114
  %v2354 = vunpack.c.l.b16 %v115
  %v2355 = vunpack.c.h.b16 %v115
  %v2356 = vunpack.c.l.b16 %v116
  %v2357 = vunpack.c.h.b16 %v116
  %v2358 = vunpack.c.l.b16 %v117
  %v2359 = vunpack.c.h.b16 %v117
  %v2360 = vunpack.c.l.b16 %v118
  %v2361 = vunpack.c.h.b16 %v118
  %v2362 = vunpack.c.l.b16 %v119
  %v2363 = vunpack.c.h.b16 %v119
  %v2364 = vunpack.c.l.b16 %v120
  %v2365 = vunpack.c.h.b16 %v120
  %v2366 = vunpack.c.l.b16 %v121
  %v2367 = vunpack.c.h.b16 %v121
  %v2368 = vunpack.c.l.b16 %v122
  %v2369 = vunpack.c.h.b16 %v122
  %v2370 = vunpack.c.l.b16 %v123
  %v2371 = vunpack.c.h.b16 %v123
  %v2372 = vunpack.c.l.b16 %v124
  %v2373 = vunpack.c.h.b16 %v124
  %v2374 = vunpack.c.l.b16 %v125
  %v2375 = vunpack.c.h.b16 %v125
  %v2376 = vunpack.c.l.b16 %v126
  %v2377 = vunpack.c.h.b16 %v126
  %v2378 = vunpack.c.l.b16 %v127
  %v2379 = vunpack.c.h.b16 %v127
  %v2380 = vunpack.c.l.b16 %v128
  %v2381 = vunpack.c.h.b16 %v128
  %v2382 = vunpack.c.l.b16 %v129
  %v2383 = vunpack.c.h.b16 %v129
  %v2384 = vunpack.c.l.b16 %v130
  %v2385 = vunpack.c.h.b16 %v130
  %v2386 = vunpack.c.l.b16 %v131
  %v2387 = vunpack.c.h.b16 %v131
  %v2388 = vunpack.c.l.b16 %v132
  %v2389 = vunpack.c.h.b16 %v132
  %v2390 = vunpack.c.l.b16 %v133
  %v2391 = vunpack.c.h.b16 %v133
  %v2392 = vunpack.c.l.b16 %v134
  %v2393 = vunpack.c.h.b16 %v134
  %v2394 = vunpack.c.l.b16 %v135
  %v2395 = vunpack.c.h.b16 %v135
  %v2396 = vunpack.c.l.b16 %v136
  %v2397 = vunpack.c.h.b16 %v136
  %v2398 = vunpack.c.l.b16 %v137
  %v2399 = vunpack.c.h.b16 %v137
  %v2400 = vunpack.c.l.b16 %v138
  %v2401 = vunpack.c.h.b16 %v138
  %v2402 = vunpack.c.l.b16 %v139
  %v2403 = vunpack.c.h.b16 %v139
  %v2404 = vunpack.c.l.b16 %v140
  %v2405 = vunpack.c.h.b16 %v140
  %v2406 = vunpack.c.l.b16 %v141
  %v2407 = vunpack.c.h.b16 %v141
  %v2408 = vunpack.c.l.b16 %v142
  %v2409 = vunpack.c.h.b16 %v142
  %v2410 = vunpack.c.l.b16 %v143
  %v2411 = vunpack.c.h.b16 %v143
  %v2412 = vunpack.c.l.b16 %v144
  %v2413 = vunpack.c.h.b16 %v144
  %v2414 = vunpack.c.l.b16 %v145
  %v2415 = vunpack.c.h.b16 %v145
  %v2416 = vunpack.c.l.b16 %v146
  %v2417 = vunpack.c.h.b16 %v146
  %v2418 = vunpack.c.l.b16 %v147
  %v2419 = vunpack.c.h.b16 %v147
  %v2420 = vunpack.c.l.b16 %v148
  %v2421 = vunpack.c.h.b16 %v148
  %v2422 = vunpack.c.l.b16 %v149
  %v2423 = vunpack.c.h.b16 %v149
  %v2424 = vunpack.c.l.b16 %v150
  %v2425 = vunpack.c.h.b16 %v150
  %v2426 = vunpack.c.l.b16 %v151
  %v2427 = vunpack.c.h.b16 %v151
  %v2428 = vunpack.c.l.b16 %v152
  %v2429 = vunpack.c.h.b16 %v152
  %v2430 = vunpack.c.l.b16 %v153
  %v2431 = vunpack.c.h.b16 %v153
  %v2432 = vunpack.c.l.b16 %v154
  %v2433 = vunpack.c.h.b16 %v154
  %v2434 = vunpack.c.l.b16 %v155
  %v2435 = vunpack.c.h.b16 %v155
  %v2436 = vunpack.c.l.b16 %v156
  %v2437 = vunpack.c.h.b16 %v156
  %v2438 = vunpack.c.l.b16 %v157
  %v2439 = vunpack.c.h.b16 %v157
  %v2440 = vunpack.c.l.b16 %v158
  %v2441 = vunpack.c.h.b16 %v158
  %v2442 = vunpack.c.l.b16 %v159
  %v2443 = vunpack.c.h.b16 %v159
  %v2444 = vunpack.c.l.b16 %v160
  %v2445 = vunpack.c.h.b16 %v160
  %v2446 = vunpack.c.l.b16 %v161
  %v2447 = vunpack.c.h.b16 %v161
  %v2448 = vunpack.c.l.b16 %v162
  %v2449 = vunpack.c.h.b16 %v162
  %v2450 = vunpack.c.l.b16 %v163
  %v2451 = vunpack.c.h.b16 %v163
  %v2452 = vunpack.c.l.b16 %v164
  %v2453 = vunpack.c.h.b16 %v164
  %v2454 = vunpack.c.l.b16 %v165
  %v2455 = vunpack.c.h.b16 %v165
  %v2456 = vunpack.c.l.b16 %v166
  %v2457 = vunpack.c.h.b16 %v166
  %v2458 = vunpack.c.l.b16 %v167
  %v2459 = vunpack.c.h.b16 %v167
  %v2460 = vunpack.c.l.b16 %v168
  %v2461 = vunpack.c.h.b16 %v168
  %v2462 = vunpack.c.l.b16 %v169
  %v2463 = vunpack.c.h.b16 %v169
  %v2464 = vunpack.c.l.b16 %v170
  %v2465 = vunpack.c.h.b16 %v170
  %v2466 = vunpack.c.l.b16 %v171
  %v2467 = vunpack.c.h.b16 %v171
  %v2468 = vunpack.c.l.b16 %v172
  %v2469 = vunpack.c.h.b16 %v172
  %v2470 = vunpack.c.l.b16 %v173
  %v2471 = vunpack.c.h.b16 %v173
  %v2472 = vunpack.c.l.b16 %v174
  %v2473 = vunpack.c.h.b16 %v174
  %v2474 = vunpack.c.l.b16 %v175
  %v2475 = vunpack.c.h.b16 %v175
  %v2476 = vunpack.c.l.b16 %v176
  %v2477 = vunpack.c.h.b16 %v176
  %v2478 = vunpack.c.l.b16 %v177
  %v2479 = vunpack.c.h.b16 %v177
  %v2480 = vunpack.c.l.b16 %v178
  %v2481 = vunpack.c.h.b16 %v178
  %v2482 = vunpack.c.l.b16 %v179
  %v2483 = vunpack.c.h.b16 %v179
  %v2484 = vunpack.c.l.b16 %v180
  %v2485 = vunpack.c.h.b16 %v180
  %v2486 = vunpack.c.l.b16 %v181
  %v2487 = vunpack.c.h.b16 %v181
  %v2488 = vunpack.c.l.b16 %v182
  %v2489 = vunpack.c.h.b16 %v182
  %v2490 = vunpack.c.l.b16 %v183
  %v2491 = vunpack.c.h.b16 %v183
  %v2492 = vunpack.c.l.b16 %v184
  %v2493 = vunpack.c.h.b16 %v184
  %v2494 = vunpack.c.l.b16 %v185
  %v2495 = vunpack.c.h.b16 %v185
  %v2496 = vunpack.c.l.b16 %v186
  %v2497 = vunpack.c.h.b16 %v186
  %v2498 = vunpack.c.l.b16 %v187
  %v2499 = vunpack.c.h.b16 %v187
  %v2500 = vunpack.c.l.b16 %v188
  %v2501 = vunpack.c.h.b16 %v188
  %v2502 = vunpack.c.l.b16 %v189
  %v2503 = vunpack.c.h.b16 %v189
  %v2504 = vunpack.c.l.b16 %v190
  %v2505 = vunpack.c.h.b16 %v190
  %v2506 = vunpack.c.l.b16 %v191
  %v2507 = vunpack.c.h.b16 %v191
  %v2508 = vunpack.c.l.b16 %v192
  %v2509 = vunpack.c.h.b16 %v192
  %v2510 = vunpack.c.l.b16 %v193
  %v2511 = vunpack.c.h.b16 %v193
  %v2512 = vunpack.c.l.b16 %v194
  %v2513 = vunpack.c.h.b16 %v194
  %v2514 = vunpack.c.l.b16 %v195
  %v2515 = vunpack.c.h.b16 %v195
  %v2516 = vunpack.c.l.b16 %v196
  %v2517 = vunpack.c.h.b16 %v196
  %v2518 = vunpack.c.l.b16 %v197
  %v2519 = vunpack.c.h.b16 %v197
  %v2520 = vunpack.c.l.b16 %v198
  %v2521 = vunpack.c.h.b16 %v198
  %v2522 = vunpack.c.l.b16 %v199
  %v2523 = vunpack.c.h.b16 %v199
  %v2524 = vunpack.c.l.b16 %v200
  %v2525 = vunpack.c.h.b16 %v200
  %v2526 = vunpack.c.l.b16 %v201
  %v2527 = vunpack.c.h.b16 %v201
  %v2528 = vunpack.c.l.b16 %v202
  %v2529 = vunpack.c.h.b16 %v202
  %v2530 = vunpack.c.l.b16 %v203
  %v2531 = vunpack.c.h.b16 %v203
  %v2532 = vunpack.c.l.b16 %v204
  %v2533 = vunpack.c.h.b16 %v204
  %v2534 = vunpack.c.l.b16 %v205
  %v2535 = vunpack.c.h.b16 %v205
  %v2536 = vunpack.c.l.b16 %v206
  %v2537 = vunpack.c.h.b16 %v206
  %v2538 = vunpack.c.l.b16 %v207
  %v2539 = vunpack.c.h.b16 %v207
  %v2540 = vunpack.c.l.b16 %v208
  %v2541 = vunpack.c.h.b16 %v208
  %v2542 = vunpack.c.l.b16 %v209
  %v2543 = vunpack.c.h.b16 %v209
  %v2544 = vunpack.c.l.b16 %v210
  %v2545 = vunpack.c.h.b16 %v210
  %v2546 = vunpack.c.l.b16 %v211
  %v2547 = vunpack.c.h.b16 %v211
  %v2548 = vunpack.c.l.b16 %v212
  %v2549 = vunpack.c.h.b16 %v212
  %v2550 = vunpack.c.l.b16 %v213
  %v2551 = vunpack.c.h.b16 %v213
  %v2552 = vunpack.c.l.b16 %v214
  %v2553 = vunpack.c.h.b16 %v214
  %v2554 = vunpack.c.l.b16 %v215
  %v2555 = vunpack.c.h.b16 %v215
  %v2556 = vunpack.c.l.b16 %v216
  %v2557 = vunpack.c.h.b16 %v216
  %v2558 = vunpack.c.l.b16 %v217
  %v2559 = vunpack.c.h.b16 %v217
  %v2560 = vunpack.c.l.b16 %v218
  %v2561 = vunpack.c.h.b16 %v218
  %v2562 = vunpack.c.l.b16 %v219
  %v2563 = vunpack.c.h.b16 %v219
  %v2564 = vunpack.c.l.b16 %v220
  %v2565 = vunpack.c.h.b16 %v220
  %v2566 = vunpack.c.l.b16 %v221
  %v2567 = vunpack.c.h.b16 %v221
  %v2568 = vunpack.c.l.b16 %v222
  %v2569 = vunpack.c.h.b16 %v222
  %v2570 = vunpack.c.l.b16 %v223
  %v2571 = vunpack.c.h.b16 %v223
  %v2572 = vunpack.c.l.b16 %v224
  %v2573 = vunpack.c.h.b16 %v224
  %v2574 = vunpack.c.l.b16 %v225
  %v2575 = vunpack.c.h.b16 %v225
  %v2576 = vunpack.c.l.b16 %v226
  %v2577 = vunpack.c.h.b16 %v226
  %v2578 = vunpack.c.l.b16 %v227
  %v2579 = vunpack.c.h.b16 %v227
  %v2580 = vunpack.c.l.b16 %v228
  %v2581 = vunpack.c.h.b16 %v228
  %v2582 = vunpack.c.l.b16 %v229
  %v2583 = vunpack.c.h.b16 %v229
  %v2584 = vunpack.c.l.b16 %v230
  %v2585 = vunpack.c.h.b16 %v230
  %v2586 = vunpack.c.l.b16 %v231
  %v2587 = vunpack.c.h.b16 %v231
  %v2588 = vunpack.c.l.b16 %v232
  %v2589 = vunpack.c.h.b16 %v232
  %v2590 = vunpack.c.l.b16 %v233
  %v2591 = vunpack.c.h.b16 %v233
  %v2592 = vunpack.c.l.b16 %v234
  %v2593 = vunpack.c.h.b16 %v234
  %v2594 = vunpack.c.l.b16 %v235
  %v2595 = vunpack.c.h.b16 %v235
  %v2596 = vunpack.c.l.b16 %v236
  %v2597 = vunpack.c.h.b16 %v236
  %v2598 = vunpack.c.l.b16 %v237
  %v2599 = vunpack.c.h.b16 %v237
  %v2600 = vunpack.c.l.b16 %v238
  %v2601 = vunpack.c.h.b16 %v238
  %v2602 = vunpack.c.l.b16 %v239
  %v2603 = vunpack.c.h.b16 %v239
  %v2604 = vunpack.c.l.b16 %v240
  %v2605 = vunpack.c.h.b16 %v240
  %v2606 = vunpack.c.l.b16 %v241
  %v2607 = vunpack.c.h.b16 %v241
  %v2608 = vunpack.c.l.b16 %v242
  %v2609 = vunpack.c.h.b16 %v242
  %v2610 = vunpack.c.l.b16 %v243
  %v2611 = vunpack.c.h.b16 %v243
  %v2612 = vunpack.c.l.b16 %v244
  %v2613 = vunpack.c.h.b16 %v244
  %v2614 = vunpack.c.l.b16 %v245
  %v2615 = vunpack.c.h.b16 %v245
  %v2616 = vunpack.c.l.b16 %v246
  %v2617 = vunpack.c.h.b16 %v246
  %v2618 = vunpack.c.l.b16 %v247
  %v2619 = vunpack.c.h.b16 %v247
  %v2620 = vunpack.c.l.b16 %v248
  %v2621 = vunpack.c.h.b16 %v248
  %v2622 = vunpack.c.l.b16 %v249
  %v2623 = vunpack.c.h.b16 %v249
  %v2624 = vunpack.c.l.b16 %v250
  %v2625 = vunpack.c.h.b16 %v250
  %v2626 = vunpack.c.l.b16 %v251
  %v2627 = vunpack.c.h.b16 %v251
  %v2628 = vunpack.c.l.b16 %v252
  %v2629 = vunpack.c.h.b16 %v252
  %v2630 = vunpack.c.l.b16 %v253
  %v2631 = vunpack.c.h.b16 %v253
  %v2632 = vunpack.c.l.b16 %v254
  %v2633 = vunpack.c.h.b16 %v254
  %v2634 = vunpack.c.l.b16 %v255
  %v2635 = vunpack.c.h.b16 %v255
  %v2636 = vunpack.c.l.b16 %v256
  %v2637 = vunpack.c.h.b16 %v256
  %v2638 = vunpack.c.l.b16 %v257
  %v2639 = vunpack.c.h.b16 %v257
  %v2640 = vunpack.c.l.b16 %v258
  %v2641 = vunpack.c.h.b16 %v258
  %v2642 = vunpack.c.l.b16 %v259
  %v2643 = vunpack.c.h.b16 %v259
  %v2644 = vunpack.c.l.b16 %v260
  %v2645 = vunpack.c.h.b16 %v260
  %v2646 = vunpack.c.l.b16 %v261
  %v2647 = vunpack.c.h.b16 %v261
  %v2648 = vunpack.c.l.b16 %v262
  %v2649 = vunpack.c.h.b16 %v262
  %v2650 = vunpack.c.l.b16 %v263
  %v2651 = vunpack.c.h.b16 %v263
  %v2652 = vunpack.c.l.b16 %v264
  %v2653 = vunpack.c.h.b16 %v264
  %v2654 = vunpack.c.l.b16 %v265
  %v2655 = vunpack.c.h.b16 %v265
  %v2656 = vunpack.c.l.b16 %v266
  %v2657 = vunpack.c.h.b16 %v266
  %v2658 = vunpack.c.l.b16 %v267
  %v2659 = vunpack.c.h.b16 %v267
  %v2660 = vunpack.c.l.b16 %v268
  %v2661 = vunpack.c.h.b16 %v268
  %v2662 = vunpack.c.l.b16 %v269
  %v2663 = vunpack.c.h.b16 %v269
  %v2664 = vunpack.c.l.b16 %v270
  %v2665 = vunpack.c.h.b16 %v270
  %v2666 = vunpack.c.l.b16 %v271
  %v2667 = vunpack.c.h.b16 %v271
  %v2668 = vunpack.c.l.b16 %v272
  %v2669 = vunpack.c.h.b16 %v272
  %v2670 = vunpack.c.l.b16 %v273
  %v2671 = vunpack.c.h.b16 %v273
  %v2672 = vunpack.c.l.b16 %v274
  %v2673 = vunpack.c.h.b16 %v274
  %v2674 = vunpack.c.l.b16 %v275
  %v2675 = vunpack.c.h.b16 %v275
  %v2676 = vunpack.c.l.b16 %v276
  %v2677 = vunpack.c.h.b16 %v276
  %v2678 = vunpack.c.l.b16 %v277
  %v2679 = vunpack.c.h.b16 %v277
  %v2680 = vunpack.c.l.b16 %v278
  %v2681 = vunpack.c.h.b16 %v278
  %v2682 = vunpack.c.l.b16 %v279
  %v2683 = vunpack.c.h.b16 %v279
  %v2684 = vunpack.c.l.b16 %v280
  %v2685 = vunpack.c.h.b16 %v280
  %v2686 = vunpack.c.l.b16 %v281
  %v2687 = vunpack.c.h.b16 %v281
  %v2688 = vunpack.c.l.b16 %v282
  %v2689 = vunpack.c.h.b16 %v282
  %v2690 = vunpack.c.l.b16 %v283
  %v2691 = vunpack.c.h.b16 %v283
  %v2692 = vunpack.c.l.b16 %v284
  %v2693 = vunpack.c.h.b16 %v284
  %v2694 = vunpack.c.l.b16 %v285
  %v2695 = vunpack.c.h.b16 %v285
  %v2696 = vunpack.c.l.b16 %v286
  %v2697 = vunpack.c.h.b16 %v286
  %v2698 = vunpack.c.l.b16 %v287
  %v2699 = vunpack.c.h.b16 %v287
  %v2700 = vunpack.c.l.b16 %v288
  %v2701 = vunpack.c.h.b16 %v288
  %v2702 = vunpack.c.l.b16 %v289
  %v2703 = vunpack.c.h.b16 %v289
  %v2704 = vunpack.c.l.b16 %v290
  %v2705 = vunpack.c.h.b16 %v290
  %v2706 = vunpack.c.l.b16 %v291
  %v2707 = vunpack.c.h.b16 %v291
  %v2708 = vunpack.c.l.b16 %v292
  %v2709 = vunpack.c.h.b16 %v292
  %v2710 = vunpack.c.l.b16 %v293
  %v2711 = vunpack.c.h.b16 %v293
  %v2712 = vunpack.c.l.b16 %v294
  %v2713 = vunpack.c.h.b16 %v294
  %v2714 = vunpack.c.l.b16 %v295
  %v2715 = vunpack.c.h.b16 %v295
  %v2716 = vunpack.c.l.b16 %v296
  %v2717 = vunpack.c.h.b16 %v296
  %v2718 = vunpack.c.l.b16 %v297
  %v2719 = vunpack.c.h.b16 %v297
  %v2720 = vunpack.c.l.b16 %v298
  %v2721 = vunpack.c.h.b16 %v298
  %v2722 = vunpack.c.l.b16 %v299
  %v2723 = vunpack.c.h.b16 %v299
  %v2724 = vunpack.c.l.b16 %v300
  %v2725 = vunpack.c.h.b16 %v300
  %v2726 = vunpack.c.l.b16 %v301
  %v2727 = vunpack.c.h.b16 %v301
  %v2728 = vunpack.c.l.b16 %v302
  %v2729 = vunpack.c.h.b16 %v302
  %v2730 = vunpack.c.l.b16 %v303
  %v2731 = vunpack.c.h.b16 %v303
  %v2732 = vunpack.c.l.b16 %v304
  %v2733 = vunpack.c.h.b16 %v304
  %v2734 = vunpack.c.l.b16 %v305
  %v2735 = vunpack.c.h.b16 %v305
  %v2736 = vunpack.c.l.b16 %v306
  %v2737 = vunpack.c.h.b16 %v306
  %v2738 = vunpack.c.l.b16 %v307
  %v2739 = vunpack.c.h.b16 %v307
  %v2740 = vunpack.c.l.b16 %v308
  %v2741 = vunpack.c.h.b16 %v308
  %v2742 = vunpack.c.l.b16 %v309
  %v2743 = vunpack.c.h.b16 %v309
  %v2744 = vunpack.c.l.b16 %v310
  %v2745 = vunpack.c.h.b16 %v310
  %v2746 = vunpack.c.l.b16 %v311
  %v2747 = vunpack.c.h.b16 %v311
  %v2748 = vunpack.c.l.b16 %v312
  %v2749 = vunpack.c.h.b16 %v312
  %v2750 = vunpack.c.l.b16 %v313
  %v2751 = vunpack.c.h.b16 %v313
  %v2752 = vunpack.c.l.b16 %v314
  %v2753 = vunpack.c.h.b16 %v314
  %v2754 = vunpack.c.l.b16 %v315
  %v2755 = vunpack.c.h.b16 %v315
  %v2756 = vunpack.c.l.b16 %v316
  %v2757 = vunpack.c.h.b16 %v316
  %v2758 = vunpack.c.l.b16 %v317
  %v2759 = vunpack.c.h.b16 %v317
  %v2760 = vunpack.c.l.b16 %v318
  %v2761 = vunpack.c.h.b16 %v318
  %v2762 = vunpack.c.l.b16 %v319
  %v2763 = vunpack.c.h.b16 %v319
  %v2764 = vunpack.c.l.b16 %v320
  %v2765 = vunpack.c.h.b16 %v320
  %v2766 = vunpack.c.l.b16 %v321
  %v2767 = vunpack.c.h.b16 %v321
  %v2768 = vunpack.c.l.b16 %v322
  %v2769 = vunpack.c.h.b16 %v322
  %v2770 = vunpack.c.l.b16 %v323
  %v2771 = vunpack.c.h.b16 %v323
  %v2772 = vunpack.c.l.b16 %v324
  %v2773 = vunpack.c.h.b16 %v324
  %v2774 = vunpack.c.l.b16 %v325
  %v2775 = vunpack.c.h.b16 %v325
  %v2776 = vunpack.c.l.b16 %v326
  %v2777 = vunpack.c.h.b16 %v326
  %v2778 = vunpack.c.l.b16 %v327
  %v2779 = vunpack.c.h.b16 %v327
  %v2780 = vunpack.c.l.b16 %v328
  %v2781 = vunpack.c.h.b16 %v328
  %v2782 = vunpack.c.l.b16 %v329
  %v2783 = vunpack.c.h.b16 %v329
  %v2784 = vunpack.c.l.b16 %v330
  %v2785 = vunpack.c.h.b16 %v330
  %v2786 = vunpack.c.l.b16 %v331
  %v2787 = vunpack.c.h.b16 %v331
  %v2788 = vunpack.c.l.b16 %v332
  %v2789 = vunpack.c.h.b16 %v332
  %v2790 = vunpack.c.l.b16 %v333
  %v2791 = vunpack.c.h.b16 %v333
  %v2792 = vunpack.c.l.b16 %v334
  %v2793 = vunpack.c.h.b16 %v334
  %v2794 = vunpack.c.l.b16 %v335
  %v2795 = vunpack.c.h.b16 %v335
  %v2796 = vunpack.c.l.b16 %v336
  %v2797 = vunpack.c.h.b16 %v336
  %v2798 = vunpack.c.l.b16 %v337
  %v2799 = vunpack.c.h.b16 %v337
  %v2800 = vunpack.c.l.b16 %v338
  %v2801 = vunpack.c.h.b16 %v338
  %v2802 = vunpack.c.l.b16 %v339
  %v2803 = vunpack.c.h.b16 %v339
  %v2804 = vunpack.c.l.b16 %v340
  %v2805 = vunpack.c.h.b16 %v340
  %v2806 = vunpack.c.l.b16 %v341
  %v2807 = vunpack.c.h.b16 %v341
  %v2808 = vunpack.c.l.b16 %v342
  %v2809 = vunpack.c.h.b16 %v342
  %v2810 = vunpack.c.l.b16 %v343
  %v2811 = vunpack.c.h.b16 %v343
  %v2812 = vunpack.c.l.b16 %v344
  %v2813 = vunpack.c.h.b16 %v344
  %v2814 = vunpack.c.l.b16 %v345
  %v2815 = vunpack.c.h.b16 %v345
  %v2816 = vunpack.c.l.b16 %v346
  %v2817 = vunpack.c.h.b16 %v346
  %v2818 = vunpack.c.l.b16 %v347
  %v2819 = vunpack.c.h.b16 %v347
  %v2820 = vunpack.c.l.b16 %v348
  %v2821 = vunpack.c.h.b16 %v348
  %v2822 = vunpack.c.l.b16 %v349
  %v2823 = vunpack.c.h.b16 %v349
  %v2824 = vunpack.c.l.b16 %v350
  %v2825 = vunpack.c.h.b16 %v350
  %v2826 = vunpack.c.l.b16 %v351
  %v2827 = vunpack.c.h.b16 %v351
  %v2828 = vunpack.c.l.b16 %v352
  %v2829 = vunpack.c.h.b16 %v352
  %v2830 = vunpack.c.l.b16 %v353
  %v2831 = vunpack.c.h.b16 %v353
  %v2832 = vunpack.c.l.b16 %v354
  %v2833 = vunpack.c.h.b16 %v354
  %v2834 = vunpack.c.l.b16 %v355
  %v2835 = vunpack.c.h.b16 %v355
  %v2836 = vunpack.c.l.b16 %v356
  %v2837 = vunpack.c.h.b16 %v356
  %v2838 = vunpack.c.l.b16 %v357
  %v2839 = vunpack.c.h.b16 %v357
  %v2840 = vunpack.c.l.b16 %v358
  %v2841 = vunpack.c.h.b16 %v358
  %v2842 = vunpack.c.l.b16 %v359
  %v2843 = vunpack.c.h.b16 %v359
  %v2844 = vunpack.c.l.b16 %v360
  %v2845 = vunpack.c.h.b16 %v360
  %v2846 = vunpack.c.l.b16 %v361
  %v2847 = vunpack.c.h.b16 %v361
  %v2848 = vunpack.c.l.b16 %v362
  %v2849 = vunpack.c.h.b16 %v362
  %v2850 = vunpack.c.l.b16 %v363
  %v2851 = vunpack.c.h.b16 %v363
  %v2852 = vunpack.c.l.b16 %v364
  %v2853 = vunpack.c.h.b16 %v364
  %v2854 = vunpack.c.l.b16 %v365
  %v2855 = vunpack.c.h.b16 %v365
  %v2856 = vunpack.c.l.b16 %v366
  %v2857 = vunpack.c.h.b16 %v366
  %v2858 = vunpack.c.l.b16 %v367
  %v2859 = vunpack.c.h.b16 %v367
  %v2860 = vunpack.c.l.b16 %v368
  %v2861 = vunpack.c.h.b16 %v368
  %v2862 = vunpack.c.l.b16 %v369
  %v2863 = vunpack.c.h.b16 %v369
  %v2864 = vunpack.c.l.b16 %v370
  %v2865 = vunpack.c.h.b16 %v370
  %v2866 = vunpack.c.l.b16 %v371
  %v2867 = vunpack.c.h.b16 %v371
  %v2868 = vunpack.c.l.b16 %v372
  %v2869 = vunpack.c.h.b16 %v372
  %v2870 = vunpack.c.l.b16 %v373
  %v2871 = vunpack.c.h.b16 %v373
  %v2872 = vunpack.c.l.b16 %v374
  %v2873 = vunpack.c.h.b16 %v374
  %v2874 = vunpack.c.l.b16 %v375
  %v2875 = vunpack.c.h.b16 %v375
  %v2876 = vunpack.c.l.b16 %v376
  %v2877 = vunpack.c.h.b16 %v376
  %v2878 = vunpack.c.l.b16 %v377
  %v2879 = vunpack.c.h.b16 %v377
  %v2880 = vunpack.c.l.b16 %v378
  %v2881 = vunpack.c.h.b16 %v378
  %v2882 = vunpack.c.l.b16 %v379
  %v2883 = vunpack.c.h.b16 %v379
  %v2884 = vunpack.c.l.b16 %v380
  %v2885 = vunpack.c.h.b16 %v380
  %v2886 = vunpack.c.l.b16 %v381
  %v2887 = vunpack.c.h.b16 %v381
  %v2888 = vunpack.c.l.b16 %v382
  %v2889 = vunpack.c.h.b16 %v382
  %v2890 = vunpack.c.l.b16 %v383
  %v2891 = vunpack.c.h.b16 %v383
  %v2892 = vunpack.c.l.b16 %v384
  %v2893 = vunpack.c.h.b16 %v384
  %v2894 = vunpack.c.l.b16 %v385
  %v2895 = vunpack.c.h.b16 %v385
  %v2896 = vunpack.c.l.b16 %v386
  %v2897 = vunpack.c.h.b16 %v386
  %v2898 = vunpack.c.l.b16 %v387
  %v2899 = vunpack.c.h.b16 %v387
  %v2900 = vunpack.c.l.b16 %v388
  %v2901 = vunpack.c.h.b16 %v388
  %v2902 = vunpack.c.l.b16 %v389
  %v2903 = vunpack.c.h.b16 %v389
  %v2904 = vunpack.c.l.b16 %v390
  %v2905 = vunpack.c.h.b16 %v390
  %v2906 = vunpack.c.l.b16 %v391
  %v2907 = vunpack.c.h.b16 %v391
  %v2908 = vunpack.c.l.b16 %v392
  %v2909 = vunpack.c.h.b16 %v392
  %v2910 = vunpack.c.l.b16 %v393
  %v2911 = vunpack.c.h.b16 %v393
  %v2912 = vunpack.c.l.b16 %v394
  %v2913 = vunpack.c.h.b16 %v394
  %v2914 = vunpack.c.l.b16 %v395
  %v2915 = vunpack.c.h.b16 %v395
  %v2916 = vunpack.c.l.b16 %v396
  %v2917 = vunpack.c.h.b16 %v396
  %v2918 = vunpack.c.l.b16 %v397
  %v2919 = vunpack.c.h.b16 %v397
  %v2920 = vunpack.c.l.b16 %v398
  %v2921 = vunpack.c.h.b16 %v398
  %v2922 = vunpack.c.l.b16 %v399
  %v2923 = vunpack.c.h.b16 %v399
  %v2924 = vunpack.c.l.b16 %v400
  %v2925 = vunpack.c.h.b16 %v400
  %v2926 = vunpack.c.l.b16 %v401
  %v2927 = vunpack.c.h.b16 %v401
  %v2928 = vunpack.c.l.b16 %v402
  %v2929 = vunpack.c.h.b16 %v402
  %v2930 = vunpack.c.l.b16 %v403
  %v2931 = vunpack.c.h.b16 %v403
  %v2932 = vunpack.c.l.b16 %v404
  %v2933 = vunpack.c.h.b16 %v404
  %v2934 = vunpack.c.l.b16 %v405
  %v2935 = vunpack.c.h.b16 %v405
  %v2936 = vunpack.c.l.b16 %v406
  %v2937 = vunpack.c.h.b16 %v406
  %v2938 = vunpack.c.l.b16 %v407
  %v2939 = vunpack.c.h.b16 %v407
  %v2940 = vunpack.c.l.b16 %v408
  %v2941 = vunpack.c.h.b16 %v408
  %v2942 = vunpack.c.l.b16 %v409
  %v2943 = vunpack.c.h.b16 %v409
  %v2944 = vunpack.c.l.b16 %v410
  %v2945 = vunpack.c.h.b16 %v410
  %v2946 = vunpack.c.l.b16 %v411
  %v2947 = vunpack.c.h.b16 %v411
  %v2948 = vunpack.c.l.b16 %v412
  %v2949 = vunpack.c.h.b16 %v412
  %v2950 = vunpack.c.l.b16 %v413
  %v2951 = vunpack.c.h.b16 %v413
  %v2952 = vunpack.c.l.b16 %v414
  %v2953 = vunpack.c.h.b16 %v414
  %v2954 = vunpack.c.l.b16 %v415
  %v2955 = vunpack.c.h.b16 %v415
  %v2956 = vunpack.c.l.b16 %v416
  %v2957 = vunpack.c.h.b16 %v416
  %v2958 = vunpack.c.l.b16 %v417
  %v2959 = vunpack.c.h.b16 %v417
  %v2960 = vunpack.c.l.b16 %v418
  %v2961 = vunpack.c.h.b16 %v418
  %v2962 = vunpack.c.l.b16 %v419
  %v2963 = vunpack.c.h.b16 %v419
  %v2964 = vunpack.c.l.b16 %v420
  %v2965 = vunpack.c.h.b16 %v420
  %v2966 = vunpack.c.l.b16 %v421
  %v2967 = vunpack.c.h.b16 %v421
  %v2968 = vunpack.c.l.b16 %v422
  %v2969 = vunpack.c.h.b16 %v422
  %v2970 = vunpack.c.l.b16 %v423
  %v2971 = vunpack.c.h.b16 %v423
  %v2972 = vunpack.c.l.b16 %v424
  %v2973 = vunpack.c.h.b16 %v424
  %v2974 = vunpack.c.l.b16 %v425
  %v2975 = vunpack.c.h.b16 %v425
  %v2976 = vunpack.c.l.b16 %v426
  %v2977 = vunpack.c.h.b16 %v426
  %v2978 = vunpack.c.l.b16 %v427
  %v2979 = vunpack.c.h.b16 %v427
  %v2980 = vunpack.c.l.b16 %v428
  %v2981 = vunpack.c.h.b16 %v428
  %v2982 = vunpack.c.l.b16 %v429
  %v2983 = vunpack.c.h.b16 %v429
  %v2984 = vunpack.c.l.b16 %v430
  %v2985 = vunpack.c.h.b16 %v430
  %v2986 = vunpack.c.l.b16 %v431
  %v2987 = vunpack.c.h.b16 %v431
  %v2988 = vunpack.c.l.b16 %v432
  %v2989 = vunpack.c.h.b16 %v432
  %v2990 = vunpack.c.l.b16 %v433
  %v2991 = vunpack.c.h.b16 %v433
  %v2992 = vunpack.c.l.b16 %v434
  %v2993 = vunpack.c.h.b16 %v434
  %v2994 = vunpack.c.l.b16 %v435
  %v2995 = vunpack.c.h.b16 %v435
  %v2996 = vunpack.c.l.b16 %v436
  %v2997 = vunpack.c.h.b16 %v436
  %v2998 = vunpack.c.l.b16 %v437
  %v2999 = vunpack.c.h.b16 %v437
  %v3000 = vunpack.c.l.b16 %v438
  %v3001 = vunpack.c.h.b16 %v438
  %v3002 = vunpack.c.l.b16 %v439
  %v3003 = vunpack.c.h.b16 %v439
  %v3004 = vunpack.c.l.b16 %v440
  %v3005 = vunpack.c.h.b16 %v440
  %v3006 = vunpack.c.l.b16 %v441
  %v3007 = vunpack.c.h.b16 %v441
  %v3008 = vunpack.c.l.b16 %v442
  %v3009 = vunpack.c.h.b16 %v442
  %v3010 = vunpack.c.l.b16 %v443
  %v3011 = vunpack.c.h.b16 %v443
  %v3012 = vunpack.c.l.b16 %v444
  %v3013 = vunpack.c.h.b16 %v444
  %v3014 = vunpack.c.l.b16 %v445
  %v3015 = vunpack.c.h.b16 %v445
  %v3016 = vunpack.c.l.b16 %v446
  %v3017 = vunpack.c.h.b16 %v446
  %v3018 = vunpack.c.l.b16 %v447
  %v3019 = vunpack.c.h.b16 %v447
  %v3020 = vunpack.c.l.b16 %v448
  %v3021 = vunpack.c.h.b16 %v448
  %v3022 = vunpack.c.l.b16 %v449
  %v3023 = vunpack.c.h.b16 %v449
  %v3024 = vunpack.c.l.b16 %v450
  %v3025 = vunpack.c.h.b16 %v450
  %v3026 = vunpack.c.l.b16 %v451
  %v3027 = vunpack.c.h.b16 %v451
  %v3028 = vunpack.c.l.b16 %v452
  %v3029 = vunpack.c.h.b16 %v452
  %v3030 = vunpack.c.l.b16 %v453
  %v3031 = vunpack.c.h.b16 %v453
  %v3032 = vunpack.c.l.b16 %v454
  %v3033 = vunpack.c.h.b16 %v454
  %v3034 = vunpack.c.l.b16 %v455
  %v3035 = vunpack.c.h.b16 %v455
  %v3036 = vunpack.c.l.b16 %v456
  %v3037 = vunpack.c.h.b16 %v456
  %v3038 = vunpack.c.l.b16 %v457
  %v3039 = vunpack.c.h.b16 %v457
  %v3040 = vunpack.c.l.b16 %v458
  %v3041 = vunpack.c.h.b16 %v458
  %v3042 = vunpack.c.l.b16 %v459
  %v3043 = vunpack.c.h.b16 %v459
  %v3044 = vunpack.c.l.b16 %v460
  %v3045 = vunpack.c.h.b16 %v460
  %v3046 = vunpack.c.l.b16 %v461
  %v3047 = vunpack.c.h.b16 %v461
  %v3048 = vunpack.c.l.b16 %v462
  %v3049 = vunpack.c.h.b16 %v462
  %v3050 = vunpack.c.l.b16 %v463
  %v3051 = vunpack.c.h.b16 %v463
  %v3052 = vunpack.c.l.b16 %v464
  %v3053 = vunpack.c.h.b16 %v464
  %v3054 = vunpack.c.l.b16 %v465
  %v3055 = vunpack.c.h.b16 %v465
  %v3056 = vunpack.c.l.b16 %v466
  %v3057 = vunpack.c.h.b16 %v466
  %v3058 = vunpack.c.l.b16 %v467
  %v3059 = vunpack.c.h.b16 %v467
  %v3060 = vunpack.c.l.b16 %v468
  %v3061 = vunpack.c.h.b16 %v468
  %v3062 = vunpack.c.l.b16 %v469
  %v3063 = vunpack.c.h.b16 %v469
  %v3064 = vunpack.c.l.b16 %v470
  %v3065 = vunpack.c.h.b16 %v470
  %v3066 = vunpack.c.l.b16 %v471
  %v3067 = vunpack.c.h.b16 %v471
  %v3068 = vunpack.c.l.b16 %v472
  %v3069 = vunpack.c.h.b16 %v472
  %v3070 = vunpack.c.l.b16 %v473
  %v3071 = vunpack.c.h.b16 %v473
  %v3072 = vunpack.c.l.b16 %v474
  %v3073 = vunpack.c.h.b16 %v474
  %v3074 = vunpack.c.l.b16 %v475
  %v3075 = vunpack.c.h.b16 %v475
  %v3076 = vunpack.c.l.b16 %v476
  %v3077 = vunpack.c.h.b16 %v476
  %v3078 = vunpack.c.l.b16 %v477
  %v3079 = vunpack.c.h.b16 %v477
  %v3080 = vunpack.c.l.b16 %v478
  %v3081 = vunpack.c.h.b16 %v478
  %v3082 = vunpack.c.l.b16 %v479
  %v3083 = vunpack.c.h.b16 %v479
  %v3084 = vunpack.c.l.b16 %v480
  %v3085 = vunpack.c.h.b16 %v480
  %v3086 = vunpack.c.l.b16 %v481
  %v3087 = vunpack.c.h.b16 %v481
  %v3088 = vunpack.c.l.b16 %v482
  %v3089 = vunpack.c.h.b16 %v482
  %v3090 = vunpack.c.l.b16 %v483
  %v3091 = vunpack.c.h.b16 %v483
  %v3092 = vunpack.c.l.b16 %v484
  %v3093 = vunpack.c.h.b16 %v484
  %v3094 = vunpack.c.l.b16 %v485
  %v3095 = vunpack.c.h.b16 %v485
  %v3096 = vunpack.c.l.b16 %v486
  %v3097 = vunpack.c.h.b16 %v486
  %v3098 = vunpack.c.l.b16 %v487
  %v3099 = vunpack.c.h.b16 %v487
  %v3100 = vunpack.c.l.b16 %v488
  %v3101 = vunpack.c.h.b16 %v488
  %v3102 = vunpack.c.l.b16 %v489
  %v3103 = vunpack.c.h.b16 %v489
  %v3104 = vunpack.c.l.b16 %v490
  %v3105 = vunpack.c.h.b16 %v490
  %v3106 = vunpack.c.l.b16 %v491
  %v3107 = vunpack.c.h.b16 %v491
  %v3108 = vunpack.c.l.b16 %v492
  %v3109 = vunpack.c.h.b16 %v492
  %v3110 = vunpack.c.l.b16 %v493
  %v3111 = vunpack.c.h.b16 %v493
  %v3112 = vunpack.c.l.b16 %v494
  %v3113 = vunpack.c.h.b16 %v494
  %v3114 = vunpack.c.l.b16 %v495
  %v3115 = vunpack.c.h.b16 %v495
  %v3116 = vunpack.c.l.b16 %v496
  %v3117 = vunpack.c.h.b16 %v496
  %v3118 = vunpack.c.l.b16 %v497
  %v3119 = vunpack.c.h.b16 %v497
  %v3120 = vunpack.c.l.b16 %v498
  %v3121 = vunpack.c.h.b16 %v498
  %v3122 = vunpack.c.l.b16 %v499
  %v3123 = vunpack.c.h.b16 %v499
  %v3124 = vunpack.c.l.b16 %v500
  %v3125 = vunpack.c.h.b16 %v500
  %v3126 = vunpack.c.l.b16 %v501
  %v3127 = vunpack.c.h.b16 %v501
  %v3128 = vunpack.c.l.b16 %v502
  %v3129 = vunpack.c.h.b16 %v502
  %v3130 = vunpack.c.l.b16 %v503
  %v3131 = vunpack.c.h.b16 %v503
  %v3132 = vunpack.c.l.b16 %v504
  %v3133 = vunpack.c.h.b16 %v504
  %v3134 = vunpack.c.l.b16 %v505
  %v3135 = vunpack.c.h.b16 %v505
  %v3136 = vunpack.c.l.b16 %v506
  %v3137 = vunpack.c.h.b16 %v506
  %v3138 = vunpack.c.l.b16 %v507
  %v3139 = vunpack.c.h.b16 %v507
  %v3140 = vunpack.c.l.b16 %v508
  %v3141 = vunpack.c.h.b16 %v508
  %v3142 = vunpack.c.l.b16 %v509
  %v3143 = vunpack.c.h.b16 %v509
  %v3144 = vunpack.c.l.b16 %v510
  %v3145 = vunpack.c.h.b16 %v510
  %v3146 = vunpack.c.l.b16 %v511
  %v3147 = vunpack.c.h.b16 %v511
  %v3148 = vunpack.c.l.b16 %v512
  %v3149 = vunpack.c.h.b16 %v512
  %v3150 = vunpack.c.l.b16 %v513
  %v3151 = vunpack.c.h.b16 %v513
  %v3152 = vunpack.c.l.b16 %v514
  %v3153 = vunpack.c.h.b16 %v514
  %v3154 = vunpack.c.l.b16 %v515
  %v3155 = vunpack.c.h.b16 %v515
  %v3156 = vunpack.c.l.b16 %v516
  %v3157 = vunpack.c.h.b16 %v516
  %v3158 = vunpack.c.l.b16 %v517
  %v3159 = vunpack.c.h.b16 %v517
  %v3160 = vunpack.c.l.b16 %v518
  %v3161 = vunpack.c.h.b16 %v518
  %v3162 = vunpack.c.l.b16 %v519
  %v3163 = vunpack.c.h.b16 %v519
  %v3164 = vunpack.c.l.b16 %v520
  %v3165 = vunpack.c.h.b16 %v520
  %v3166 = vunpack.c.l.b16 %v521
  %v3167 = vunpack.c.h.b16 %v521
  %v3168 = vunpack.c.l.b16 %v522
  %v3169 = vunpack.c.h.b16 %v522
  %v3170 = vunpack.c.l.b16 %v523
  %v3171 = vunpack.c.h.b16 %v523
  %v3172 = vunpack.c.l.b16 %v524
  %v3173 = vunpack.c.h.b16 %v524
  %v3174 = vunpack.c.l.b16 %v525
  %v3175 = vunpack.c.h.b16 %v525
  %v3176 = vunpack.c.l.b16 %v526
  %v3177 = vunpack.c.h.b16 %v526
  %v3178 = vunpack.c.l.b16 %v527
  %v3179 = vunpack.c.h.b16 %v527
  %v3180 = vunpack.c.l.b16 %v528
  %v3181 = vunpack.c.h.b16 %v528
  %v3182 = vunpack.c.l.b16 %v529
  %v3183 = vunpack.c.h.b16 %v529
  %v3184 = vunpack.c.l.b16 %v530
  %v3185 = vunpack.c.h.b16 %v530
  %v3186 = vunpack.c.l.b16 %v531
  %v3187 = vunpack.c.h.b16 %v531
  %v3188 = vunpack.c.l.b16 %v532
  %v3189 = vunpack.c.h.b16 %v532
  %v3190 = vunpack.c.l.b16 %v533
  %v3191 = vunpack.c.h.b16 %v533
  %v3192 = vunpack.c.l.b16 %v534
  %v3193 = vunpack.c.h.b16 %v534
  %v3194 = vunpack.c.l.b16 %v535
  %v3195 = vunpack.c.h.b16 %v535
  %v3196 = vunpack.c.l.b16 %v536
  %v3197 = vunpack.c.h.b16 %v536
  %v3198 = vunpack.c.l.b16 %v537
  %v3199 = vunpack.c.h.b16 %v537
  %v3200 = vunpack.c.l.b16 %v538
  %v3201 = vunpack.c.h.b16 %v538
  %v3202 = vunpack.c.l.b16 %v539
  %v3203 = vunpack.c.h.b16 %v539
  %v3204 = vunpack.c.l.b16 %v540
  %v3205 = vunpack.c.h.b16 %v540
  %v3206 = vunpack.c.l.b16 %v541
  %v3207 = vunpack.c.h.b16 %v541
  %v3208 = vunpack.c.l.b16 %v542
  %v3209 = vunpack.c.h.b16 %v542
  %v3210 = vunpack.c.l.b16 %v543
  %v3211 = vunpack.c.h.b16 %v543
  %v3212 = vunpack.c.l.b16 %v544
  %v3213 = vunpack.c.h.b16 %v544
  %v3214 = vunpack.c.l.b16 %v545
  %v3215 = vunpack.c.h.b16 %v545
  %v3216 = vunpack.c.l.b16 %v546
  %v3217 = vunpack.c.h.b16 %v546
  %v3218 = vunpack.c.l.b16 %v547
  %v3219 = vunpack.c.h.b16 %v547
  %v3220 = vunpack.c.l.b16 %v548
  %v3221 = vunpack.c.h.b16 %v548
  %v3222 = vunpack.c.l.b16 %v549
  %v3223 = vunpack.c.h.b16 %v549
  %v3224 = vunpack.c.l.b16 %v550
  %v3225 = vunpack.c.h.b16 %v550
  %v3226 = vunpack.c.l.b16 %v551
  %v3227 = vunpack.c.h.b16 %v551
  %v3228 = vunpack.c.l.b16 %v552
  %v3229 = vunpack.c.h.b16 %v552
  %v3230 = vunpack.c.l.b16 %v553
  %v3231 = vunpack.c.h.b16 %v553
  %v3232 = vunpack.c.l.b16 %v554
  %v3233 = vunpack.c.h.b16 %v554
  %v3234 = vunpack.c.l.b16 %v555
  %v3235 = vunpack.c.h.b16 %v555
  %v3236 = vunpack.c.l.b16 %v556
  %v3237 = vunpack.c.h.b16 %v556
  %v3238 = vunpack.c.l.b16 %v557
  %v3239 = vunpack.c.h.b16 %v557
  %v3240 = vunpack.c.l.b16 %v558
  %v3241 = vunpack.c.h.b16 %v558
  %v3242 = vunpack.c.l.b16 %v559
  %v3243 = vunpack.c.h.b16 %v559
  %v3244 = vunpack.c.l.b16 %v560
  %v3245 = vunpack.c.h.b16 %v560
  %v3246 = vunpack.c.l.b16 %v561
  %v3247 = vunpack.c.h.b16 %v561
  %v3248 = vunpack.c.l.b16 %v562
  %v3249 = vunpack.c.h.b16 %v562
  %v3250 = vunpack.c.l.b16 %v563
  %v3251 = vunpack.c.h.b16 %v563
  %v3252 = vunpack.c.l.b16 %v564
  %v3253 = vunpack.c.h.b16 %v564
  %v3254 = vunpack.c.l.b16 %v565
  %v3255 = vunpack.c.h.b16 %v565
  %v3256 = vunpack.c.l.b16 %v566
  %v3257 = vunpack.c.h.b16 %v566
  %v3258 = vunpack.c.l.b16 %v567
  %v3259 = vunpack.c.h.b16 %v567
  %v3260 = vunpack.c.l.b16 %v568
  %v3261 = vunpack.c.h.b16 %v568
  %v3262 = vunpack.c.l.b16 %v569
  %v3263 = vunpack.c.h.b16 %v569
  %v3264 = vunpack.c.l.b16 %v570
  %v3265 = vunpack.c.h.b16 %v570
  %v3266 = vunpack.c.l.b16 %v571
  %v3267 = vunpack.c.h.b16 %v571
  %v3268 = vunpack.c.l.b16 %v572
  %v3269 = vunpack.c.h.b16 %v572
  %v3270 = vunpack.c.l.b16 %v573
  %v3271 = vunpack.c.h.b16 %v573
  %v3272 = vunpack.c.l.b16 %v574
  %v3273 = vunpack.c.h.b16 %v574
  %v3274 = vunpack.c.l.b16 %v575
  %v3275 = vunpack.c.h.b16 %v575
  %v3276 = vunpack.c.l.b16 %v576
  %v3277 = vunpack.c.h.b16 %v576
  %v3278 = vunpack.c.l.b16 %v577
  %v3279 = vunpack.c.h.b16 %v577
  %v3280 = vunpack.c.l.b16 %v578
  %v3281 = vunpack.c.h.b16 %v578
  %v3282 = vunpack.c.l.b16 %v579
  %v3283 = vunpack.c.h.b16 %v579
  %v3284 = vunpack.c.l.b16 %v580
  %v3285 = vunpack.c.h.b16 %v580
  %v3286 = vunpack.c.l.b16 %v581
  %v3287 = vunpack.c.h.b16 %v581
  %v3288 = vunpack.c.l.b16 %v582
  %v3289 = vunpack.c.h.b16 %v582
  %v3290 = vunpack.c.l.b16 %v583
  %v3291 = vunpack.c.h.b16 %v583
  %v3292 = vunpack.c.l.b16 %v584
  %v3293 = vunpack.c.h.b16 %v584
  %v3294 = vunpack.c.l.b16 %v585
  %v3295 = vunpack.c.h.b16 %v585
  %v3296 = vunpack.c.l.b16 %v586
  %v3297 = vunpack.c.h.b16 %v586
  %v3298 = vunpack.c.l.b16 %v587
  %v3299 = vunpack.c.h.b16 %v587
  %v3300 = vunpack.c.l.b16 %v588
  %v3301 = vunpack.c.h.b16 %v588
  %v3302 = vunpack.c.l.b16 %v589
  %v3303 = vunpack.c.h.b16 %v589
  %v3304 = vunpack.c.l.b16 %v590
  %v3305 = vunpack.c.h.b16 %v590
  %v3306 = vunpack.c.l.b16 %v591
  %v3307 = vunpack.c.h.b16 %v591
  %v3308 = vunpack.c.l.b16 %v592
  %v3309 = vunpack.c.h.b16 %v592
  %v3310 = vunpack.c.l.b16 %v593
  %v3311 = vunpack.c.h.b16 %v593
  %v3312 = vunpack.c.l.b16 %v594
  %v3313 = vunpack.c.h.b16 %v594
  %v3314 = vunpack.c.l.b16 %v595
  %v3315 = vunpack.c.h.b16 %v595
  %v3316 = vunpack.c.l.b16 %v596
  %v3317 = vunpack.c.h.b16 %v596
  %v3318 = vunpack.c.l.b16 %v597
  %v3319 = vunpack.c.h.b16 %v597
  %v3320 = vunpack.c.l.b16 %v598
  %v3321 = vunpack.c.h.b16 %v598
  %v3322 = vunpack.c.l.b16 %v599
  %v3323 = vunpack.c.h.b16 %v599
  %v3324 = vunpack.c.l.b16 %v600
  %v3325 = vunpack.c.h.b16 %v600
  %v3326 = vunpack.c.l.b16 %v601
  %v3327 = vunpack.c.h.b16 %v601
  %v3328 = vunpack.c.l.b16 %v602
  %v3329 = vunpack.c.h.b16 %v602
  %v3330 = vunpack.c.l.b16 %v603
  %v3331 = vunpack.c.h.b16 %v603
  %v3332 = vunpack.c.l.b16 %v604
  %v3333 = vunpack.c.h.b16 %v604
  %v3334 = vunpack.c.l.b16 %v605
  %v3335 = vunpack.c.h.b16 %v605
  %v3336 = vunpack.c.l.b16 %v606
  %v3337 = vunpack.c.h.b16 %v606
  %v3338 = vunpack.c.l.b16 %v607
  %v3339 = vunpack.c.h.b16 %v607
  %v3340 = vunpack.c.l.b16 %v608
  %v3341 = vunpack.c.h.b16 %v608
  %v3342 = vunpack.c.l.b16 %v609
  %v3343 = vunpack.c.h.b16 %v609
  %v3344 = vunpack.c.l.b16 %v610
  %v3345 = vunpack.c.h.b16 %v610
  %v3346 = vunpack.c.l.b16 %v611
  %v3347 = vunpack.c.h.b16 %v611
  %v3348 = vunpack.c.l.b16 %v612
  %v3349 = vunpack.c.h.b16 %v612
  %v3350 = vunpack.c.l.b16 %v613
  %v3351 = vunpack.c.h.b16 %v613
  %v3352 = vunpack.c.l.b16 %v614
  %v3353 = vunpack.c.h.b16 %v614
  %v3354 = vunpack.c.l.b16 %v615
  %v3355 = vunpack.c.h.b16 %v615
  %v3356 = vunpack.c.l.b16 %v616
  %v3357 = vunpack.c.h.b16 %v616
  %v3358 = vunpack.c.l.b16 %v617
  %v3359 = vunpack.c.h.b16 %v617
  %v3360 = vunpack.c.l.b16 %v618
  %v3361 = vunpack.c.h.b16 %v618
  %v3362 = vunpack.c.l.b16 %v619
  %v3363 = vunpack.c.h.b16 %v619
  %v3364 = vunpack.c.l.b16 %v620
  %v3365 = vunpack.c.h.b16 %v620
  %v3366 = vunpack.c.l.b16 %v621
  %v3367 = vunpack.c.h.b16 %v621
  %v3368 = vunpack.c.l.b16 %v622
  %v3369 = vunpack.c.h.b16 %v622
  %v3370 = vunpack.c.l.b16 %v623
  %v3371 = vunpack.c.h.b16 %v623
  %v3372 = vunpack.c.l.b16 %v624
  %v3373 = vunpack.c.h.b16 %v624
  %v3374 = vunpack.c.l.b16 %v625
  %v3375 = vunpack.c.h.b16 %v625
  %v3376 = vunpack.c.l.b16 %v626
  %v3377 = vunpack.c.h.b16 %v626
  %v3378 = vunpack.c.l.b16 %v627
  %v3379 = vunpack.c.h.b16 %v627
  %v3380 = vunpack.c.l.b16 %v628
  %v3381 = vunpack.c.h.b16 %v628
  %v3382 = vunpack.c.l.b16 %v629
  %v3383 = vunpack.c.h.b16 %v629
  %v3384 = vunpack.c.l.b16 %v630
  %v3385 = vunpack.c.h.b16 %v630
  %v3386 = vunpack.c.l.b16 %v631
  %v3387 = vunpack.c.h.b16 %v631
  %v3388 = vunpack.c.l.b16 %v632
  %v3389 = vunpack.c.h.b16 %v632
  %v3390 = vunpack.c.l.b16 %v633
  %v3391 = vunpack.c.h.b16 %v633
  %v3392 = vunpack.c.l.b16 %v634
  %v3393 = vunpack.c.h.b16 %v634
  %v3394 = vunpack.c.l.b16 %v635
  %v3395 = vunpack.c.h.b16 %v635
  %v3396 = vunpack.c.l.b16 %v636
  %v3397 = vunpack.c.h.b16 %v636
  %v3398 = vunpack.c.l.b16 %v637
  %v3399 = vunpack.c.h.b16 %v637
  %v3400 = vunpack.c.l.b16 %v638
  %v3401 = vunpack.c.h.b16 %v638
  %v3402 = vunpack.c.l.b16 %v639
  %v3403 = vunpack.c.h.b16 %v639
  %v3404 = vunpack.c.l.b16 %v640
  %v3405 = vunpack.c.h.b16 %v640
  %v3406 = vunpack.c.l.b16 %v641
  %v3407 = vunpack.c.h.b16 %v641
  %v3408 = vunpack.c.l.b16 %v642
  %v3409 = vunpack.c.h.b16 %v642
  %v3410 = vunpack.c.l.b16 %v643
  %v3411 = vunpack.c.h.b16 %v643
  %v3412 = vunpack.c.l.b16 %v644
  %v3413 = vunpack.c.h.b16 %v644
  %v3414 = vunpack.c.l.b16 %v645
  %v3415 = vunpack.c.h.b16 %v645
  %v3416 = vunpack.c.l.b16 %v646
  %v3417 = vunpack.c.h.b16 %v646
  %v3418 = vunpack.c.l.b16 %v647
  %v3419 = vunpack.c.h.b16 %v647
  %v3420 = vunpack.c.l.b16 %v648
  %v3421 = vunpack.c.h.b16 %v648
  %v3422 = vunpack.c.l.b16 %v649
  %v3423 = vunpack.c.h.b16 %v649
  %v3424 = vunpack.c.l.b16 %v650
  %v3425 = vunpack.c.h.b16 %v650
  %v3426 = vunpack.c.l.b16 %v651
  %v3427 = vunpack.c.h.b16 %v651
  %v3428 = vunpack.c.l.b16 %v652
  %v3429 = vunpack.c.h.b16 %v652
  %v3430 = vunpack.c.l.b16 %v653
  %v3431 = vunpack.c.h.b16 %v653
  %v3432 = vunpack.c.l.b16 %v654
  %v3433 = vunpack.c.h.b16 %v654
  %v3434 = vunpack.c.l.b16 %v655
  %v3435 = vunpack.c.h.b16 %v655
  %v3436 = vunpack.c.l.b16 %v656
  %v3437 = vunpack.c.h.b16 %v656
  %v3438 = vunpack.c.l.b16 %v657
  %v3439 = vunpack.c.h.b16 %v657
  %v3440 = vunpack.c.l.b16 %v658
  %v3441 = vunpack.c.h.b16 %v658
  %v3442 = vunpack.c.l.b16 %v659
  %v3443 = vunpack.c.h.b16 %v659
  %v3444 = vunpack.c.l.b16 %v660
  %v3445 = vunpack.c.h.b16 %v660
  %v3446 = vunpack.c.l.b16 %v661
  %v3447 = vunpack.c.h.b16 %v661
  %v3448 = vunpack.c.l.b16 %v662
  %v3449 = vunpack.c.h.b16 %v662
  %v3450 = vunpack.c.l.b16 %v663
  %v3451 = vunpack.c.h.b16 %v663
  %v3452 = vunpack.c.l.b16 %v664
  %v3453 = vunpack.c.h.b16 %v664
  %v3454 = vunpack.c.l.b16 %v665
  %v3455 = vunpack.c.h.b16 %v665
  %v3456 = vunpack.c.l.b16 %v666
  %v3457 = vunpack.c.h.b16 %v666
  %v3458 = vunpack.c.l.b16 %v667
  %v3459 = vunpack.c.h.b16 %v667
  %v3460 = vunpack.c.l.b16 %v668
  %v3461 = vunpack.c.h.b16 %v668
  %v3462 = vunpack.c.l.b16 %v669
  %v3463 = vunpack.c.h.b16 %v669
  %v3464 = vunpack.c.l.b16 %v670
  %v3465 = vunpack.c.h.b16 %v670
  %v3466 = vunpack.c.l.b16 %v671
  %v3467 = vunpack.c.h.b16 %v671
  %v3468 = vunpack.c.l.b16 %v672
  %v3469 = vunpack.c.h.b16 %v672
  %v3470 = vunpack.c.l.b16 %v673
  %v3471 = vunpack.c.h.b16 %v673
  %v3472 = vunpack.c.l.b16 %v674
  %v3473 = vunpack.c.h.b16 %v674
  %v3474 = vunpack.c.l.b16 %v675
  %v3475 = vunpack.c.h.b16 %v675
  %v3476 = vunpack.c.l.b16 %v676
  %v3477 = vunpack.c.h.b16 %v676
  %v3478 = vunpack.c.l.b16 %v677
  %v3479 = vunpack.c.h.b16 %v677
  %v3480 = vunpack.c.l.b16 %v678
  %v3481 = vunpack.c.h.b16 %v678
  %v3482 = vunpack.c.l.b16 %v679
  %v3483 = vunpack.c.h.b16 %v679
  %v3484 = vunpack.c.l.b16 %v680
  %v3485 = vunpack.c.h.b16 %v680
  %v3486 = vunpack.c.l.b16 %v681
  %v3487 = vunpack.c.h.b16 %v681
  %v3488 = vunpack.c.l.b16 %v682
  %v3489 = vunpack.c.h.b16 %v682
  %v3490 = vunpack.c.l.b16 %v683
  %v3491 = vunpack.c.h.b16 %v683
  %v3492 = vunpack.c.l.b16 %v684
  %v3493 = vunpack.c.h.b16 %v684
  %v3494 = vunpack.c.l.b16 %v685
  %v3495 = vunpack.c.h.b16 %v685
  %v3496 = vunpack.c.l.b16 %v686
  %v3497 = vunpack.c.h.b16 %v686
  %v3498 = vunpack.c.l.b16 %v687
  %v3499 = vunpack.c.h.b16 %v687
  %v3500 = vunpack.c.l.b16 %v688
  %v3501 = vunpack.c.h.b16 %v688
  %v3502 = vunpack.c.l.b16 %v689
  %v3503 = vunpack.c.h.b16 %v689
  %v3504 = vunpack.c.l.b16 %v690
  %v3505 = vunpack.c.h.b16 %v690
  %v3506 = vunpack.c.l.b16 %v691
  %v3507 = vunpack.c.h.b16 %v691
  %v3508 = vunpack.c.l.b16 %v692
  %v3509 = vunpack.c.h.b16 %v692
  %v3510 = vunpack.c.l.b16 %v693
  %v3511 = vunpack.c.h.b16 %v693
  %v3512 = vunpack.c.l.b16 %v694
  %v3513 = vunpack.c.h.b16 %v694
  %v3514 = vunpack.c.l.b16 %v695
  %v3515 = vunpack.c.h.b16 %v695
  %v3516 = vunpack.c.l.b16 %v696
  %v3517 = vunpack.c.h.b16 %v696
  %v3518 = vunpack.c.l.b16 %v697
  %v3519 = vunpack.c.h.b16 %v697
  %v3520 = vunpack.c.l.b16 %v698
  %v3521 = vunpack.c.h.b16 %v698
  %v3522 = vunpack.c.l.b16 %v699
  %v3523 = vunpack.c.h.b16 %v699
  %v3524 = vunpack.c.l.b16 %v700
  %v3525 = vunpack.c.h.b16 %v700
  %v3526 = vunpack.c.l.b16 %v701
  %v3527 = vunpack.c.h.b16 %v701
  %v3528 = vunpack.c.l.b16 %v702
  %v3529 = vunpack.c.h.b16 %v702
  %v3530 = vunpack.c.l.b16 %v703
  %v3531 = vunpack.c.h.b16 %v703
  %v3532 = vunpack.c.l.b16 %v704
  %v3533 = vunpack.c.h.b16 %v704
  %v3534 = vunpack.c.l.b16 %v705
  %v3535 = vunpack.c.h.b16 %v705
  %v3536 = vunpack.c.l.b16 %v706
  %v3537 = vunpack.c.h.b16 %v706
  %v3538 = vunpack.c.l.b16 %v707
  %v3539 = vunpack.c.h.b16 %v707
  %v3540 = vunpack.c.l.b16 %v708
  %v3541 = vunpack.c.h.b16 %v708
  %v3542 = vunpack.c.l.b16 %v709
  %v3543 = vunpack.c.h.b16 %v709
  %v3544 = vunpack.c.l.b16 %v710
  %v3545 = vunpack.c.h.b16 %v710
  %v3546 = vunpack.c.l.b16 %v711
  %v3547 = vunpack.c.h.b16 %v711
  %v3548 = vunpack.c.l.b16 %v712
  %v3549 = vunpack.c.h.b16 %v712
  %v3550 = vunpack.c.l.b16 %v713
  %v3551 = vunpack.c.h.b16 %v713
  %v3552 = vunpack.c.l.b16 %v714
  %v3553 = vunpack.c.h.b16 %v714
  %v3554 = vunpack.c.l.b16 %v715
  %v3555 = vunpack.c.h.b16 %v715
  %v3556 = vunpack.c.l.b16 %v716
  %v3557 = vunpack.c.h.b16 %v716
  %v3558 = vunpack.c.l.b16 %v717
  %v3559 = vunpack.c.h.b16 %v717
  %v3560 = vunpack.c.l.b16 %v718
  %v3561 = vunpack.c.h.b16 %v718
  %v3562 = vunpack.c.l.b16 %v719
  %v3563 = vunpack.c.h.b16 %v719
  %v3564 = vunpack.c.l.b16 %v720
  %v3565 = vunpack.c.h.b16 %v720
  %v3566 = vunpack.c.l.b16 %v721
  %v3567 = vunpack.c.h.b16 %v721
  %v3568 = vunpack.c.l.b16 %v722
  %v3569 = vunpack.c.h.b16 %v722
  %v3570 = vunpack.c.l.b16 %v723
  %v3571 = vunpack.c.h.b16 %v723
  %v3572 = vunpack.c.l.b16 %v724
  %v3573 = vunpack.c.h.b16 %v724
  %v3574 = vunpack.c.l.b16 %v725
  %v3575 = vunpack.c.h.b16 %v725
  %v3576 = vunpack.c.l.b16 %v726
  %v3577 = vunpack.c.h.b16 %v726
  %v3578 = vunpack.c.l.b16 %v727
  %v3579 = vunpack.c.h.b16 %v727
  %v3580 = vunpack.c.l.b16 %v728
  %v3581 = vunpack.c.h.b16 %v728
  %v3582 = vunpack.c.l.b16 %v729
  %v3583 = vunpack.c.h.b16 %v729
  %v3584 = vunpack.c.l.b16 %v730
  %v3585 = vunpack.c.h.b16 %v730
  %v3586 = vunpack.c.l.b16 %v731
  %v3587 = vunpack.c.h.b16 %v731
  %v3588 = vunpack.c.l.b16 %v732
  %v3589 = vunpack.c.h.b16 %v732
  %v3590 = vunpack.c.l.b16 %v733
  %v3591 = vunpack.c.h.b16 %v733
  %v3592 = vunpack.c.l.b16 %v734
  %v3593 = vunpack.c.h.b16 %v734
  %v3594 = vunpack.c.l.b16 %v735
  %v3595 = vunpack.c.h.b16 %v735
  %v3596 = vunpack.c.l.b16 %v736
  %v3597 = vunpack.c.h.b16 %v736
  %v3598 = vunpack.c.l.b16 %v737
  %v3599 = vunpack.c.h.b16 %v737
  %v3600 = vunpack.c.l.b16 %v738
  %v3601 = vunpack.c.h.b16 %v738
  %v3602 = vunpack.c.l.b16 %v739
  %v3603 = vunpack.c.h.b16 %v739
  %v3604 = vunpack.c.l.b16 %v740
  %v3605 = vunpack.c.h.b16 %v740
  %v3606 = vunpack.c.l.b16 %v741
  %v3607 = vunpack.c.h.b16 %v741
  %v3608 = vunpack.c.l.b16 %v742
  %v3609 = vunpack.c.h.b16 %v742
  %v3610 = vunpack.c.l.b16 %v743
  %v3611 = vunpack.c.h.b16 %v743
  %v3612 = vunpack.c.l.b16 %v744
  %v3613 = vunpack.c.h.b16 %v744
  %v3614 = vunpack.c.l.b16 %v745
  %v3615 = vunpack.c.h.b16 %v745
  %v3616 = vunpack.c.l.b16 %v746
  %v3617 = vunpack.c.h.b16 %v746
  %v3618 = vunpack.c.l.b16 %v747
  %v3619 = vunpack.c.h.b16 %v747
  %v3620 = vunpack.c.l.b16 %v748
  %v3621 = vunpack.c.h.b16 %v748
  %v3622 = vunpack.c.l.b16 %v749
  %v3623 = vunpack.c.h.b16 %v749
  %v3624 = vunpack.c.l.b16 %v750
  %v3625 = vunpack.c.h.b16 %v750
  %v3626 = vunpack.c.l.b16 %v751
  %v3627 = vunpack.c.h.b16 %v751
  %v3628 = vunpack.c.l.b16 %v752
  %v3629 = vunpack.c.h.b16 %v752
  %v3630 = vunpack.c.l.b16 %v753
  %v3631 = vunpack.c.h.b16 %v753
  %v3632 = vunpack.c.l.b16 %v754
  %v3633 = vunpack.c.h.b16 %v754
  %v3634 = vunpack.c.l.b16 %v755
  %v3635 = vunpack.c.h.b16 %v755
  %v3636 = vunpack.c.l.b16 %v756
  %v3637 = vunpack.c.h.b16 %v756
  %v3638 = vunpack.c.l.b16 %v757
  %v3639 = vunpack.c.h.b16 %v757
  %v3640 = vunpack.c.l.b16 %v758
  %v3641 = vunpack.c.h.b16 %v758
  %v3642 = vunpack.c.l.b16 %v759
  %v3643 = vunpack.c.h.b16 %v759
  %v3644 = vunpack.c.l.b16 %v760
  %v3645 = vunpack.c.h.b16 %v760
  %v3646 = vunpack.c.l.b16 %v761
  %v3647 = vunpack.c.h.b16 %v761
  %v3648 = vunpack.c.l.b16 %v762
  %v3649 = vunpack.c.h.b16 %v762
  %v3650 = vunpack.c.l.b16 %v763
  %v3651 = vunpack.c.h.b16 %v763
  %v3652 = vunpack.c.l.b16 %v764
  %v3653 = vunpack.c.h.b16 %v764
  %v3654 = vunpack.c.l.b16 %v765
  %v3655 = vunpack.c.h.b16 %v765
  %v3656 = vunpack.c.l.b16 %v766
  %v3657 = vunpack.c.h.b16 %v766
  %v3658 = vunpack.c.l.b16 %v767
  %v3659 = vunpack.c.h.b16 %v767
  %v3660 = vunpack.c.l.b16 %v768
  %v3661 = vunpack.c.h.b16 %v768
  %v3662 = vunpack.c.l.b16 %v769
  %v3663 = vunpack.c.h.b16 %v769
  %v3664 = vunpack.c.l.b16 %v770
  %v3665 = vunpack.c.h.b16 %v770
  %v3666 = vunpack.c.l.b16 %v771
  %v3667 = vunpack.c.h.b16 %v771
  %v3668 = vunpack.c.l.b16 %v772
  %v3669 = vunpack.c.h.b16 %v772
  %v3670 = vunpack.c.l.b16 %v773
  %v3671 = vunpack.c.h.b16 %v773
  %v3672 = vunpack.c.l.b16 %v774
  %v3673 = vunpack.c.h.b16 %v774
  %v3674 = vunpack.c.l.b16 %v775
  %v3675 = vunpack.c.h.b16 %v775
  %v3676 = vunpack.c.l.b16 %v776
  %v3677 = vunpack.c.h.b16 %v776
  %v3678 = vunpack.c.l.b16 %v777
  %v3679 = vunpack.c.h.b16 %v777
  %v3680 = vunpack.c.l.b16 %v778
  %v3681 = vunpack.c.h.b16 %v778
  %v3682 = vunpack.c.l.b16 %v779
  %v3683 = vunpack.c.h.b16 %v779
  %v3684 = vunpack.c.l.b16 %v780
  %v3685 = vunpack.c.h.b16 %v780
  %v3686 = vunpack.c.l.b16 %v781
  %v3687 = vunpack.c.h.b16 %v781
  %v3688 = vunpack.c.l.b16 %v782
  %v3689 = vunpack.c.h.b16 %v782
  %v3690 = vunpack.c.l.b16 %v783
  %v3691 = vunpack.c.h.b16 %v783
  %v3692 = vunpack.c.l.b16 %v784
  %v3693 = vunpack.c.h.b16 %v784
  %v3694 = vunpack.c.l.b16 %v785
  %v3695 = vunpack.c.h.b16 %v785
  %v3696 = vunpack.c.l.b16 %v786
  %v3697 = vunpack.c.h.b16 %v786
  %v3698 = vunpack.c.l.b16 %v787
  %v3699 = vunpack.c.h.b16 %v787
  %v3700 = vunpack.c.l.b16 %v788
  %v3701 = vunpack.c.h.b16 %v788
  %v3702 = vunpack.c.l.b16 %v789
  %v3703 = vunpack.c.h.b16 %v789
  %v3704 = vunpack.c.l.b16 %v790
  %v3705 = vunpack.c.h.b16 %v790
  %v3706 = vunpack.c.l.b16 %v791
  %v3707 = vunpack.c.h.b16 %v791
  %v3708 = vunpack.c.l.b16 %v792
  %v3709 = vunpack.c.h.b16 %v792
  %v3710 = vunpack.c.l.b16 %v793
  %v3711 = vunpack.c.h.b16 %v793
  %v3712 = vunpack.c.l.b16 %v794
  %v3713 = vunpack.c.h.b16 %v794
  %v3714 = vunpack.c.l.b16 %v795
  %v3715 = vunpack.c.h.b16 %v795
  %v3716 = vunpack.c.l.b16 %v796
  %v3717 = vunpack.c.h.b16 %v796
  %v3718 = vunpack.c.l.b16 %v797
  %v3719 = vunpack.c.h.b16 %v797
  %v3720 = vunpack.c.l.b16 %v798
  %v3721 = vunpack.c.h.b16 %v798
  %v3722 = vunpack.c.l.b16 %v799
  %v3723 = vunpack.c.h.b16 %v799
  %v3724 = vunpack.c.l.b16 %v800
  %v3725 = vunpack.c.h.b16 %v800
  %v3726 = vunpack.c.l.b16 %v801
  %v3727 = vunpack.c.h.b16 %v801
  %v3728 = vunpack.c.l.b16 %v802
  %v3729 = vunpack.c.h.b16 %v802
  %v3730 = vunpack.c.l.b16 %v803
  %v3731 = vunpack.c.h.b16 %v803
  %v3732 = vunpack.c.l.b16 %v804
  %v3733 = vunpack.c.h.b16 %v804
  %v3734 = vunpack.c.l.b16 %v805
  %v3735 = vunpack.c.h.b16 %v805
  %v3736 = vunpack.c.l.b16 %v806
  %v3737 = vunpack.c.h.b16 %v806
  %v3738 = vunpack.c.l.b16 %v807
  %v3739 = vunpack.c.h.b16 %v807
  %v3740 = vunpack.c.l.b16 %v808
  %v3741 = vunpack.c.h.b16 %v808
  %v3742 = vunpack.c.l.b16 %v809
  %v3743 = vunpack.c.h.b16 %v809
  %v3744 = vunpack.c.l.b16 %v810
  %v3745 = vunpack.c.h.b16 %v810
  %v3746 = vunpack.c.l.b16 %v811
  %v3747 = vunpack.c.h.b16 %v811
  %v3748 = vunpack.c.l.b16 %v812
  %v3749 = vunpack.c.h.b16 %v812
  %v3750 = vunpack.c.l.b16 %v813
  %v3751 = vunpack.c.h.b16 %v813
  %v3752 = vunpack.c.l.b16 %v814
  %v3753 = vunpack.c.h.b16 %v814
  %v3754 = vunpack.c.l.b16 %v815
  %v3755 = vunpack.c.h.b16 %v815
  %v3756 = vunpack.c.l.b16 %v816
  %v3757 = vunpack.c.h.b16 %v816
  %v3758 = vunpack.c.l.b16 %v817
  %v3759 = vunpack.c.h.b16 %v817
  %v3760 = vunpack.c.l.b16 %v818
  %v3761 = vunpack.c.h.b16 %v818
  %v3762 = vunpack.c.l.b16 %v819
  %v3763 = vunpack.c.h.b16 %v819
  %v3764 = vunpack.c.l.b16 %v820
  %v3765 = vunpack.c.h.b16 %v820
  %v3766 = vunpack.c.l.b16 %v821
  %v3767 = vunpack.c.h.b16 %v821
  %v3768 = vunpack.c.l.b16 %v822
  %v3769 = vunpack.c.h.b16 %v822
  %v3770 = vunpack.c.l.b16 %v823
  %v3771 = vunpack.c.h.b16 %v823
  %v3772 = vunpack.c.l.b16 %v824
  %v3773 = vunpack.c.h.b16 %v824
  %v3774 = vunpack.c.l.b16 %v825
  %v3775 = vunpack.c.h.b16 %v825
  %v3776 = vunpack.c.l.b16 %v826
  %v3777 = vunpack.c.h.b16 %v826
  %v3778 = vunpack.c.l.b16 %v827
  %v3779 = vunpack.c.h.b16 %v827
  %v3780 = vunpack.c.l.b16 %v828
  %v3781 = vunpack.c.h.b16 %v828
  %v3782 = vunpack.c.l.b16 %v829
  %v3783 = vunpack.c.h.b16 %v829
  %v3784 = vunpack.c.l.b16 %v830
  %v3785 = vunpack.c.h.b16 %v830
  %v3786 = vunpack.c.l.b16 %v831
  %v3787 = vunpack.c.h.b16 %v831
  %v3788 = vunpack.c.l.b16 %v832
  %v3789 = vunpack.c.h.b16 %v832
  %v3790 = vunpack.c.l.b16 %v833
  %v3791 = vunpack.c.h.b16 %v833
  %v3792 = vunpack.c.l.b16 %v834
  %v3793 = vunpack.c.h.b16 %v834
  %v3794 = vunpack.c.l.b16 %v835
  %v3795 = vunpack.c.h.b16 %v835
  %v3796 = vunpack.c.l.b16 %v836
  %v3797 = vunpack.c.h.b16 %v836
  %v3798 = vunpack.c.l.b16 %v837
  %v3799 = vunpack.c.h.b16 %v837
  %v3800 = vunpack.c.l.b16 %v838
  %v3801 = vunpack.c.h.b16 %v838
  %v3802 = vunpack.c.l.b16 %v839
  %v3803 = vunpack.c.h.b16 %v839
  %v3804 = vunpack.c.l.b16 %v840
  %v3805 = vunpack.c.h.b16 %v840
  %v3806 = vunpack.c.l.b16 %v841
  %v3807 = vunpack.c.h.b16 %v841
  %v3808 = vunpack.c.l.b16 %v842
  %v3809 = vunpack.c.h.b16 %v842
  %v3810 = vunpack.c.l.b16 %v843
  %v3811 = vunpack.c.h.b16 %v843
  %v3812 = vunpack.c.l.b16 %v844
  %v3813 = vunpack.c.h.b16 %v844
  %v3814 = vunpack.c.l.b16 %v845
  %v3815 = vunpack.c.h.b16 %v845
  %v3816 = vunpack.c.l.b16 %v846
  %v3817 = vunpack.c.h.b16 %v846
  %v3818 = vunpack.c.l.b16 %v847
  %v3819 = vunpack.c.h.b16 %v847
  %v3820 = vunpack.c.l.b16 %v848
  %v3821 = vunpack.c.h.b16 %v848
  %v3822 = vunpack.c.l.b16 %v849
  %v3823 = vunpack.c.h.b16 %v849
  %v3824 = vunpack.c.l.b16 %v850
  %v3825 = vunpack.c.h.b16 %v850
  %v3826 = vunpack.c.l.b16 %v851
  %v3827 = vunpack.c.h.b16 %v851
  %v3828 = vunpack.c.l.b16 %v852
  %v3829 = vunpack.c.h.b16 %v852
  %v3830 = vunpack.c.l.b16 %v853
  %v3831 = vunpack.c.h.b16 %v853
  %v3832 = vunpack.c.l.b16 %v854
  %v3833 = vunpack.c.h.b16 %v854
  %v3834 = vunpack.c.l.b16 %v855
  %v3835 = vunpack.c.h.b16 %v855
  %v3836 = vunpack.c.l.b16 %v856
  %v3837 = vunpack.c.h.b16 %v856
  %v3838 = vunpack.c.l.b16 %v857
  %v3839 = vunpack.c.h.b16 %v857
  %v3840 = vunpack.c.l.b16 %v858
  %v3841 = vunpack.c.h.b16 %v858
  %v3842 = vunpack.c.l.b16 %v859
  %v3843 = vunpack.c.h.b16 %v859
  %v3844 = vunpack.c.l.b16 %v860
  %v3845 = vunpack.c.h.b16 %v860
  %v3846 = vunpack.c.l.b16 %v861
  %v3847 = vunpack.c.h.b16 %v861
  %v3848 = vunpack.c.l.b16 %v862
  %v3849 = vunpack.c.h.b16 %v862
  %v3850 = vunpack.c.l.b16 %v863
  %v3851 = vunpack.c.h.b16 %v863
  %v3852 = vunpack.c.l.b16 %v864
  %v3853 = vunpack.c.h.b16 %v864
  %v3854 = vunpack.c.l.b16 %v865
  %v3855 = vunpack.c.h.b16 %v865
  %v3856 = vunpack.c.l.b16 %v866
  %v3857 = vunpack.c.h.b16 %v866
  %v3858 = vunpack.c.l.b16 %v867
  %v3859 = vunpack.c.h.b16 %v867
  %v3860 = vunpack.c.l.b16 %v868
  %v3861 = vunpack.c.h.b16 %v868
  %v3862 = vunpack.c.l.b16 %v869
  %v3863 = vunpack.c.h.b16 %v869
  %v3864 = vunpack.c.l.b16 %v870
  %v3865 = vunpack.c.h.b16 %v870
  %v3866 = vunpack.c.l.b16 %v871
  %v3867 = vunpack.c.h.b16 %v871
  %v3868 = vunpack.c.l.b16 %v872
  %v3869 = vunpack.c.h.b16 %v872
  %v3870 = vunpack.c.l.b16 %v873
  %v3871 = vunpack.c.h.b16 %v873
  %v3872 = vunpack.c.l.b16 %v874
  %v3873 = vunpack.c.h.b16 %v874
  %v3874 = vunpack.c.l.b16 %v875
  %v3875 = vunpack.c.h.b16 %v875
  %v3876 = vunpack.c.l.b16 %v876
  %v3877 = vunpack.c.h.b16 %v876
  %v3878 = vunpack.c.l.b16 %v877
  %v3879 = vunpack.c.h.b16 %v877
  %v3880 = vunpack.c.l.b16 %v878
  %v3881 = vunpack.c.h.b16 %v878
  %v3882 = vunpack.c.l.b16 %v879
  %v3883 = vunpack.c.h.b16 %v879
  %v3884 = vunpack.c.l.b16 %v880
  %v3885 = vunpack.c.h.b16 %v880
  %v3886 = vunpack.c.l.b16 %v881
  %v3887 = vunpack.c.h.b16 %v881
  %v3888 = vunpack.c.l.b16 %v882
  %v3889 = vunpack.c.h.b16 %v882
  %v3890 = vunpack.c.l.b16 %v883
  %v3891 = vunpack.c.h.b16 %v883
  %v3892 = vunpack.c.l.b16 %v884
  %v3893 = vunpack.c.h.b16 %v884
  %v3894 = vunpack.c.l.b16 %v885
  %v3895 = vunpack.c.h.b16 %v885
  %v3896 = vunpack.c.l.b16 %v886
  %v3897 = vunpack.c.h.b16 %v886
  %v3898 = vunpack.c.l.b16 %v887
  %v3899 = vunpack.c.h.b16 %v887
  %v3900 = vunpack.c.l.b16 %v888
  %v3901 = vunpack.c.h.b16 %v888
  %v3902 = vunpack.c.l.b16 %v889
  %v3903 = vunpack.c.h.b16 %v889
  %v3904 = vunpack.c.l.b16 %v890
  %v3905 = vunpack.c.h.b16 %v890
  %v3906 = vunpack.c.l.b16 %v891
  %v3907 = vunpack.c.h.b16 %v891
  %v3908 = vunpack.c.l.b16 %v892
  %v3909 = vunpack.c.h.b16 %v892
  %v3910 = vunpack.c.l.b16 %v893
  %v3911 = vunpack.c.h.b16 %v893
  %v3912 = vunpack.c.l.b16 %v894
  %v3913 = vunpack.c.h.b16 %v894
  %v3914 = vunpack.c.l.b16 %v895
  %v3915 = vunpack.c.h.b16 %v895
  %v3916 = vunpack.c.l.b16 %v896
  %v3917 = vunpack.c.h.b16 %v896
  %v3918 = vunpack.c.l.b16 %v897
  %v3919 = vunpack.c.h.b16 %v897
  %v3920 = vunpack.c.l.b16 %v898
  %v3921 = vunpack.c.h.b16 %v898
  %v3922 = vunpack.c.l.b16 %v899
  %v3923 = vunpack.c.h.b16 %v899
  %v3924 = vunpack.c.l.b16 %v900
  %v3925 = vunpack.c.h.b16 %v900
  %v3926 = vunpack.c.l.b16 %v901
  %v3927 = vunpack.c.h.b16 %v901
  %v3928 = vunpack.c.l.b16 %v902
  %v3929 = vunpack.c.h.b16 %v902
  %v3930 = vunpack.c.l.b16 %v903
  %v3931 = vunpack.c.h.b16 %v903
  %v3932 = vunpack.c.l.b16 %v904
  %v3933 = vunpack.c.h.b16 %v904
  %v3934 = vunpack.c.l.b16 %v905
  %v3935 = vunpack.c.h.b16 %v905
  %v3936 = vunpack.c.l.b16 %v906
  %v3937 = vunpack.c.h.b16 %v906
  %v3938 = vunpack.c.l.b16 %v907
  %v3939 = vunpack.c.h.b16 %v907
  %v3940 = vunpack.c.l.b16 %v908
  %v3941 = vunpack.c.h.b16 %v908
  %v3942 = vunpack.c.l.b16 %v909
  %v3943 = vunpack.c.h.b16 %v909
  %v3944 = vunpack.c.l.b16 %v910
  %v3945 = vunpack.c.h.b16 %v910
  %v3946 = vunpack.c.l.b16 %v911
  %v3947 = vunpack.c.h.b16 %v911
  %v3948 = vunpack.c.l.b16 %v912
  %v3949 = vunpack.c.h.b16 %v912
  %v3950 = vunpack.c.l.b16 %v913
  %v3951 = vunpack.c.h.b16 %v913
  %v3952 = vunpack.c.l.b16 %v914
  %v3953 = vunpack.c.h.b16 %v914
  %v3954 = vunpack.c.l.b16 %v915
  %v3955 = vunpack.c.h.b16 %v915
  %v3956 = vunpack.c.l.b16 %v916
  %v3957 = vunpack.c.h.b16 %v916
  %v3958 = vunpack.c.l.b16 %v917
  %v3959 = vunpack.c.h.b16 %v917
  %v3960 = vunpack.c.l.b16 %v918
  %v3961 = vunpack.c.h.b16 %v918
  %v3962 = vunpack.c.l.b16 %v919
  %v3963 = vunpack.c.h.b16 %v919
  %v3964 = vunpack.c.l.b16 %v920
  %v3965 = vunpack.c.h.b16 %v920
  %v3966 = vunpack.c.l.b16 %v921
  %v3967 = vunpack.c.h.b16 %v921
  %v3968 = vunpack.c.l.b16 %v922
  %v3969 = vunpack.c.h.b16 %v922
  %v3970 = vunpack.c.l.b16 %v923
  %v3971 = vunpack.c.h.b16 %v923
  %v3972 = vunpack.c.l.b16 %v924
  %v3973 = vunpack.c.h.b16 %v924
  %v3974 = vunpack.c.l.b16 %v925
  %v3975 = vunpack.c.h.b16 %v925
  %v3976 = vunpack.c.l.b16 %v926
  %v3977 = vunpack.c.h.b16 %v926
  %v3978 = vunpack.c.l.b16 %v927
  %v3979 = vunpack.c.h.b16 %v927
  %v3980 = vunpack.c.l.b16 %v928
  %v3981 = vunpack.c.h.b16 %v928
  %v3982 = vunpack.c.l.b16 %v929
  %v3983 = vunpack.c.h.b16 %v929
  %v3984 = vunpack.c.l.b16 %v930
  %v3985 = vunpack.c.h.b16 %v930
  %v3986 = vunpack.c.l.b16 %v931
  %v3987 = vunpack.c.h.b16 %v931
  %v3988 = vunpack.c.l.b16 %v932
  %v3989 = vunpack.c.h.b16 %v932
  %v3990 = vunpack.c.l.b16 %v933
  %v3991 = vunpack.c.h.b16 %v933
  %v3992 = vunpack.c.l.b16 %v934
  %v3993 = vunpack.c.h.b16 %v934
  %v3994 = vunpack.c.l.b16 %v935
  %v3995 = vunpack.c.h.b16 %v935
  %v3996 = vunpack.c.l.b16 %v936
  %v3997 = vunpack.c.h.b16 %v936
  %v3998 = vunpack.c.l.b16 %v937
  %v3999 = vunpack.c.h.b16 %v937
  %v4000 = vunpack.c.l.b16 %v938
  %v4001 = vunpack.c.h.b16 %v938
  %v4002 = vunpack.c.l.b16 %v939
  %v4003 = vunpack.c.h.b16 %v939
  %v4004 = vunpack.c.l.b16 %v940
  %v4005 = vunpack.c.h.b16 %v940
  %v4006 = vunpack.c.l.b16 %v941
  %v4007 = vunpack.c.h.b16 %v941
  %v4008 = vunpack.c.l.b16 %v942
  %v4009 = vunpack.c.h.b16 %v942
  %v4010 = vunpack.c.l.b16 %v943
  %v4011 = vunpack.c.h.b16 %v943
  %v4012 = vunpack.c.l.b16 %v944
  %v4013 = vunpack.c.h.b16 %v944
  %v4014 = vunpack.c.l.b16 %v945
  %v4015 = vunpack.c.h.b16 %v945
  %v4016 = vunpack.c.l.b16 %v946
  %v4017 = vunpack.c.h.b16 %v946
  %v4018 = vunpack.c.l.b16 %v947
  %v4019 = vunpack.c.h.b16 %v947
  %v4020 = vunpack.c.l.b16 %v948
  %v4021 = vunpack.c.h.b16 %v948
  %v4022 = vunpack.c.l.b16 %v949
  %v4023 = vunpack.c.h.b16 %v949
  %v4024 = vunpack.c.l.b16 %v950
  %v4025 = vunpack.c.h.b16 %v950
  %v4026 = vunpack.c.l.b16 %v951
  %v4027 = vunpack.c.h.b16 %v951
  %v4028 = vunpack.c.l.b16 %v952
  %v4029 = vunpack.c.h.b16 %v952
  %v4030 = vunpack.c.l.b16 %v953
  %v4031 = vunpack.c.h.b16 %v953
  %v4032 = vunpack.c.l.b16 %v954
  %v4033 = vunpack.c.h.b16 %v954
  %v4034 = vunpack.c.l.b16 %v955
  %v4035 = vunpack.c.h.b16 %v955
  %v4036 = vunpack.c.l.b16 %v956
  %v4037 = vunpack.c.h.b16 %v956
  %v4038 = vunpack.c.l.b16 %v957
  %v4039 = vunpack.c.h.b16 %v957
  %v4040 = vunpack.c.l.b16 %v958
  %v4041 = vunpack.c.h.b16 %v958
  %v4042 = vunpack.c.l.b16 %v959
  %v4043 = vunpack.c.h.b16 %v959
  %v4044 = vunpack.c.l.b16 %v960
  %v4045 = vunpack.c.h.b16 %v960
  %v4046 = vunpack.c.l.b16 %v961
  %v4047 = vunpack.c.h.b16 %v961
  %v4048 = vunpack.c.l.b16 %v962
  %v4049 = vunpack.c.h.b16 %v962
  %v4050 = vunpack.c.l.b16 %v963
  %v4051 = vunpack.c.h.b16 %v963
  %v4052 = vunpack.c.l.b16 %v964
  %v4053 = vunpack.c.h.b16 %v964
  %v4054 = vunpack.c.l.b16 %v965
  %v4055 = vunpack.c.h.b16 %v965
  %v4056 = vunpack.c.l.b16 %v966
  %v4057 = vunpack.c.h.b16 %v966
  %v4058 = vunpack.c.l.b16 %v967
  %v4059 = vunpack.c.h.b16 %v967
  %v4060 = vunpack.c.l.b16 %v968
  %v4061 = vunpack.c.h.b16 %v968
  %v4062 = vunpack.c.l.b16 %v969
  %v4063 = vunpack.c.h.b16 %v969
  %v4064 = vunpack.c.l.b16 %v970
  %v4065 = vunpack.c.h.b16 %v970
  %v4066 = vunpack.c.l.b16 %v971
  %v4067 = vunpack.c.h.b16 %v971
  %v4068 = vunpack.c.l.b16 %v972
  %v4069 = vunpack.c.h.b16 %v972
  %v4070 = vunpack.c.l.b16 %v973
  %v4071 = vunpack.c.h.b16 %v973
  %v4072 = vunpack.c.l.b16 %v974
  %v4073 = vunpack.c.h.b16 %v974
  %v4074 = vunpack.c.l.b16 %v975
  %v4075 = vunpack.c.h.b16 %v975
  %v4076 = vunpack.c.l.b16 %v976
  %v4077 = vunpack.c.h.b16 %v976
  %v4078 = vunpack.c.l.b16 %v977
  %v4079 = vunpack.c.h.b16 %v977
  %v4080 = vunpack.c.l.b16 %v978
  %v4081 = vunpack.c.h.b16 %v978
  %v4082 = vunpack.c.l.b16 %v979
  %v4083 = vunpack.c.h.b16 %v979
  %v4084 = vunpack.c.l.b16 %v980
  %v4085 = vunpack.c.h.b16 %v980
  %v4086 = vunpack.c.l.b16 %v981
  %v4087 = vunpack.c.h.b16 %v981
  %v4088 = vunpack.c.l.b16 %v982
  %v4089 = vunpack.c.h.b16 %v982
  %v4090 = vunpack.c.l.b16 %v983
  %v4091 = vunpack.c.h.b16 %v983
  %v4092 = vunpack.c.l.b16 %v984
  %v4093 = vunpack.c.h.b16 %v984
  %v4094 = vunpack.c.l.b16 %v985
  %v4095 = vunpack.c.h.b16 %v985
  %v4096 = vunpack.c.l.b16 %v986
  %v4097 = vunpack.c.h.b16 %v986
  %v4098 = vunpack.c.l.b16 %v987
  %v4099 = vunpack.c.h.b16 %v987
  %v4100 = vunpack.c.l.b16 %v988
  %v4101 = vunpack.c.h.b16 %v988
  %v4102 = vunpack.c.l.b16 %v989
  %v4103 = vunpack.c.h.b16 %v989
  %v4104 = vunpack.c.l.b16 %v990
  %v4105 = vunpack.c.h.b16 %v990
  %v4106 = vunpack.c.l.b16 %v991
  %v4107 = vunpack.c.h.b16 %v991
  %v4108 = vunpack.c.l.b16 %v992
  %v4109 = vunpack.c.h.b16 %v992
  %v4110 = vunpack.c.l.b16 %v993
  %v4111 = vunpack.c.h.b16 %v993
  %v4112 = vunpack.c.l.b16 %v994
  %v4113 = vunpack.c.h.b16 %v994
  %v4114 = vunpack.c.l.b16 %v995
  %v4115 = vunpack.c.h.b16 %v995
  %v4116 = vunpack.c.l.b16 %v996
  %v4117 = vunpack.c.h.b16 %v996
  %v4118 = vunpack.c.l.b16 %v997
  %v4119 = vunpack.c.h.b16 %v997
  %v4120 = vunpack.c.l.b16 %v998
  %v4121 = vunpack.c.h.b16 %v998
  %v4122 = vunpack.c.l.b16 %v999
  %v4123 = vunpack.c.h.b16 %v999
  %v4124 = vunpack.c.l.b16 %v1000
  %v4125 = vunpack.c.h.b16 %v1000
  %v4126 = vunpack.c.l.b16 %v1001
  %v4127 = vunpack.c.h.b16 %v1001
  %v4128 = vunpack.c.l.b16 %v1002
  %v4129 = vunpack.c.h.b16 %v1002
  %v4130 = vunpack.c.l.b16 %v1003
  %v4131 = vunpack.c.h.b16 %v1003
  %v4132 = vunpack.c.l.b16 %v1004
  %v4133 = vunpack.c.h.b16 %v1004
  %v4134 = vunpack.c.l.b16 %v1005
  %v4135 = vunpack.c.h.b16 %v1005
  %v4136 = vunpack.c.l.b16 %v1006
  %v4137 = vunpack.c.h.b16 %v1006
  %v4138 = vunpack.c.l.b16 %v1007
  %v4139 = vunpack.c.h.b16 %v1007
  %v4140 = vunpack.c.l.b16 %v1008
  %v4141 = vunpack.c.h.b16 %v1008
  %v4142 = vunpack.c.l.b16 %v1009
  %v4143 = vunpack.c.h.b16 %v1009
  %v4144 = vunpack.c.l.b16 %v1010
  %v4145 = vunpack.c.h.b16 %v1010
  %v4146 = vunpack.c.l.b16 %v1011
  %v4147 = vunpack.c.h.b16 %v1011
  %v4148 = vunpack.c.l.b16 %v1012
  %v4149 = vunpack.c.h.b16 %v1012
  %v4150 = vunpack.c.l.b16 %v1013
  %v4151 = vunpack.c.h.b16 %v1013
  %v4152 = vunpack.c.l.b16 %v1014
  %v4153 = vunpack.c.h.b16 %v1014
  %v4154 = vunpack.c.l.b16 %v1015
  %v4155 = vunpack.c.h.b16 %v1015
  %v4156 = vunpack.c.l.b16 %v1016
  %v4157 = vunpack.c.h.b16 %v1016
  %v4158 = vunpack.c.l.b16 %v1017
  %v4159 = vunpack.c.h.b16 %v1017
  %v4160 = vunpack.c.l.b16 %v1018
  %v4161 = vunpack.c.h.b16 %v1018
  %v4162 = vunpack.c.l.b16 %v1019
  %v4163 = vunpack.c.h.b16 %v1019
  %v4164 = vunpack.c.l.b16 %v1020
  %v4165 = vunpack.c.h.b16 %v1020
  %v4166 = vunpack.c.l.b16 %v1021
  %v4167 = vunpack.c.h.b16 %v1021
  %v4168 = vunpack.c.l.b16 %v1022
  %v4169 = vunpack.c.h.b16 %v1022
  %v4170 = vunpack.c.l.b16 %v1023
  %v4171 = vunpack.c.h.b16 %v1023
  %v4172 = vunpack.c.l.b16 %v1024
  %v4173 = vunpack.c.h.b16 %v1024
  %v4174 = vunpack.c.l.b16 %v1025
  %v4175 = vunpack.c.h.b16 %v1025
  %v4176 = vunpack.c.l.b16 %v1026
  %v4177 = vunpack.c.h.b16 %v1026
  %v4178 = vunpack.c.l.b16 %v1027
  %v4179 = vunpack.c.h.b16 %v1027
  %v4180 = vunpack.c.l.b16 %v1028
  %v4181 = vunpack.c.h.b16 %v1028
  %v4182 = vunpack.c.l.b16 %v1029
  %v4183 = vunpack.c.h.b16 %v1029
  %v4184 = vunpack.c.l.b16 %v1030
  %v4185 = vunpack.c.h.b16 %v1030
  %v4186 = vunpack.c.l.b16 %v1031
  %v4187 = vunpack.c.h.b16 %v1031
  %v4188 = vunpack.c.l.b16 %v1032
  %v4189 = vunpack.c.h.b16 %v1032
  %v4190 = vunpack.c.l.b16 %v1033
  %v4191 = vunpack.c.h.b16 %v1033
  %v4192 = vunpack.c.l.b16 %v1034
  %v4193 = vunpack.c.h.b16 %v1034
  %v4194 = vunpack.c.l.b16 %v1035
  %v4195 = vunpack.c.h.b16 %v1035
  %v4196 = vunpack.c.l.b16 %v1036
  %v4197 = vunpack.c.h.b16 %v1036
  %v4198 = vunpack.c.l.b16 %v1037
  %v4199 = vunpack.c.h.b16 %v1037
  %v4200 = vunpack.c.l.b16 %v1038
  %v4201 = vunpack.c.h.b16 %v1038
  %v4202 = vunpack.c.l.b16 %v1039
  %v4203 = vunpack.c.h.b16 %v1039
  %v4204 = vunpack.c.l.b16 %v1040
  %v4205 = vunpack.c.h.b16 %v1040
  %v4206 = vunpack.c.l.b16 %v1041
  %v4207 = vunpack.c.h.b16 %v1041
  %v4208 = vunpack.c.l.b16 %v1042
  %v4209 = vunpack.c.h.b16 %v1042
  %v4210 = vunpack.c.l.b16 %v1043
  %v4211 = vunpack.c.h.b16 %v1043
  %v4212 = vunpack.c.l.b16 %v1044
  %v4213 = vunpack.c.h.b16 %v1044
  %v4214 = vunpack.c.l.b16 %v1045
  %v4215 = vunpack.c.h.b16 %v1045
  %v4216 = vunpack.c.l.b16 %v1046
  %v4217 = vunpack.c.h.b16 %v1046
  %v4218 = vunpack.c.l.b16 %v1047
  %v4219 = vunpack.c.h.b16 %v1047
  %v4220 = vunpack.c.l.b16 %v1048
  %v4221 = vunpack.c.h.b16 %v1048
  %v4222 = vunpack.c.l.b16 %v1049
  %v4223 = vunpack.c.h.b16 %v1049
  %v4224 = vunpack.c.l.b16 %v1050
  %v4225 = vunpack.c.h.b16 %v1050
  %v4226 = vunpack.c.l.b16 %v1051
  %v4227 = vunpack.c.h.b16 %v1051
  %v4228 = vunpack.c.l.b16 %v1052
  %v4229 = vunpack.c.h.b16 %v1052
  %v4230 = vunpack.c.l.b16 %v1053
  %v4231 = vunpack.c.h.b16 %v1053
  %v4232 = vunpack.c.l.b16 %v1054
  %v4233 = vunpack.c.h.b16 %v1054
  %v4234 = vunpack.c.l.b16 %v1055
  %v4235 = vunpack.c.h.b16 %v1055
  %v4236 = vunpack.c.l.b16 %v1056
  %v4237 = vunpack.c.h.b16 %v1056
  %v4238 = vunpack.c.l.b16 %v1057
  %v4239 = vunpack.c.h.b16 %v1057
  %v4240 = vunpack.c.l.b16 %v1058
  %v4241 = vunpack.c.h.b16 %v1058
  %v4242 = vunpack.c.l.b16 %v1059
  %v4243 = vunpack.c.h.b16 %v1059
  %v4244 = vpack.c.b16 %v2200, %v2196
  %v4245 = vpack.c.b16 %v2201, %v2197
  %v4246 = vpack.c.b16 %v2202, %v2198
  %v4247 = vpack.c.b16 %v2203, %v2199
  %v4248 = vpack.c.b16 %v2208, %v2204
  %v4249 = vpack.c.b16 %v2209, %v2205
  %v4250 = vpack.c.b16 %v2210, %v2206
  %v4251 = vpack.c.b16 %v2211, %v2207
  %v4252 = vpack.c.b16 %v2216, %v2212
  %v4253 = vpack.c.b16 %v2217, %v2213
  %v4254 = vpack.c.b16 %v2218, %v2214
  %v4255 = vpack.c.b16 %v2219, %v2215
  %v4256 = vpack.c.b16 %v2224, %v2220
  %v4257 = vpack.c.b16 %v2225, %v2221
  %v4258 = vpack.c.b16 %v2226, %v2222
  %v4259 = vpack.c.b16 %v2227, %v2223
  %v4260 = vpack.c.b16 %v2232, %v2228
  %v4261 = vpack.c.b16 %v2233, %v2229
  %v4262 = vpack.c.b16 %v2234, %v2230
  %v4263 = vpack.c.b16 %v2235, %v2231
  %v4264 = vpack.c.b16 %v2240, %v2236
  %v4265 = vpack.c.b16 %v2241, %v2237
  %v4266 = vpack.c.b16 %v2242, %v2238
  %v4267 = vpack.c.b16 %v2243, %v2239
  %v4268 = vpack.c.b16 %v2248, %v2244
  %v4269 = vpack.c.b16 %v2249, %v2245
  %v4270 = vpack.c.b16 %v2250, %v2246
  %v4271 = vpack.c.b16 %v2251, %v2247
  %v4272 = vpack.c.b16 %v2256, %v2252
  %v4273 = vpack.c.b16 %v2257, %v2253
  %v4274 = vpack.c.b16 %v2258, %v2254
  %v4275 = vpack.c.b16 %v2259, %v2255
  %v4276 = vpack.c.b16 %v2264, %v2260
  %v4277 = vpack.c.b16 %v2265, %v2261
  %v4278 = vpack.c.b16 %v2266, %v2262
  %v4279 = vpack.c.b16 %v2267, %v2263
  %v4280 = vpack.c.b16 %v2272, %v2268
  %v4281 = vpack.c.b16 %v2273, %v2269
  %v4282 = vpack.c.b16 %v2274, %v2270
  %v4283 = vpack.c.b16 %v2275, %v2271
  %v4284 = vpack.c.b16 %v2280, %v2276
  %v4285 = vpack.c.b16 %v2281, %v2277
  %v4286 = vpack.c.b16 %v2282, %v2278
  %v4287 = vpack.c.b16 %v2283, %v2279
  %v4288 = vpack.c.b16 %v2288, %v2284
  %v4289 = vpack.c.b16 %v2289, %v2285
  %v4290 = vpack.c.b16 %v2290, %v2286
  %v4291 = vpack.c.b16 %v2291, %v2287
  %v4292 = vpack.c.b16 %v2296, %v2292
  %v4293 = vpack.c.b16 %v2297, %v2293
  %v4294 = vpack.c.b16 %v2298, %v2294
  %v4295 = vpack.c.b16 %v2299, %v2295
  %v4296 = vpack.c.b16 %v2304, %v2300
  %v4297 = vpack.c.b16 %v2305, %v2301
  %v4298 = vpack.c.b16 %v2306, %v2302
  %v4299 = vpack.c.b16 %v2307, %v2303
  %v4300 = vpack.c.b16 %v2312, %v2308
  %v4301 = vpack.c.b16 %v2313, %v2309
  %v4302 = vpack.c.b16 %v2314, %v2310
  %v4303 = vpack.c.b16 %v2315, %v2311
  %v4304 = vpack.c.b16 %v2320, %v2316
  %v4305 = vpack.c.b16 %v2321, %v2317
  %v4306 = vpack.c.b16 %v2322, %v2318
  %v4307 = vpack.c.b16 %v2323, %v2319
  %v4308 = vpack.c.b16 %v2328, %v2324
  %v4309 = vpack.c.b16 %v2329, %v2325
  %v4310 = vpack.c.b16 %v2330, %v2326
  %v4311 = vpack.c.b16 %v2331, %v2327
  %v4312 = vpack.c.b16 %v2336, %v2332
  %v4313 = vpack.c.b16 %v2337, %v2333
  %v4314 = vpack.c.b16 %v2338, %v2334
  %v4315 = vpack.c.b16 %v2339, %v2335
  %v4316 = vpack.c.b16 %v2344, %v2340
  %v4317 = vpack.c.b16 %v2345, %v2341
  %v4318 = vpack.c.b16 %v2346, %v2342
  %v4319 = vpack.c.b16 %v2347, %v2343
  %v4320 = vpack.c.b16 %v2352, %v2348
  %v4321 = vpack.c.b16 %v2353, %v2349
  %v4322 = vpack.c.b16 %v2354, %v2350
  %v4323 = vpack.c.b16 %v2355, %v2351
  %v4324 = vpack.c.b16 %v2360, %v2356
  %v4325 = vpack.c.b16 %v2361, %v2357
  %v4326 = vpack.c.b16 %v2362, %v2358
  %v4327 = vpack.c.b16 %v2363, %v2359
  %v4328 = vpack.c.b16 %v2368, %v2364
  %v4329 = vpack.c.b16 %v2369, %v2365
  %v4330 = vpack.c.b16 %v2370, %v2366
  %v4331 = vpack.c.b16 %v2371, %v2367
  %v4332 = vpack.c.b16 %v2376, %v2372
  %v4333 = vpack.c.b16 %v2377, %v2373
  %v4334 = vpack.c.b16 %v2378, %v2374
  %v4335 = vpack.c.b16 %v2379, %v2375
  %v4336 = vpack.c.b16 %v2384, %v2380
  %v4337 = vpack.c.b16 %v2385, %v2381
  %v4338 = vpack.c.b16 %v2386, %v2382
  %v4339 = vpack.c.b16 %v2387, %v2383
  %v4340 = vpack.c.b16 %v2392, %v2388
  %v4341 = vpack.c.b16 %v2393, %v2389
  %v4342 = vpack.c.b16 %v2394, %v2390
  %v4343 = vpack.c.b16 %v2395, %v2391
  %v4344 = vpack.c.b16 %v2400, %v2396
  %v4345 = vpack.c.b16 %v2401, %v2397
  %v4346 = vpack.c.b16 %v2402, %v2398
  %v4347 = vpack.c.b16 %v2403, %v2399
  %v4348 = vpack.c.b16 %v2408, %v2404
  %v4349 = vpack.c.b16 %v2409, %v2405
  %v4350 = vpack.c.b16 %v2410, %v2406
  %v4351 = vpack.c.b16 %v2411, %v2407
  %v4352 = vpack.c.b16 %v2416, %v2412
  %v4353 = vpack.c.b16 %v2417, %v2413
  %v4354 = vpack.c.b16 %v2418, %v2414
  %v4355 = vpack.c.b16 %v2419, %v2415
  %v4356 = vpack.c.b16 %v2424, %v2420
  %v4357 = vpack.c.b16 %v2425, %v2421
  %v4358 = vpack.c.b16 %v2426, %v2422
  %v4359 = vpack.c.b16 %v2427, %v2423
  %v4360 = vpack.c.b16 %v2432, %v2428
  %v4361 = vpack.c.b16 %v2433, %v2429
  %v4362 = vpack.c.b16 %v2434, %v2430
  %v4363 = vpack.c.b16 %v2435, %v2431
  %v4364 = vpack.c.b16 %v2440, %v2436
  %v4365 = vpack.c.b16 %v2441, %v2437
  %v4366 = vpack.c.b16 %v2442, %v2438
  %v4367 = vpack.c.b16 %v2443, %v2439
  %v4368 = vpack.c.b16 %v2448, %v2444
  %v4369 = vpack.c.b16 %v2449, %v2445
  %v4370 = vpack.c.b16 %v2450, %v2446
  %v4371 = vpack.c.b16 %v2451, %v2447
  %v4372 = vpack.c.b16 %v2456, %v2452
  %v4373 = vpack.c.b16 %v2457, %v2453
  %v4374 = vpack.c.b16 %v2458, %v2454
  %v4375 = vpack.c.b16 %v2459, %v2455
  %v4376 = vpack.c.b16 %v2464, %v2460
  %v4377 = vpack.c.b16 %v2465, %v2461
  %v4378 = vpack.c.b16 %v2466, %v2462
  %v4379 = vpack.c.b16 %v2467, %v2463
  %v4380 = vpack.c.b16 %v2472, %v2468
  %v4381 = vpack.c.b16 %v2473, %v2469
  %v4382 = vpack.c.b16 %v2474, %v2470
  %v4383 = vpack.c.b16 %v2475, %v2471
  %v4384 = vpack.c.b16 %v2480, %v2476
  %v4385 = vpack.c.b16 %v2481, %v2477
  %v4386 = vpack.c.b16 %v2482, %v2478
  %v4387 = vpack.c.b16 %v2483, %v2479
  %v4388 = vpack.c.b16 %v2488, %v2484
  %v4389 = vpack.c.b16 %v2489, %v2485
  %v4390 = vpack.c.b16 %v2490, %v2486
  %v4391 = vpack.c.b16 %v2491, %v2487
  %v4392 = vpack.c.b16 %v2496, %v2492
  %v4393 = vpack.c.b16 %v2497, %v2493
  %v4394 = vpack.c.b16 %v2498, %v2494
  %v4395 = vpack.c.b16 %v2499, %v2495
  %v4396 = vpack.c.b16 %v2504, %v2500
  %v4397 = vpack.c.b16 %v2505, %v2501
  %v4398 = vpack.c.b16 %v2506, %v2502
  %v4399 = vpack.c.b16 %v2507, %v2503
  %v4400 = vpack.c.b16 %v2512, %v2508
  %v4401 = vpack.c.b16 %v2513, %v2509
  %v4402 = vpack.c.b16 %v2514, %v2510
  %v4403 = vpack.c.b16 %v2515, %v2511
  %v4404 = vpack.c.b16 %v2520, %v2516
  %v4405 = vpack.c.b16 %v2521, %v2517
  %v4406 = vpack.c.b16 %v2522, %v2518
  %v4407 = vpack.c.b16 %v2523, %v2519
  %v4408 = vpack.c.b16 %v2528, %v2524
  %v4409 = vpack.c.b16 %v2529, %v2525
  %v4410 = vpack.c.b16 %v2530, %v2526
  %v4411 = vpack.c.b16 %v2531, %v2527
  %v4412 = vpack.c.b16 %v2536, %v2532
  %v4413 = vpack.c.b16 %v2537, %v2533
  %v4414 = vpack.c.b16 %v2538, %v2534
  %v4415 = vpack.c.b16 %v2539, %v2535
  %v4416 = vpack.c.b16 %v2544, %v2540
  %v4417 = vpack.c.b16 %v2545, %v2541
  %v4418 = vpack.c.b16 %v2546, %v2542
  %v4419 = vpack.c.b16 %v2547, %v2543
  %v4420 = vpack.c.b16 %v2552, %v2548
  %v4421 = vpack.c.b16 %v2553, %v2549
  %v4422 = vpack.c.b16 %v2554, %v2550
  %v4423 = vpack.c.b16 %v2555, %v2551
  %v4424 = vpack.c.b16 %v2560, %v2556
  %v4425 = vpack.c.b16 %v2561, %v2557
  %v4426 = vpack.c.b16 %v2562, %v2558
  %v4427 = vpack.c.b16 %v2563, %v2559
  %v4428 = vpack.c.b16 %v2568, %v2564
  %v4429 = vpack.c.b16 %v2569, %v2565
  %v4430 = vpack.c.b16 %v2570, %v2566
  %v4431 = vpack.c.b16 %v2571, %v2567
  %v4432 = vpack.c.b16 %v2576, %v2572
  %v4433 = vpack.c.b16 %v2577, %v2573
  %v4434 = vpack.c.b16 %v2578, %v2574
  %v4435 = vpack.c.b16 %v2579, %v2575
  %v4436 = vpack.c.b16 %v2584, %v2580
  %v4437 = vpack.c.b16 %v2585, %v2581
  %v4438 = vpack.c.b16 %v2586, %v2582
  %v4439 = vpack.c.b16 %v2587, %v2583
  %v4440 = vpack.c.b16 %v2592, %v2588
  %v4441 = vpack.c.b16 %v2593, %v2589
  %v4442 = vpack.c.b16 %v2594, %v2590
  %v4443 = vpack.c.b16 %v2595, %v2591
  %v4444 = vpack.c.b16 %v2600, %v2596
  %v4445 = vpack.c.b16 %v2601, %v2597
  %v4446 = vpack.c.b16 %v2602, %v2598
  %v4447 = vpack.c.b16 %v2603, %v2599
  %v4448 = vpack.c.b16 %v2608, %v2604
  %v4449 = vpack.c.b16 %v2609, %v2605
  %v4450 = vpack.c.b16 %v2610, %v2606
  %v4451 = vpack.c.b16 %v2611, %v2607
  %v4452 = vpack.c.b16 %v2616, %v2612
  %v4453 = vpack.c.b16 %v2617, %v2613
  %v4454 = vpack.c.b16 %v2618, %v2614
  %v4455 = vpack.c.b16 %v2619, %v2615
  %v4456 = vpack.c.b16 %v2624, %v2620
  %v4457 = vpack.c.b16 %v2625, %v2621
  %v4458 = vpack.c.b16 %v2626, %v2622
  %v4459 = vpack.c.b16 %v2627, %v2623
  %v4460 = vpack.c.b16 %v2632, %v2628
  %v4461 = vpack.c.b16 %v2633, %v2629
  %v4462 = vpack.c.b16 %v2634, %v2630
  %v4463 = vpack.c.b16 %v2635, %v2631
  %v4464 = vpack.c.b16 %v2640, %v2636
  %v4465 = vpack.c.b16 %v2641, %v2637
  %v4466 = vpack.c.b16 %v2642, %v2638
  %v4467 = vpack.c.b16 %v2643, %v2639
  %v4468 = vpack.c.b16 %v2648, %v2644
  %v4469 = vpack.c.b16 %v2649, %v2645
  %v4470 = vpack.c.b16 %v2650, %v2646
  %v4471 = vpack.c.b16 %v2651, %v2647
  %v4472 = vpack.c.b16 %v2656, %v2652
  %v4473 = vpack.c.b16 %v2657, %v2653
  %v4474 = vpack.c.b16 %v2658, %v2654
  %v4475 = vpack.c.b16 %v2659, %v2655
  %v4476 = vpack.c.b16 %v2664, %v2660
  %v4477 = vpack.c.b16 %v2665, %v2661
  %v4478 = vpack.c.b16 %v2666, %v2662
  %v4479 = vpack.c.b16 %v2667, %v2663
  %v4480 = vpack.c.b16 %v2672, %v2668
  %v4481 = vpack.c.b16 %v2673, %v2669
  %v4482 = vpack.c.b16 %v2674, %v2670
  %v4483 = vpack.c.b16 %v2675, %v2671
  %v4484 = vpack.c.b16 %v2680, %v2676
  %v4485 = vpack.c.b16 %v2681, %v2677
  %v4486 = vpack.c.b16 %v2682, %v2678
  %v4487 = vpack.c.b16 %v2683, %v2679
  %v4488 = vpack.c.b16 %v2688, %v2684
  %v4489 = vpack.c.b16 %v2689, %v2685
  %v4490 = vpack.c.b16 %v2690, %v2686
  %v4491 = vpack.c.b16 %v2691, %v2687
  %v4492 = vpack.c.b16 %v2696, %v2692
  %v4493 = vpack.c.b16 %v2697, %v2693
  %v4494 = vpack.c.b16 %v2698, %v2694
  %v4495 = vpack.c.b16 %v2699, %v2695
  %v4496 = vpack.c.b16 %v2704, %v2700
  %v4497 = vpack.c.b16 %v2705, %v2701
  %v4498 = vpack.c.b16 %v2706, %v2702
  %v4499 = vpack.c.b16 %v2707, %v2703
  %v4500 = vpack.c.b16 %v2712, %v2708
  %v4501 = vpack.c.b16 %v2713, %v2709
  %v4502 = vpack.c.b16 %v2714, %v2710
  %v4503 = vpack.c.b16 %v2715, %v2711
  %v4504 = vpack.c.b16 %v2720, %v2716
  %v4505 = vpack.c.b16 %v2721, %v2717
  %v4506 = vpack.c.b16 %v2722, %v2718
  %v4507 = vpack.c.b16 %v2723, %v2719
  %v4508 = vpack.c.b16 %v2728, %v2724
  %v4509 = vpack.c.b16 %v2729, %v2725
  %v4510 = vpack.c.b16 %v2730, %v2726
  %v4511 = vpack.c.b16 %v2731, %v2727
  %v4512 = vpack.c.b16 %v2736, %v2732
  %v4513 = vpack.c.b16 %v2737, %v2733
  %v4514 = vpack.c.b16 %v2738, %v2734
  %v4515 = vpack.c.b16 %v2739, %v2735
  %v4516 = vpack.c.b16 %v2744, %v2740
  %v4517 = vpack.c.b16 %v2745, %v2741
  %v4518 = vpack.c.b16 %v2746, %v2742
  %v4519 = vpack.c.b16 %v2747, %v2743
  %v4520 = vpack.c.b16 %v2752, %v2748
  %v4521 = vpack.c.b16 %v2753, %v2749
  %v4522 = vpack.c.b16 %v2754, %v2750
  %v4523 = vpack.c.b16 %v2755, %v2751
  %v4524 = vpack.c.b16 %v2760, %v2756
  %v4525 = vpack.c.b16 %v2761, %v2757
  %v4526 = vpack.c.b16 %v2762, %v2758
  %v4527 = vpack.c.b16 %v2763, %v2759
  %v4528 = vpack.c.b16 %v2768, %v2764
  %v4529 = vpack.c.b16 %v2769, %v2765
  %v4530 = vpack.c.b16 %v2770, %v2766
  %v4531 = vpack.c.b16 %v2771, %v2767
  %v4532 = vpack.c.b16 %v2776, %v2772
  %v4533 = vpack.c.b16 %v2777, %v2773
  %v4534 = vpack.c.b16 %v2778, %v2774
  %v4535 = vpack.c.b16 %v2779, %v2775
  %v4536 = vpack.c.b16 %v2784, %v2780
  %v4537 = vpack.c.b16 %v2785, %v2781
  %v4538 = vpack.c.b16 %v2786, %v2782
  %v4539 = vpack.c.b16 %v2787, %v2783
  %v4540 = vpack.c.b16 %v2792, %v2788
  %v4541 = vpack.c.b16 %v2793, %v2789
  %v4542 = vpack.c.b16 %v2794, %v2790
  %v4543 = vpack.c.b16 %v2795, %v2791
  %v4544 = vpack.c.b16 %v2800, %v2796
  %v4545 = vpack.c.b16 %v2801, %v2797
  %v4546 = vpack.c.b16 %v2802, %v2798
  %v4547 = vpack.c.b16 %v2803, %v2799
  %v4548 = vpack.c.b16 %v2808, %v2804
  %v4549 = vpack.c.b16 %v2809, %v2805
  %v4550 = vpack.c.b16 %v2810, %v2806
  %v4551 = vpack.c.b16 %v2811, %v2807
  %v4552 = vpack.c.b16 %v2816, %v2812
  %v4553 = vpack.c.b16 %v2817, %v2813
  %v4554 = vpack.c.b16 %v2818, %v2814
  %v4555 = vpack.c.b16 %v2819, %v2815
  %v4556 = vpack.c.b16 %v2824, %v2820
  %v4557 = vpack.c.b16 %v2825, %v2821
  %v4558 = vpack.c.b16 %v2826, %v2822
  %v4559 = vpack.c.b16 %v2827, %v2823
  %v4560 = vpack.c.b16 %v2832, %v2828
  %v4561 = vpack.c.b16 %v2833, %v2829
  %v4562 = vpack.c.b16 %v2834, %v2830
  %v4563 = vpack.c.b16 %v2835, %v2831
  %v4564 = vpack.c.b16 %v2840, %v2836
  %v4565 = vpack.c.b16 %v2841, %v2837
  %v4566 = vpack.c.b16 %v2842, %v2838
  %v4567 = vpack.c.b16 %v2843, %v2839
  %v4568 = vpack.c.b16 %v2848, %v2844
  %v4569 = vpack.c.b16 %v2849, %v2845
  %v4570 = vpack.c.b16 %v2850, %v2846
  %v4571 = vpack.c.b16 %v2851, %v2847
  %v4572 = vpack.c.b16 %v2856, %v2852
  %v4573 = vpack.c.b16 %v2857, %v2853
  %v4574 = vpack.c.b16 %v2858, %v2854
  %v4575 = vpack.c.b16 %v2859, %v2855
  %v4576 = vpack.c.b16 %v2864, %v2860
  %v4577 = vpack.c.b16 %v2865, %v2861
  %v4578 = vpack.c.b16 %v2866, %v2862
  %v4579 = vpack.c.b16 %v2867, %v2863
  %v4580 = vpack.c.b16 %v2872, %v2868
  %v4581 = vpack.c.b16 %v2873, %v2869
  %v4582 = vpack.c.b16 %v2874, %v2870
  %v4583 = vpack.c.b16 %v2875, %v2871
  %v4584 = vpack.c.b16 %v2880, %v2876
  %v4585 = vpack.c.b16 %v2881, %v2877
  %v4586 = vpack.c.b16 %v2882, %v2878
  %v4587 = vpack.c.b16 %v2883, %v2879
  %v4588 = vpack.c.b16 %v2888, %v2884
  %v4589 = vpack.c.b16 %v2889, %v2885
  %v4590 = vpack.c.b16 %v2890, %v2886
  %v4591 = vpack.c.b16 %v2891, %v2887
  %v4592 = vpack.c.b16 %v2896, %v2892
  %v4593 = vpack.c.b16 %v2897, %v2893
  %v4594 = vpack.c.b16 %v2898, %v2894
  %v4595 = vpack.c.b16 %v2899, %v2895
  %v4596 = vpack.c.b16 %v2904, %v2900
  %v4597 = vpack.c.b16 %v2905, %v2901
  %v4598 = vpack.c.b16 %v2906, %v2902
  %v4599 = vpack.c.b16 %v2907, %v2903
  %v4600 = vpack.c.b16 %v2912, %v2908
  %v4601 = vpack.c.b16 %v2913, %v2909
  %v4602 = vpack.c.b16 %v2914, %v2910
  %v4603 = vpack.c.b16 %v2915, %v2911
  %v4604 = vpack.c.b16 %v2920, %v2916
  %v4605 = vpack.c.b16 %v2921, %v2917
  %v4606 = vpack.c.b16 %v2922, %v2918
  %v4607 = vpack.c.b16 %v2923, %v2919
  %v4608 = vpack.c.b16 %v2928, %v2924
  %v4609 = vpack.c.b16 %v2929, %v2925
  %v4610 = vpack.c.b16 %v2930, %v2926
  %v4611 = vpack.c.b16 %v2931, %v2927
  %v4612 = vpack.c.b16 %v2936, %v2932
  %v4613 = vpack.c.b16 %v2937, %v2933
  %v4614 = vpack.c.b16 %v2938, %v2934
  %v4615 = vpack.c.b16 %v2939, %v2935
  %v4616 = vpack.c.b16 %v2944, %v2940
  %v4617 = vpack.c.b16 %v2945, %v2941
  %v4618 = vpack.c.b16 %v2946, %v2942
  %v4619 = vpack.c.b16 %v2947, %v2943
  %v4620 = vpack.c.b16 %v2952, %v2948
  %v4621 = vpack.c.b16 %v2953, %v2949
  %v4622 = vpack.c.b16 %v2954, %v2950
  %v4623 = vpack.c.b16 %v2955, %v2951
  %v4624 = vpack.c.b16 %v2960, %v2956
  %v4625 = vpack.c.b16 %v2961, %v2957
  %v4626 = vpack.c.b16 %v2962, %v2958
  %v4627 = vpack.c.b16 %v2963, %v2959
  %v4628 = vpack.c.b16 %v2968, %v2964
  %v4629 = vpack.c.b16 %v2969, %v2965
  %v4630 = vpack.c.b16 %v2970, %v2966
  %v4631 = vpack.c.b16 %v2971, %v2967
  %v4632 = vpack.c.b16 %v2976, %v2972
  %v4633 = vpack.c.b16 %v2977, %v2973
  %v4634 = vpack.c.b16 %v2978, %v2974
  %v4635 = vpack.c.b16 %v2979, %v2975
  %v4636 = vpack.c.b16 %v2984, %v2980
  %v4637 = vpack.c.b16 %v2985, %v2981
  %v4638 = vpack.c.b16 %v2986, %v2982
  %v4639 = vpack.c.b16 %v2987, %v2983
  %v4640 = vpack.c.b16 %v2992, %v2988
  %v4641 = vpack.c.b16 %v2993, %v2989
  %v4642 = vpack.c.b16 %v2994, %v2990
  %v4643 = vpack.c.b16 %v2995, %v2991
  %v4644 = vpack.c.b16 %v3000, %v2996
  %v4645 = vpack.c.b16 %v3001, %v2997
  %v4646 = vpack.c.b16 %v3002, %v2998
  %v4647 = vpack.c.b16 %v3003, %v2999
  %v4648 = vpack.c.b16 %v3008, %v3004
  %v4649 = vpack.c.b16 %v3009, %v3005
  %v4650 = vpack.c.b16 %v3010, %v3006
  %v4651 = vpack.c.b16 %v3011, %v3007
  %v4652 = vpack.c.b16 %v3016, %v3012
  %v4653 = vpack.c.b16 %v3017, %v3013
  %v4654 = vpack.c.b16 %v3018, %v3014
  %v4655 = vpack.c.b16 %v3019, %v3015
  %v4656 = vpack.c.b16 %v3024, %v3020
  %v4657 = vpack.c.b16 %v3025, %v3021
  %v4658 = vpack.c.b16 %v3026, %v3022
  %v4659 = vpack.c.b16 %v3027, %v3023
  %v4660 = vpack.c.b16 %v3032, %v3028
  %v4661 = vpack.c.b16 %v3033, %v3029
  %v4662 = vpack.c.b16 %v3034, %v3030
  %v4663 = vpack.c.b16 %v3035, %v3031
  %v4664 = vpack.c.b16 %v3040, %v3036
  %v4665 = vpack.c.b16 %v3041, %v3037
  %v4666 = vpack.c.b16 %v3042, %v3038
  %v4667 = vpack.c.b16 %v3043, %v3039
  %v4668 = vpack.c.b16 %v3048, %v3044
  %v4669 = vpack.c.b16 %v3049, %v3045
  %v4670 = vpack.c.b16 %v3050, %v3046
  %v4671 = vpack.c.b16 %v3051, %v3047
  %v4672 = vpack.c.b16 %v3056, %v3052
  %v4673 = vpack.c.b16 %v3057, %v3053
  %v4674 = vpack.c.b16 %v3058, %v3054
  %v4675 = vpack.c.b16 %v3059, %v3055
  %v4676 = vpack.c.b16 %v3064, %v3060
  %v4677 = vpack.c.b16 %v3065, %v3061
  %v4678 = vpack.c.b16 %v3066, %v3062
  %v4679 = vpack.c.b16 %v3067, %v3063
  %v4680 = vpack.c.b16 %v3072, %v3068
  %v4681 = vpack.c.b16 %v3073, %v3069
  %v4682 = vpack.c.b16 %v3074, %v3070
  %v4683 = vpack.c.b16 %v3075, %v3071
  %v4684 = vpack.c.b16 %v3080, %v3076
  %v4685 = vpack.c.b16 %v3081, %v3077
  %v4686 = vpack.c.b16 %v3082, %v3078
  %v4687 = vpack.c.b16 %v3083, %v3079
  %v4688 = vpack.c.b16 %v3088, %v3084
  %v4689 = vpack.c.b16 %v3089, %v3085
  %v4690 = vpack.c.b16 %v3090, %v3086
  %v4691 = vpack.c.b16 %v3091, %v3087
  %v4692 = vpack.c.b16 %v3096, %v3092
  %v4693 = vpack.c.b16 %v3097, %v3093
  %v4694 = vpack.c.b16 %v3098, %v3094
  %v4695 = vpack.c.b16 %v3099, %v3095
  %v4696 = vpack.c.b16 %v3104, %v3100
  %v4697 = vpack.c.b16 %v3105, %v3101
  %v4698 = vpack.c.b16 %v3106, %v3102
  %v4699 = vpack.c.b16 %v3107, %v3103
  %v4700 = vpack.c.b16 %v3112, %v3108
  %v4701 = vpack.c.b16 %v3113, %v3109
  %v4702 = vpack.c.b16 %v3114, %v3110
  %v4703 = vpack.c.b16 %v3115, %v3111
  %v4704 = vpack.c.b16 %v3120, %v3116
  %v4705 = vpack.c.b16 %v3121, %v3117
  %v4706 = vpack.c.b16 %v3122, %v3118
  %v4707 = vpack.c.b16 %v3123, %v3119
  %v4708 = vpack.c.b16 %v3128, %v3124
  %v4709 = vpack.c.b16 %v3129, %v3125
  %v4710 = vpack.c.b16 %v3130, %v3126
  %v4711 = vpack.c.b16 %v3131, %v3127
  %v4712 = vpack.c.b16 %v3136, %v3132
  %v4713 = vpack.c.b16 %v3137, %v3133
  %v4714 = vpack.c.b16 %v3138, %v3134
  %v4715 = vpack.c.b16 %v3139, %v3135
  %v4716 = vpack.c.b16 %v3144, %v3140
  %v4717 = vpack.c.b16 %v3145, %v3141
  %v4718 = vpack.c.b16 %v3146, %v3142
  %v4719 = vpack.c.b16 %v3147, %v3143
  %v4720 = vpack.c.b16 %v3152, %v3148
  %v4721 = vpack.c.b16 %v3153, %v3149
  %v4722 = vpack.c.b16 %v3154, %v3150
  %v4723 = vpack.c.b16 %v3155, %v3151
  %v4724 = vpack.c.b16 %v3160, %v3156
  %v4725 = vpack.c.b16 %v3161, %v3157
  %v4726 = vpack.c.b16 %v3162, %v3158
  %v4727 = vpack.c.b16 %v3163, %v3159
  %v4728 = vpack.c.b16 %v3168, %v3164
  %v4729 = vpack.c.b16 %v3169, %v3165
  %v4730 = vpack.c.b16 %v3170, %v3166
  %v4731 = vpack.c.b16 %v3171, %v3167
  %v4732 = vpack.c.b16 %v3176, %v3172
  %v4733 = vpack.c.b16 %v3177, %v3173
  %v4734 = vpack.c.b16 %v3178, %v3174
  %v4735 = vpack.c.b16 %v3179, %v3175
  %v4736 = vpack.c.b16 %v3184, %v3180
  %v4737 = vpack.c.b16 %v3185, %v3181
  %v4738 = vpack.c.b16 %v3186, %v3182
  %v4739 = vpack.c.b16 %v3187, %v3183
  %v4740 = vpack.c.b16 %v3192, %v3188
  %v4741 = vpack.c.b16 %v3193, %v3189
  %v4742 = vpack.c.b16 %v3194, %v3190
  %v4743 = vpack.c.b16 %v3195, %v3191
  %v4744 = vpack.c.b16 %v3200, %v3196
  %v4745 = vpack.c.b16 %v3201, %v3197
  %v4746 = vpack.c.b16 %v3202, %v3198
  %v4747 = vpack.c.b16 %v3203, %v3199
  %v4748 = vpack.c.b16 %v3208, %v3204
  %v4749 = vpack.c.b16 %v3209, %v3205
  %v4750 = vpack.c.b16 %v3210, %v3206
  %v4751 = vpack.c.b16 %v3211, %v3207
  %v4752 = vpack.c.b16 %v3216, %v3212
  %v4753 = vpack.c.b16 %v3217, %v3213
  %v4754 = vpack.c.b16 %v3218, %v3214
  %v4755 = vpack.c.b16 %v3219, %v3215
  %v4756 = vpack.c.b16 %v3224, %v3220
  %v4757 = vpack.c.b16 %v3225, %v3221
  %v4758 = vpack.c.b16 %v3226, %v3222
  %v4759 = vpack.c.b16 %v3227, %v3223
  %v4760 = vpack.c.b16 %v3232, %v3228
  %v4761 = vpack.c.b16 %v3233, %v3229
  %v4762 = vpack.c.b16 %v3234, %v3230
  %v4763 = vpack.c.b16 %v3235, %v3231
  %v4764 = vpack.c.b16 %v3240, %v3236
  %v4765 = vpack.c.b16 %v3241, %v3237
  %v4766 = vpack.c.b16 %v3242, %v3238
  %v4767 = vpack.c.b16 %v3243, %v3239
  %v4768 = vpack.c.b16 %v3248, %v3244
  %v4769 = vpack.c.b16 %v3249, %v3245
  %v4770 = vpack.c.b16 %v3250, %v3246
  %v4771 = vpack.c.b16 %v3251, %v3247
  %v4772 = vpack.c.b16 %v3256, %v3252
  %v4773 = vpack.c.b16 %v3257, %v3253
  %v4774 = vpack.c.b16 %v3258, %v3254
  %v4775 = vpack.c.b16 %v3259, %v3255
  %v4776 = vpack.c.b16 %v3264, %v3260
  %v4777 = vpack.c.b16 %v3265, %v3261
  %v4778 = vpack.c.b16 %v3266, %v3262
  %v4779 = vpack.c.b16 %v3267, %v3263
  %v4780 = vpack.c.b16 %v3272, %v3268
  %v4781 = vpack.c.b16 %v3273, %v3269
  %v4782 = vpack.c.b16 %v3274, %v3270
  %v4783 = vpack.c.b16 %v3275, %v3271
  %v4784 = vpack.c.b16 %v3280, %v3276
  %v4785 = vpack.c.b16 %v3281, %v3277
  %v4786 = vpack.c.b16 %v3282, %v3278
  %v4787 = vpack.c.b16 %v3283, %v3279
  %v4788 = vpack.c.b16 %v3288, %v3284
  %v4789 = vpack.c.b16 %v3289, %v3285
  %v4790 = vpack.c.b16 %v3290, %v3286
  %v4791 = vpack.c.b16 %v3291, %v3287
  %v4792 = vpack.c.b16 %v3296, %v3292
  %v4793 = vpack.c.b16 %v3297, %v3293
  %v4794 = vpack.c.b16 %v3298, %v3294
  %v4795 = vpack.c.b16 %v3299, %v3295
  %v4796 = vpack.c.b16 %v3304, %v3300
  %v4797 = vpack.c.b16 %v3305, %v3301
  %v4798 = vpack.c.b16 %v3306, %v3302
  %v4799 = vpack.c.b16 %v3307, %v3303
  %v4800 = vpack.c.b16 %v3312, %v3308
  %v4801 = vpack.c.b16 %v3313, %v3309
  %v4802 = vpack.c.b16 %v3314, %v3310
  %v4803 = vpack.c.b16 %v3315, %v3311
  %v4804 = vpack.c.b16 %v3320, %v3316
  %v4805 = vpack.c.b16 %v3321, %v3317
  %v4806 = vpack.c.b16 %v3322, %v3318
  %v4807 = vpack.c.b16 %v3323, %v3319
  %v4808 = vpack.c.b16 %v3328, %v3324
  %v4809 = vpack.c.b16 %v3329, %v3325
  %v4810 = vpack.c.b16 %v3330, %v3326
  %v4811 = vpack.c.b16 %v3331, %v3327
  %v4812 = vpack.c.b16 %v3336, %v3332
  %v4813 = vpack.c.b16 %v3337, %v3333
  %v4814 = vpack.c.b16 %v3338, %v3334
  %v4815 = vpack.c.b16 %v3339, %v3335
  %v4816 = vpack.c.b16 %v3344, %v3340
  %v4817 = vpack.c.b16 %v3345, %v3341
  %v4818 = vpack.c.b16 %v3346, %v3342
  %v4819 = vpack.c.b16 %v3347, %v3343
  %v4820 = vpack.c.b16 %v3352, %v3348
  %v4821 = vpack.c.b16 %v3353, %v3349
  %v4822 = vpack.c.b16 %v3354, %v3350
  %v4823 = vpack.c.b16 %v3355, %v3351
  %v4824 = vpack.c.b16 %v3360, %v3356
  %v4825 = vpack.c.b16 %v3361, %v3357
  %v4826 = vpack.c.b16 %v3362, %v3358
  %v4827 = vpack.c.b16 %v3363, %v3359
  %v4828 = vpack.c.b16 %v3368, %v3364
  %v4829 = vpack.c.b16 %v3369, %v3365
  %v4830 = vpack.c.b16 %v3370, %v3366
  %v4831 = vpack.c.b16 %v3371, %v3367
  %v4832 = vpack.c.b16 %v3376, %v3372
  %v4833 = vpack.c.b16 %v3377, %v3373
  %v4834 = vpack.c.b16 %v3378, %v3374
  %v4835 = vpack.c.b16 %v3379, %v3375
  %v4836 = vpack.c.b16 %v3384, %v3380
  %v4837 = vpack.c.b16 %v3385, %v3381
  %v4838 = vpack.c.b16 %v3386, %v3382
  %v4839 = vpack.c.b16 %v3387, %v3383
  %v4840 = vpack.c.b16 %v3392, %v3388
  %v4841 = vpack.c.b16 %v3393, %v3389
  %v4842 = vpack.c.b16 %v3394, %v3390
  %v4843 = vpack.c.b16 %v3395, %v3391
  %v4844 = vpack.c.b16 %v3400, %v3396
  %v4845 = vpack.c.b16 %v3401, %v3397
  %v4846 = vpack.c.b16 %v3402, %v3398
  %v4847 = vpack.c.b16 %v3403, %v3399
  %v4848 = vpack.c.b16 %v3408, %v3404
  %v4849 = vpack.c.b16 %v3409, %v3405
  %v4850 = vpack.c.b16 %v3410, %v3406
  %v4851 = vpack.c.b16 %v3411, %v3407
  %v4852 = vpack.c.b16 %v3416, %v3412
  %v4853 = vpack.c.b16 %v3417, %v3413
  %v4854 = vpack.c.b16 %v3418, %v3414
  %v4855 = vpack.c.b16 %v3419, %v3415
  %v4856 = vpack.c.b16 %v3424, %v3420
  %v4857 = vpack.c.b16 %v3425, %v3421
  %v4858 = vpack.c.b16 %v3426, %v3422
  %v4859 = vpack.c.b16 %v3427, %v3423
  %v4860 = vpack.c.b16 %v3432, %v3428
  %v4861 = vpack.c.b16 %v3433, %v3429
  %v4862 = vpack.c.b16 %v3434, %v3430
  %v4863 = vpack.c.b16 %v3435, %v3431
  %v4864 = vpack.c.b16 %v3440, %v3436
  %v4865 = vpack.c.b16 %v3441, %v3437
  %v4866 = vpack.c.b16 %v3442, %v3438
  %v4867 = vpack.c.b16 %v3443, %v3439
  %v4868 = vpack.c.b16 %v3448, %v3444
  %v4869 = vpack.c.b16 %v3449, %v3445
  %v4870 = vpack.c.b16 %v3450, %v3446
  %v4871 = vpack.c.b16 %v3451, %v3447
  %v4872 = vpack.c.b16 %v3456, %v3452
  %v4873 = vpack.c.b16 %v3457, %v3453
  %v4874 = vpack.c.b16 %v3458, %v3454
  %v4875 = vpack.c.b16 %v3459, %v3455
  %v4876 = vpack.c.b16 %v3464, %v3460
  %v4877 = vpack.c.b16 %v3465, %v3461
  %v4878 = vpack.c.b16 %v3466, %v3462
  %v4879 = vpack.c.b16 %v3467, %v3463
  %v4880 = vpack.c.b16 %v3472, %v3468
  %v4881 = vpack.c.b16 %v3473, %v3469
  %v4882 = vpack.c.b16 %v3474, %v3470
  %v4883 = vpack.c.b16 %v3475, %v3471
  %v4884 = vpack.c.b16 %v3480, %v3476
  %v4885 = vpack.c.b16 %v3481, %v3477
  %v4886 = vpack.c.b16 %v3482, %v3478
  %v4887 = vpack.c.b16 %v3483, %v3479
  %v4888 = vpack.c.b16 %v3488, %v3484
  %v4889 = vpack.c.b16 %v3489, %v3485
  %v4890 = vpack.c.b16 %v3490, %v3486
  %v4891 = vpack.c.b16 %v3491, %v3487
  %v4892 = vpack.c.b16 %v3496, %v3492
  %v4893 = vpack.c.b16 %v3497, %v3493
  %v4894 = vpack.c.b16 %v3498, %v3494
  %v4895 = vpack.c.b16 %v3499, %v3495
  %v4896 = vpack.c.b16 %v3504, %v3500
  %v4897 = vpack.c.b16 %v3505, %v3501
  %v4898 = vpack.c.b16 %v3506, %v3502
  %v4899 = vpack.c.b16 %v3507, %v3503
  %v4900 = vpack.c.b16 %v3512, %v3508
  %v4901 = vpack.c.b16 %v3513, %v3509
  %v4902 = vpack.c.b16 %v3514, %v3510
  %v4903 = vpack.c.b16 %v3515, %v3511
  %v4904 = vpack.c.b16 %v3520, %v3516
  %v4905 = vpack.c.b16 %v3521, %v3517
  %v4906 = vpack.c.b16 %v3522, %v3518
  %v4907 = vpack.c.b16 %v3523, %v3519
  %v4908 = vpack.c.b16 %v3528, %v3524
  %v4909 = vpack.c.b16 %v3529, %v3525
  %v4910 = vpack.c.b16 %v3530, %v3526
  %v4911 = vpack.c.b16 %v3531, %v3527
  %v4912 = vpack.c.b16 %v3536, %v3532
  %v4913 = vpack.c.b16 %v3537, %v3533
  %v4914 = vpack.c.b16 %v3538, %v3534
  %v4915 = vpack.c.b16 %v3539, %v3535
  %v4916 = vpack.c.b16 %v3544, %v3540
  %v4917 = vpack.c.b16 %v3545, %v3541
  %v4918 = vpack.c.b16 %v3546, %v3542
  %v4919 = vpack.c.b16 %v3547, %v3543
  %v4920 = vpack.c.b16 %v3552, %v3548
  %v4921 = vpack.c.b16 %v3553, %v3549
  %v4922 = vpack.c.b16 %v3554, %v3550
  %v4923 = vpack.c.b16 %v3555, %v3551
  %v4924 = vpack.c.b16 %v3560, %v3556
  %v4925 = vpack.c.b16 %v3561, %v3557
  %v4926 = vpack.c.b16 %v3562, %v3558
  %v4927 = vpack.c.b16 %v3563, %v3559
  %v4928 = vpack.c.b16 %v3568, %v3564
  %v4929 = vpack.c.b16 %v3569, %v3565
  %v4930 = vpack.c.b16 %v3570, %v3566
  %v4931 = vpack.c.b16 %v3571, %v3567
  %v4932 = vpack.c.b16 %v3576, %v3572
  %v4933 = vpack.c.b16 %v3577, %v3573
  %v4934 = vpack.c.b16 %v3578, %v3574
  %v4935 = vpack.c.b16 %v3579, %v3575
  %v4936 = vpack.c.b16 %v3584, %v3580
  %v4937 = vpack.c.b16 %v3585, %v3581
  %v4938 = vpack.c.b16 %v3586, %v3582
  %v4939 = vpack.c.b16 %v3587, %v3583
  %v4940 = vpack.c.b16 %v3592, %v3588
  %v4941 = vpack.c.b16 %v3593, %v3589
  %v4942 = vpack.c.b16 %v3594, %v3590
  %v4943 = vpack.c.b16 %v3595, %v3591
  %v4944 = vpack.c.b16 %v3600, %v3596
  %v4945 = vpack.c.b16 %v3601, %v3597
  %v4946 = vpack.c.b16 %v3602, %v3598
  %v4947 = vpack.c.b16 %v3603, %v3599
  %v4948 = vpack.c.b16 %v3608, %v3604
  %v4949 = vpack.c.b16 %v3609, %v3605
  %v4950 = vpack.c.b16 %v3610, %v3606
  %v4951 = vpack.c.b16 %v3611, %v3607
  %v4952 = vpack.c.b16 %v3616, %v3612
  %v4953 = vpack.c.b16 %v3617, %v3613
  %v4954 = vpack.c.b16 %v3618, %v3614
  %v4955 = vpack.c.b16 %v3619, %v3615
  %v4956 = vpack.c.b16 %v3624, %v3620
  %v4957 = vpack.c.b16 %v3625, %v3621
  %v4958 = vpack.c.b16 %v3626, %v3622
  %v4959 = vpack.c.b16 %v3627, %v3623
  %v4960 = vpack.c.b16 %v3632, %v3628
  %v4961 = vpack.c.b16 %v3633, %v3629
  %v4962 = vpack.c.b16 %v3634, %v3630
  %v4963 = vpack.c.b16 %v3635, %v3631
  %v4964 = vpack.c.b16 %v3640, %v3636
  %v4965 = vpack.c.b16 %v3641, %v3637
  %v4966 = vpack.c.b16 %v3642, %v3638
  %v4967 = vpack.c.b16 %v3643, %v3639
  %v4968 = vpack.c.b16 %v3648, %v3644
  %v4969 = vpack.c.b16 %v3649, %v3645
  %v4970 = vpack.c.b16 %v3650, %v3646
  %v4971 = vpack.c.b16 %v3651, %v3647
  %v4972 = vpack.c.b16 %v3656, %v3652
  %v4973 = vpack.c.b16 %v3657, %v3653
  %v4974 = vpack.c.b16 %v3658, %v3654
  %v4975 = vpack.c.b16 %v3659, %v3655
  %v4976 = vpack.c.b16 %v3664, %v3660
  %v4977 = vpack.c.b16 %v3665, %v3661
  %v4978 = vpack.c.b16 %v3666, %v3662
  %v4979 = vpack.c.b16 %v3667, %v3663
  %v4980 = vpack.c.b16 %v3672, %v3668
  %v4981 = vpack.c.b16 %v3673, %v3669
  %v4982 = vpack.c.b16 %v3674, %v3670
  %v4983 = vpack.c.b16 %v3675, %v3671
  %v4984 = vpack.c.b16 %v3680, %v3676
  %v4985 = vpack.c.b16 %v3681, %v3677
  %v4986 = vpack.c.b16 %v3682, %v3678
  %v4987 = vpack.c.b16 %v3683, %v3679
  %v4988 = vpack.c.b16 %v3688, %v3684
  %v4989 = vpack.c.b16 %v3689, %v3685
  %v4990 = vpack.c.b16 %v3690, %v3686
  %v4991 = vpack.c.b16 %v3691, %v3687
  %v4992 = vpack.c.b16 %v3696, %v3692
  %v4993 = vpack.c.b16 %v3697, %v3693
  %v4994 = vpack.c.b16 %v3698, %v3694
  %v4995 = vpack.c.b16 %v3699, %v3695
  %v4996 = vpack.c.b16 %v3704, %v3700
  %v4997 = vpack.c.b16 %v3705, %v3701
  %v4998 = vpack.c.b16 %v3706, %v3702
  %v4999 = vpack.c.b16 %v3707, %v3703
  %v5000 = vpack.c.b16 %v3712, %v3708
  %v5001 = vpack.c.b16 %v3713, %v3709
  %v5002 = vpack.c.b16 %v3714, %v3710
  %v5003 = vpack.c.b16 %v3715, %v3711
  %v5004 = vpack.c.b16 %v3720, %v3716
  %v5005 = vpack.c.b16 %v3721, %v3717
  %v5006 = vpack.c.b16 %v3722, %v3718
  %v5007 = vpack.c.b16 %v3723, %v3719
  %v5008 = vpack.c.b16 %v3728, %v3724
  %v5009 = vpack.c.b16 %v3729, %v3725
  %v5010 = vpack.c.b16 %v3730, %v3726
  %v5011 = vpack.c.b16 %v3731, %v3727
  %v5012 = vpack.c.b16 %v3736, %v3732
  %v5013 = vpack.c.b16 %v3737, %v3733
  %v5014 = vpack.c.b16 %v3738, %v3734
  %v5015 = vpack.c.b16 %v3739, %v3735
  %v5016 = vpack.c.b16 %v3744, %v3740
  %v5017 = vpack.c.b16 %v3745, %v3741
  %v5018 = vpack.c.b16 %v3746, %v3742
  %v5019 = vpack.c.b16 %v3747, %v3743
  %v5020 = vpack.c.b16 %v3752, %v3748
  %v5021 = vpack.c.b16 %v3753, %v3749
  %v5022 = vpack.c.b16 %v3754, %v3750
  %v5023 = vpack.c.b16 %v3755, %v3751
  %v5024 = vpack.c.b16 %v3760, %v3756
  %v5025 = vpack.c.b16 %v3761, %v3757
  %v5026 = vpack.c.b16 %v3762, %v3758
  %v5027 = vpack.c.b16 %v3763, %v3759
  %v5028 = vpack.c.b16 %v3768, %v3764
  %v5029 = vpack.c.b16 %v3769, %v3765
  %v5030 = vpack.c.b16 %v3770, %v3766
  %v5031 = vpack.c.b16 %v3771, %v3767
  %v5032 = vpack.c.b16 %v3776, %v3772
  %v5033 = vpack.c.b16 %v3777, %v3773
  %v5034 = vpack.c.b16 %v3778, %v3774
  %v5035 = vpack.c.b16 %v3779, %v3775
  %v5036 = vpack.c.b16 %v3784, %v3780
  %v5037 = vpack.c.b16 %v3785, %v3781
  %v5038 = vpack.c.b16 %v3786, %v3782
  %v5039 = vpack.c.b16 %v3787, %v3783
  %v5040 = vpack.c.b16 %v3792, %v3788
  %v5041 = vpack.c.b16 %v3793, %v3789
  %v5042 = vpack.c.b16 %v3794, %v3790
  %v5043 = vpack.c.b16 %v3795, %v3791
  %v5044 = vpack.c.b16 %v3800, %v3796
  %v5045 = vpack.c.b16 %v3801, %v3797
  %v5046 = vpack.c.b16 %v3802, %v3798
  %v5047 = vpack.c.b16 %v3803, %v3799
  %v5048 = vpack.c.b16 %v3808, %v3804
  %v5049 = vpack.c.b16 %v3809, %v3805
  %v5050 = vpack.c.b16 %v3810, %v3806
  %v5051 = vpack.c.b16 %v3811, %v3807
  %v5052 = vpack.c.b16 %v3816, %v3812
  %v5053 = vpack.c.b16 %v3817, %v3813
  %v5054 = vpack.c.b16 %v3818, %v3814
  %v5055 = vpack.c.b16 %v3819, %v3815
  %v5056 = vpack.c.b16 %v3824, %v3820
  %v5057 = vpack.c.b16 %v3825, %v3821
  %v5058 = vpack.c.b16 %v3826, %v3822
  %v5059 = vpack.c.b16 %v3827, %v3823
  %v5060 = vpack.c.b16 %v3832, %v3828
  %v5061 = vpack.c.b16 %v3833, %v3829
  %v5062 = vpack.c.b16 %v3834, %v3830
  %v5063 = vpack.c.b16 %v3835, %v3831
  %v5064 = vpack.c.b16 %v3840, %v3836
  %v5065 = vpack.c.b16 %v3841, %v3837
  %v5066 = vpack.c.b16 %v3842, %v3838
  %v5067 = vpack.c.b16 %v3843, %v3839
  %v5068 = vpack.c.b16 %v3848, %v3844
  %v5069 = vpack.c.b16 %v3849, %v3845
  %v5070 = vpack.c.b16 %v3850, %v3846
  %v5071 = vpack.c.b16 %v3851, %v3847
  %v5072 = vpack.c.b16 %v3856, %v3852
  %v5073 = vpack.c.b16 %v3857, %v3853
  %v5074 = vpack.c.b16 %v3858, %v3854
  %v5075 = vpack.c.b16 %v3859, %v3855
  %v5076 = vpack.c.b16 %v3864, %v3860
  %v5077 = vpack.c.b16 %v3865, %v3861
  %v5078 = vpack.c.b16 %v3866, %v3862
  %v5079 = vpack.c.b16 %v3867, %v3863
  %v5080 = vpack.c.b16 %v3872, %v3868
  %v5081 = vpack.c.b16 %v3873, %v3869
  %v5082 = vpack.c.b16 %v3874, %v3870
  %v5083 = vpack.c.b16 %v3875, %v3871
  %v5084 = vpack.c.b16 %v3880, %v3876
  %v5085 = vpack.c.b16 %v3881, %v3877
  %v5086 = vpack.c.b16 %v3882, %v3878
  %v5087 = vpack.c.b16 %v3883, %v3879
  %v5088 = vpack.c.b16 %v3888, %v3884
  %v5089 = vpack.c.b16 %v3889, %v3885
  %v5090 = vpack.c.b16 %v3890, %v3886
  %v5091 = vpack.c.b16 %v3891, %v3887
  %v5092 = vpack.c.b16 %v3896, %v3892
  %v5093 = vpack.c.b16 %v3897, %v3893
  %v5094 = vpack.c.b16 %v3898, %v3894
  %v5095 = vpack.c.b16 %v3899, %v3895
  %v5096 = vpack.c.b16 %v3904, %v3900
  %v5097 = vpack.c.b16 %v3905, %v3901
  %v5098 = vpack.c.b16 %v3906, %v3902
  %v5099 = vpack.c.b16 %v3907, %v3903
  %v5100 = vpack.c.b16 %v3912, %v3908
  %v5101 = vpack.c.b16 %v3913, %v3909
  %v5102 = vpack.c.b16 %v3914, %v3910
  %v5103 = vpack.c.b16 %v3915, %v3911
  %v5104 = vpack.c.b16 %v3920, %v3916
  %v5105 = vpack.c.b16 %v3921, %v3917
  %v5106 = vpack.c.b16 %v3922, %v3918
  %v5107 = vpack.c.b16 %v3923, %v3919
  %v5108 = vpack.c.b16 %v3928, %v3924
  %v5109 = vpack.c.b16 %v3929, %v3925
  %v5110 = vpack.c.b16 %v3930, %v3926
  %v5111 = vpack.c.b16 %v3931, %v3927
  %v5112 = vpack.c.b16 %v3936, %v3932
  %v5113 = vpack.c.b16 %v3937, %v3933
  %v5114 = vpack.c.b16 %v3938, %v3934
  %v5115 = vpack.c.b16 %v3939, %v3935
  %v5116 = vpack.c.b16 %v3944, %v3940
  %v5117 = vpack.c.b16 %v3945, %v3941
  %v5118 = vpack.c.b16 %v3946, %v3942
  %v5119 = vpack.c.b16 %v3947, %v3943
  %v5120 = vpack.c.b16 %v3952, %v3948
  %v5121 = vpack.c.b16 %v3953, %v3949
  %v5122 = vpack.c.b16 %v3954, %v3950
  %v5123 = vpack.c.b16 %v3955, %v3951
  %v5124 = vpack.c.b16 %v3960, %v3956
  %v5125 = vpack.c.b16 %v3961, %v3957
  %v5126 = vpack.c.b16 %v3962, %v3958
  %v5127 = vpack.c.b16 %v3963, %v3959
  %v5128 = vpack.c.b16 %v3968, %v3964
  %v5129 = vpack.c.b16 %v3969, %v3965
  %v5130 = vpack.c.b16 %v3970, %v3966
  %v5131 = vpack.c.b16 %v3971, %v3967
  %v5132 = vpack.c.b16 %v3976, %v3972
  %v5133 = vpack.c.b16 %v3977, %v3973
  %v5134 = vpack.c.b16 %v3978, %v3974
  %v5135 = vpack.c.b16 %v3979, %v3975
  %v5136 = vpack.c.b16 %v3984, %v3980
  %v5137 = vpack.c.b16 %v3985, %v3981
  %v5138 = vpack.c.b16 %v3986, %v3982
  %v5139 = vpack.c.b16 %v3987, %v3983
  %v5140 = vpack.c.b16 %v3992, %v3988
  %v5141 = vpack.c.b16 %v3993, %v3989
  %v5142 = vpack.c.b16 %v3994, %v3990
  %v5143 = vpack.c.b16 %v3995, %v3991
  %v5144 = vpack.c.b16 %v4000, %v3996
  %v5145 = vpack.c.b16 %v4001, %v3997
  %v5146 = vpack.c.b16 %v4002, %v3998
  %v5147 = vpack.c.b16 %v4003, %v3999
  %v5148 = vpack.c.b16 %v4008, %v4004
  %v5149 = vpack.c.b16 %v4009, %v4005
  %v5150 = vpack.c.b16 %v4010, %v4006
  %v5151 = vpack.c.b16 %v4011, %v4007
  %v5152 = vpack.c.b16 %v4016, %v4012
  %v5153 = vpack.c.b16 %v4017, %v4013
  %v5154 = vpack.c.b16 %v4018, %v4014
  %v5155 = vpack.c.b16 %v4019, %v4015
  %v5156 = vpack.c.b16 %v4024, %v4020
  %v5157 = vpack.c.b16 %v4025, %v4021
  %v5158 = vpack.c.b16 %v4026, %v4022
  %v5159 = vpack.c.b16 %v4027, %v4023
  %v5160 = vpack.c.b16 %v4032, %v4028
  %v5161 = vpack.c.b16 %v4033, %v4029
  %v5162 = vpack.c.b16 %v4034, %v4030
  %v5163 = vpack.c.b16 %v4035, %v4031
  %v5164 = vpack.c.b16 %v4040, %v4036
  %v5165 = vpack.c.b16 %v4041, %v4037
  %v5166 = vpack.c.b16 %v4042, %v4038
  %v5167 = vpack.c.b16 %v4043, %v4039
  %v5168 = vpack.c.b16 %v4048, %v4044
  %v5169 = vpack.c.b16 %v4049, %v4045
  %v5170 = vpack.c.b16 %v4050, %v4046
  %v5171 = vpack.c.b16 %v4051, %v4047
  %v5172 = vpack.c.b16 %v4056, %v4052
  %v5173 = vpack.c.b16 %v4057, %v4053
  %v5174 = vpack.c.b16 %v4058, %v4054
  %v5175 = vpack.c.b16 %v4059, %v4055
  %v5176 = vpack.c.b16 %v4064, %v4060
  %v5177 = vpack.c.b16 %v4065, %v4061
  %v5178 = vpack.c.b16 %v4066, %v4062
  %v5179 = vpack.c.b16 %v4067, %v4063
  %v5180 = vpack.c.b16 %v4072, %v4068
  %v5181 = vpack.c.b16 %v4073, %v4069
  %v5182 = vpack.c.b16 %v4074, %v4070
  %v5183 = vpack.c.b16 %v4075, %v4071
  %v5184 = vpack.c.b16 %v4080, %v4076
  %v5185 = vpack.c.b16 %v4081, %v4077
  %v5186 = vpack.c.b16 %v4082, %v4078
  %v5187 = vpack.c.b16 %v4083, %v4079
  %v5188 = vpack.c.b16 %v4088, %v4084
  %v5189 = vpack.c.b16 %v4089, %v4085
  %v5190 = vpack.c.b16 %v4090, %v4086
  %v5191 = vpack.c.b16 %v4091, %v4087
  %v5192 = vpack.c.b16 %v4096, %v4092
  %v5193 = vpack.c.b16 %v4097, %v4093
  %v5194 = vpack.c.b16 %v4098, %v4094
  %v5195 = vpack.c.b16 %v4099, %v4095
  %v5196 = vpack.c.b16 %v4104, %v4100
  %v5197 = vpack.c.b16 %v4105, %v4101
  %v5198 = vpack.c.b16 %v4106, %v4102
  %v5199 = vpack.c.b16 %v4107, %v4103
  %v5200 = vpack.c.b16 %v4112, %v4108
  %v5201 = vpack.c.b16 %v4113, %v4109
  %v5202 = vpack.c.b16 %v4114, %v4110
  %v5203 = vpack.c.b16 %v4115, %v4111
  %v5204 = vpack.c.b16 %v4120, %v4116
  %v5205 = vpack.c.b16 %v4121, %v4117
  %v5206 = vpack.c.b16 %v4122, %v4118
  %v5207 = vpack.c.b16 %v4123, %v4119
  %v5208 = vpack.c.b16 %v4128, %v4124
  %v5209 = vpack.c.b16 %v4129, %v4125
  %v5210 = vpack.c.b16 %v4130, %v4126
  %v5211 = vpack.c.b16 %v4131, %v4127
  %v5212 = vpack.c.b16 %v4136, %v4132
  %v5213 = vpack.c.b16 %v4137, %v4133
  %v5214 = vpack.c.b16 %v4138, %v4134
  %v5215 = vpack.c.b16 %v4139, %v4135
  %v5216 = vpack.c.b16 %v4144, %v4140
  %v5217 = vpack.c.b16 %v4145, %v4141
  %v5218 = vpack.c.b16 %v4146, %v4142
  %v5219 = vpack.c.b16 %v4147, %v4143
  %v5220 = vpack.c.b16 %v4152, %v4148
  %v5221 = vpack.c.b16 %v4153, %v4149
  %v5222 = vpack.c.b16 %v4154, %v4150
  %v5223 = vpack.c.b16 %v4155, %v4151
  %v5224 = vpack.c.b16 %v4160, %v4156
  %v5225 = vpack.c.b16 %v4161, %v4157
  %v5226 = vpack.c.b16 %v4162, %v4158
  %v5227 = vpack.c.b16 %v4163, %v4159
  %v5228 = vpack.c.b16 %v4168, %v4164
  %v5229 = vpack.c.b16 %v4169, %v4165
  %v5230 = vpack.c.b16 %v4170, %v4166
  %v5231 = vpack.c.b16 %v4171, %v4167
  %v5232 = vpack.c.b16 %v4176, %v4172
  %v5233 = vpack.c.b16 %v4177, %v4173
  %v5234 = vpack.c.b16 %v4178, %v4174
  %v5235 = vpack.c.b16 %v4179, %v4175
  %v5236 = vpack.c.b16 %v4184, %v4180
  %v5237 = vpack.c.b16 %v4185, %v4181
  %v5238 = vpack.c.b16 %v4186, %v4182
  %v5239 = vpack.c.b16 %v4187, %v4183
  %v5240 = vpack.c.b16 %v4192, %v4188
  %v5241 = vpack.c.b16 %v4193, %v4189
  %v5242 = vpack.c.b16 %v4194, %v4190
  %v5243 = vpack.c.b16 %v4195, %v4191
  %v5244 = vpack.c.b16 %v4200, %v4196
  %v5245 = vpack.c.b16 %v4201, %v4197
  %v5246 = vpack.c.b16 %v4202, %v4198
  %v5247 = vpack.c.b16 %v4203, %v4199
  %v5248 = vpack.c.b16 %v4208, %v4204
  %v5249 = vpack.c.b16 %v4209, %v4205
  %v5250 = vpack.c.b16 %v4210, %v4206
  %v5251 = vpack.c.b16 %v4211, %v4207
  %v5252 = vpack.c.b16 %v4216, %v4212
  %v5253 = vpack.c.b16 %v4217, %v4213
  %v5254 = vpack.c.b16 %v4218, %v4214
  %v5255 = vpack.c.b16 %v4219, %v4215
  %v5256 = vpack.c.b16 %v4224, %v4220
  %v5257 = vpack.c.b16 %v4225, %v4221
  %v5258 = vpack.c.b16 %v4226, %v4222
  %v5259 = vpack.c.b16 %v4227, %v4223
  %v5260 = vpack.c.b16 %v4232, %v4228
  %v5261 = vpack.c.b16 %v4233, %v4229
  %v5262 = vpack.c.b16 %v4234, %v4230
  %v5263 = vpack.c.b16 %v4235, %v4231
  %v5264 = vpack.c.b16 %v4240, %v4236
  %v5265 = vpack.c.b16 %v4241, %v4237
  %v5266 = vpack.c.b16 %v4242, %v4238
  %v5267 = vpack.c.b16 %v4243, %v4239
  %6292 = vmatpush.bf16.msra.mxu0 %v4272
  %6293 = vmatpush.bf16.msra.mxu0 %v4268
  %6294 = vmatpush.bf16.msra.mxu0 %v4264
  %6295 = vmatpush.bf16.msra.mxu0 %v4260
  %6296 = vmatpush.bf16.msra.mxu0 %v4256
  %6297 = vmatpush.bf16.msra.mxu0 %v4252
  %6298 = vmatpush.bf16.msra.mxu0 %v4248
  %6299 = vmatpush.bf16.msra.mxu0 %v4244
  %6300 = vmatmul.bf16.gmra.mxu0 %v1108
  %v6301 = vpop.f32.mrf.mxu0
  %v6302 = vadd.f32 0.0, %v6301
  %v6303 = vpop.f32.mrf.mxu0
  %6304 = vdwg.mxu0
  %6305 = vmatpush.bf16.msra.mxu0 %v4304
  %6306 = vmatpush.bf16.msra.mxu0 %v4300
  %6307 = vmatpush.bf16.msra.mxu0 %v4296
  %6308 = vmatpush.bf16.msra.mxu0 %v4292
  %6309 = vmatpush.bf16.msra.mxu0 %v4288
  %6310 = vmatpush.bf16.msra.mxu0 %v4284
  %6311 = vmatpush.bf16.msra.mxu0 %v4280
  %6312 = vmatpush.bf16.msra.mxu0 %v4276
  %6313 = vmatmul.bf16.gmra.mxu0 %v1109
  %v6314 = vpop.f32.mrf.mxu0
  %v6315 = vadd.f32 %v6302, %v6314
  %v6316 = vpop.f32.mrf.mxu0
  %6317 = vdwg.mxu0
  %6318 = vmatpush.bf16.msra.mxu0 %v4336
  %6319 = vmatpush.bf16.msra.mxu0 %v4332
  %6320 = vmatpush.bf16.msra.mxu0 %v4328
  %6321 = vmatpush.bf16.msra.mxu0 %v4324
  %6322 = vmatpush.bf16.msra.mxu0 %v4320
  %6323 = vmatpush.bf16.msra.mxu0 %v4316
  %6324 = vmatpush.bf16.msra.mxu0 %v4312
  %6325 = vmatpush.bf16.msra.mxu0 %v4308
  %6326 = vmatmul.bf16.gmra.mxu0 %v1110
  %v6327 = vpop.f32.mrf.mxu0
  %v6328 = vadd.f32 %v6315, %v6327
  %v6329 = vpop.f32.mrf.mxu0
  %6330 = vdwg.mxu0
  %6331 = vmatpush.bf16.msra.mxu0 %v4368
  %6332 = vmatpush.bf16.msra.mxu0 %v4364
  %6333 = vmatpush.bf16.msra.mxu0 %v4360
  %6334 = vmatpush.bf16.msra.mxu0 %v4356
  %6335 = vmatpush.bf16.msra.mxu0 %v4352
  %6336 = vmatpush.bf16.msra.mxu0 %v4348
  %6337 = vmatpush.bf16.msra.mxu0 %v4344
  %6338 = vmatpush.bf16.msra.mxu0 %v4340
  %6339 = vmatmul.bf16.gmra.mxu0 %v1111
  %v6340 = vpop.f32.mrf.mxu0
  %v6341 = vadd.f32 %v6328, %v6340
  %v6342 = vpop.f32.mrf.mxu0
  %6343 = vdwg.mxu0
  %6344 = vmatpush.bf16.msra.mxu0 %v4400
  %6345 = vmatpush.bf16.msra.mxu0 %v4396
  %6346 = vmatpush.bf16.msra.mxu0 %v4392
  %6347 = vmatpush.bf16.msra.mxu0 %v4388
  %6348 = vmatpush.bf16.msra.mxu0 %v4384
  %6349 = vmatpush.bf16.msra.mxu0 %v4380
  %6350 = vmatpush.bf16.msra.mxu0 %v4376
  %6351 = vmatpush.bf16.msra.mxu0 %v4372
  %6352 = vmatmul.bf16.gmra.mxu0 %v1112
  %v6353 = vpop.f32.mrf.mxu0
  %v6354 = vadd.f32 %v6341, %v6353
  %v6355 = vpop.f32.mrf.mxu0
  %6356 = vdwg.mxu0
  %6357 = vmatpush.bf16.msra.mxu0 %v4432
  %6358 = vmatpush.bf16.msra.mxu0 %v4428
  %6359 = vmatpush.bf16.msra.mxu0 %v4424
  %6360 = vmatpush.bf16.msra.mxu0 %v4420
  %6361 = vmatpush.bf16.msra.mxu0 %v4416
  %6362 = vmatpush.bf16.msra.mxu0 %v4412
  %6363 = vmatpush.bf16.msra.mxu0 %v4408
  %6364 = vmatpush.bf16.msra.mxu0 %v4404
  %6365 = vmatmul.bf16.gmra.mxu0 %v1113
  %v6366 = vpop.f32.mrf.mxu0
  %v6367 = vadd.f32 %v6354, %v6366
  %v6368 = vpop.f32.mrf.mxu0
  %6369 = vdwg.mxu0
  %6370 = vmatpush.bf16.msra.mxu0 %v4464
  %6371 = vmatpush.bf16.msra.mxu0 %v4460
  %6372 = vmatpush.bf16.msra.mxu0 %v4456
  %6373 = vmatpush.bf16.msra.mxu0 %v4452
  %6374 = vmatpush.bf16.msra.mxu0 %v4448
  %6375 = vmatpush.bf16.msra.mxu0 %v4444
  %6376 = vmatpush.bf16.msra.mxu0 %v4440
  %6377 = vmatpush.bf16.msra.mxu0 %v4436
  %6378 = vmatmul.bf16.gmra.mxu0 %v1114
  %v6379 = vpop.f32.mrf.mxu0
  %v6380 = vadd.f32 %v6367, %v6379
  %v6381 = vpop.f32.mrf.mxu0
  %6382 = vdwg.mxu0
  %6383 = vmatpush.bf16.msra.mxu0 %v4496
  %6384 = vmatpush.bf16.msra.mxu0 %v4492
  %6385 = vmatpush.bf16.msra.mxu0 %v4488
  %6386 = vmatpush.bf16.msra.mxu0 %v4484
  %6387 = vmatpush.bf16.msra.mxu0 %v4480
  %6388 = vmatpush.bf16.msra.mxu0 %v4476
  %6389 = vmatpush.bf16.msra.mxu0 %v4472
  %6390 = vmatpush.bf16.msra.mxu0 %v4468
  %6391 = vmatmul.bf16.gmra.mxu0 %v1115
  %v6392 = vpop.f32.mrf.mxu0
  %v6393 = vadd.f32 %v6380, %v6392
  %v6394 = vpop.f32.mrf.mxu0
  %6395 = vdwg.mxu0
  %6396 = vmatpush.bf16.msra.mxu0 %v4528
  %6397 = vmatpush.bf16.msra.mxu0 %v4524
  %6398 = vmatpush.bf16.msra.mxu0 %v4520
  %6399 = vmatpush.bf16.msra.mxu0 %v4516
  %6400 = vmatpush.bf16.msra.mxu0 %v4512
  %6401 = vmatpush.bf16.msra.mxu0 %v4508
  %6402 = vmatpush.bf16.msra.mxu0 %v4504
  %6403 = vmatpush.bf16.msra.mxu0 %v4500
  %6404 = vmatmul.bf16.gmra.mxu0 %v1116
  %v6405 = vpop.f32.mrf.mxu0
  %v6406 = vadd.f32 %v6393, %v6405
  %v6407 = vpop.f32.mrf.mxu0
  %6408 = vdwg.mxu0
  %6409 = vmatpush.bf16.msra.mxu0 %v4560
  %6410 = vmatpush.bf16.msra.mxu0 %v4556
  %6411 = vmatpush.bf16.msra.mxu0 %v4552
  %6412 = vmatpush.bf16.msra.mxu0 %v4548
  %6413 = vmatpush.bf16.msra.mxu0 %v4544
  %6414 = vmatpush.bf16.msra.mxu0 %v4540
  %6415 = vmatpush.bf16.msra.mxu0 %v4536
  %6416 = vmatpush.bf16.msra.mxu0 %v4532
  %6417 = vmatmul.bf16.gmra.mxu0 %v1117
  %v6418 = vpop.f32.mrf.mxu0
  %v6419 = vadd.f32 %v6406, %v6418
  %v6420 = vpop.f32.mrf.mxu0
  %6421 = vdwg.mxu0
  %6422 = vmatpush.bf16.msra.mxu0 %v4592
  %6423 = vmatpush.bf16.msra.mxu0 %v4588
  %6424 = vmatpush.bf16.msra.mxu0 %v4584
  %6425 = vmatpush.bf16.msra.mxu0 %v4580
  %6426 = vmatpush.bf16.msra.mxu0 %v4576
  %6427 = vmatpush.bf16.msra.mxu0 %v4572
  %6428 = vmatpush.bf16.msra.mxu0 %v4568
  %6429 = vmatpush.bf16.msra.mxu0 %v4564
  %6430 = vmatmul.bf16.gmra.mxu0 %v1118
  %v6431 = vpop.f32.mrf.mxu0
  %v6432 = vadd.f32 %v6419, %v6431
  %v6433 = vpop.f32.mrf.mxu0
  %6434 = vdwg.mxu0
  %6435 = vmatpush.bf16.msra.mxu0 %v4624
  %6436 = vmatpush.bf16.msra.mxu0 %v4620
  %6437 = vmatpush.bf16.msra.mxu0 %v4616
  %6438 = vmatpush.bf16.msra.mxu0 %v4612
  %6439 = vmatpush.bf16.msra.mxu0 %v4608
  %6440 = vmatpush.bf16.msra.mxu0 %v4604
  %6441 = vmatpush.bf16.msra.mxu0 %v4600
  %6442 = vmatpush.bf16.msra.mxu0 %v4596
  %6443 = vmatmul.bf16.gmra.mxu0 %v1119
  %v6444 = vpop.f32.mrf.mxu0
  %v6445 = vadd.f32 %v6432, %v6444
  %v6446 = vpop.f32.mrf.mxu0
  %6447 = vdwg.mxu0
  %6448 = vmatpush.bf16.msra.mxu0 %v4656
  %6449 = vmatpush.bf16.msra.mxu0 %v4652
  %6450 = vmatpush.bf16.msra.mxu0 %v4648
  %6451 = vmatpush.bf16.msra.mxu0 %v4644
  %6452 = vmatpush.bf16.msra.mxu0 %v4640
  %6453 = vmatpush.bf16.msra.mxu0 %v4636
  %6454 = vmatpush.bf16.msra.mxu0 %v4632
  %6455 = vmatpush.bf16.msra.mxu0 %v4628
  %6456 = vmatmul.bf16.gmra.mxu0 %v1120
  %v6457 = vpop.f32.mrf.mxu0
  %v6458 = vadd.f32 %v6445, %v6457
  %v6459 = vpop.f32.mrf.mxu0
  %6460 = vdwg.mxu0
  %6461 = vmatpush.bf16.msra.mxu0 %v4688
  %6462 = vmatpush.bf16.msra.mxu0 %v4684
  %6463 = vmatpush.bf16.msra.mxu0 %v4680
  %6464 = vmatpush.bf16.msra.mxu0 %v4676
  %6465 = vmatpush.bf16.msra.mxu0 %v4672
  %6466 = vmatpush.bf16.msra.mxu0 %v4668
  %6467 = vmatpush.bf16.msra.mxu0 %v4664
  %6468 = vmatpush.bf16.msra.mxu0 %v4660
  %6469 = vmatmul.bf16.gmra.mxu0 %v1121
  %v6470 = vpop.f32.mrf.mxu0
  %v6471 = vadd.f32 %v6458, %v6470
  %v6472 = vpop.f32.mrf.mxu0
  %6473 = vdwg.mxu0
  %6474 = vmatpush.bf16.msra.mxu0 %v4720
  %6475 = vmatpush.bf16.msra.mxu0 %v4716
  %6476 = vmatpush.bf16.msra.mxu0 %v4712
  %6477 = vmatpush.bf16.msra.mxu0 %v4708
  %6478 = vmatpush.bf16.msra.mxu0 %v4704
  %6479 = vmatpush.bf16.msra.mxu0 %v4700
  %6480 = vmatpush.bf16.msra.mxu0 %v4696
  %6481 = vmatpush.bf16.msra.mxu0 %v4692
  %6482 = vmatmul.bf16.gmra.mxu0 %v1122
  %v6483 = vpop.f32.mrf.mxu0
  %v6484 = vadd.f32 %v6471, %v6483
  %v6485 = vpop.f32.mrf.mxu0
  %6486 = vdwg.mxu0
  %6487 = vmatpush.bf16.msra.mxu0 %v4752
  %6488 = vmatpush.bf16.msra.mxu0 %v4748
  %6489 = vmatpush.bf16.msra.mxu0 %v4744
  %6490 = vmatpush.bf16.msra.mxu0 %v4740
  %6491 = vmatpush.bf16.msra.mxu0 %v4736
  %6492 = vmatpush.bf16.msra.mxu0 %v4732
  %6493 = vmatpush.bf16.msra.mxu0 %v4728
  %6494 = vmatpush.bf16.msra.mxu0 %v4724
  %6495 = vmatmul.bf16.gmra.mxu0 %v1123
  %v6496 = vpop.f32.mrf.mxu0
  %v6497 = vadd.f32 %v6484, %v6496
  %v6498 = vpop.f32.mrf.mxu0
  %6499 = vdwg.mxu0
  %6500 = vmatpush.bf16.msra.mxu0 %v4784
  %6501 = vmatpush.bf16.msra.mxu0 %v4780
  %6502 = vmatpush.bf16.msra.mxu0 %v4776
  %6503 = vmatpush.bf16.msra.mxu0 %v4772
  %6504 = vmatpush.bf16.msra.mxu0 %v4768
  %6505 = vmatpush.bf16.msra.mxu0 %v4764
  %6506 = vmatpush.bf16.msra.mxu0 %v4760
  %6507 = vmatpush.bf16.msra.mxu0 %v4756
  %6508 = vmatmul.bf16.gmra.mxu0 %v1124
  %v6509 = vpop.f32.mrf.mxu0
  %v6510 = vadd.f32 %v6497, %v6509
  %v6511 = vpop.f32.mrf.mxu0
  %6512 = vdwg.mxu0
  %6513 = vmatpush.bf16.msra.mxu0 %v4816
  %6514 = vmatpush.bf16.msra.mxu0 %v4812
  %6515 = vmatpush.bf16.msra.mxu0 %v4808
  %6516 = vmatpush.bf16.msra.mxu0 %v4804
  %6517 = vmatpush.bf16.msra.mxu0 %v4800
  %6518 = vmatpush.bf16.msra.mxu0 %v4796
  %6519 = vmatpush.bf16.msra.mxu0 %v4792
  %6520 = vmatpush.bf16.msra.mxu0 %v4788
  %6521 = vmatmul.bf16.gmra.mxu0 %v1125
  %v6522 = vpop.f32.mrf.mxu0
  %v6523 = vadd.f32 %v6510, %v6522
  %v6524 = vpop.f32.mrf.mxu0
  %6525 = vdwg.mxu0
  %6526 = vmatpush.bf16.msra.mxu0 %v4848
  %6527 = vmatpush.bf16.msra.mxu0 %v4844
  %6528 = vmatpush.bf16.msra.mxu0 %v4840
  %6529 = vmatpush.bf16.msra.mxu0 %v4836
  %6530 = vmatpush.bf16.msra.mxu0 %v4832
  %6531 = vmatpush.bf16.msra.mxu0 %v4828
  %6532 = vmatpush.bf16.msra.mxu0 %v4824
  %6533 = vmatpush.bf16.msra.mxu0 %v4820
  %6534 = vmatmul.bf16.gmra.mxu0 %v1126
  %v6535 = vpop.f32.mrf.mxu0
  %v6536 = vadd.f32 %v6523, %v6535
  %v6537 = vpop.f32.mrf.mxu0
  %6538 = vdwg.mxu0
  %6539 = vmatpush.bf16.msra.mxu0 %v4880
  %6540 = vmatpush.bf16.msra.mxu0 %v4876
  %6541 = vmatpush.bf16.msra.mxu0 %v4872
  %6542 = vmatpush.bf16.msra.mxu0 %v4868
  %6543 = vmatpush.bf16.msra.mxu0 %v4864
  %6544 = vmatpush.bf16.msra.mxu0 %v4860
  %6545 = vmatpush.bf16.msra.mxu0 %v4856
  %6546 = vmatpush.bf16.msra.mxu0 %v4852
  %6547 = vmatmul.bf16.gmra.mxu0 %v1127
  %v6548 = vpop.f32.mrf.mxu0
  %v6549 = vadd.f32 %v6536, %v6548
  %v6550 = vpop.f32.mrf.mxu0
  %6551 = vdwg.mxu0
  %6552 = vmatpush.bf16.msra.mxu0 %v4912
  %6553 = vmatpush.bf16.msra.mxu0 %v4908
  %6554 = vmatpush.bf16.msra.mxu0 %v4904
  %6555 = vmatpush.bf16.msra.mxu0 %v4900
  %6556 = vmatpush.bf16.msra.mxu0 %v4896
  %6557 = vmatpush.bf16.msra.mxu0 %v4892
  %6558 = vmatpush.bf16.msra.mxu0 %v4888
  %6559 = vmatpush.bf16.msra.mxu0 %v4884
  %6560 = vmatmul.bf16.gmra.mxu0 %v1128
  %v6561 = vpop.f32.mrf.mxu0
  %v6562 = vadd.f32 %v6549, %v6561
  %v6563 = vpop.f32.mrf.mxu0
  %6564 = vdwg.mxu0
  %6565 = vmatpush.bf16.msra.mxu0 %v4944
  %6566 = vmatpush.bf16.msra.mxu0 %v4940
  %6567 = vmatpush.bf16.msra.mxu0 %v4936
  %6568 = vmatpush.bf16.msra.mxu0 %v4932
  %6569 = vmatpush.bf16.msra.mxu0 %v4928
  %6570 = vmatpush.bf16.msra.mxu0 %v4924
  %6571 = vmatpush.bf16.msra.mxu0 %v4920
  %6572 = vmatpush.bf16.msra.mxu0 %v4916
  %6573 = vmatmul.bf16.gmra.mxu0 %v1129
  %v6574 = vpop.f32.mrf.mxu0
  %v6575 = vadd.f32 %v6562, %v6574
  %v6576 = vpop.f32.mrf.mxu0
  %6577 = vdwg.mxu0
  %6578 = vmatpush.bf16.msra.mxu0 %v4976
  %6579 = vmatpush.bf16.msra.mxu0 %v4972
  %6580 = vmatpush.bf16.msra.mxu0 %v4968
  %6581 = vmatpush.bf16.msra.mxu0 %v4964
  %6582 = vmatpush.bf16.msra.mxu0 %v4960
  %6583 = vmatpush.bf16.msra.mxu0 %v4956
  %6584 = vmatpush.bf16.msra.mxu0 %v4952
  %6585 = vmatpush.bf16.msra.mxu0 %v4948
  %6586 = vmatmul.bf16.gmra.mxu0 %v1130
  %v6587 = vpop.f32.mrf.mxu0
  %v6588 = vadd.f32 %v6575, %v6587
  %v6589 = vpop.f32.mrf.mxu0
  %6590 = vdwg.mxu0
  %6591 = vmatpush.bf16.msra.mxu0 %v5008
  %6592 = vmatpush.bf16.msra.mxu0 %v5004
  %6593 = vmatpush.bf16.msra.mxu0 %v5000
  %6594 = vmatpush.bf16.msra.mxu0 %v4996
  %6595 = vmatpush.bf16.msra.mxu0 %v4992
  %6596 = vmatpush.bf16.msra.mxu0 %v4988
  %6597 = vmatpush.bf16.msra.mxu0 %v4984
  %6598 = vmatpush.bf16.msra.mxu0 %v4980
  %6599 = vmatmul.bf16.gmra.mxu0 %v1131
  %v6600 = vpop.f32.mrf.mxu0
  %v6601 = vadd.f32 %v6588, %v6600
  %v6602 = vpop.f32.mrf.mxu0
  %6603 = vdwg.mxu0
  %6604 = vmatpush.bf16.msra.mxu0 %v5040
  %6605 = vmatpush.bf16.msra.mxu0 %v5036
  %6606 = vmatpush.bf16.msra.mxu0 %v5032
  %6607 = vmatpush.bf16.msra.mxu0 %v5028
  %6608 = vmatpush.bf16.msra.mxu0 %v5024
  %6609 = vmatpush.bf16.msra.mxu0 %v5020
  %6610 = vmatpush.bf16.msra.mxu0 %v5016
  %6611 = vmatpush.bf16.msra.mxu0 %v5012
  %6612 = vmatmul.bf16.gmra.mxu0 %v1132
  %v6613 = vpop.f32.mrf.mxu0
  %v6614 = vadd.f32 %v6601, %v6613
  %v6615 = vpop.f32.mrf.mxu0
  %6616 = vdwg.mxu0
  %6617 = vmatpush.bf16.msra.mxu0 %v5072
  %6618 = vmatpush.bf16.msra.mxu0 %v5068
  %6619 = vmatpush.bf16.msra.mxu0 %v5064
  %6620 = vmatpush.bf16.msra.mxu0 %v5060
  %6621 = vmatpush.bf16.msra.mxu0 %v5056
  %6622 = vmatpush.bf16.msra.mxu0 %v5052
  %6623 = vmatpush.bf16.msra.mxu0 %v5048
  %6624 = vmatpush.bf16.msra.mxu0 %v5044
  %6625 = vmatmul.bf16.gmra.mxu0 %v1133
  %v6626 = vpop.f32.mrf.mxu0
  %v6627 = vadd.f32 %v6614, %v6626
  %v6628 = vpop.f32.mrf.mxu0
  %6629 = vdwg.mxu0
  %6630 = vmatpush.bf16.msra.mxu0 %v5104
  %6631 = vmatpush.bf16.msra.mxu0 %v5100
  %6632 = vmatpush.bf16.msra.mxu0 %v5096
  %6633 = vmatpush.bf16.msra.mxu0 %v5092
  %6634 = vmatpush.bf16.msra.mxu0 %v5088
  %6635 = vmatpush.bf16.msra.mxu0 %v5084
  %6636 = vmatpush.bf16.msra.mxu0 %v5080
  %6637 = vmatpush.bf16.msra.mxu0 %v5076
  %6638 = vmatmul.bf16.gmra.mxu0 %v1134
  %v6639 = vpop.f32.mrf.mxu0
  %v6640 = vadd.f32 %v6627, %v6639
  %v6641 = vpop.f32.mrf.mxu0
  %6642 = vdwg.mxu0
  %6643 = vmatpush.bf16.msra.mxu0 %v5136
  %6644 = vmatpush.bf16.msra.mxu0 %v5132
  %6645 = vmatpush.bf16.msra.mxu0 %v5128
  %6646 = vmatpush.bf16.msra.mxu0 %v5124
  %6647 = vmatpush.bf16.msra.mxu0 %v5120
  %6648 = vmatpush.bf16.msra.mxu0 %v5116
  %6649 = vmatpush.bf16.msra.mxu0 %v5112
  %6650 = vmatpush.bf16.msra.mxu0 %v5108
  %6651 = vmatmul.bf16.gmra.mxu0 %v1135
  %v6652 = vpop.f32.mrf.mxu0
  %v6653 = vadd.f32 %v6640, %v6652
  %v6654 = vpop.f32.mrf.mxu0
  %6655 = vdwg.mxu0
  %6656 = vmatpush.bf16.msra.mxu0 %v5168
  %6657 = vmatpush.bf16.msra.mxu0 %v5164
  %6658 = vmatpush.bf16.msra.mxu0 %v5160
  %6659 = vmatpush.bf16.msra.mxu0 %v5156
  %6660 = vmatpush.bf16.msra.mxu0 %v5152
  %6661 = vmatpush.bf16.msra.mxu0 %v5148
  %6662 = vmatpush.bf16.msra.mxu0 %v5144
  %6663 = vmatpush.bf16.msra.mxu0 %v5140
  %6664 = vmatmul.bf16.gmra.mxu0 %v1136
  %v6665 = vpop.f32.mrf.mxu0
  %v6666 = vadd.f32 %v6653, %v6665
  %v6667 = vpop.f32.mrf.mxu0
  %6668 = vdwg.mxu0
  %6669 = vmatpush.bf16.msra.mxu0 %v5200
  %6670 = vmatpush.bf16.msra.mxu0 %v5196
  %6671 = vmatpush.bf16.msra.mxu0 %v5192
  %6672 = vmatpush.bf16.msra.mxu0 %v5188
  %6673 = vmatpush.bf16.msra.mxu0 %v5184
  %6674 = vmatpush.bf16.msra.mxu0 %v5180
  %6675 = vmatpush.bf16.msra.mxu0 %v5176
  %6676 = vmatpush.bf16.msra.mxu0 %v5172
  %6677 = vmatmul.bf16.gmra.mxu0 %v1137
  %v6678 = vpop.f32.mrf.mxu0
  %v6679 = vadd.f32 %v6666, %v6678
  %v6680 = vpop.f32.mrf.mxu0
  %6681 = vdwg.mxu0
  %6682 = vmatpush.bf16.msra.mxu0 %v5232
  %6683 = vmatpush.bf16.msra.mxu0 %v5228
  %6684 = vmatpush.bf16.msra.mxu0 %v5224
  %6685 = vmatpush.bf16.msra.mxu0 %v5220
  %6686 = vmatpush.bf16.msra.mxu0 %v5216
  %6687 = vmatpush.bf16.msra.mxu0 %v5212
  %6688 = vmatpush.bf16.msra.mxu0 %v5208
  %6689 = vmatpush.bf16.msra.mxu0 %v5204
  %6690 = vmatmul.bf16.gmra.mxu0 %v1138
  %v6691 = vpop.f32.mrf.mxu0
  %v6692 = vadd.f32 %v6679, %v6691
  %v6693 = vpop.f32.mrf.mxu0
  %6694 = vdwg.mxu0
  %6695 = vmatpush.bf16.msra.mxu0 %v5264
  %6696 = vmatpush.bf16.msra.mxu0 %v5260
  %6697 = vmatpush.bf16.msra.mxu0 %v5256
  %6698 = vmatpush.bf16.msra.mxu0 %v5252
  %6699 = vmatpush.bf16.msra.mxu0 %v5248
  %6700 = vmatpush.bf16.msra.mxu0 %v5244
  %6701 = vmatpush.bf16.msra.mxu0 %v5240
  %6702 = vmatpush.bf16.msra.mxu0 %v5236
  %6703 = vmatmul.bf16.gmra.mxu0 %v1139
  %v6704 = vpop.f32.mrf.mxu0
  %v6705 = vadd.f32 %v6692, %v6704
  %v6706 = vpop.f32.mrf.mxu0
  %6707 = vdwg.mxu0
  %6708 = vmatpush.bf16.msra.mxu0 %v4273
  %6709 = vmatpush.bf16.msra.mxu0 %v4269
  %6710 = vmatpush.bf16.msra.mxu0 %v4265
  %6711 = vmatpush.bf16.msra.mxu0 %v4261
  %6712 = vmatpush.bf16.msra.mxu0 %v4257
  %6713 = vmatpush.bf16.msra.mxu0 %v4253
  %6714 = vmatpush.bf16.msra.mxu0 %v4249
  %6715 = vmatpush.bf16.msra.mxu0 %v4245
  %6716 = vmatmul.bf16.gmra.mxu0 %v1108
  %v6717 = vpop.f32.mrf.mxu0
  %v6718 = vadd.f32 0.0, %v6717
  %v6719 = vpop.f32.mrf.mxu0
  %6720 = vdwg.mxu0
  %6721 = vmatpush.bf16.msra.mxu0 %v4305
  %6722 = vmatpush.bf16.msra.mxu0 %v4301
  %6723 = vmatpush.bf16.msra.mxu0 %v4297
  %6724 = vmatpush.bf16.msra.mxu0 %v4293
  %6725 = vmatpush.bf16.msra.mxu0 %v4289
  %6726 = vmatpush.bf16.msra.mxu0 %v4285
  %6727 = vmatpush.bf16.msra.mxu0 %v4281
  %6728 = vmatpush.bf16.msra.mxu0 %v4277
  %6729 = vmatmul.bf16.gmra.mxu0 %v1109
  %v6730 = vpop.f32.mrf.mxu0
  %v6731 = vadd.f32 %v6718, %v6730
  %v6732 = vpop.f32.mrf.mxu0
  %6733 = vdwg.mxu0
  %6734 = vmatpush.bf16.msra.mxu0 %v4337
  %6735 = vmatpush.bf16.msra.mxu0 %v4333
  %6736 = vmatpush.bf16.msra.mxu0 %v4329
  %6737 = vmatpush.bf16.msra.mxu0 %v4325
  %6738 = vmatpush.bf16.msra.mxu0 %v4321
  %6739 = vmatpush.bf16.msra.mxu0 %v4317
  %6740 = vmatpush.bf16.msra.mxu0 %v4313
  %6741 = vmatpush.bf16.msra.mxu0 %v4309
  %6742 = vmatmul.bf16.gmra.mxu0 %v1110
  %v6743 = vpop.f32.mrf.mxu0
  %v6744 = vadd.f32 %v6731, %v6743
  %v6745 = vpop.f32.mrf.mxu0
  %6746 = vdwg.mxu0
  %6747 = vmatpush.bf16.msra.mxu0 %v4369
  %6748 = vmatpush.bf16.msra.mxu0 %v4365
  %6749 = vmatpush.bf16.msra.mxu0 %v4361
  %6750 = vmatpush.bf16.msra.mxu0 %v4357
  %6751 = vmatpush.bf16.msra.mxu0 %v4353
  %6752 = vmatpush.bf16.msra.mxu0 %v4349
  %6753 = vmatpush.bf16.msra.mxu0 %v4345
  %6754 = vmatpush.bf16.msra.mxu0 %v4341
  %6755 = vmatmul.bf16.gmra.mxu0 %v1111
  %v6756 = vpop.f32.mrf.mxu0
  %v6757 = vadd.f32 %v6744, %v6756
  %v6758 = vpop.f32.mrf.mxu0
  %6759 = vdwg.mxu0
  %6760 = vmatpush.bf16.msra.mxu0 %v4401
  %6761 = vmatpush.bf16.msra.mxu0 %v4397
  %6762 = vmatpush.bf16.msra.mxu0 %v4393
  %6763 = vmatpush.bf16.msra.mxu0 %v4389
  %6764 = vmatpush.bf16.msra.mxu0 %v4385
  %6765 = vmatpush.bf16.msra.mxu0 %v4381
  %6766 = vmatpush.bf16.msra.mxu0 %v4377
  %6767 = vmatpush.bf16.msra.mxu0 %v4373
  %6768 = vmatmul.bf16.gmra.mxu0 %v1112
  %v6769 = vpop.f32.mrf.mxu0
  %v6770 = vadd.f32 %v6757, %v6769
  %v6771 = vpop.f32.mrf.mxu0
  %6772 = vdwg.mxu0
  %6773 = vmatpush.bf16.msra.mxu0 %v4433
  %6774 = vmatpush.bf16.msra.mxu0 %v4429
  %6775 = vmatpush.bf16.msra.mxu0 %v4425
  %6776 = vmatpush.bf16.msra.mxu0 %v4421
  %6777 = vmatpush.bf16.msra.mxu0 %v4417
  %6778 = vmatpush.bf16.msra.mxu0 %v4413
  %6779 = vmatpush.bf16.msra.mxu0 %v4409
  %6780 = vmatpush.bf16.msra.mxu0 %v4405
  %6781 = vmatmul.bf16.gmra.mxu0 %v1113
  %v6782 = vpop.f32.mrf.mxu0
  %v6783 = vadd.f32 %v6770, %v6782
  %v6784 = vpop.f32.mrf.mxu0
  %6785 = vdwg.mxu0
  %6786 = vmatpush.bf16.msra.mxu0 %v4465
  %6787 = vmatpush.bf16.msra.mxu0 %v4461
  %6788 = vmatpush.bf16.msra.mxu0 %v4457
  %6789 = vmatpush.bf16.msra.mxu0 %v4453
  %6790 = vmatpush.bf16.msra.mxu0 %v4449
  %6791 = vmatpush.bf16.msra.mxu0 %v4445
  %6792 = vmatpush.bf16.msra.mxu0 %v4441
  %6793 = vmatpush.bf16.msra.mxu0 %v4437
  %6794 = vmatmul.bf16.gmra.mxu0 %v1114
  %v6795 = vpop.f32.mrf.mxu0
  %v6796 = vadd.f32 %v6783, %v6795
  %v6797 = vpop.f32.mrf.mxu0
  %6798 = vdwg.mxu0
  %6799 = vmatpush.bf16.msra.mxu0 %v4497
  %6800 = vmatpush.bf16.msra.mxu0 %v4493
  %6801 = vmatpush.bf16.msra.mxu0 %v4489
  %6802 = vmatpush.bf16.msra.mxu0 %v4485
  %6803 = vmatpush.bf16.msra.mxu0 %v4481
  %6804 = vmatpush.bf16.msra.mxu0 %v4477
  %6805 = vmatpush.bf16.msra.mxu0 %v4473
  %6806 = vmatpush.bf16.msra.mxu0 %v4469
  %6807 = vmatmul.bf16.gmra.mxu0 %v1115
  %v6808 = vpop.f32.mrf.mxu0
  %v6809 = vadd.f32 %v6796, %v6808
  %v6810 = vpop.f32.mrf.mxu0
  %6811 = vdwg.mxu0
  %6812 = vmatpush.bf16.msra.mxu0 %v4529
  %6813 = vmatpush.bf16.msra.mxu0 %v4525
  %6814 = vmatpush.bf16.msra.mxu0 %v4521
  %6815 = vmatpush.bf16.msra.mxu0 %v4517
  %6816 = vmatpush.bf16.msra.mxu0 %v4513
  %6817 = vmatpush.bf16.msra.mxu0 %v4509
  %6818 = vmatpush.bf16.msra.mxu0 %v4505
  %6819 = vmatpush.bf16.msra.mxu0 %v4501
  %6820 = vmatmul.bf16.gmra.mxu0 %v1116
  %v6821 = vpop.f32.mrf.mxu0
  %v6822 = vadd.f32 %v6809, %v6821
  %v6823 = vpop.f32.mrf.mxu0
  %6824 = vdwg.mxu0
  %6825 = vmatpush.bf16.msra.mxu0 %v4561
  %6826 = vmatpush.bf16.msra.mxu0 %v4557
  %6827 = vmatpush.bf16.msra.mxu0 %v4553
  %6828 = vmatpush.bf16.msra.mxu0 %v4549
  %6829 = vmatpush.bf16.msra.mxu0 %v4545
  %6830 = vmatpush.bf16.msra.mxu0 %v4541
  %6831 = vmatpush.bf16.msra.mxu0 %v4537
  %6832 = vmatpush.bf16.msra.mxu0 %v4533
  %6833 = vmatmul.bf16.gmra.mxu0 %v1117
  %v6834 = vpop.f32.mrf.mxu0
  %v6835 = vadd.f32 %v6822, %v6834
  %v6836 = vpop.f32.mrf.mxu0
  %6837 = vdwg.mxu0
  %6838 = vmatpush.bf16.msra.mxu0 %v4593
  %6839 = vmatpush.bf16.msra.mxu0 %v4589
  %6840 = vmatpush.bf16.msra.mxu0 %v4585
  %6841 = vmatpush.bf16.msra.mxu0 %v4581
  %6842 = vmatpush.bf16.msra.mxu0 %v4577
  %6843 = vmatpush.bf16.msra.mxu0 %v4573
  %6844 = vmatpush.bf16.msra.mxu0 %v4569
  %6845 = vmatpush.bf16.msra.mxu0 %v4565
  %6846 = vmatmul.bf16.gmra.mxu0 %v1118
  %v6847 = vpop.f32.mrf.mxu0
  %v6848 = vadd.f32 %v6835, %v6847
  %v6849 = vpop.f32.mrf.mxu0
  %6850 = vdwg.mxu0
  %6851 = vmatpush.bf16.msra.mxu0 %v4625
  %6852 = vmatpush.bf16.msra.mxu0 %v4621
  %6853 = vmatpush.bf16.msra.mxu0 %v4617
  %6854 = vmatpush.bf16.msra.mxu0 %v4613
  %6855 = vmatpush.bf16.msra.mxu0 %v4609
  %6856 = vmatpush.bf16.msra.mxu0 %v4605
  %6857 = vmatpush.bf16.msra.mxu0 %v4601
  %6858 = vmatpush.bf16.msra.mxu0 %v4597
  %6859 = vmatmul.bf16.gmra.mxu0 %v1119
  %v6860 = vpop.f32.mrf.mxu0
  %v6861 = vadd.f32 %v6848, %v6860
  %v6862 = vpop.f32.mrf.mxu0
  %6863 = vdwg.mxu0
  %6864 = vmatpush.bf16.msra.mxu0 %v4657
  %6865 = vmatpush.bf16.msra.mxu0 %v4653
  %6866 = vmatpush.bf16.msra.mxu0 %v4649
  %6867 = vmatpush.bf16.msra.mxu0 %v4645
  %6868 = vmatpush.bf16.msra.mxu0 %v4641
  %6869 = vmatpush.bf16.msra.mxu0 %v4637
  %6870 = vmatpush.bf16.msra.mxu0 %v4633
  %6871 = vmatpush.bf16.msra.mxu0 %v4629
  %6872 = vmatmul.bf16.gmra.mxu0 %v1120
  %v6873 = vpop.f32.mrf.mxu0
  %v6874 = vadd.f32 %v6861, %v6873
  %v6875 = vpop.f32.mrf.mxu0
  %6876 = vdwg.mxu0
  %6877 = vmatpush.bf16.msra.mxu0 %v4689
  %6878 = vmatpush.bf16.msra.mxu0 %v4685
  %6879 = vmatpush.bf16.msra.mxu0 %v4681
  %6880 = vmatpush.bf16.msra.mxu0 %v4677
  %6881 = vmatpush.bf16.msra.mxu0 %v4673
  %6882 = vmatpush.bf16.msra.mxu0 %v4669
  %6883 = vmatpush.bf16.msra.mxu0 %v4665
  %6884 = vmatpush.bf16.msra.mxu0 %v4661
  %6885 = vmatmul.bf16.gmra.mxu0 %v1121
  %v6886 = vpop.f32.mrf.mxu0
  %v6887 = vadd.f32 %v6874, %v6886
  %v6888 = vpop.f32.mrf.mxu0
  %6889 = vdwg.mxu0
  %6890 = vmatpush.bf16.msra.mxu0 %v4721
  %6891 = vmatpush.bf16.msra.mxu0 %v4717
  %6892 = vmatpush.bf16.msra.mxu0 %v4713
  %6893 = vmatpush.bf16.msra.mxu0 %v4709
  %6894 = vmatpush.bf16.msra.mxu0 %v4705
  %6895 = vmatpush.bf16.msra.mxu0 %v4701
  %6896 = vmatpush.bf16.msra.mxu0 %v4697
  %6897 = vmatpush.bf16.msra.mxu0 %v4693
  %6898 = vmatmul.bf16.gmra.mxu0 %v1122
  %v6899 = vpop.f32.mrf.mxu0
  %v6900 = vadd.f32 %v6887, %v6899
  %v6901 = vpop.f32.mrf.mxu0
  %6902 = vdwg.mxu0
  %6903 = vmatpush.bf16.msra.mxu0 %v4753
  %6904 = vmatpush.bf16.msra.mxu0 %v4749
  %6905 = vmatpush.bf16.msra.mxu0 %v4745
  %6906 = vmatpush.bf16.msra.mxu0 %v4741
  %6907 = vmatpush.bf16.msra.mxu0 %v4737
  %6908 = vmatpush.bf16.msra.mxu0 %v4733
  %6909 = vmatpush.bf16.msra.mxu0 %v4729
  %6910 = vmatpush.bf16.msra.mxu0 %v4725
  %6911 = vmatmul.bf16.gmra.mxu0 %v1123
  %v6912 = vpop.f32.mrf.mxu0
  %v6913 = vadd.f32 %v6900, %v6912
  %v6914 = vpop.f32.mrf.mxu0
  %6915 = vdwg.mxu0
  %6916 = vmatpush.bf16.msra.mxu0 %v4785
  %6917 = vmatpush.bf16.msra.mxu0 %v4781
  %6918 = vmatpush.bf16.msra.mxu0 %v4777
  %6919 = vmatpush.bf16.msra.mxu0 %v4773
  %6920 = vmatpush.bf16.msra.mxu0 %v4769
  %6921 = vmatpush.bf16.msra.mxu0 %v4765
  %6922 = vmatpush.bf16.msra.mxu0 %v4761
  %6923 = vmatpush.bf16.msra.mxu0 %v4757
  %6924 = vmatmul.bf16.gmra.mxu0 %v1124
  %v6925 = vpop.f32.mrf.mxu0
  %v6926 = vadd.f32 %v6913, %v6925
  %v6927 = vpop.f32.mrf.mxu0
  %6928 = vdwg.mxu0
  %6929 = vmatpush.bf16.msra.mxu0 %v4817
  %6930 = vmatpush.bf16.msra.mxu0 %v4813
  %6931 = vmatpush.bf16.msra.mxu0 %v4809
  %6932 = vmatpush.bf16.msra.mxu0 %v4805
  %6933 = vmatpush.bf16.msra.mxu0 %v4801
  %6934 = vmatpush.bf16.msra.mxu0 %v4797
  %6935 = vmatpush.bf16.msra.mxu0 %v4793
  %6936 = vmatpush.bf16.msra.mxu0 %v4789
  %6937 = vmatmul.bf16.gmra.mxu0 %v1125
  %v6938 = vpop.f32.mrf.mxu0
  %v6939 = vadd.f32 %v6926, %v6938
  %v6940 = vpop.f32.mrf.mxu0
  %6941 = vdwg.mxu0
  %6942 = vmatpush.bf16.msra.mxu0 %v4849
  %6943 = vmatpush.bf16.msra.mxu0 %v4845
  %6944 = vmatpush.bf16.msra.mxu0 %v4841
  %6945 = vmatpush.bf16.msra.mxu0 %v4837
  %6946 = vmatpush.bf16.msra.mxu0 %v4833
  %6947 = vmatpush.bf16.msra.mxu0 %v4829
  %6948 = vmatpush.bf16.msra.mxu0 %v4825
  %6949 = vmatpush.bf16.msra.mxu0 %v4821
  %6950 = vmatmul.bf16.gmra.mxu0 %v1126
  %v6951 = vpop.f32.mrf.mxu0
  %v6952 = vadd.f32 %v6939, %v6951
  %v6953 = vpop.f32.mrf.mxu0
  %6954 = vdwg.mxu0
  %6955 = vmatpush.bf16.msra.mxu0 %v4881
  %6956 = vmatpush.bf16.msra.mxu0 %v4877
  %6957 = vmatpush.bf16.msra.mxu0 %v4873
  %6958 = vmatpush.bf16.msra.mxu0 %v4869
  %6959 = vmatpush.bf16.msra.mxu0 %v4865
  %6960 = vmatpush.bf16.msra.mxu0 %v4861
  %6961 = vmatpush.bf16.msra.mxu0 %v4857
  %6962 = vmatpush.bf16.msra.mxu0 %v4853
  %6963 = vmatmul.bf16.gmra.mxu0 %v1127
  %v6964 = vpop.f32.mrf.mxu0
  %v6965 = vadd.f32 %v6952, %v6964
  %v6966 = vpop.f32.mrf.mxu0
  %6967 = vdwg.mxu0
  %6968 = vmatpush.bf16.msra.mxu0 %v4913
  %6969 = vmatpush.bf16.msra.mxu0 %v4909
  %6970 = vmatpush.bf16.msra.mxu0 %v4905
  %6971 = vmatpush.bf16.msra.mxu0 %v4901
  %6972 = vmatpush.bf16.msra.mxu0 %v4897
  %6973 = vmatpush.bf16.msra.mxu0 %v4893
  %6974 = vmatpush.bf16.msra.mxu0 %v4889
  %6975 = vmatpush.bf16.msra.mxu0 %v4885
  %6976 = vmatmul.bf16.gmra.mxu0 %v1128
  %v6977 = vpop.f32.mrf.mxu0
  %v6978 = vadd.f32 %v6965, %v6977
  %v6979 = vpop.f32.mrf.mxu0
  %6980 = vdwg.mxu0
  %6981 = vmatpush.bf16.msra.mxu0 %v4945
  %6982 = vmatpush.bf16.msra.mxu0 %v4941
  %6983 = vmatpush.bf16.msra.mxu0 %v4937
  %6984 = vmatpush.bf16.msra.mxu0 %v4933
  %6985 = vmatpush.bf16.msra.mxu0 %v4929
  %6986 = vmatpush.bf16.msra.mxu0 %v4925
  %6987 = vmatpush.bf16.msra.mxu0 %v4921
  %6988 = vmatpush.bf16.msra.mxu0 %v4917
  %6989 = vmatmul.bf16.gmra.mxu0 %v1129
  %v6990 = vpop.f32.mrf.mxu0
  %v6991 = vadd.f32 %v6978, %v6990
  %v6992 = vpop.f32.mrf.mxu0
  %6993 = vdwg.mxu0
  %6994 = vmatpush.bf16.msra.mxu0 %v4977
  %6995 = vmatpush.bf16.msra.mxu0 %v4973
  %6996 = vmatpush.bf16.msra.mxu0 %v4969
  %6997 = vmatpush.bf16.msra.mxu0 %v4965
  %6998 = vmatpush.bf16.msra.mxu0 %v4961
  %6999 = vmatpush.bf16.msra.mxu0 %v4957
  %7000 = vmatpush.bf16.msra.mxu0 %v4953
  %7001 = vmatpush.bf16.msra.mxu0 %v4949
  %7002 = vmatmul.bf16.gmra.mxu0 %v1130
  %v7003 = vpop.f32.mrf.mxu0
  %v7004 = vadd.f32 %v6991, %v7003
  %v7005 = vpop.f32.mrf.mxu0
  %7006 = vdwg.mxu0
  %7007 = vmatpush.bf16.msra.mxu0 %v5009
  %7008 = vmatpush.bf16.msra.mxu0 %v5005
  %7009 = vmatpush.bf16.msra.mxu0 %v5001
  %7010 = vmatpush.bf16.msra.mxu0 %v4997
  %7011 = vmatpush.bf16.msra.mxu0 %v4993
  %7012 = vmatpush.bf16.msra.mxu0 %v4989
  %7013 = vmatpush.bf16.msra.mxu0 %v4985
  %7014 = vmatpush.bf16.msra.mxu0 %v4981
  %7015 = vmatmul.bf16.gmra.mxu0 %v1131
  %v7016 = vpop.f32.mrf.mxu0
  %v7017 = vadd.f32 %v7004, %v7016
  %v7018 = vpop.f32.mrf.mxu0
  %7019 = vdwg.mxu0
  %7020 = vmatpush.bf16.msra.mxu0 %v5041
  %7021 = vmatpush.bf16.msra.mxu0 %v5037
  %7022 = vmatpush.bf16.msra.mxu0 %v5033
  %7023 = vmatpush.bf16.msra.mxu0 %v5029
  %7024 = vmatpush.bf16.msra.mxu0 %v5025
  %7025 = vmatpush.bf16.msra.mxu0 %v5021
  %7026 = vmatpush.bf16.msra.mxu0 %v5017
  %7027 = vmatpush.bf16.msra.mxu0 %v5013
  %7028 = vmatmul.bf16.gmra.mxu0 %v1132
  %v7029 = vpop.f32.mrf.mxu0
  %v7030 = vadd.f32 %v7017, %v7029
  %v7031 = vpop.f32.mrf.mxu0
  %7032 = vdwg.mxu0
  %7033 = vmatpush.bf16.msra.mxu0 %v5073
  %7034 = vmatpush.bf16.msra.mxu0 %v5069
  %7035 = vmatpush.bf16.msra.mxu0 %v5065
  %7036 = vmatpush.bf16.msra.mxu0 %v5061
  %7037 = vmatpush.bf16.msra.mxu0 %v5057
  %7038 = vmatpush.bf16.msra.mxu0 %v5053
  %7039 = vmatpush.bf16.msra.mxu0 %v5049
  %7040 = vmatpush.bf16.msra.mxu0 %v5045
  %7041 = vmatmul.bf16.gmra.mxu0 %v1133
  %v7042 = vpop.f32.mrf.mxu0
  %v7043 = vadd.f32 %v7030, %v7042
  %v7044 = vpop.f32.mrf.mxu0
  %7045 = vdwg.mxu0
  %7046 = vmatpush.bf16.msra.mxu0 %v5105
  %7047 = vmatpush.bf16.msra.mxu0 %v5101
  %7048 = vmatpush.bf16.msra.mxu0 %v5097
  %7049 = vmatpush.bf16.msra.mxu0 %v5093
  %7050 = vmatpush.bf16.msra.mxu0 %v5089
  %7051 = vmatpush.bf16.msra.mxu0 %v5085
  %7052 = vmatpush.bf16.msra.mxu0 %v5081
  %7053 = vmatpush.bf16.msra.mxu0 %v5077
  %7054 = vmatmul.bf16.gmra.mxu0 %v1134
  %v7055 = vpop.f32.mrf.mxu0
  %v7056 = vadd.f32 %v7043, %v7055
  %v7057 = vpop.f32.mrf.mxu0
  %7058 = vdwg.mxu0
  %7059 = vmatpush.bf16.msra.mxu0 %v5137
  %7060 = vmatpush.bf16.msra.mxu0 %v5133
  %7061 = vmatpush.bf16.msra.mxu0 %v5129
  %7062 = vmatpush.bf16.msra.mxu0 %v5125
  %7063 = vmatpush.bf16.msra.mxu0 %v5121
  %7064 = vmatpush.bf16.msra.mxu0 %v5117
  %7065 = vmatpush.bf16.msra.mxu0 %v5113
  %7066 = vmatpush.bf16.msra.mxu0 %v5109
  %7067 = vmatmul.bf16.gmra.mxu0 %v1135
  %v7068 = vpop.f32.mrf.mxu0
  %v7069 = vadd.f32 %v7056, %v7068
  %v7070 = vpop.f32.mrf.mxu0
  %7071 = vdwg.mxu0
  %7072 = vmatpush.bf16.msra.mxu0 %v5169
  %7073 = vmatpush.bf16.msra.mxu0 %v5165
  %7074 = vmatpush.bf16.msra.mxu0 %v5161
  %7075 = vmatpush.bf16.msra.mxu0 %v5157
  %7076 = vmatpush.bf16.msra.mxu0 %v5153
  %7077 = vmatpush.bf16.msra.mxu0 %v5149
  %7078 = vmatpush.bf16.msra.mxu0 %v5145
  %7079 = vmatpush.bf16.msra.mxu0 %v5141
  %7080 = vmatmul.bf16.gmra.mxu0 %v1136
  %v7081 = vpop.f32.mrf.mxu0
  %v7082 = vadd.f32 %v7069, %v7081
  %v7083 = vpop.f32.mrf.mxu0
  %7084 = vdwg.mxu0
  %7085 = vmatpush.bf16.msra.mxu0 %v5201
  %7086 = vmatpush.bf16.msra.mxu0 %v5197
  %7087 = vmatpush.bf16.msra.mxu0 %v5193
  %7088 = vmatpush.bf16.msra.mxu0 %v5189
  %7089 = vmatpush.bf16.msra.mxu0 %v5185
  %7090 = vmatpush.bf16.msra.mxu0 %v5181
  %7091 = vmatpush.bf16.msra.mxu0 %v5177
  %7092 = vmatpush.bf16.msra.mxu0 %v5173
  %7093 = vmatmul.bf16.gmra.mxu0 %v1137
  %v7094 = vpop.f32.mrf.mxu0
  %v7095 = vadd.f32 %v7082, %v7094
  %v7096 = vpop.f32.mrf.mxu0
  %7097 = vdwg.mxu0
  %7098 = vmatpush.bf16.msra.mxu0 %v5233
  %7099 = vmatpush.bf16.msra.mxu0 %v5229
  %7100 = vmatpush.bf16.msra.mxu0 %v5225
  %7101 = vmatpush.bf16.msra.mxu0 %v5221
  %7102 = vmatpush.bf16.msra.mxu0 %v5217
  %7103 = vmatpush.bf16.msra.mxu0 %v5213
  %7104 = vmatpush.bf16.msra.mxu0 %v5209
  %7105 = vmatpush.bf16.msra.mxu0 %v5205
  %7106 = vmatmul.bf16.gmra.mxu0 %v1138
  %v7107 = vpop.f32.mrf.mxu0
  %v7108 = vadd.f32 %v7095, %v7107
  %v7109 = vpop.f32.mrf.mxu0
  %7110 = vdwg.mxu0
  %7111 = vmatpush.bf16.msra.mxu0 %v5265
  %7112 = vmatpush.bf16.msra.mxu0 %v5261
  %7113 = vmatpush.bf16.msra.mxu0 %v5257
  %7114 = vmatpush.bf16.msra.mxu0 %v5253
  %7115 = vmatpush.bf16.msra.mxu0 %v5249
  %7116 = vmatpush.bf16.msra.mxu0 %v5245
  %7117 = vmatpush.bf16.msra.mxu0 %v5241
  %7118 = vmatpush.bf16.msra.mxu0 %v5237
  %7119 = vmatmul.bf16.gmra.mxu0 %v1139
  %v7120 = vpop.f32.mrf.mxu0
  %v7121 = vadd.f32 %v7108, %v7120
  %v7122 = vpop.f32.mrf.mxu0
  %7123 = vdwg.mxu0
  %7124 = vmatpush.bf16.msra.mxu0 %v4274
  %7125 = vmatpush.bf16.msra.mxu0 %v4270
  %7126 = vmatpush.bf16.msra.mxu0 %v4266
  %7127 = vmatpush.bf16.msra.mxu0 %v4262
  %7128 = vmatpush.bf16.msra.mxu0 %v4258
  %7129 = vmatpush.bf16.msra.mxu0 %v4254
  %7130 = vmatpush.bf16.msra.mxu0 %v4250
  %7131 = vmatpush.bf16.msra.mxu0 %v4246
  %7132 = vmatmul.bf16.gmra.mxu0 %v1108
  %v7133 = vpop.f32.mrf.mxu0
  %v7134 = vadd.f32 0.0, %v7133
  %v7135 = vpop.f32.mrf.mxu0
  %7136 = vdwg.mxu0
  %7137 = vmatpush.bf16.msra.mxu0 %v4306
  %7138 = vmatpush.bf16.msra.mxu0 %v4302
  %7139 = vmatpush.bf16.msra.mxu0 %v4298
  %7140 = vmatpush.bf16.msra.mxu0 %v4294
  %7141 = vmatpush.bf16.msra.mxu0 %v4290
  %7142 = vmatpush.bf16.msra.mxu0 %v4286
  %7143 = vmatpush.bf16.msra.mxu0 %v4282
  %7144 = vmatpush.bf16.msra.mxu0 %v4278
  %7145 = vmatmul.bf16.gmra.mxu0 %v1109
  %v7146 = vpop.f32.mrf.mxu0
  %v7147 = vadd.f32 %v7134, %v7146
  %v7148 = vpop.f32.mrf.mxu0
  %7149 = vdwg.mxu0
  %7150 = vmatpush.bf16.msra.mxu0 %v4338
  %7151 = vmatpush.bf16.msra.mxu0 %v4334
  %7152 = vmatpush.bf16.msra.mxu0 %v4330
  %7153 = vmatpush.bf16.msra.mxu0 %v4326
  %7154 = vmatpush.bf16.msra.mxu0 %v4322
  %7155 = vmatpush.bf16.msra.mxu0 %v4318
  %7156 = vmatpush.bf16.msra.mxu0 %v4314
  %7157 = vmatpush.bf16.msra.mxu0 %v4310
  %7158 = vmatmul.bf16.gmra.mxu0 %v1110
  %v7159 = vpop.f32.mrf.mxu0
  %v7160 = vadd.f32 %v7147, %v7159
  %v7161 = vpop.f32.mrf.mxu0
  %7162 = vdwg.mxu0
  %7163 = vmatpush.bf16.msra.mxu0 %v4370
  %7164 = vmatpush.bf16.msra.mxu0 %v4366
  %7165 = vmatpush.bf16.msra.mxu0 %v4362
  %7166 = vmatpush.bf16.msra.mxu0 %v4358
  %7167 = vmatpush.bf16.msra.mxu0 %v4354
  %7168 = vmatpush.bf16.msra.mxu0 %v4350
  %7169 = vmatpush.bf16.msra.mxu0 %v4346
  %7170 = vmatpush.bf16.msra.mxu0 %v4342
  %7171 = vmatmul.bf16.gmra.mxu0 %v1111
  %v7172 = vpop.f32.mrf.mxu0
  %v7173 = vadd.f32 %v7160, %v7172
  %v7174 = vpop.f32.mrf.mxu0
  %7175 = vdwg.mxu0
  %7176 = vmatpush.bf16.msra.mxu0 %v4402
  %7177 = vmatpush.bf16.msra.mxu0 %v4398
  %7178 = vmatpush.bf16.msra.mxu0 %v4394
  %7179 = vmatpush.bf16.msra.mxu0 %v4390
  %7180 = vmatpush.bf16.msra.mxu0 %v4386
  %7181 = vmatpush.bf16.msra.mxu0 %v4382
  %7182 = vmatpush.bf16.msra.mxu0 %v4378
  %7183 = vmatpush.bf16.msra.mxu0 %v4374
  %7184 = vmatmul.bf16.gmra.mxu0 %v1112
  %v7185 = vpop.f32.mrf.mxu0
  %v7186 = vadd.f32 %v7173, %v7185
  %v7187 = vpop.f32.mrf.mxu0
  %7188 = vdwg.mxu0
  %7189 = vmatpush.bf16.msra.mxu0 %v4434
  %7190 = vmatpush.bf16.msra.mxu0 %v4430
  %7191 = vmatpush.bf16.msra.mxu0 %v4426
  %7192 = vmatpush.bf16.msra.mxu0 %v4422
  %7193 = vmatpush.bf16.msra.mxu0 %v4418
  %7194 = vmatpush.bf16.msra.mxu0 %v4414
  %7195 = vmatpush.bf16.msra.mxu0 %v4410
  %7196 = vmatpush.bf16.msra.mxu0 %v4406
  %7197 = vmatmul.bf16.gmra.mxu0 %v1113
  %v7198 = vpop.f32.mrf.mxu0
  %v7199 = vadd.f32 %v7186, %v7198
  %v7200 = vpop.f32.mrf.mxu0
  %7201 = vdwg.mxu0
  %7202 = vmatpush.bf16.msra.mxu0 %v4466
  %7203 = vmatpush.bf16.msra.mxu0 %v4462
  %7204 = vmatpush.bf16.msra.mxu0 %v4458
  %7205 = vmatpush.bf16.msra.mxu0 %v4454
  %7206 = vmatpush.bf16.msra.mxu0 %v4450
  %7207 = vmatpush.bf16.msra.mxu0 %v4446
  %7208 = vmatpush.bf16.msra.mxu0 %v4442
  %7209 = vmatpush.bf16.msra.mxu0 %v4438
  %7210 = vmatmul.bf16.gmra.mxu0 %v1114
  %v7211 = vpop.f32.mrf.mxu0
  %v7212 = vadd.f32 %v7199, %v7211
  %v7213 = vpop.f32.mrf.mxu0
  %7214 = vdwg.mxu0
  %7215 = vmatpush.bf16.msra.mxu0 %v4498
  %7216 = vmatpush.bf16.msra.mxu0 %v4494
  %7217 = vmatpush.bf16.msra.mxu0 %v4490
  %7218 = vmatpush.bf16.msra.mxu0 %v4486
  %7219 = vmatpush.bf16.msra.mxu0 %v4482
  %7220 = vmatpush.bf16.msra.mxu0 %v4478
  %7221 = vmatpush.bf16.msra.mxu0 %v4474
  %7222 = vmatpush.bf16.msra.mxu0 %v4470
  %7223 = vmatmul.bf16.gmra.mxu0 %v1115
  %v7224 = vpop.f32.mrf.mxu0
  %v7225 = vadd.f32 %v7212, %v7224
  %v7226 = vpop.f32.mrf.mxu0
  %7227 = vdwg.mxu0
  %7228 = vmatpush.bf16.msra.mxu0 %v4530
  %7229 = vmatpush.bf16.msra.mxu0 %v4526
  %7230 = vmatpush.bf16.msra.mxu0 %v4522
  %7231 = vmatpush.bf16.msra.mxu0 %v4518
  %7232 = vmatpush.bf16.msra.mxu0 %v4514
  %7233 = vmatpush.bf16.msra.mxu0 %v4510
  %7234 = vmatpush.bf16.msra.mxu0 %v4506
  %7235 = vmatpush.bf16.msra.mxu0 %v4502
  %7236 = vmatmul.bf16.gmra.mxu0 %v1116
  %v7237 = vpop.f32.mrf.mxu0
  %v7238 = vadd.f32 %v7225, %v7237
  %v7239 = vpop.f32.mrf.mxu0
  %7240 = vdwg.mxu0
  %7241 = vmatpush.bf16.msra.mxu0 %v4562
  %7242 = vmatpush.bf16.msra.mxu0 %v4558
  %7243 = vmatpush.bf16.msra.mxu0 %v4554
  %7244 = vmatpush.bf16.msra.mxu0 %v4550
  %7245 = vmatpush.bf16.msra.mxu0 %v4546
  %7246 = vmatpush.bf16.msra.mxu0 %v4542
  %7247 = vmatpush.bf16.msra.mxu0 %v4538
  %7248 = vmatpush.bf16.msra.mxu0 %v4534
  %7249 = vmatmul.bf16.gmra.mxu0 %v1117
  %v7250 = vpop.f32.mrf.mxu0
  %v7251 = vadd.f32 %v7238, %v7250
  %v7252 = vpop.f32.mrf.mxu0
  %7253 = vdwg.mxu0
  %7254 = vmatpush.bf16.msra.mxu0 %v4594
  %7255 = vmatpush.bf16.msra.mxu0 %v4590
  %7256 = vmatpush.bf16.msra.mxu0 %v4586
  %7257 = vmatpush.bf16.msra.mxu0 %v4582
  %7258 = vmatpush.bf16.msra.mxu0 %v4578
  %7259 = vmatpush.bf16.msra.mxu0 %v4574
  %7260 = vmatpush.bf16.msra.mxu0 %v4570
  %7261 = vmatpush.bf16.msra.mxu0 %v4566
  %7262 = vmatmul.bf16.gmra.mxu0 %v1118
  %v7263 = vpop.f32.mrf.mxu0
  %v7264 = vadd.f32 %v7251, %v7263
  %v7265 = vpop.f32.mrf.mxu0
  %7266 = vdwg.mxu0
  %7267 = vmatpush.bf16.msra.mxu0 %v4626
  %7268 = vmatpush.bf16.msra.mxu0 %v4622
  %7269 = vmatpush.bf16.msra.mxu0 %v4618
  %7270 = vmatpush.bf16.msra.mxu0 %v4614
  %7271 = vmatpush.bf16.msra.mxu0 %v4610
  %7272 = vmatpush.bf16.msra.mxu0 %v4606
  %7273 = vmatpush.bf16.msra.mxu0 %v4602
  %7274 = vmatpush.bf16.msra.mxu0 %v4598
  %7275 = vmatmul.bf16.gmra.mxu0 %v1119
  %v7276 = vpop.f32.mrf.mxu0
  %v7277 = vadd.f32 %v7264, %v7276
  %v7278 = vpop.f32.mrf.mxu0
  %7279 = vdwg.mxu0
  %7280 = vmatpush.bf16.msra.mxu0 %v4658
  %7281 = vmatpush.bf16.msra.mxu0 %v4654
  %7282 = vmatpush.bf16.msra.mxu0 %v4650
  %7283 = vmatpush.bf16.msra.mxu0 %v4646
  %7284 = vmatpush.bf16.msra.mxu0 %v4642
  %7285 = vmatpush.bf16.msra.mxu0 %v4638
  %7286 = vmatpush.bf16.msra.mxu0 %v4634
  %7287 = vmatpush.bf16.msra.mxu0 %v4630
  %7288 = vmatmul.bf16.gmra.mxu0 %v1120
  %v7289 = vpop.f32.mrf.mxu0
  %v7290 = vadd.f32 %v7277, %v7289
  %v7291 = vpop.f32.mrf.mxu0
  %7292 = vdwg.mxu0
  %7293 = vmatpush.bf16.msra.mxu0 %v4690
  %7294 = vmatpush.bf16.msra.mxu0 %v4686
  %7295 = vmatpush.bf16.msra.mxu0 %v4682
  %7296 = vmatpush.bf16.msra.mxu0 %v4678
  %7297 = vmatpush.bf16.msra.mxu0 %v4674
  %7298 = vmatpush.bf16.msra.mxu0 %v4670
  %7299 = vmatpush.bf16.msra.mxu0 %v4666
  %7300 = vmatpush.bf16.msra.mxu0 %v4662
  %7301 = vmatmul.bf16.gmra.mxu0 %v1121
  %v7302 = vpop.f32.mrf.mxu0
  %v7303 = vadd.f32 %v7290, %v7302
  %v7304 = vpop.f32.mrf.mxu0
  %7305 = vdwg.mxu0
  %7306 = vmatpush.bf16.msra.mxu0 %v4722
  %7307 = vmatpush.bf16.msra.mxu0 %v4718
  %7308 = vmatpush.bf16.msra.mxu0 %v4714
  %7309 = vmatpush.bf16.msra.mxu0 %v4710
  %7310 = vmatpush.bf16.msra.mxu0 %v4706
  %7311 = vmatpush.bf16.msra.mxu0 %v4702
  %7312 = vmatpush.bf16.msra.mxu0 %v4698
  %7313 = vmatpush.bf16.msra.mxu0 %v4694
  %7314 = vmatmul.bf16.gmra.mxu0 %v1122
  %v7315 = vpop.f32.mrf.mxu0
  %v7316 = vadd.f32 %v7303, %v7315
  %v7317 = vpop.f32.mrf.mxu0
  %7318 = vdwg.mxu0
  %7319 = vmatpush.bf16.msra.mxu0 %v4754
  %7320 = vmatpush.bf16.msra.mxu0 %v4750
  %7321 = vmatpush.bf16.msra.mxu0 %v4746
  %7322 = vmatpush.bf16.msra.mxu0 %v4742
  %7323 = vmatpush.bf16.msra.mxu0 %v4738
  %7324 = vmatpush.bf16.msra.mxu0 %v4734
  %7325 = vmatpush.bf16.msra.mxu0 %v4730
  %7326 = vmatpush.bf16.msra.mxu0 %v4726
  %7327 = vmatmul.bf16.gmra.mxu0 %v1123
  %v7328 = vpop.f32.mrf.mxu0
  %v7329 = vadd.f32 %v7316, %v7328
  %v7330 = vpop.f32.mrf.mxu0
  %7331 = vdwg.mxu0
  %7332 = vmatpush.bf16.msra.mxu0 %v4786
  %7333 = vmatpush.bf16.msra.mxu0 %v4782
  %7334 = vmatpush.bf16.msra.mxu0 %v4778
  %7335 = vmatpush.bf16.msra.mxu0 %v4774
  %7336 = vmatpush.bf16.msra.mxu0 %v4770
  %7337 = vmatpush.bf16.msra.mxu0 %v4766
  %7338 = vmatpush.bf16.msra.mxu0 %v4762
  %7339 = vmatpush.bf16.msra.mxu0 %v4758
  %7340 = vmatmul.bf16.gmra.mxu0 %v1124
  %v7341 = vpop.f32.mrf.mxu0
  %v7342 = vadd.f32 %v7329, %v7341
  %v7343 = vpop.f32.mrf.mxu0
  %7344 = vdwg.mxu0
  %7345 = vmatpush.bf16.msra.mxu0 %v4818
  %7346 = vmatpush.bf16.msra.mxu0 %v4814
  %7347 = vmatpush.bf16.msra.mxu0 %v4810
  %7348 = vmatpush.bf16.msra.mxu0 %v4806
  %7349 = vmatpush.bf16.msra.mxu0 %v4802
  %7350 = vmatpush.bf16.msra.mxu0 %v4798
  %7351 = vmatpush.bf16.msra.mxu0 %v4794
  %7352 = vmatpush.bf16.msra.mxu0 %v4790
  %7353 = vmatmul.bf16.gmra.mxu0 %v1125
  %v7354 = vpop.f32.mrf.mxu0
  %v7355 = vadd.f32 %v7342, %v7354
  %v7356 = vpop.f32.mrf.mxu0
  %7357 = vdwg.mxu0
  %7358 = vmatpush.bf16.msra.mxu0 %v4850
  %7359 = vmatpush.bf16.msra.mxu0 %v4846
  %7360 = vmatpush.bf16.msra.mxu0 %v4842
  %7361 = vmatpush.bf16.msra.mxu0 %v4838
  %7362 = vmatpush.bf16.msra.mxu0 %v4834
  %7363 = vmatpush.bf16.msra.mxu0 %v4830
  %7364 = vmatpush.bf16.msra.mxu0 %v4826
  %7365 = vmatpush.bf16.msra.mxu0 %v4822
  %7366 = vmatmul.bf16.gmra.mxu0 %v1126
  %v7367 = vpop.f32.mrf.mxu0
  %v7368 = vadd.f32 %v7355, %v7367
  %v7369 = vpop.f32.mrf.mxu0
  %7370 = vdwg.mxu0
  %7371 = vmatpush.bf16.msra.mxu0 %v4882
  %7372 = vmatpush.bf16.msra.mxu0 %v4878
  %7373 = vmatpush.bf16.msra.mxu0 %v4874
  %7374 = vmatpush.bf16.msra.mxu0 %v4870
  %7375 = vmatpush.bf16.msra.mxu0 %v4866
  %7376 = vmatpush.bf16.msra.mxu0 %v4862
  %7377 = vmatpush.bf16.msra.mxu0 %v4858
  %7378 = vmatpush.bf16.msra.mxu0 %v4854
  %7379 = vmatmul.bf16.gmra.mxu0 %v1127
  %v7380 = vpop.f32.mrf.mxu0
  %v7381 = vadd.f32 %v7368, %v7380
  %v7382 = vpop.f32.mrf.mxu0
  %7383 = vdwg.mxu0
  %7384 = vmatpush.bf16.msra.mxu0 %v4914
  %7385 = vmatpush.bf16.msra.mxu0 %v4910
  %7386 = vmatpush.bf16.msra.mxu0 %v4906
  %7387 = vmatpush.bf16.msra.mxu0 %v4902
  %7388 = vmatpush.bf16.msra.mxu0 %v4898
  %7389 = vmatpush.bf16.msra.mxu0 %v4894
  %7390 = vmatpush.bf16.msra.mxu0 %v4890
  %7391 = vmatpush.bf16.msra.mxu0 %v4886
  %7392 = vmatmul.bf16.gmra.mxu0 %v1128
  %v7393 = vpop.f32.mrf.mxu0
  %v7394 = vadd.f32 %v7381, %v7393
  %v7395 = vpop.f32.mrf.mxu0
  %7396 = vdwg.mxu0
  %7397 = vmatpush.bf16.msra.mxu0 %v4946
  %7398 = vmatpush.bf16.msra.mxu0 %v4942
  %7399 = vmatpush.bf16.msra.mxu0 %v4938
  %7400 = vmatpush.bf16.msra.mxu0 %v4934
  %7401 = vmatpush.bf16.msra.mxu0 %v4930
  %7402 = vmatpush.bf16.msra.mxu0 %v4926
  %7403 = vmatpush.bf16.msra.mxu0 %v4922
  %7404 = vmatpush.bf16.msra.mxu0 %v4918
  %7405 = vmatmul.bf16.gmra.mxu0 %v1129
  %v7406 = vpop.f32.mrf.mxu0
  %v7407 = vadd.f32 %v7394, %v7406
  %v7408 = vpop.f32.mrf.mxu0
  %7409 = vdwg.mxu0
  %7410 = vmatpush.bf16.msra.mxu0 %v4978
  %7411 = vmatpush.bf16.msra.mxu0 %v4974
  %7412 = vmatpush.bf16.msra.mxu0 %v4970
  %7413 = vmatpush.bf16.msra.mxu0 %v4966
  %7414 = vmatpush.bf16.msra.mxu0 %v4962
  %7415 = vmatpush.bf16.msra.mxu0 %v4958
  %7416 = vmatpush.bf16.msra.mxu0 %v4954
  %7417 = vmatpush.bf16.msra.mxu0 %v4950
  %7418 = vmatmul.bf16.gmra.mxu0 %v1130
  %v7419 = vpop.f32.mrf.mxu0
  %v7420 = vadd.f32 %v7407, %v7419
  %v7421 = vpop.f32.mrf.mxu0
  %7422 = vdwg.mxu0
  %7423 = vmatpush.bf16.msra.mxu0 %v5010
  %7424 = vmatpush.bf16.msra.mxu0 %v5006
  %7425 = vmatpush.bf16.msra.mxu0 %v5002
  %7426 = vmatpush.bf16.msra.mxu0 %v4998
  %7427 = vmatpush.bf16.msra.mxu0 %v4994
  %7428 = vmatpush.bf16.msra.mxu0 %v4990
  %7429 = vmatpush.bf16.msra.mxu0 %v4986
  %7430 = vmatpush.bf16.msra.mxu0 %v4982
  %7431 = vmatmul.bf16.gmra.mxu0 %v1131
  %v7432 = vpop.f32.mrf.mxu0
  %v7433 = vadd.f32 %v7420, %v7432
  %v7434 = vpop.f32.mrf.mxu0
  %7435 = vdwg.mxu0
  %7436 = vmatpush.bf16.msra.mxu0 %v5042
  %7437 = vmatpush.bf16.msra.mxu0 %v5038
  %7438 = vmatpush.bf16.msra.mxu0 %v5034
  %7439 = vmatpush.bf16.msra.mxu0 %v5030
  %7440 = vmatpush.bf16.msra.mxu0 %v5026
  %7441 = vmatpush.bf16.msra.mxu0 %v5022
  %7442 = vmatpush.bf16.msra.mxu0 %v5018
  %7443 = vmatpush.bf16.msra.mxu0 %v5014
  %7444 = vmatmul.bf16.gmra.mxu0 %v1132
  %v7445 = vpop.f32.mrf.mxu0
  %v7446 = vadd.f32 %v7433, %v7445
  %v7447 = vpop.f32.mrf.mxu0
  %7448 = vdwg.mxu0
  %7449 = vmatpush.bf16.msra.mxu0 %v5074
  %7450 = vmatpush.bf16.msra.mxu0 %v5070
  %7451 = vmatpush.bf16.msra.mxu0 %v5066
  %7452 = vmatpush.bf16.msra.mxu0 %v5062
  %7453 = vmatpush.bf16.msra.mxu0 %v5058
  %7454 = vmatpush.bf16.msra.mxu0 %v5054
  %7455 = vmatpush.bf16.msra.mxu0 %v5050
  %7456 = vmatpush.bf16.msra.mxu0 %v5046
  %7457 = vmatmul.bf16.gmra.mxu0 %v1133
  %v7458 = vpop.f32.mrf.mxu0
  %v7459 = vadd.f32 %v7446, %v7458
  %v7460 = vpop.f32.mrf.mxu0
  %7461 = vdwg.mxu0
  %7462 = vmatpush.bf16.msra.mxu0 %v5106
  %7463 = vmatpush.bf16.msra.mxu0 %v5102
  %7464 = vmatpush.bf16.msra.mxu0 %v5098
  %7465 = vmatpush.bf16.msra.mxu0 %v5094
  %7466 = vmatpush.bf16.msra.mxu0 %v5090
  %7467 = vmatpush.bf16.msra.mxu0 %v5086
  %7468 = vmatpush.bf16.msra.mxu0 %v5082
  %7469 = vmatpush.bf16.msra.mxu0 %v5078
  %7470 = vmatmul.bf16.gmra.mxu0 %v1134
  %v7471 = vpop.f32.mrf.mxu0
  %v7472 = vadd.f32 %v7459, %v7471
  %v7473 = vpop.f32.mrf.mxu0
  %7474 = vdwg.mxu0
  %7475 = vmatpush.bf16.msra.mxu0 %v5138
  %7476 = vmatpush.bf16.msra.mxu0 %v5134
  %7477 = vmatpush.bf16.msra.mxu0 %v5130
  %7478 = vmatpush.bf16.msra.mxu0 %v5126
  %7479 = vmatpush.bf16.msra.mxu0 %v5122
  %7480 = vmatpush.bf16.msra.mxu0 %v5118
  %7481 = vmatpush.bf16.msra.mxu0 %v5114
  %7482 = vmatpush.bf16.msra.mxu0 %v5110
  %7483 = vmatmul.bf16.gmra.mxu0 %v1135
  %v7484 = vpop.f32.mrf.mxu0
  %v7485 = vadd.f32 %v7472, %v7484
  %v7486 = vpop.f32.mrf.mxu0
  %7487 = vdwg.mxu0
  %7488 = vmatpush.bf16.msra.mxu0 %v5170
  %7489 = vmatpush.bf16.msra.mxu0 %v5166
  %7490 = vmatpush.bf16.msra.mxu0 %v5162
  %7491 = vmatpush.bf16.msra.mxu0 %v5158
  %7492 = vmatpush.bf16.msra.mxu0 %v5154
  %7493 = vmatpush.bf16.msra.mxu0 %v5150
  %7494 = vmatpush.bf16.msra.mxu0 %v5146
  %7495 = vmatpush.bf16.msra.mxu0 %v5142
  %7496 = vmatmul.bf16.gmra.mxu0 %v1136
  %v7497 = vpop.f32.mrf.mxu0
  %v7498 = vadd.f32 %v7485, %v7497
  %v7499 = vpop.f32.mrf.mxu0
  %7500 = vdwg.mxu0
  %7501 = vmatpush.bf16.msra.mxu0 %v5202
  %7502 = vmatpush.bf16.msra.mxu0 %v5198
  %7503 = vmatpush.bf16.msra.mxu0 %v5194
  %7504 = vmatpush.bf16.msra.mxu0 %v5190
  %7505 = vmatpush.bf16.msra.mxu0 %v5186
  %7506 = vmatpush.bf16.msra.mxu0 %v5182
  %7507 = vmatpush.bf16.msra.mxu0 %v5178
  %7508 = vmatpush.bf16.msra.mxu0 %v5174
  %7509 = vmatmul.bf16.gmra.mxu0 %v1137
  %v7510 = vpop.f32.mrf.mxu0
  %v7511 = vadd.f32 %v7498, %v7510
  %v7512 = vpop.f32.mrf.mxu0
  %7513 = vdwg.mxu0
  %7514 = vmatpush.bf16.msra.mxu0 %v5234
  %7515 = vmatpush.bf16.msra.mxu0 %v5230
  %7516 = vmatpush.bf16.msra.mxu0 %v5226
  %7517 = vmatpush.bf16.msra.mxu0 %v5222
  %7518 = vmatpush.bf16.msra.mxu0 %v5218
  %7519 = vmatpush.bf16.msra.mxu0 %v5214
  %7520 = vmatpush.bf16.msra.mxu0 %v5210
  %7521 = vmatpush.bf16.msra.mxu0 %v5206
  %7522 = vmatmul.bf16.gmra.mxu0 %v1138
  %v7523 = vpop.f32.mrf.mxu0
  %v7524 = vadd.f32 %v7511, %v7523
  %v7525 = vpop.f32.mrf.mxu0
  %7526 = vdwg.mxu0
  %7527 = vmatpush.bf16.msra.mxu0 %v5266
  %7528 = vmatpush.bf16.msra.mxu0 %v5262
  %7529 = vmatpush.bf16.msra.mxu0 %v5258
  %7530 = vmatpush.bf16.msra.mxu0 %v5254
  %7531 = vmatpush.bf16.msra.mxu0 %v5250
  %7532 = vmatpush.bf16.msra.mxu0 %v5246
  %7533 = vmatpush.bf16.msra.mxu0 %v5242
  %7534 = vmatpush.bf16.msra.mxu0 %v5238
  %7535 = vmatmul.bf16.gmra.mxu0 %v1139
  %v7536 = vpop.f32.mrf.mxu0
  %v7537 = vadd.f32 %v7524, %v7536
  %v7538 = vpop.f32.mrf.mxu0
  %7539 = vdwg.mxu0
  %7540 = vmatpush.bf16.msra.mxu0 %v4275
  %7541 = vmatpush.bf16.msra.mxu0 %v4271
  %7542 = vmatpush.bf16.msra.mxu0 %v4267
  %7543 = vmatpush.bf16.msra.mxu0 %v4263
  %7544 = vmatpush.bf16.msra.mxu0 %v4259
  %7545 = vmatpush.bf16.msra.mxu0 %v4255
  %7546 = vmatpush.bf16.msra.mxu0 %v4251
  %7547 = vmatpush.bf16.msra.mxu0 %v4247
  %7548 = vmatmul.bf16.gmra.mxu0 %v1108
  %v7549 = vpop.f32.mrf.mxu0
  %v7550 = vadd.f32 0.0, %v7549
  %v7551 = vpop.f32.mrf.mxu0
  %7552 = vdwg.mxu0
  %7553 = vmatpush.bf16.msra.mxu0 %v4307
  %7554 = vmatpush.bf16.msra.mxu0 %v4303
  %7555 = vmatpush.bf16.msra.mxu0 %v4299
  %7556 = vmatpush.bf16.msra.mxu0 %v4295
  %7557 = vmatpush.bf16.msra.mxu0 %v4291
  %7558 = vmatpush.bf16.msra.mxu0 %v4287
  %7559 = vmatpush.bf16.msra.mxu0 %v4283
  %7560 = vmatpush.bf16.msra.mxu0 %v4279
  %7561 = vmatmul.bf16.gmra.mxu0 %v1109
  %v7562 = vpop.f32.mrf.mxu0
  %v7563 = vadd.f32 %v7550, %v7562
  %v7564 = vpop.f32.mrf.mxu0
  %7565 = vdwg.mxu0
  %7566 = vmatpush.bf16.msra.mxu0 %v4339
  %7567 = vmatpush.bf16.msra.mxu0 %v4335
  %7568 = vmatpush.bf16.msra.mxu0 %v4331
  %7569 = vmatpush.bf16.msra.mxu0 %v4327
  %7570 = vmatpush.bf16.msra.mxu0 %v4323
  %7571 = vmatpush.bf16.msra.mxu0 %v4319
  %7572 = vmatpush.bf16.msra.mxu0 %v4315
  %7573 = vmatpush.bf16.msra.mxu0 %v4311
  %7574 = vmatmul.bf16.gmra.mxu0 %v1110
  %v7575 = vpop.f32.mrf.mxu0
  %v7576 = vadd.f32 %v7563, %v7575
  %v7577 = vpop.f32.mrf.mxu0
  %7578 = vdwg.mxu0
  %7579 = vmatpush.bf16.msra.mxu0 %v4371
  %7580 = vmatpush.bf16.msra.mxu0 %v4367
  %7581 = vmatpush.bf16.msra.mxu0 %v4363
  %7582 = vmatpush.bf16.msra.mxu0 %v4359
  %7583 = vmatpush.bf16.msra.mxu0 %v4355
  %7584 = vmatpush.bf16.msra.mxu0 %v4351
  %7585 = vmatpush.bf16.msra.mxu0 %v4347
  %7586 = vmatpush.bf16.msra.mxu0 %v4343
  %7587 = vmatmul.bf16.gmra.mxu0 %v1111
  %v7588 = vpop.f32.mrf.mxu0
  %v7589 = vadd.f32 %v7576, %v7588
  %v7590 = vpop.f32.mrf.mxu0
  %7591 = vdwg.mxu0
  %7592 = vmatpush.bf16.msra.mxu0 %v4403
  %7593 = vmatpush.bf16.msra.mxu0 %v4399
  %7594 = vmatpush.bf16.msra.mxu0 %v4395
  %7595 = vmatpush.bf16.msra.mxu0 %v4391
  %7596 = vmatpush.bf16.msra.mxu0 %v4387
  %7597 = vmatpush.bf16.msra.mxu0 %v4383
  %7598 = vmatpush.bf16.msra.mxu0 %v4379
  %7599 = vmatpush.bf16.msra.mxu0 %v4375
  %7600 = vmatmul.bf16.gmra.mxu0 %v1112
  %v7601 = vpop.f32.mrf.mxu0
  %v7602 = vadd.f32 %v7589, %v7601
  %v7603 = vpop.f32.mrf.mxu0
  %7604 = vdwg.mxu0
  %7605 = vmatpush.bf16.msra.mxu0 %v4435
  %7606 = vmatpush.bf16.msra.mxu0 %v4431
  %7607 = vmatpush.bf16.msra.mxu0 %v4427
  %7608 = vmatpush.bf16.msra.mxu0 %v4423
  %7609 = vmatpush.bf16.msra.mxu0 %v4419
  %7610 = vmatpush.bf16.msra.mxu0 %v4415
  %7611 = vmatpush.bf16.msra.mxu0 %v4411
  %7612 = vmatpush.bf16.msra.mxu0 %v4407
  %7613 = vmatmul.bf16.gmra.mxu0 %v1113
  %v7614 = vpop.f32.mrf.mxu0
  %v7615 = vadd.f32 %v7602, %v7614
  %v7616 = vpop.f32.mrf.mxu0
  %7617 = vdwg.mxu0
  %7618 = vmatpush.bf16.msra.mxu0 %v4467
  %7619 = vmatpush.bf16.msra.mxu0 %v4463
  %7620 = vmatpush.bf16.msra.mxu0 %v4459
  %7621 = vmatpush.bf16.msra.mxu0 %v4455
  %7622 = vmatpush.bf16.msra.mxu0 %v4451
  %7623 = vmatpush.bf16.msra.mxu0 %v4447
  %7624 = vmatpush.bf16.msra.mxu0 %v4443
  %7625 = vmatpush.bf16.msra.mxu0 %v4439
  %7626 = vmatmul.bf16.gmra.mxu0 %v1114
  %v7627 = vpop.f32.mrf.mxu0
  %v7628 = vadd.f32 %v7615, %v7627
  %v7629 = vpop.f32.mrf.mxu0
  %7630 = vdwg.mxu0
  %7631 = vmatpush.bf16.msra.mxu0 %v4499
  %7632 = vmatpush.bf16.msra.mxu0 %v4495
  %7633 = vmatpush.bf16.msra.mxu0 %v4491
  %7634 = vmatpush.bf16.msra.mxu0 %v4487
  %7635 = vmatpush.bf16.msra.mxu0 %v4483
  %7636 = vmatpush.bf16.msra.mxu0 %v4479
  %7637 = vmatpush.bf16.msra.mxu0 %v4475
  %7638 = vmatpush.bf16.msra.mxu0 %v4471
  %7639 = vmatmul.bf16.gmra.mxu0 %v1115
  %v7640 = vpop.f32.mrf.mxu0
  %v7641 = vadd.f32 %v7628, %v7640
  %v7642 = vpop.f32.mrf.mxu0
  %7643 = vdwg.mxu0
  %7644 = vmatpush.bf16.msra.mxu0 %v4531
  %7645 = vmatpush.bf16.msra.mxu0 %v4527
  %7646 = vmatpush.bf16.msra.mxu0 %v4523
  %7647 = vmatpush.bf16.msra.mxu0 %v4519
  %7648 = vmatpush.bf16.msra.mxu0 %v4515
  %7649 = vmatpush.bf16.msra.mxu0 %v4511
  %7650 = vmatpush.bf16.msra.mxu0 %v4507
  %7651 = vmatpush.bf16.msra.mxu0 %v4503
  %7652 = vmatmul.bf16.gmra.mxu0 %v1116
  %v7653 = vpop.f32.mrf.mxu0
  %v7654 = vadd.f32 %v7641, %v7653
  %v7655 = vpop.f32.mrf.mxu0
  %7656 = vdwg.mxu0
  %7657 = vmatpush.bf16.msra.mxu0 %v4563
  %7658 = vmatpush.bf16.msra.mxu0 %v4559
  %7659 = vmatpush.bf16.msra.mxu0 %v4555
  %7660 = vmatpush.bf16.msra.mxu0 %v4551
  %7661 = vmatpush.bf16.msra.mxu0 %v4547
  %7662 = vmatpush.bf16.msra.mxu0 %v4543
  %7663 = vmatpush.bf16.msra.mxu0 %v4539
  %7664 = vmatpush.bf16.msra.mxu0 %v4535
  %7665 = vmatmul.bf16.gmra.mxu0 %v1117
  %v7666 = vpop.f32.mrf.mxu0
  %v7667 = vadd.f32 %v7654, %v7666
  %v7668 = vpop.f32.mrf.mxu0
  %7669 = vdwg.mxu0
  %7670 = vmatpush.bf16.msra.mxu0 %v4595
  %7671 = vmatpush.bf16.msra.mxu0 %v4591
  %7672 = vmatpush.bf16.msra.mxu0 %v4587
  %7673 = vmatpush.bf16.msra.mxu0 %v4583
  %7674 = vmatpush.bf16.msra.mxu0 %v4579
  %7675 = vmatpush.bf16.msra.mxu0 %v4575
  %7676 = vmatpush.bf16.msra.mxu0 %v4571
  %7677 = vmatpush.bf16.msra.mxu0 %v4567
  %7678 = vmatmul.bf16.gmra.mxu0 %v1118
  %v7679 = vpop.f32.mrf.mxu0
  %v7680 = vadd.f32 %v7667, %v7679
  %v7681 = vpop.f32.mrf.mxu0
  %7682 = vdwg.mxu0
  %7683 = vmatpush.bf16.msra.mxu0 %v4627
  %7684 = vmatpush.bf16.msra.mxu0 %v4623
  %7685 = vmatpush.bf16.msra.mxu0 %v4619
  %7686 = vmatpush.bf16.msra.mxu0 %v4615
  %7687 = vmatpush.bf16.msra.mxu0 %v4611
  %7688 = vmatpush.bf16.msra.mxu0 %v4607
  %7689 = vmatpush.bf16.msra.mxu0 %v4603
  %7690 = vmatpush.bf16.msra.mxu0 %v4599
  %7691 = vmatmul.bf16.gmra.mxu0 %v1119
  %v7692 = vpop.f32.mrf.mxu0
  %v7693 = vadd.f32 %v7680, %v7692
  %v7694 = vpop.f32.mrf.mxu0
  %7695 = vdwg.mxu0
  %7696 = vmatpush.bf16.msra.mxu0 %v4659
  %7697 = vmatpush.bf16.msra.mxu0 %v4655
  %7698 = vmatpush.bf16.msra.mxu0 %v4651
  %7699 = vmatpush.bf16.msra.mxu0 %v4647
  %7700 = vmatpush.bf16.msra.mxu0 %v4643
  %7701 = vmatpush.bf16.msra.mxu0 %v4639
  %7702 = vmatpush.bf16.msra.mxu0 %v4635
  %7703 = vmatpush.bf16.msra.mxu0 %v4631
  %7704 = vmatmul.bf16.gmra.mxu0 %v1120
  %v7705 = vpop.f32.mrf.mxu0
  %v7706 = vadd.f32 %v7693, %v7705
  %v7707 = vpop.f32.mrf.mxu0
  %7708 = vdwg.mxu0
  %7709 = vmatpush.bf16.msra.mxu0 %v4691
  %7710 = vmatpush.bf16.msra.mxu0 %v4687
  %7711 = vmatpush.bf16.msra.mxu0 %v4683
  %7712 = vmatpush.bf16.msra.mxu0 %v4679
  %7713 = vmatpush.bf16.msra.mxu0 %v4675
  %7714 = vmatpush.bf16.msra.mxu0 %v4671
  %7715 = vmatpush.bf16.msra.mxu0 %v4667
  %7716 = vmatpush.bf16.msra.mxu0 %v4663
  %7717 = vmatmul.bf16.gmra.mxu0 %v1121
  %v7718 = vpop.f32.mrf.mxu0
  %v7719 = vadd.f32 %v7706, %v7718
  %v7720 = vpop.f32.mrf.mxu0
  %7721 = vdwg.mxu0
  %7722 = vmatpush.bf16.msra.mxu0 %v4723
  %7723 = vmatpush.bf16.msra.mxu0 %v4719
  %7724 = vmatpush.bf16.msra.mxu0 %v4715
  %7725 = vmatpush.bf16.msra.mxu0 %v4711
  %7726 = vmatpush.bf16.msra.mxu0 %v4707
  %7727 = vmatpush.bf16.msra.mxu0 %v4703
  %7728 = vmatpush.bf16.msra.mxu0 %v4699
  %7729 = vmatpush.bf16.msra.mxu0 %v4695
  %7730 = vmatmul.bf16.gmra.mxu0 %v1122
  %v7731 = vpop.f32.mrf.mxu0
  %v7732 = vadd.f32 %v7719, %v7731
  %v7733 = vpop.f32.mrf.mxu0
  %7734 = vdwg.mxu0
  %7735 = vmatpush.bf16.msra.mxu0 %v4755
  %7736 = vmatpush.bf16.msra.mxu0 %v4751
  %7737 = vmatpush.bf16.msra.mxu0 %v4747
  %7738 = vmatpush.bf16.msra.mxu0 %v4743
  %7739 = vmatpush.bf16.msra.mxu0 %v4739
  %7740 = vmatpush.bf16.msra.mxu0 %v4735
  %7741 = vmatpush.bf16.msra.mxu0 %v4731
  %7742 = vmatpush.bf16.msra.mxu0 %v4727
  %7743 = vmatmul.bf16.gmra.mxu0 %v1123
  %v7744 = vpop.f32.mrf.mxu0
  %v7745 = vadd.f32 %v7732, %v7744
  %v7746 = vpop.f32.mrf.mxu0
  %7747 = vdwg.mxu0
  %7748 = vmatpush.bf16.msra.mxu0 %v4787
  %7749 = vmatpush.bf16.msra.mxu0 %v4783
  %7750 = vmatpush.bf16.msra.mxu0 %v4779
  %7751 = vmatpush.bf16.msra.mxu0 %v4775
  %7752 = vmatpush.bf16.msra.mxu0 %v4771
  %7753 = vmatpush.bf16.msra.mxu0 %v4767
  %7754 = vmatpush.bf16.msra.mxu0 %v4763
  %7755 = vmatpush.bf16.msra.mxu0 %v4759
  %7756 = vmatmul.bf16.gmra.mxu0 %v1124
  %v7757 = vpop.f32.mrf.mxu0
  %v7758 = vadd.f32 %v7745, %v7757
  %v7759 = vpop.f32.mrf.mxu0
  %7760 = vdwg.mxu0
  %7761 = vmatpush.bf16.msra.mxu0 %v4819
  %7762 = vmatpush.bf16.msra.mxu0 %v4815
  %7763 = vmatpush.bf16.msra.mxu0 %v4811
  %7764 = vmatpush.bf16.msra.mxu0 %v4807
  %7765 = vmatpush.bf16.msra.mxu0 %v4803
  %7766 = vmatpush.bf16.msra.mxu0 %v4799
  %7767 = vmatpush.bf16.msra.mxu0 %v4795
  %7768 = vmatpush.bf16.msra.mxu0 %v4791
  %7769 = vmatmul.bf16.gmra.mxu0 %v1125
  %v7770 = vpop.f32.mrf.mxu0
  %v7771 = vadd.f32 %v7758, %v7770
  %v7772 = vpop.f32.mrf.mxu0
  %7773 = vdwg.mxu0
  %7774 = vmatpush.bf16.msra.mxu0 %v4851
  %7775 = vmatpush.bf16.msra.mxu0 %v4847
  %7776 = vmatpush.bf16.msra.mxu0 %v4843
  %7777 = vmatpush.bf16.msra.mxu0 %v4839
  %7778 = vmatpush.bf16.msra.mxu0 %v4835
  %7779 = vmatpush.bf16.msra.mxu0 %v4831
  %7780 = vmatpush.bf16.msra.mxu0 %v4827
  %7781 = vmatpush.bf16.msra.mxu0 %v4823
  %7782 = vmatmul.bf16.gmra.mxu0 %v1126
  %v7783 = vpop.f32.mrf.mxu0
  %v7784 = vadd.f32 %v7771, %v7783
  %v7785 = vpop.f32.mrf.mxu0
  %7786 = vdwg.mxu0
  %7787 = vmatpush.bf16.msra.mxu0 %v4883
  %7788 = vmatpush.bf16.msra.mxu0 %v4879
  %7789 = vmatpush.bf16.msra.mxu0 %v4875
  %7790 = vmatpush.bf16.msra.mxu0 %v4871
  %7791 = vmatpush.bf16.msra.mxu0 %v4867
  %7792 = vmatpush.bf16.msra.mxu0 %v4863
  %7793 = vmatpush.bf16.msra.mxu0 %v4859
  %7794 = vmatpush.bf16.msra.mxu0 %v4855
  %7795 = vmatmul.bf16.gmra.mxu0 %v1127
  %v7796 = vpop.f32.mrf.mxu0
  %v7797 = vadd.f32 %v7784, %v7796
  %v7798 = vpop.f32.mrf.mxu0
  %7799 = vdwg.mxu0
  %7800 = vmatpush.bf16.msra.mxu0 %v4915
  %7801 = vmatpush.bf16.msra.mxu0 %v4911
  %7802 = vmatpush.bf16.msra.mxu0 %v4907
  %7803 = vmatpush.bf16.msra.mxu0 %v4903
  %7804 = vmatpush.bf16.msra.mxu0 %v4899
  %7805 = vmatpush.bf16.msra.mxu0 %v4895
  %7806 = vmatpush.bf16.msra.mxu0 %v4891
  %7807 = vmatpush.bf16.msra.mxu0 %v4887
  %7808 = vmatmul.bf16.gmra.mxu0 %v1128
  %v7809 = vpop.f32.mrf.mxu0
  %v7810 = vadd.f32 %v7797, %v7809
  %v7811 = vpop.f32.mrf.mxu0
  %7812 = vdwg.mxu0
  %7813 = vmatpush.bf16.msra.mxu0 %v4947
  %7814 = vmatpush.bf16.msra.mxu0 %v4943
  %7815 = vmatpush.bf16.msra.mxu0 %v4939
  %7816 = vmatpush.bf16.msra.mxu0 %v4935
  %7817 = vmatpush.bf16.msra.mxu0 %v4931
  %7818 = vmatpush.bf16.msra.mxu0 %v4927
  %7819 = vmatpush.bf16.msra.mxu0 %v4923
  %7820 = vmatpush.bf16.msra.mxu0 %v4919
  %7821 = vmatmul.bf16.gmra.mxu0 %v1129
  %v7822 = vpop.f32.mrf.mxu0
  %v7823 = vadd.f32 %v7810, %v7822
  %v7824 = vpop.f32.mrf.mxu0
  %7825 = vdwg.mxu0
  %7826 = vmatpush.bf16.msra.mxu0 %v4979
  %7827 = vmatpush.bf16.msra.mxu0 %v4975
  %7828 = vmatpush.bf16.msra.mxu0 %v4971
  %7829 = vmatpush.bf16.msra.mxu0 %v4967
  %7830 = vmatpush.bf16.msra.mxu0 %v4963
  %7831 = vmatpush.bf16.msra.mxu0 %v4959
  %7832 = vmatpush.bf16.msra.mxu0 %v4955
  %7833 = vmatpush.bf16.msra.mxu0 %v4951
  %7834 = vmatmul.bf16.gmra.mxu0 %v1130
  %v7835 = vpop.f32.mrf.mxu0
  %v7836 = vadd.f32 %v7823, %v7835
  %v7837 = vpop.f32.mrf.mxu0
  %7838 = vdwg.mxu0
  %7839 = vmatpush.bf16.msra.mxu0 %v5011
  %7840 = vmatpush.bf16.msra.mxu0 %v5007
  %7841 = vmatpush.bf16.msra.mxu0 %v5003
  %7842 = vmatpush.bf16.msra.mxu0 %v4999
  %7843 = vmatpush.bf16.msra.mxu0 %v4995
  %7844 = vmatpush.bf16.msra.mxu0 %v4991
  %7845 = vmatpush.bf16.msra.mxu0 %v4987
  %7846 = vmatpush.bf16.msra.mxu0 %v4983
  %7847 = vmatmul.bf16.gmra.mxu0 %v1131
  %v7848 = vpop.f32.mrf.mxu0
  %v7849 = vadd.f32 %v7836, %v7848
  %v7850 = vpop.f32.mrf.mxu0
  %7851 = vdwg.mxu0
  %7852 = vmatpush.bf16.msra.mxu0 %v5043
  %7853 = vmatpush.bf16.msra.mxu0 %v5039
  %7854 = vmatpush.bf16.msra.mxu0 %v5035
  %7855 = vmatpush.bf16.msra.mxu0 %v5031
  %7856 = vmatpush.bf16.msra.mxu0 %v5027
  %7857 = vmatpush.bf16.msra.mxu0 %v5023
  %7858 = vmatpush.bf16.msra.mxu0 %v5019
  %7859 = vmatpush.bf16.msra.mxu0 %v5015
  %7860 = vmatmul.bf16.gmra.mxu0 %v1132
  %v7861 = vpop.f32.mrf.mxu0
  %v7862 = vadd.f32 %v7849, %v7861
  %v7863 = vpop.f32.mrf.mxu0
  %7864 = vdwg.mxu0
  %7865 = vmatpush.bf16.msra.mxu0 %v5075
  %7866 = vmatpush.bf16.msra.mxu0 %v5071
  %7867 = vmatpush.bf16.msra.mxu0 %v5067
  %7868 = vmatpush.bf16.msra.mxu0 %v5063
  %7869 = vmatpush.bf16.msra.mxu0 %v5059
  %7870 = vmatpush.bf16.msra.mxu0 %v5055
  %7871 = vmatpush.bf16.msra.mxu0 %v5051
  %7872 = vmatpush.bf16.msra.mxu0 %v5047
  %7873 = vmatmul.bf16.gmra.mxu0 %v1133
  %v7874 = vpop.f32.mrf.mxu0
  %v7875 = vadd.f32 %v7862, %v7874
  %v7876 = vpop.f32.mrf.mxu0
  %7877 = vdwg.mxu0
  %7878 = vmatpush.bf16.msra.mxu0 %v5107
  %7879 = vmatpush.bf16.msra.mxu0 %v5103
  %7880 = vmatpush.bf16.msra.mxu0 %v5099
  %7881 = vmatpush.bf16.msra.mxu0 %v5095
  %7882 = vmatpush.bf16.msra.mxu0 %v5091
  %7883 = vmatpush.bf16.msra.mxu0 %v5087
  %7884 = vmatpush.bf16.msra.mxu0 %v5083
  %7885 = vmatpush.bf16.msra.mxu0 %v5079
  %7886 = vmatmul.bf16.gmra.mxu0 %v1134
  %v7887 = vpop.f32.mrf.mxu0
  %v7888 = vadd.f32 %v7875, %v7887
  %v7889 = vpop.f32.mrf.mxu0
  %7890 = vdwg.mxu0
  %7891 = vmatpush.bf16.msra.mxu0 %v5139
  %7892 = vmatpush.bf16.msra.mxu0 %v5135
  %7893 = vmatpush.bf16.msra.mxu0 %v5131
  %7894 = vmatpush.bf16.msra.mxu0 %v5127
  %7895 = vmatpush.bf16.msra.mxu0 %v5123
  %7896 = vmatpush.bf16.msra.mxu0 %v5119
  %7897 = vmatpush.bf16.msra.mxu0 %v5115
  %7898 = vmatpush.bf16.msra.mxu0 %v5111
  %7899 = vmatmul.bf16.gmra.mxu0 %v1135
  %v7900 = vpop.f32.mrf.mxu0
  %v7901 = vadd.f32 %v7888, %v7900
  %v7902 = vpop.f32.mrf.mxu0
  %7903 = vdwg.mxu0
  %7904 = vmatpush.bf16.msra.mxu0 %v5171
  %7905 = vmatpush.bf16.msra.mxu0 %v5167
  %7906 = vmatpush.bf16.msra.mxu0 %v5163
  %7907 = vmatpush.bf16.msra.mxu0 %v5159
  %7908 = vmatpush.bf16.msra.mxu0 %v5155
  %7909 = vmatpush.bf16.msra.mxu0 %v5151
  %7910 = vmatpush.bf16.msra.mxu0 %v5147
  %7911 = vmatpush.bf16.msra.mxu0 %v5143
  %7912 = vmatmul.bf16.gmra.mxu0 %v1136
  %v7913 = vpop.f32.mrf.mxu0
  %v7914 = vadd.f32 %v7901, %v7913
  %v7915 = vpop.f32.mrf.mxu0
  %7916 = vdwg.mxu0
  %7917 = vmatpush.bf16.msra.mxu0 %v5203
  %7918 = vmatpush.bf16.msra.mxu0 %v5199
  %7919 = vmatpush.bf16.msra.mxu0 %v5195
  %7920 = vmatpush.bf16.msra.mxu0 %v5191
  %7921 = vmatpush.bf16.msra.mxu0 %v5187
  %7922 = vmatpush.bf16.msra.mxu0 %v5183
  %7923 = vmatpush.bf16.msra.mxu0 %v5179
  %7924 = vmatpush.bf16.msra.mxu0 %v5175
  %7925 = vmatmul.bf16.gmra.mxu0 %v1137
  %v7926 = vpop.f32.mrf.mxu0
  %v7927 = vadd.f32 %v7914, %v7926
  %v7928 = vpop.f32.mrf.mxu0
  %7929 = vdwg.mxu0
  %7930 = vmatpush.bf16.msra.mxu0 %v5235
  %7931 = vmatpush.bf16.msra.mxu0 %v5231
  %7932 = vmatpush.bf16.msra.mxu0 %v5227
  %7933 = vmatpush.bf16.msra.mxu0 %v5223
  %7934 = vmatpush.bf16.msra.mxu0 %v5219
  %7935 = vmatpush.bf16.msra.mxu0 %v5215
  %7936 = vmatpush.bf16.msra.mxu0 %v5211
  %7937 = vmatpush.bf16.msra.mxu0 %v5207
  %7938 = vmatmul.bf16.gmra.mxu0 %v1138
  %v7939 = vpop.f32.mrf.mxu0
  %v7940 = vadd.f32 %v7927, %v7939
  %v7941 = vpop.f32.mrf.mxu0
  %7942 = vdwg.mxu0
  %7943 = vmatpush.bf16.msra.mxu0 %v5267
  %7944 = vmatpush.bf16.msra.mxu0 %v5263
  %7945 = vmatpush.bf16.msra.mxu0 %v5259
  %7946 = vmatpush.bf16.msra.mxu0 %v5255
  %7947 = vmatpush.bf16.msra.mxu0 %v5251
  %7948 = vmatpush.bf16.msra.mxu0 %v5247
  %7949 = vmatpush.bf16.msra.mxu0 %v5243
  %7950 = vmatpush.bf16.msra.mxu0 %v5239
  %7951 = vmatmul.bf16.gmra.mxu0 %v1139
  %v7952 = vpop.f32.mrf.mxu0
  %v7953 = vadd.f32 %v7940, %v7952
  %v7954 = vpop.f32.mrf.mxu0
  %7955 = vdwg.mxu0
  %v7956 = vrot.slane %v6705, 4
  %v7957 = vadd.f32 %v6705, %v7956
  %v7958 = vrot.slane %v7957, 2
  %v7959 = vadd.f32 %v7957, %v7958
  %v7960 = vrot.slane %v7959, 1
  %v7961 = vadd.f32 %v7959, %v7960
  %v7962 = vrot.slane %v7121, 4
  %v7963 = vadd.f32 %v7121, %v7962
  %v7964 = vrot.slane %v7963, 2
  %v7965 = vadd.f32 %v7963, %v7964
  %v7966 = vrot.slane %v7965, 1
  %v7967 = vadd.f32 %v7965, %v7966
  %v7968 = vrot.slane %v7537, 4
  %v7969 = vadd.f32 %v7537, %v7968
  %v7970 = vrot.slane %v7969, 2
  %v7971 = vadd.f32 %v7969, %v7970
  %v7972 = vrot.slane %v7971, 1
  %v7973 = vadd.f32 %v7971, %v7972
  %v7974 = vrot.slane %v7953, 4
  %v7975 = vadd.f32 %v7953, %v7974
  %v7976 = vrot.slane %v7975, 2
  %v7977 = vadd.f32 %v7975, %v7976
  %v7978 = vrot.slane %v7977, 1
  %v7979 = vadd.f32 %v7977, %v7978
  %v7980 = vrcp.pop 8.0
  %v7981 = vmul.f32 8.0, %v7980
  %v7982 = vsub.f32 1.0, %v7981
  %v7983 = vmul.f32 %v7980, %v7982
  %v7984 = vadd.f32 %v7980, %v7983
  %vm7985 = vweird.f32 %v7980
  %v7986 = vsel %vm7985, %v7980, %v7984
  %v7987 = vmul.f32 %v7961, %v7986
  %v7988 = vmul.f32 %v7967, %v7986
  %v7989 = vmul.f32 %v7973, %v7986
  %v7990 = vmul.f32 %v7979, %v7986
  %v7991 = vsub.f32 %v6705, %v7987
  %v7992 = vsub.f32 %v7121, %v7988
  %v7993 = vsub.f32 %v7537, %v7989
  %v7994 = vsub.f32 %v7953, %v7990
  %v7995 = vmul.f32 %v7991, %v7991
  %v7996 = vmul.f32 %v7992, %v7992
  %v7997 = vmul.f32 %v7993, %v7993
  %v7998 = vmul.f32 %v7994, %v7994
  %v7999 = vrot.slane %v7995, 4
  %v8000 = vadd.f32 %v7995, %v7999
  %v8001 = vrot.slane %v8000, 2
  %v8002 = vadd.f32 %v8000, %v8001
  %v8003 = vrot.slane %v8002, 1
  %v8004 = vadd.f32 %v8002, %v8003
  %v8005 = vrot.slane %v7996, 4
  %v8006 = vadd.f32 %v7996, %v8005
  %v8007 = vrot.slane %v8006, 2
  %v8008 = vadd.f32 %v8006, %v8007
  %v8009 = vrot.slane %v8008, 1
  %v8010 = vadd.f32 %v8008, %v8009
  %v8011 = vrot.slane %v7997, 4
  %v8012 = vadd.f32 %v7997, %v8011
  %v8013 = vrot.slane %v8012, 2
  %v8014 = vadd.f32 %v8012, %v8013
  %v8015 = vrot.slane %v8014, 1
  %v8016 = vadd.f32 %v8014, %v8015
  %v8017 = vrot.slane %v7998, 4
  %v8018 = vadd.f32 %v7998, %v8017
  %v8019 = vrot.slane %v8018, 2
  %v8020 = vadd.f32 %v8018, %v8019
  %v8021 = vrot.slane %v8020, 1
  %v8022 = vadd.f32 %v8020, %v8021
  %v8023 = vmul.f32 %v8004, %v7986
  %v8024 = vmul.f32 %v8010, %v7986
  %v8025 = vmul.f32 %v8016, %v7986
  %v8026 = vmul.f32 %v8022, %v7986
  %v8027 = vld [vmem:[%s2] sm:$0xf]
  %v8028 = vadd.f32 %v8023, 1e-05
  %v8029 = vadd.f32 %v8024, 1e-05
  %v8030 = vadd.f32 %v8025, 1e-05
  %v8031 = vadd.f32 %v8026, 1e-05
  %v8032 = vrsqrt.pop %v8028
  %v8033 = vmul.f32 %v8032, %v8028
  %v8034 = vmul.f32 %v8033, %v8032
  %v8035 = vmul.f32 0.5, %v8034
  %v8036 = vsub.f32 1.5, %v8035
  %v8037 = vmul.f32 %v8032, %v8036
  %vm8038 = vweird.f32 %v8028
  %vm8039 = vweird.f32 %v8032
  %vm8040 = vmor %vm8038, %vm8039
  %v8041 = vsel %vm8040, %v8032, %v8037
  %v8042 = vrsqrt.pop %v8029
  %v8043 = vmul.f32 %v8042, %v8029
  %v8044 = vmul.f32 %v8043, %v8042
  %v8045 = vmul.f32 0.5, %v8044
  %v8046 = vsub.f32 1.5, %v8045
  %v8047 = vmul.f32 %v8042, %v8046
  %vm8048 = vweird.f32 %v8029
  %vm8049 = vweird.f32 %v8042
  %vm8050 = vmor %vm8048, %vm8049
  %v8051 = vsel %vm8050, %v8042, %v8047
  %v8052 = vrsqrt.pop %v8030
  %v8053 = vmul.f32 %v8052, %v8030
  %v8054 = vmul.f32 %v8053, %v8052
  %v8055 = vmul.f32 0.5, %v8054
  %v8056 = vsub.f32 1.5, %v8055
  %v8057 = vmul.f32 %v8052, %v8056
  %vm8058 = vweird.f32 %v8030
  %vm8059 = vweird.f32 %v8052
  %vm8060 = vmor %vm8058, %vm8059
  %v8061 = vsel %vm8060, %v8052, %v8057
  %v8062 = vrsqrt.pop %v8031
  %v8063 = vmul.f32 %v8062, %v8031
  %v8064 = vmul.f32 %v8063, %v8062
  %v8065 = vmul.f32 0.5, %v8064
  %v8066 = vsub.f32 1.5, %v8065
  %v8067 = vmul.f32 %v8062, %v8066
  %vm8068 = vweird.f32 %v8031
  %vm8069 = vweird.f32 %v8062
  %vm8070 = vmor %vm8068, %vm8069
  %v8071 = vsel %vm8070, %v8062, %v8067
  %v8076 = vrot.slane %v8051, 7
  %v8077 = vrot.slane %v8061, 6
  %v8078 = vrot.slane %v8071, 5
  %vm8079 = vcmask 1040384
  %v8080 = vsel %vm8079, %v8041, %v8076
  %vm8081 = vcmask 1042434
  %v8082 = vsel %vm8081, %v8077, %v8078
  %vm8083 = vcmask 1041408
  %v8084 = vsel %vm8083, %v8080, %v8082
  %v8086 = vmul.f32 %v8027, %v8084
  %v8087 = vld [vmem:[%s3] sm:$0xf]
  %v8089 = vperm.slane %v8086, 0
  %v8090 = vperm.slane %v8086, 1
  %v8091 = vperm.slane %v8086, 2
  %v8092 = vperm.slane %v8086, 3
  %v8097 = vmul.f32 %v7987, %v8089
  %v8098 = vmul.f32 %v7988, %v8090
  %v8099 = vmul.f32 %v7989, %v8091
  %v8100 = vmul.f32 %v7990, %v8092
  %v8105 = vrot.slane %v8098, 7
  %v8106 = vrot.slane %v8099, 6
  %v8107 = vrot.slane %v8100, 5
  %v8108 = vsel %vm8079, %v8097, %v8105
  %v8109 = vsel %vm8081, %v8106, %v8107
  %v8110 = vsel %vm8083, %v8108, %v8109
  %v8112 = vsub.f32 %v8087, %v8110
  %v8113 = vmul.f32 %v6705, %v8089
  %v8114 = vmul.f32 %v7121, %v8090
  %v8115 = vmul.f32 %v7537, %v8091
  %v8116 = vmul.f32 %v7953, %v8092
  %v8118 = vperm.slane %v8112, 0
  %v8119 = vperm.slane %v8112, 1
  %v8120 = vperm.slane %v8112, 2
  %v8121 = vperm.slane %v8112, 3
  %v8126 = vadd.f32 %v8113, %v8118
  %v8127 = vadd.f32 %v8114, %v8119
  %v8128 = vadd.f32 %v8115, %v8120
  %v8129 = vadd.f32 %v8116, %v8121
  %v8130 = vmax.f32 %v8126, 0.0
  %v8131 = vmax.f32 %v8127, 0.0
  %v8132 = vmax.f32 %v8128, 0.0
  %v8133 = vmax.f32 %v8129, 0.0
  %v8134 = vpack.c.bf16 %v8131, %v8130
  %v8135 = vpack.c.bf16 %v8133, %v8132
  %v8136 = vunpack.c.l.bf16 %v8134
  %v8137 = vunpack.c.h.bf16 %v8134
  %v8138 = vunpack.c.l.bf16 %v8135
  %v8139 = vunpack.c.h.bf16 %v8135
  %v8140 = vld [vmem:[%s4] sm:$0xff]
  %v8141 = vld [vmem:[%s4 + $0x8] sm:$0xff]
  %v8142 = vld [vmem:[%s4 + $0x10] sm:$0xff]
  %v8143 = vld [vmem:[%s4 + $0x18] sm:$0xff]
  %v8144 = vmul.f32 %v8136, %v8140
  %v8145 = vmul.f32 %v8137, %v8141
  %v8146 = vmul.f32 %v8138, %v8142
  %v8147 = vmul.f32 %v8139, %v8143
  %v8148 = vadd.f32 %v8144, %v8145
  %v8149 = vadd.f32 %v8148, %v8146
  %v8150 = vadd.f32 %v8149, %v8147
  %8151 = vadd.xlane.f32.xlu0 %v8150
  %v8152 = vpop.xlane.xlu0 %8151
  %vm8153 = vcmask 7168
  %8154 = vst.msk [vmem:[%s5] sm:$0xff] %vm8153, %v8152
  // Predicated region
  $region22: #{discriminator_forward.7} parent=0 // pred_check
    _
  $region23: #{discriminator_forward.7} parent=0 // pred_check_branch
    %8156 = sbr.rel (0) target = $region25
  $region24: #{discriminator_forward.7} parent=0 // pred_region
    _
  $region25: #{discriminator_forward.7} parent=0 // pred_fallthru
    _
  // Predicated region
  $region26: #{discriminator_forward.7} parent=0 // pred_check
    _
  $region27: #{discriminator_forward.7} parent=0 // pred_check_branch
    %8158 = sbr.rel (0) target = $region29
  $region28: #{discriminator_forward.7} parent=0 // pred_region
    _
  $region29: #{discriminator_forward.7} parent=0 // pred_fallthru
    _

</llo_original>
